<compile_context>
chip_gen: v7x
topology: tpu7x:2x2x1
jax: 0.10.0
libtpu: 0.0.40
codegen_flags: <defaults>
</compile_context>

<pallas_src>
import functools
import numpy as np
import jax
import jax.numpy as jnp
from jax import lax
from jax.experimental import pallas as pl
from jax.experimental.pallas import tpu as pltpu


# Generation-safe VMEM budget (v7x has 64 MiB physical; per-step buffers are tiny).
_VMEM_LIMIT_BYTES = 32 * 1024 * 1024
# Pixel-axis (lane) tile of the channels-first 1x1-conv matmul.
_PIX_TILE = 2048
# Token-axis (lane) tile for the channels-first Swin MLP.
_TOK_TILE = 2048
# Streaming dtype for the conv chain (accumulation stays f32 inside the kernels).
_ACT_DTYPE = jnp.bfloat16


def _round_up(x, m):
    return (x + m - 1) // m * m


def _gelu_tanh(x):
    # TODO(synk): tanh-approximate GELU (PyTorch default is exact erf).
    c = 0.7978845608028654  # sqrt(2/pi)
    return 0.5 * x * (1.0 + jnp.tanh(c * (x + 0.044715 * x * x * x)))


def _apply_act(x, act):
    if act is None:
        return x
    if act == "relu":
        return jnp.maximum(x, 0.0)
    if act == "sigmoid":
        return jax.nn.sigmoid(x)
    if act == "gelu":
        return _gelu_tanh(x)
    raise ValueError(f"unknown act {act}")


# ----------------------------------------------------------------------------
# Kernel 1: batched channels-first matmul
#   out[b] = act(W @ (x[b] (+ add[b])) + bias) (* gate[b])
#   x block (1, K, T) with pixels on the lane axis; grid (B, pixel tiles).
# ----------------------------------------------------------------------------
def _mm_bc_kernel(*refs, act, has_add, has_gate):
    w_ref, x_ref, b_ref = refs[0], refs[1], refs[2]
    idx = 3
    add_ref = None
    g_ref = None
    if has_add:
        add_ref = refs[idx]
        idx += 1
    if has_gate:
        g_ref = refs[idx]
        idx += 1
    o_ref = refs[-1]

    x = x_ref[0]                                    # (K, T)
    if add_ref is not None:
        x = x + add_ref[0]                          # fused c3 + cf
    acc = jnp.dot(w_ref[...], x, preferred_element_type=jnp.float32)   # (O, T)
    acc = acc + b_ref[...]
    acc = _apply_act(acc, act)
    if g_ref is not None:
        acc = g_ref[0].astype(jnp.float32) * acc    # e.g. x * sigmoid(conv4(.))
    o_ref[0] = acc.astype(o_ref.dtype)


def _batched_mm(wmat, x, bias, *, act=None, add=None, gate=None, out_dtype=None):
    """x: (B, K, P); wmat: (O, K); add: (B, K, P) or None; gate: (B, O, P) or None."""
    O, K = wmat.shape
    B, K2, P = x.shape
    assert K == K2
    out_dtype = x.dtype if out_dtype is None else out_dtype
    T = min(_PIX_TILE, _round_up(P, 128))
    Pp = _round_up(P, T)
    if Pp != P:
        x = jnp.pad(x, ((0, 0), (0, 0), (0, Pp - P)))
        if add is not None:
            add = jnp.pad(add, ((0, 0), (0, 0), (0, Pp - P)))
        if gate is not None:
            gate = jnp.pad(gate, ((0, 0), (0, 0), (0, Pp - P)))
    dt = x.dtype
    inputs = [wmat.astype(dt), x, bias.reshape(O, 1).astype(jnp.float32)]
    in_specs = [pl.BlockSpec((O, K), lambda b, i: (0, 0)),
                pl.BlockSpec((1, K, T), lambda b, i: (b, 0, i)),
                pl.BlockSpec((O, 1), lambda b, i: (0, 0))]
    if add is not None:
        inputs.append(add.astype(dt))
        in_specs.append(pl.BlockSpec((1, K, T), lambda b, i: (b, 0, i)))
    if gate is not None:
        inputs.append(gate.astype(dt))
        in_specs.append(pl.BlockSpec((1, O, T), lambda b, i: (b, 0, i)))
    out = pl.pallas_call(
        functools.partial(_mm_bc_kernel, act=act,
                          has_add=add is not None, has_gate=gate is not None),
        out_shape=jax.ShapeDtypeStruct((B, O, Pp), out_dtype),
        grid=(B, Pp // T),
        in_specs=in_specs,
        out_specs=pl.BlockSpec((1, O, T), lambda b, i: (b, 0, i)),
        compiler_params=pltpu.CompilerParams(
            dimension_semantics=("parallel", "parallel"),
            vmem_limit_bytes=_VMEM_LIMIT_BYTES),
    )(*inputs)
    return out[:, :, :P] if Pp != P else out


# ----------------------------------------------------------------------------
# Kernel 2: channels-first fused-im2col stride-1 conv.
#   Input (1, Cin, Hp*Wp + kw-1), taps are static lane-shifted slices,
#   output (1, O, Ho*Wp) — lane-dense.  One image per grid step.
# ----------------------------------------------------------------------------
def _conv_cf_kernel(x_ref, w_ref, b_ref, o_ref, *, kh, kw, wp, npix_out, act):
    acc = None
    for i in range(kh):
        for j in range(kw):
            s = i * wp + j
            xs = x_ref[0, :, s:s + npix_out]                    # (Cin, Ho*Wp)
            # Per-tap small dots; MXU is <3% utilised at these channel counts,
            # lane-density of the loads/stores is what matters.
            t = jnp.dot(w_ref[i * kw + j], xs, preferred_element_type=jnp.float32)
            acc = t if acc is None else acc + t
    acc = acc + b_ref[...]
    acc = _apply_act(acc, act)
    o_ref[0] = acc.astype(o_ref.dtype)                          # lane-dense store


def _conv2d_fused(x, w, b, padding, act, out_dtype):
    B, Cin, H, W = x.shape
    O, _, kh, kw = w.shape
    Hp, Wp = H + 2 * padding, W + 2 * padding
    Ho, Wo = Hp - kh + 1, Wp - kw + 1
    xp = x
    if padding:
        xp = jnp.pad(x, ((0, 0), (0, 0), (padding, padding), (padding, padding)))
    xf = xp.reshape(B, Cin, Hp * Wp)
    if kw > 1:
        xf = jnp.pad(xf, ((0, 0), (0, 0), (0, kw - 1)))          # overrun guard
    npix_in = Hp * Wp + (kw - 1)
    npix_out = Ho * Wp
    wk = jnp.transpose(w, (2, 3, 0, 1)).reshape(kh * kw, O, Cin).astype(x.dtype)
    out = pl.pallas_call(
        functools.partial(_conv_cf_kernel, kh=kh, kw=kw, wp=Wp,
                          npix_out=npix_out, act=act),
        out_shape=jax.ShapeDtypeStruct((B, O, npix_out), out_dtype),
        grid=(B,),
        in_specs=[pl.BlockSpec((1, Cin, npix_in), lambda bb: (bb, 0, 0)),
                  pl.BlockSpec((kh * kw, O, Cin), lambda bb: (0, 0, 0)),
                  pl.BlockSpec((O, 1), lambda bb: (0, 0))],
        out_specs=pl.BlockSpec((1, O, npix_out), lambda bb: (bb, 0, 0)),
        compiler_params=pltpu.CompilerParams(
            dimension_semantics=("parallel",),
            vmem_limit_bytes=_VMEM_LIMIT_BYTES),
    )(xf, wk, b.reshape(O, 1).astype(jnp.float32))
    return out.reshape(B, O, Ho, Wp)[:, :, :, :Wo]


def conv2d(x, w, b, stride=1, padding=0, act=None, gate=None, add=None,
           out_dtype=None):
    """NCHW conv, weight (O, Cin, kh, kw), bias (O,).  Matmuls run in Pallas."""
    B, Cin, H, W = x.shape
    O, _, kh, kw = w.shape
    out_dtype = x.dtype if out_dtype is None else out_dtype
    if kh == 1 and kw == 1 and stride == 1:
        P = H * W
        xm = x.reshape(B, Cin, P)
        am = add.reshape(B, Cin, P).astype(x.dtype) if add is not None else None
        gm = gate.reshape(B, O, P).astype(x.dtype) if gate is not None else None
        out = _batched_mm(w.reshape(O, Cin), xm, b, act=act, add=am, gate=gm,
                          out_dtype=out_dtype)
        return out.reshape(B, O, H, W)
    assert gate is None and add is None
    if stride == 1:
        return _conv2d_fused(x, w, b, padding, act, out_dtype)
    # Strided conv (ESA conv2, 7x7 output): XLA-side im2col feeding the batched
    # channels-first Pallas matmul (tiny tensor).
    xp = x
    if padding:
        xp = jnp.pad(x, ((0, 0), (0, 0), (padding, padding), (padding, padding)))
    Ho = (H + 2 * padding - kh) // stride + 1
    Wo = (W + 2 * padding - kw) // stride + 1
    patches = []
    for i in range(kh):
        for j in range(kw):
            patches.append(xp[:, :, i:i + stride * (Ho - 1) + 1:stride,
                              j:j + stride * (Wo - 1) + 1:stride])
    p = jnp.stack(patches, axis=2)                      # (B, Cin, kh*kw, Ho, Wo)
    pim = p.reshape(B, Cin * kh * kw, Ho * Wo)
    out = _batched_mm(w.reshape(O, Cin * kh * kw), pim, b, act=act,
                      out_dtype=out_dtype)
    return out.reshape(B, O, Ho, Wo)


def max_pool2d(x, kernel, stride):
    # TODO(synk): max-pool kept in XLA glue (tiny 7x7 -> 1x1 reduction here).
    y = lax.reduce_window(x.astype(jnp.float32), -jnp.inf, lax.max,
                          (1, 1, kernel, kernel), (1, 1, stride, stride), "VALID")
    return y.astype(x.dtype)


def _resize_matrix(out_size, in_size):
    # PyTorch bilinear, align_corners=False semantics.
    dst = np.arange(out_size, dtype=np.float64)
    src = (dst + 0.5) * (in_size / out_size) - 0.5
    src = np.maximum(src, 0.0)
    i0 = np.minimum(np.floor(src).astype(np.int64), in_size - 1)
    i1 = np.minimum(i0 + 1, in_size - 1)
    l1 = src - i0
    l0 = 1.0 - l1
    M = np.zeros((out_size, in_size), np.float64)
    M[np.arange(out_size), i0] += l0
    M[np.arange(out_size), i1] += l1
    return jnp.asarray(M, jnp.float32)


def bilinear_resize(x, out_h, out_w):
    # TODO(synk): separable bilinear resize kept in XLA glue (input is 1x1 here).
    Mh = _resize_matrix(out_h, x.shape[2])
    Mw = _resize_matrix(out_w, x.shape[3])
    return jnp.einsum("oh,bchw,pw->bcop", Mh, x.astype(jnp.float32), Mw)


# ----------------------------------------------------------------------------
# ESA (channels-first throughout, bf16 streaming, f32 output)
# ----------------------------------------------------------------------------
def esa_forward(x, p):
    B, C, H, W = x.shape
    xs = x.astype(_ACT_DTYPE)
    c1_ = conv2d(xs, p["conv1"]["w"], p["conv1"]["b"])
    c1 = conv2d(c1_, p["conv2"]["w"], p["conv2"]["b"], stride=2, padding=0)
    v_max = max_pool2d(c1, 7, 3)
    v_range = conv2d(v_max, p["conv_max"]["w"], p["conv_max"]["b"],
                     padding=1, act="relu")
    c3 = conv2d(v_range, p["conv3"]["w"], p["conv3"]["b"], padding=1, act="relu")
    c3 = conv2d(c3, p["conv3_"]["w"], p["conv3_"]["b"], padding=1)
    c3 = bilinear_resize(c3, H, W).astype(_ACT_DTYPE)
    cf = conv2d(c1_, p["conv_f"]["w"], p["conv_f"]["b"])
    # Fully fused:  out = x * sigmoid(conv4(c3 + cf))  (add + matmul + gate in one kernel)
    return conv2d(c3, p["conv4"]["w"], p["conv4"]["b"], act="sigmoid",
                  gate=xs, add=cf, out_dtype=jnp.float32)


# ----------------------------------------------------------------------------
# Kernel 3: fused Swin attention block — one window per grid step, windows read
# directly from the (shifted) NHWC tensor via BlockSpec index maps.
# ----------------------------------------------------------------------------
def _swin_attn_kernel(x_ref, lng_ref, lnb_ref, qkvw_ref, qkvb_ref, rel_ref,
                      mask_ref, projw_ref, projb_ref, o_ref,
                      *, num_heads, head_dim, eps, ws):
    c = x_ref.shape[-1]
    n = ws * ws
    x = x_ref[0].reshape(n, c)                                   # (N, C)
    # LayerNorm over C
    mu = jnp.mean(x, axis=-1, keepdims=True)
    var = jnp.mean(jnp.square(x - mu), axis=-1, keepdims=True)
    xn = (x - mu) * lax.rsqrt(var + eps) * lng_ref[...] + lnb_ref[...]
    qkv = jnp.dot(xn, qkvw_ref[...],
                  preferred_element_type=jnp.float32) + qkvb_ref[...]   # (N, 3C)
    # Hoisted out of the head loop: rel-pos bias + shift mask, (nh, N, N).
    bias = rel_ref[...] + mask_ref[0][None]
    projw = projw_ref[...]                                       # (C, C)
    scale = head_dim ** -0.5
    y = jnp.zeros((n, c), jnp.float32)
    for h in range(num_heads):
        q = qkv[:, h * head_dim:(h + 1) * head_dim] * scale
        k = qkv[:, c + h * head_dim:c + (h + 1) * head_dim]
        v = qkv[:, 2 * c + h * head_dim:2 * c + (h + 1) * head_dim]
        s = jnp.einsum("nd,md->nm", q, k,
                       preferred_element_type=jnp.float32) + bias[h]
        s = s - jnp.max(s, axis=-1, keepdims=True)
        e = jnp.exp(s)
        prob = e * pl.reciprocal(jnp.sum(e, axis=-1, keepdims=True), approx=True)
        ctx = jnp.dot(prob, v, preferred_element_type=jnp.float32)       # (N, hd)
        # per-head output projection -> no lane-axis concat of heads
        y = y + jnp.dot(ctx, projw[h * head_dim:(h + 1) * head_dim, :],
                        preferred_element_type=jnp.float32)
    out = x + y + projb_ref[...]
    o_ref[0] = out.reshape(ws, ws, c).astype(o_ref.dtype)


def pallas_swin_attention(x_sp, rel_bias, mask, p, num_heads, ws):
    B, H, W, C = x_sp.shape
    N = ws * ws
    nWh, nWw = H // ws, W // ws
    head_dim = C // num_heads
    f32 = jnp.float32
    return pl.pallas_call(
        functools.partial(_swin_attn_kernel, num_heads=num_heads,
                          head_dim=head_dim, eps=1e-5, ws=ws),
        out_shape=jax.ShapeDtypeStruct((B, H, W, C), f32),
        grid=(B, nWh, nWw),
        in_specs=[
            pl.BlockSpec((1, ws, ws, C), lambda b, i, j: (b, i, j, 0)),
            pl.BlockSpec((1, C), lambda b, i, j: (0, 0)),
            pl.BlockSpec((1, C), lambda b, i, j: (0, 0)),
            pl.BlockSpec((C, 3 * C), lambda b, i, j: (0, 0)),
            pl.BlockSpec((1, 3 * C), lambda b, i, j: (0, 0)),
            pl.BlockSpec((num_heads, N, N), lambda b, i, j: (0, 0, 0)),
            pl.BlockSpec((1, N, N), lambda b, i, j: (i * nWw + j, 0, 0)),
            pl.BlockSpec((C, C), lambda b, i, j: (0, 0)),
            pl.BlockSpec((1, C), lambda b, i, j: (0, 0)),
        ],
        out_specs=pl.BlockSpec((1, ws, ws, C), lambda b, i, j: (b, i, j, 0)),
        compiler_params=pltpu.CompilerParams(
            dimension_semantics=("parallel", "parallel", "parallel"),
            vmem_limit_bytes=_VMEM_LIMIT_BYTES),
    )(x_sp.astype(f32),
      p["ln1_g"].reshape(1, C).astype(f32), p["ln1_b"].reshape(1, C).astype(f32),
      p["qkv"]["w"].astype(f32), p["qkv"]["b"].reshape(1, 3 * C).astype(f32),
      rel_bias.astype(f32), mask.astype(f32),
      p["proj"]["w"].astype(f32), p["proj"]["b"].reshape(1, C).astype(f32))


# ----------------------------------------------------------------------------
# Kernel 4: channels-first fused Swin MLP (LN2 + fc1 + GELU + fc2 + residual)
#   blocks are (C, tok_tile) with tokens on the lane axis -> lane-dense stores.
# ----------------------------------------------------------------------------
def _swin_mlp_kernel(x_ref, lng_ref, lnb_ref, w1_ref, b1_ref, w2_ref, b2_ref,
                     o_ref, *, eps):
    x = x_ref[0].astype(jnp.float32)                             # (C, T)
    mu = jnp.mean(x, axis=0, keepdims=True)
    var = jnp.mean(jnp.square(x - mu), axis=0, keepdims=True)
    xn = (x - mu) * lax.rsqrt(var + eps) * lng_ref[...] + lnb_ref[...]
    h = jnp.dot(w1_ref[...], xn, preferred_element_type=jnp.float32) + b1_ref[...]
    h = _gelu_tanh(h)
    y = jnp.dot(w2_ref[...], h, preferred_element_type=jnp.float32) + b2_ref[...]
    o_ref[0] = (x + y).astype(o_ref.dtype)


def pallas_swin_mlp(x_bcl, p):
    B, C, L = x_bcl.shape
    hidden = p["fc1"]["w"].shape[1]
    T = min(_TOK_TILE, _round_up(L, 128))
    Lp = _round_up(L, T)
    if Lp != L:
        x_bcl = jnp.pad(x_bcl, ((0, 0), (0, 0), (0, Lp - L)))
    f32 = jnp.float32
    out = pl.pallas_call(
        functools.partial(_swin_mlp_kernel, eps=1e-5),
        out_shape=jax.ShapeDtypeStruct((B, C, Lp), f32),
        grid=(B, Lp // T),
        in_specs=[
            pl.BlockSpec((1, C, T), lambda b, i: (b, 0, i)),
            pl.BlockSpec((C, 1), lambda b, i: (0, 0)),
            pl.BlockSpec((C, 1), lambda b, i: (0, 0)),
            pl.BlockSpec((hidden, C), lambda b, i: (0, 0)),
            pl.BlockSpec((hidden, 1), lambda b, i: (0, 0)),
            pl.BlockSpec((C, hidden), lambda b, i: (0, 0)),
            pl.BlockSpec((C, 1), lambda b, i: (0, 0)),
        ],
        out_specs=pl.BlockSpec((1, C, T), lambda b, i: (b, 0, i)),
        compiler_params=pltpu.CompilerParams(
            dimension_semantics=("parallel", "parallel"),
            vmem_limit_bytes=_VMEM_LIMIT_BYTES),
    )(x_bcl.astype(f32),
      p["ln2_g"].reshape(C, 1).astype(f32), p["ln2_b"].reshape(C, 1).astype(f32),
      jnp.transpose(p["fc1"]["w"]).astype(f32),
      p["fc1"]["b"].reshape(hidden, 1).astype(f32),
      jnp.transpose(p["fc2"]["w"]).astype(f32),
      p["fc2"]["b"].reshape(C, 1).astype(f32))
    return out[:, :, :L] if Lp != L else out


# ----------------------------------------------------------------------------
# Swin transformer block (HNCT-style SwinT body)
# ----------------------------------------------------------------------------
def window_partition(x, ws):
    B, H, W, C = x.shape
    x = x.reshape(B, H // ws, ws, W // ws, ws, C)
    return x.transpose(0, 1, 3, 2, 4, 5).reshape(-1, ws, ws, C)


def relative_position_index(ws):
    coords = np.stack(np.meshgrid(np.arange(ws), np.arange(ws), indexing="ij"))
    coords_flat = coords.reshape(2, -1)
    rel = coords_flat[:, :, None] - coords_flat[:, None, :]     # (2, N, N)
    rel = rel.transpose(1, 2, 0).astype(np.int64)
    rel[:, :, 0] += ws - 1
    rel[:, :, 1] += ws - 1
    rel[:, :, 0] *= 2 * ws - 1
    return jnp.asarray(rel.sum(-1), jnp.int32)                  # (N, N)


def compute_attn_mask(H, W, ws, shift):
    img_mask = np.zeros((1, H, W, 1), np.float32)
    cnt = 0
    for hs in (slice(0, -ws), slice(-ws, -shift), slice(-shift, None)):
        for wsl in (slice(0, -ws), slice(-ws, -shift), slice(-shift, None)):
            img_mask[:, hs, wsl, :] = cnt
            cnt += 1
    mask_windows = window_partition(jnp.asarray(img_mask), ws).reshape(-1, ws * ws)
    diff = mask_windows[:, None, :] - mask_windows[:, :, None]
    return jnp.where(diff != 0, -100.0, 0.0).astype(jnp.float32)   # (nW, N, N)


def swin_block_forward(x_img, p, ws, shift, num_heads, rel_index, attn_mask):
    B, C, H, W = x_img.shape
    assert H % ws == 0 and W % ws == 0
    N = ws * ws
    nW = (H // ws) * (W // ws)

    x_sp = jnp.transpose(x_img, (0, 2, 3, 1))                    # (B, H, W, C)
    if shift > 0:
        x_sp = jnp.roll(x_sp, (-shift, -shift), axis=(1, 2))

    rel_bias = p["rel_table"][rel_index.reshape(-1)]
    rel_bias = rel_bias.reshape(N, N, num_heads).transpose(2, 0, 1)   # (nh, N, N)
    mask = attn_mask if attn_mask is not None else jnp.zeros((nW, N, N), jnp.float32)

    # fused: LN1 + QKV + window MHA (rel bias + shift mask) + proj + residual;
    # windows are gathered straight from x_sp via the BlockSpec index maps.
    attn = pallas_swin_attention(x_sp, rel_bias, mask, p, num_heads, ws)  # (B,H,W,C)
    if shift > 0:
        attn = jnp.roll(attn, (shift, shift), axis=(1, 2))

    # fused, channels-first: LN2 + fc1 + GELU + fc2 + residual
    x_cf = jnp.transpose(attn, (0, 3, 1, 2)).reshape(B, C, H * W)
    y = pallas_swin_mlp(x_cf, p)                                 # (B, C, L)
    return y.reshape(B, C, H, W)


def swint_forward(x, blocks, num_heads, window_size):
    B, C, H, W = x.shape
    rel_index = relative_position_index(window_size)
    for i, p in enumerate(blocks):
        shift = 0 if i % 2 == 0 else window_size // 2
        attn_mask = compute_attn_mask(H, W, window_size, shift) if shift > 0 else None
        x = swin_block_forward(x, p, window_size, shift, num_heads, rel_index, attn_mask)
    return x


# ----------------------------------------------------------------------------
# HBCT
# ----------------------------------------------------------------------------
def hbct_forward(x, params, num_heads, window_size):
    x = esa_forward(x, params["esa2"])                           # f32
    x = swint_forward(x, params["swint"], num_heads, window_size)
    x = conv2d(x.astype(_ACT_DTYPE), params["c"]["w"], params["c"]["b"], padding=1)
    x = esa_forward(x, params["esa"])                            # f32
    return x


# ----------------------------------------------------------------------------
# Deterministic parameter init
# ----------------------------------------------------------------------------
class KeyGen:
    def __init__(self, seed=0):
        self.key = jax.random.PRNGKey(seed)

    def __call__(self):
        self.key, sub = jax.random.split(self.key)
        return sub


def init_conv(kg, out_c, in_c, k):
    return {"w": jax.random.normal(kg(), (out_c, in_c, k, k), jnp.float32) * 0.05,
            "b": jax.random.normal(kg(), (out_c,), jnp.float32) * 0.05}


def init_linear(kg, in_f, out_f):
    return {"w": jax.random.normal(kg(), (in_f, out_f), jnp.float32) * 0.05,
            "b": jax.random.normal(kg(), (out_f,), jnp.float32) * 0.05}


def init_esa(kg, n_feats):
    f = n_feats // 4
    return {
        "conv1": init_conv(kg, f, n_feats, 1),
        "conv_f": init_conv(kg, f, f, 1),
        "conv_max": init_conv(kg, f, f, 3),
        "conv2": init_conv(kg, f, f, 3),
        "conv3": init_conv(kg, f, f, 3),
        "conv3_": init_conv(kg, f, f, 3),
        "conv4": init_conv(kg, n_feats, f, 1),
    }


def init_swin_block(kg, dim, num_heads, ws, mlp_ratio=2.0):
    hidden = int(dim * mlp_ratio)
    return {
        "ln1_g": jnp.ones((dim,), jnp.float32),
        "ln1_b": jnp.zeros((dim,), jnp.float32),
        "qkv": init_linear(kg, dim, 3 * dim),
        "rel_table": jax.random.normal(kg(), ((2 * ws - 1) ** 2, num_heads),
                                       jnp.float32) * 0.02,
        "proj": init_linear(kg, dim, dim),
        "ln2_g": jnp.ones((dim,), jnp.float32),
        "ln2_b": jnp.zeros((dim,), jnp.float32),
        "fc1": init_linear(kg, dim, hidden),
        "fc2": init_linear(kg, hidden, dim),
    }


if __name__ == "__main__":
    in_channels, depth, num_heads = 8, 2, 2
    window_size = 8
    B, H, W = 2, 16, 16

    kg = KeyGen(0)
    params = {
        "esa2": init_esa(kg, in_channels),
        "swint": [init_swin_block(kg, in_channels, num_heads, window_size)
                  for _ in range(depth)],
        "c": init_conv(kg, in_channels, in_channels, 3),
        "esa": init_esa(kg, in_channels),
    }

    x = jax.random.normal(jax.random.PRNGKey(0), (B, in_channels, H, W), jnp.float32)

    fwd = jax.jit(lambda xx, pp: hbct_forward(xx, pp, num_heads, window_size))
    out = jax.block_until_ready(fwd(x, params))
    assert out.shape == (B, in_channels, H, W)
    assert bool(jnp.all(jnp.isfinite(out)))
    print("KERNEL_OK")
</pallas_src>

<mosaic_0001>
module attributes {stable_mosaic.version = 11 : i64} {
  func.func @_mm_bc_kernel(%arg0: i32, %arg1: i32, %arg2: memref<2x8xbf16, #tpu.memory_space<vmem>>, %arg3: memref<1x8x256xbf16, #tpu.memory_space<vmem>>, %arg4: memref<2x1xf32, #tpu.memory_space<vmem>>, %arg5: memref<1x2x256xbf16, #tpu.memory_space<vmem>>) attributes {dimension_semantics = [#tpu.dimension_semantics<parallel>, #tpu.dimension_semantics<parallel>], iteration_bounds = array<i64: 2, 1>, scalar_prefetch = 0 : i64, scratch_operands = 0 : i64, tpu.core_type = #tpu.core_type<tc>, window_params = [{pipeline_mode = #tpu.pipeline_mode<synchronous>, transform_indices = @transform_0, window_bounds = array<i64: 2, 8>}, {transform_indices = @transform_1, window_bounds = array<i64: 1, 8, 256>}, {pipeline_mode = #tpu.pipeline_mode<synchronous>, transform_indices = @transform_2, window_bounds = array<i64: 2, 1>}, {transform_indices = @transform_3, window_bounds = array<i64: 1, 2, 256>}]} {
    %c0 = arith.constant 0 : index
    %c0_0 = arith.constant 0 : index
    %c0_1 = arith.constant 0 : index
    %0 = vector.load %arg3[%c0, %c0_0, %c0_1] : memref<1x8x256xbf16, #tpu.memory_space<vmem>>, vector<1x8x256xbf16>
    %1 = vector.shape_cast %0 : vector<1x8x256xbf16> to vector<8x256xbf16>
    %c0_2 = arith.constant 0 : index
    %c0_3 = arith.constant 0 : index
    %2 = vector.load %arg2[%c0_2, %c0_3] : memref<2x8xbf16, #tpu.memory_space<vmem>>, vector<2x8xbf16>
    %cst = arith.constant dense<0.000000e+00> : vector<2x256xf32>
    %3 = tpu.matmul %2, %1, %cst {dimension_numbers = #tpu.dot_dimension_numbers<[1], [0], [0], [1], [0, 0, 1, 1], [], []>} : vector<2x8xbf16>, vector<8x256xbf16>, vector<2x256xf32> -> vector<2x256xf32>
    %c0_4 = arith.constant 0 : index
    %c0_5 = arith.constant 0 : index
    %4 = vector.load %arg4[%c0_4, %c0_5] : memref<2x1xf32, #tpu.memory_space<vmem>>, vector<2x1xf32>
    %5 = vector.broadcast %4 : vector<2x1xf32> to vector<2x256xf32>
    %6 = arith.addf %3, %5 : vector<2x256xf32>
    %7 = arith.truncf %6 : vector<2x256xf32> to vector<2x256xbf16>
    %c0_6 = arith.constant 0 : index
    %c0_7 = arith.constant 0 : index
    %c0_8 = arith.constant 0 : index
    %8 = vector.load %arg5[%c0_6, %c0_7, %c0_8] : memref<1x2x256xbf16, #tpu.memory_space<vmem>>, vector<1x2x256xbf16>
    %9 = vector.shape_cast %8 : vector<1x2x256xbf16> to vector<2x256xbf16>
    %10 = vector.shape_cast %7 : vector<2x256xbf16> to vector<1x2x256xbf16>
    tpu.vector_store %arg5[%c0_6, %c0_7, %c0_8], %10 {strides = array<i32>} : memref<1x2x256xbf16, #tpu.memory_space<vmem>>, vector<1x2x256xbf16>,
    return
  }
  func.func @transform_0(%arg0: i32, %arg1: i32) -> (i32, i32) {
    %c0_i32 = arith.constant 0 : i32
    %c0_i32_0 = arith.constant 0 : i32
    %c0_i32_1 = arith.constant 0 : i32
    return %c0_i32, %c0_i32_0 : i32, i32
  }
  func.func @transform_1(%arg0: i32, %arg1: i32) -> (i32, i32, i32) {
    %c0_i32 = arith.constant 0 : i32
    %c0_i32_0 = arith.constant 0 : i32
    return %arg0, %c0_i32, %arg1 : i32, i32, i32
  }
  func.func @transform_2(%arg0: i32, %arg1: i32) -> (i32, i32) {
    %c0_i32 = arith.constant 0 : i32
    %c0_i32_0 = arith.constant 0 : i32
    %c0_i32_1 = arith.constant 0 : i32
    return %c0_i32, %c0_i32_0 : i32, i32
  }
  func.func @transform_3(%arg0: i32, %arg1: i32) -> (i32, i32, i32) {
    %c0_i32 = arith.constant 0 : i32
    %c0_i32_0 = arith.constant 0 : i32
    return %arg0, %c0_i32, %arg1 : i32, i32, i32
  }
}

module attributes {stable_mosaic.version = 11 : i64} {
  func.func @_conv_cf_kernel(%arg0: i32, %arg1: memref<1x2x11xbf16, #tpu.memory_space<vmem>>, %arg2: memref<9x2x2xbf16, #tpu.memory_space<vmem>>, %arg3: memref<2x1xf32, #tpu.memory_space<vmem>>, %arg4: memref<1x2x3xbf16, #tpu.memory_space<vmem>>) attributes {dimension_semantics = [#tpu.dimension_semantics<parallel>], iteration_bounds = array<i64: 2>, scalar_prefetch = 0 : i64, scratch_operands = 0 : i64, tpu.core_type = #tpu.core_type<tc>, window_params = [{transform_indices = @transform_0, window_bounds = array<i64: 1, 2, 11>}, {pipeline_mode = #tpu.pipeline_mode<synchronous>, transform_indices = @transform_1, window_bounds = array<i64: 9, 2, 2>}, {pipeline_mode = #tpu.pipeline_mode<synchronous>, transform_indices = @transform_2, window_bounds = array<i64: 2, 1>}, {transform_indices = @transform_3, window_bounds = array<i64: 1, 2, 3>}]} {
    %c0 = arith.constant 0 : index
    %c0_0 = arith.constant 0 : index
    %c0_1 = arith.constant 0 : index
    %0 = vector.load %arg1[%c0, %c0_0, %c0_1] : memref<1x2x11xbf16, #tpu.memory_space<vmem>>, vector<1x2x3xbf16>
    %1 = vector.shape_cast %0 : vector<1x2x3xbf16> to vector<2x3xbf16>
    %c0_2 = arith.constant 0 : index
    %c0_3 = arith.constant 0 : index
    %c0_4 = arith.constant 0 : index
    %2 = vector.load %arg2[%c0_2, %c0_3, %c0_4] : memref<9x2x2xbf16, #tpu.memory_space<vmem>>, vector<1x2x2xbf16>
    %3 = vector.shape_cast %2 : vector<1x2x2xbf16> to vector<2x2xbf16>
    %cst = arith.constant dense<0.000000e+00> : vector<2x3xf32>
    %4 = tpu.matmul %3, %1, %cst {dimension_numbers = #tpu.dot_dimension_numbers<[1], [0], [0], [1], [0, 0, 1, 1], [], []>} : vector<2x2xbf16>, vector<2x3xbf16>, vector<2x3xf32> -> vector<2x3xf32>
    %c0_5 = arith.constant 0 : index
    %c0_6 = arith.constant 0 : index
    %c1 = arith.constant 1 : index
    %5 = vector.load %arg1[%c0_5, %c0_6, %c1] : memref<1x2x11xbf16, #tpu.memory_space<vmem>>, vector<1x2x3xbf16>
    %6 = vector.shape_cast %5 : vector<1x2x3xbf16> to vector<2x3xbf16>
    %c1_7 = arith.constant 1 : index
    %c0_8 = arith.constant 0 : index
    %c0_9 = arith.constant 0 : index
    %7 = vector.load %arg2[%c1_7, %c0_8, %c0_9] : memref<9x2x2xbf16, #tpu.memory_space<vmem>>, vector<1x2x2xbf16>
    %8 = vector.shape_cast %7 : vector<1x2x2xbf16> to vector<2x2xbf16>
    %cst_10 = arith.constant dense<0.000000e+00> : vector<2x3xf32>
    %9 = tpu.matmul %8, %6, %cst_10 {dimension_numbers = #tpu.dot_dimension_numbers<[1], [0], [0], [1], [0, 0, 1, 1], [], []>} : vector<2x2xbf16>, vector<2x3xbf16>, vector<2x3xf32> -> vector<2x3xf32>
    %10 = arith.addf %4, %9 : vector<2x3xf32>
    %c0_11 = arith.constant 0 : index
    %c0_12 = arith.constant 0 : index
    %c2 = arith.constant 2 : index
    %11 = vector.load %arg1[%c0_11, %c0_12, %c2] : memref<1x2x11xbf16, #tpu.memory_space<vmem>>, vector<1x2x3xbf16>
    %12 = vector.shape_cast %11 : vector<1x2x3xbf16> to vector<2x3xbf16>
    %c2_13 = arith.constant 2 : index
    %c0_14 = arith.constant 0 : index
    %c0_15 = arith.constant 0 : index
    %13 = vector.load %arg2[%c2_13, %c0_14, %c0_15] : memref<9x2x2xbf16, #tpu.memory_space<vmem>>, vector<1x2x2xbf16>
    %14 = vector.shape_cast %13 : vector<1x2x2xbf16> to vector<2x2xbf16>
    %cst_16 = arith.constant dense<0.000000e+00> : vector<2x3xf32>
    %15 = tpu.matmul %14, %12, %cst_16 {dimension_numbers = #tpu.dot_dimension_numbers<[1], [0], [0], [1], [0, 0, 1, 1], [], []>} : vector<2x2xbf16>, vector<2x3xbf16>, vector<2x3xf32> -> vector<2x3xf32>
    %16 = arith.addf %10, %15 : vector<2x3xf32>
    %c0_17 = arith.constant 0 : index
    %c0_18 = arith.constant 0 : index
    %c3 = arith.constant 3 : index
    %17 = vector.load %arg1[%c0_17, %c0_18, %c3] : memref<1x2x11xbf16, #tpu.memory_space<vmem>>, vector<1x2x3xbf16>
    %18 = vector.shape_cast %17 : vector<1x2x3xbf16> to vector<2x3xbf16>
    %c3_19 = arith.constant 3 : index
    %c0_20 = arith.constant 0 : index
    %c0_21 = arith.constant 0 : index
    %19 = vector.load %arg2[%c3_19, %c0_20, %c0_21] : memref<9x2x2xbf16, #tpu.memory_space<vmem>>, vector<1x2x2xbf16>
    %20 = vector.shape_cast %19 : vector<1x2x2xbf16> to vector<2x2xbf16>
    %cst_22 = arith.constant dense<0.000000e+00> : vector<2x3xf32>
    %21 = tpu.matmul %20, %18, %cst_22 {dimension_numbers = #tpu.dot_dimension_numbers<[1], [0], [0], [1], [0, 0, 1, 1], [], []>} : vector<2x2xbf16>, vector<2x3xbf16>, vector<2x3xf32> -> vector<2x3xf32>
    %22 = arith.addf %16, %21 : vector<2x3xf32>
    %c0_23 = arith.constant 0 : index
    %c0_24 = arith.constant 0 : index
    %c4 = arith.constant 4 : index
    %23 = vector.load %arg1[%c0_23, %c0_24, %c4] : memref<1x2x11xbf16, #tpu.memory_space<vmem>>, vector<1x2x3xbf16>
    %24 = vector.shape_cast %23 : vector<1x2x3xbf16> to vector<2x3xbf16>
    %c4_25 = arith.constant 4 : index
    %c0_26 = arith.constant 0 : index
    %c0_27 = arith.constant 0 : index
    %25 = vector.load %arg2[%c4_25, %c0_26, %c0_27] : memref<9x2x2xbf16, #tpu.memory_space<vmem>>, vector<1x2x2xbf16>
    %26 = vector.shape_cast %25 : vector<1x2x2xbf16> to vector<2x2xbf16>
    %cst_28 = arith.constant dense<0.000000e+00> : vector<2x3xf32>
    %27 = tpu.matmul %26, %24, %cst_28 {dimension_numbers = #tpu.dot_dimension_numbers<[1], [0], [0], [1], [0, 0, 1, 1], [], []>} : vector<2x2xbf16>, vector<2x3xbf16>, vector<2x3xf32> -> vector<2x3xf32>
    %28 = arith.addf %22, %27 : vector<2x3xf32>
    %c0_29 = arith.constant 0 : index
    %c0_30 = arith.constant 0 : index
    %c5 = arith.constant 5 : index
    %29 = vector.load %arg1[%c0_29, %c0_30, %c5] : memref<1x2x11xbf16, #tpu.memory_space<vmem>>, vector<1x2x3xbf16>
    %30 = vector.shape_cast %29 : vector<1x2x3xbf16> to vector<2x3xbf16>
    %c5_31 = arith.constant 5 : index
    %c0_32 = arith.constant 0 : index
    %c0_33 = arith.constant 0 : index
    %31 = vector.load %arg2[%c5_31, %c0_32, %c0_33] : memref<9x2x2xbf16, #tpu.memory_space<vmem>>, vector<1x2x2xbf16>
    %32 = vector.shape_cast %31 : vector<1x2x2xbf16> to vector<2x2xbf16>
    %cst_34 = arith.constant dense<0.000000e+00> : vector<2x3xf32>
    %33 = tpu.matmul %32, %30, %cst_34 {dimension_numbers = #tpu.dot_dimension_numbers<[1], [0], [0], [1], [0, 0, 1, 1], [], []>} : vector<2x2xbf16>, vector<2x3xbf16>, vector<2x3xf32> -> vector<2x3xf32>
    %34 = arith.addf %28, %33 : vector<2x3xf32>
    %c0_35 = arith.constant 0 : index
    %c0_36 = arith.constant 0 : index
    %c6 = arith.constant 6 : index
    %35 = vector.load %arg1[%c0_35, %c0_36, %c6] : memref<1x2x11xbf16, #tpu.memory_space<vmem>>, vector<1x2x3xbf16>
    %36 = vector.shape_cast %35 : vector<1x2x3xbf16> to vector<2x3xbf16>
    %c6_37 = arith.constant 6 : index
    %c0_38 = arith.constant 0 : index
    %c0_39 = arith.constant 0 : index
    %37 = vector.load %arg2[%c6_37, %c0_38, %c0_39] : memref<9x2x2xbf16, #tpu.memory_space<vmem>>, vector<1x2x2xbf16>
    %38 = vector.shape_cast %37 : vector<1x2x2xbf16> to vector<2x2xbf16>
    %cst_40 = arith.constant dense<0.000000e+00> : vector<2x3xf32>
    %39 = tpu.matmul %38, %36, %cst_40 {dimension_numbers = #tpu.dot_dimension_numbers<[1], [0], [0], [1], [0, 0, 1, 1], [], []>} : vector<2x2xbf16>, vector<2x3xbf16>, vector<2x3xf32> -> vector<2x3xf32>
    %40 = arith.addf %34, %39 : vector<2x3xf32>
    %c0_41 = arith.constant 0 : index
    %c0_42 = arith.constant 0 : index
    %c7 = arith.constant 7 : index
    %41 = vector.load %arg1[%c0_41, %c0_42, %c7] : memref<1x2x11xbf16, #tpu.memory_space<vmem>>, vector<1x2x3xbf16>
    %42 = vector.shape_cast %41 : vector<1x2x3xbf16> to vector<2x3xbf16>
    %c7_43 = arith.constant 7 : index
    %c0_44 = arith.constant 0 : index
    %c0_45 = arith.constant 0 : index
    %43 = vector.load %arg2[%c7_43, %c0_44, %c0_45] : memref<9x2x2xbf16, #tpu.memory_space<vmem>>, vector<1x2x2xbf16>
    %44 = vector.shape_cast %43 : vector<1x2x2xbf16> to vector<2x2xbf16>
    %cst_46 = arith.constant dense<0.000000e+00> : vector<2x3xf32>
    %45 = tpu.matmul %44, %42, %cst_46 {dimension_numbers = #tpu.dot_dimension_numbers<[1], [0], [0], [1], [0, 0, 1, 1], [], []>} : vector<2x2xbf16>, vector<2x3xbf16>, vector<2x3xf32> -> vector<2x3xf32>
    %46 = arith.addf %40, %45 : vector<2x3xf32>
    %c0_47 = arith.constant 0 : index
    %c0_48 = arith.constant 0 : index
    %c8 = arith.constant 8 : index
    %47 = vector.load %arg1[%c0_47, %c0_48, %c8] : memref<1x2x11xbf16, #tpu.memory_space<vmem>>, vector<1x2x3xbf16>
    %48 = vector.shape_cast %47 : vector<1x2x3xbf16> to vector<2x3xbf16>
    %c8_49 = arith.constant 8 : index
    %c0_50 = arith.constant 0 : index
    %c0_51 = arith.constant 0 : index
    %49 = vector.load %arg2[%c8_49, %c0_50, %c0_51] : memref<9x2x2xbf16, #tpu.memory_space<vmem>>, vector<1x2x2xbf16>
    %50 = vector.shape_cast %49 : vector<1x2x2xbf16> to vector<2x2xbf16>
    %cst_52 = arith.constant dense<0.000000e+00> : vector<2x3xf32>
    %51 = tpu.matmul %50, %48, %cst_52 {dimension_numbers = #tpu.dot_dimension_numbers<[1], [0], [0], [1], [0, 0, 1, 1], [], []>} : vector<2x2xbf16>, vector<2x3xbf16>, vector<2x3xf32> -> vector<2x3xf32>
    %52 = arith.addf %46, %51 : vector<2x3xf32>
    %c0_53 = arith.constant 0 : index
    %c0_54 = arith.constant 0 : index
    %53 = vector.load %arg3[%c0_53, %c0_54] : memref<2x1xf32, #tpu.memory_space<vmem>>, vector<2x1xf32>
    %54 = vector.broadcast %53 : vector<2x1xf32> to vector<2x3xf32>
    %55 = arith.addf %52, %54 : vector<2x3xf32>
    %cst_55 = arith.constant 0.000000e+00 : f32
    %56 = vector.broadcast %cst_55 : f32 to vector<2x3xf32>
    %57 = arith.maximumf %55, %56 : vector<2x3xf32>
    %58 = arith.truncf %57 : vector<2x3xf32> to vector<2x3xbf16>
    %c0_56 = arith.constant 0 : index
    %c0_57 = arith.constant 0 : index
    %c0_58 = arith.constant 0 : index
    %59 = vector.load %arg4[%c0_56, %c0_57, %c0_58] : memref<1x2x3xbf16, #tpu.memory_space<vmem>>, vector<1x2x3xbf16>
    %60 = vector.shape_cast %59 : vector<1x2x3xbf16> to vector<2x3xbf16>
    %61 = vector.shape_cast %58 : vector<2x3xbf16> to vector<1x2x3xbf16>
    tpu.vector_store %arg4[%c0_56, %c0_57, %c0_58], %61 {strides = array<i32>} : memref<1x2x3xbf16, #tpu.memory_space<vmem>>, vector<1x2x3xbf16>,
    return
  }
  func.func @transform_0(%arg0: i32) -> (i32, i32, i32) {
    %c0_i32 = arith.constant 0 : i32
    %c0_i32_0 = arith.constant 0 : i32
    %c0_i32_1 = arith.constant 0 : i32
    return %arg0, %c0_i32, %c0_i32_0 : i32, i32, i32
  }
  func.func @transform_1(%arg0: i32) -> (i32, i32, i32) {
    %c0_i32 = arith.constant 0 : i32
    %c0_i32_0 = arith.constant 0 : i32
    %c0_i32_1 = arith.constant 0 : i32
    %c0_i32_2 = arith.constant 0 : i32
    return %c0_i32, %c0_i32_0, %c0_i32_1 : i32, i32, i32
  }
  func.func @transform_2(%arg0: i32) -> (i32, i32) {
    %c0_i32 = arith.constant 0 : i32
    %c0_i32_0 = arith.constant 0 : i32
    %c0_i32_1 = arith.constant 0 : i32
    return %c0_i32, %c0_i32_0 : i32, i32
  }
  func.func @transform_3(%arg0: i32) -> (i32, i32, i32) {
    %c0_i32 = arith.constant 0 : i32
    %c0_i32_0 = arith.constant 0 : i32
    %c0_i32_1 = arith.constant 0 : i32
    return %arg0, %c0_i32, %c0_i32_0 : i32, i32, i32
  }
}

module attributes {stable_mosaic.version = 11 : i64} {
  func.func @_mm_bc_kernel(%arg0: i32, %arg1: i32, %arg2: memref<2x18xbf16, #tpu.memory_space<vmem>>, %arg3: memref<1x18x128xbf16, #tpu.memory_space<vmem>>, %arg4: memref<2x1xf32, #tpu.memory_space<vmem>>, %arg5: memref<1x2x128xbf16, #tpu.memory_space<vmem>>) attributes {dimension_semantics = [#tpu.dimension_semantics<parallel>, #tpu.dimension_semantics<parallel>], iteration_bounds = array<i64: 2, 1>, scalar_prefetch = 0 : i64, scratch_operands = 0 : i64, tpu.core_type = #tpu.core_type<tc>, window_params = [{pipeline_mode = #tpu.pipeline_mode<synchronous>, transform_indices = @transform_0, window_bounds = array<i64: 2, 18>}, {transform_indices = @transform_1, window_bounds = array<i64: 1, 18, 128>}, {pipeline_mode = #tpu.pipeline_mode<synchronous>, transform_indices = @transform_2, window_bounds = array<i64: 2, 1>}, {transform_indices = @transform_3, window_bounds = array<i64: 1, 2, 128>}]} {
    %c0 = arith.constant 0 : index
    %c0_0 = arith.constant 0 : index
    %c0_1 = arith.constant 0 : index
    %0 = vector.load %arg3[%c0, %c0_0, %c0_1] : memref<1x18x128xbf16, #tpu.memory_space<vmem>>, vector<1x18x128xbf16>
    %1 = vector.shape_cast %0 : vector<1x18x128xbf16> to vector<18x128xbf16>
    %c0_2 = arith.constant 0 : index
    %c0_3 = arith.constant 0 : index
    %2 = vector.load %arg2[%c0_2, %c0_3] : memref<2x18xbf16, #tpu.memory_space<vmem>>, vector<2x18xbf16>
    %cst = arith.constant dense<0.000000e+00> : vector<2x128xf32>
    %3 = tpu.matmul %2, %1, %cst {dimension_numbers = #tpu.dot_dimension_numbers<[1], [0], [0], [1], [0, 0, 1, 1], [], []>} : vector<2x18xbf16>, vector<18x128xbf16>, vector<2x128xf32> -> vector<2x128xf32>
    %c0_4 = arith.constant 0 : index
    %c0_5 = arith.constant 0 : index
    %4 = vector.load %arg4[%c0_4, %c0_5] : memref<2x1xf32, #tpu.memory_space<vmem>>, vector<2x1xf32>
    %5 = vector.broadcast %4 : vector<2x1xf32> to vector<2x128xf32>
    %6 = arith.addf %3, %5 : vector<2x128xf32>
    %7 = arith.truncf %6 : vector<2x128xf32> to vector<2x128xbf16>
    %c0_6 = arith.constant 0 : index
    %c0_7 = arith.constant 0 : index
    %c0_8 = arith.constant 0 : index
    %8 = vector.load %arg5[%c0_6, %c0_7, %c0_8] : memref<1x2x128xbf16, #tpu.memory_space<vmem>>, vector<1x2x128xbf16>
    %9 = vector.shape_cast %8 : vector<1x2x128xbf16> to vector<2x128xbf16>
    %10 = vector.shape_cast %7 : vector<2x128xbf16> to vector<1x2x128xbf16>
    tpu.vector_store %arg5[%c0_6, %c0_7, %c0_8], %10 {strides = array<i32>} : memref<1x2x128xbf16, #tpu.memory_space<vmem>>, vector<1x2x128xbf16>,
    return
  }
  func.func @transform_0(%arg0: i32, %arg1: i32) -> (i32, i32) {
    %c0_i32 = arith.constant 0 : i32
    %c0_i32_0 = arith.constant 0 : i32
    %c0_i32_1 = arith.constant 0 : i32
    return %c0_i32, %c0_i32_0 : i32, i32
  }
  func.func @transform_1(%arg0: i32, %arg1: i32) -> (i32, i32, i32) {
    %c0_i32 = arith.constant 0 : i32
    %c0_i32_0 = arith.constant 0 : i32
    return %arg0, %c0_i32, %arg1 : i32, i32, i32
  }
  func.func @transform_2(%arg0: i32, %arg1: i32) -> (i32, i32) {
    %c0_i32 = arith.constant 0 : i32
    %c0_i32_0 = arith.constant 0 : i32
    %c0_i32_1 = arith.constant 0 : i32
    return %c0_i32, %c0_i32_0 : i32, i32
  }
  func.func @transform_3(%arg0: i32, %arg1: i32) -> (i32, i32, i32) {
    %c0_i32 = arith.constant 0 : i32
    %c0_i32_0 = arith.constant 0 : i32
    return %arg0, %c0_i32, %arg1 : i32, i32, i32
  }
}

module attributes {stable_mosaic.version = 11 : i64} {
  func.func @_conv_cf_kernel(%arg0: i32, %arg1: memref<1x2x11xbf16, #tpu.memory_space<vmem>>, %arg2: memref<9x2x2xbf16, #tpu.memory_space<vmem>>, %arg3: memref<2x1xf32, #tpu.memory_space<vmem>>, %arg4: memref<1x2x3xbf16, #tpu.memory_space<vmem>>) attributes {dimension_semantics = [#tpu.dimension_semantics<parallel>], iteration_bounds = array<i64: 2>, scalar_prefetch = 0 : i64, scratch_operands = 0 : i64, tpu.core_type = #tpu.core_type<tc>, window_params = [{transform_indices = @transform_0, window_bounds = array<i64: 1, 2, 11>}, {pipeline_mode = #tpu.pipeline_mode<synchronous>, transform_indices = @transform_1, window_bounds = array<i64: 9, 2, 2>}, {pipeline_mode = #tpu.pipeline_mode<synchronous>, transform_indices = @transform_2, window_bounds = array<i64: 2, 1>}, {transform_indices = @transform_3, window_bounds = array<i64: 1, 2, 3>}]} {
    %c0 = arith.constant 0 : index
    %c0_0 = arith.constant 0 : index
    %c0_1 = arith.constant 0 : index
    %0 = vector.load %arg1[%c0, %c0_0, %c0_1] : memref<1x2x11xbf16, #tpu.memory_space<vmem>>, vector<1x2x3xbf16>
    %1 = vector.shape_cast %0 : vector<1x2x3xbf16> to vector<2x3xbf16>
    %c0_2 = arith.constant 0 : index
    %c0_3 = arith.constant 0 : index
    %c0_4 = arith.constant 0 : index
    %2 = vector.load %arg2[%c0_2, %c0_3, %c0_4] : memref<9x2x2xbf16, #tpu.memory_space<vmem>>, vector<1x2x2xbf16>
    %3 = vector.shape_cast %2 : vector<1x2x2xbf16> to vector<2x2xbf16>
    %cst = arith.constant dense<0.000000e+00> : vector<2x3xf32>
    %4 = tpu.matmul %3, %1, %cst {dimension_numbers = #tpu.dot_dimension_numbers<[1], [0], [0], [1], [0, 0, 1, 1], [], []>} : vector<2x2xbf16>, vector<2x3xbf16>, vector<2x3xf32> -> vector<2x3xf32>
    %c0_5 = arith.constant 0 : index
    %c0_6 = arith.constant 0 : index
    %c1 = arith.constant 1 : index
    %5 = vector.load %arg1[%c0_5, %c0_6, %c1] : memref<1x2x11xbf16, #tpu.memory_space<vmem>>, vector<1x2x3xbf16>
    %6 = vector.shape_cast %5 : vector<1x2x3xbf16> to vector<2x3xbf16>
    %c1_7 = arith.constant 1 : index
    %c0_8 = arith.constant 0 : index
    %c0_9 = arith.constant 0 : index
    %7 = vector.load %arg2[%c1_7, %c0_8, %c0_9] : memref<9x2x2xbf16, #tpu.memory_space<vmem>>, vector<1x2x2xbf16>
    %8 = vector.shape_cast %7 : vector<1x2x2xbf16> to vector<2x2xbf16>
    %cst_10 = arith.constant dense<0.000000e+00> : vector<2x3xf32>
    %9 = tpu.matmul %8, %6, %cst_10 {dimension_numbers = #tpu.dot_dimension_numbers<[1], [0], [0], [1], [0, 0, 1, 1], [], []>} : vector<2x2xbf16>, vector<2x3xbf16>, vector<2x3xf32> -> vector<2x3xf32>
    %10 = arith.addf %4, %9 : vector<2x3xf32>
    %c0_11 = arith.constant 0 : index
    %c0_12 = arith.constant 0 : index
    %c2 = arith.constant 2 : index
    %11 = vector.load %arg1[%c0_11, %c0_12, %c2] : memref<1x2x11xbf16, #tpu.memory_space<vmem>>, vector<1x2x3xbf16>
    %12 = vector.shape_cast %11 : vector<1x2x3xbf16> to vector<2x3xbf16>
    %c2_13 = arith.constant 2 : index
    %c0_14 = arith.constant 0 : index
    %c0_15 = arith.constant 0 : index
    %13 = vector.load %arg2[%c2_13, %c0_14, %c0_15] : memref<9x2x2xbf16, #tpu.memory_space<vmem>>, vector<1x2x2xbf16>
    %14 = vector.shape_cast %13 : vector<1x2x2xbf16> to vector<2x2xbf16>
    %cst_16 = arith.constant dense<0.000000e+00> : vector<2x3xf32>
    %15 = tpu.matmul %14, %12, %cst_16 {dimension_numbers = #tpu.dot_dimension_numbers<[1], [0], [0], [1], [0, 0, 1, 1], [], []>} : vector<2x2xbf16>, vector<2x3xbf16>, vector<2x3xf32> -> vector<2x3xf32>
    %16 = arith.addf %10, %15 : vector<2x3xf32>
    %c0_17 = arith.constant 0 : index
    %c0_18 = arith.constant 0 : index
    %c3 = arith.constant 3 : index
    %17 = vector.load %arg1[%c0_17, %c0_18, %c3] : memref<1x2x11xbf16, #tpu.memory_space<vmem>>, vector<1x2x3xbf16>
    %18 = vector.shape_cast %17 : vector<1x2x3xbf16> to vector<2x3xbf16>
    %c3_19 = arith.constant 3 : index
    %c0_20 = arith.constant 0 : index
    %c0_21 = arith.constant 0 : index
    %19 = vector.load %arg2[%c3_19, %c0_20, %c0_21] : memref<9x2x2xbf16, #tpu.memory_space<vmem>>, vector<1x2x2xbf16>
    %20 = vector.shape_cast %19 : vector<1x2x2xbf16> to vector<2x2xbf16>
    %cst_22 = arith.constant dense<0.000000e+00> : vector<2x3xf32>
    %21 = tpu.matmul %20, %18, %cst_22 {dimension_numbers = #tpu.dot_dimension_numbers<[1], [0], [0], [1], [0, 0, 1, 1], [], []>} : vector<2x2xbf16>, vector<2x3xbf16>, vector<2x3xf32> -> vector<2x3xf32>
    %22 = arith.addf %16, %21 : vector<2x3xf32>
    %c0_23 = arith.constant 0 : index
    %c0_24 = arith.constant 0 : index
    %c4 = arith.constant 4 : index
    %23 = vector.load %arg1[%c0_23, %c0_24, %c4] : memref<1x2x11xbf16, #tpu.memory_space<vmem>>, vector<1x2x3xbf16>
    %24 = vector.shape_cast %23 : vector<1x2x3xbf16> to vector<2x3xbf16>
    %c4_25 = arith.constant 4 : index
    %c0_26 = arith.constant 0 : index
    %c0_27 = arith.constant 0 : index
    %25 = vector.load %arg2[%c4_25, %c0_26, %c0_27] : memref<9x2x2xbf16, #tpu.memory_space<vmem>>, vector<1x2x2xbf16>
    %26 = vector.shape_cast %25 : vector<1x2x2xbf16> to vector<2x2xbf16>
    %cst_28 = arith.constant dense<0.000000e+00> : vector<2x3xf32>
    %27 = tpu.matmul %26, %24, %cst_28 {dimension_numbers = #tpu.dot_dimension_numbers<[1], [0], [0], [1], [0, 0, 1, 1], [], []>} : vector<2x2xbf16>, vector<2x3xbf16>, vector<2x3xf32> -> vector<2x3xf32>
    %28 = arith.addf %22, %27 : vector<2x3xf32>
    %c0_29 = arith.constant 0 : index
    %c0_30 = arith.constant 0 : index
    %c5 = arith.constant 5 : index
    %29 = vector.load %arg1[%c0_29, %c0_30, %c5] : memref<1x2x11xbf16, #tpu.memory_space<vmem>>, vector<1x2x3xbf16>
    %30 = vector.shape_cast %29 : vector<1x2x3xbf16> to vector<2x3xbf16>
    %c5_31 = arith.constant 5 : index
    %c0_32 = arith.constant 0 : index
    %c0_33 = arith.constant 0 : index
    %31 = vector.load %arg2[%c5_31, %c0_32, %c0_33] : memref<9x2x2xbf16, #tpu.memory_space<vmem>>, vector<1x2x2xbf16>
    %32 = vector.shape_cast %31 : vector<1x2x2xbf16> to vector<2x2xbf16>
    %cst_34 = arith.constant dense<0.000000e+00> : vector<2x3xf32>
    %33 = tpu.matmul %32, %30, %cst_34 {dimension_numbers = #tpu.dot_dimension_numbers<[1], [0], [0], [1], [0, 0, 1, 1], [], []>} : vector<2x2xbf16>, vector<2x3xbf16>, vector<2x3xf32> -> vector<2x3xf32>
    %34 = arith.addf %28, %33 : vector<2x3xf32>
    %c0_35 = arith.constant 0 : index
    %c0_36 = arith.constant 0 : index
    %c6 = arith.constant 6 : index
    %35 = vector.load %arg1[%c0_35, %c0_36, %c6] : memref<1x2x11xbf16, #tpu.memory_space<vmem>>, vector<1x2x3xbf16>
    %36 = vector.shape_cast %35 : vector<1x2x3xbf16> to vector<2x3xbf16>
    %c6_37 = arith.constant 6 : index
    %c0_38 = arith.constant 0 : index
    %c0_39 = arith.constant 0 : index
    %37 = vector.load %arg2[%c6_37, %c0_38, %c0_39] : memref<9x2x2xbf16, #tpu.memory_space<vmem>>, vector<1x2x2xbf16>
    %38 = vector.shape_cast %37 : vector<1x2x2xbf16> to vector<2x2xbf16>
    %cst_40 = arith.constant dense<0.000000e+00> : vector<2x3xf32>
    %39 = tpu.matmul %38, %36, %cst_40 {dimension_numbers = #tpu.dot_dimension_numbers<[1], [0], [0], [1], [0, 0, 1, 1], [], []>} : vector<2x2xbf16>, vector<2x3xbf16>, vector<2x3xf32> -> vector<2x3xf32>
    %40 = arith.addf %34, %39 : vector<2x3xf32>
    %c0_41 = arith.constant 0 : index
    %c0_42 = arith.constant 0 : index
    %c7 = arith.constant 7 : index
    %41 = vector.load %arg1[%c0_41, %c0_42, %c7] : memref<1x2x11xbf16, #tpu.memory_space<vmem>>, vector<1x2x3xbf16>
    %42 = vector.shape_cast %41 : vector<1x2x3xbf16> to vector<2x3xbf16>
    %c7_43 = arith.constant 7 : index
    %c0_44 = arith.constant 0 : index
    %c0_45 = arith.constant 0 : index
    %43 = vector.load %arg2[%c7_43, %c0_44, %c0_45] : memref<9x2x2xbf16, #tpu.memory_space<vmem>>, vector<1x2x2xbf16>
    %44 = vector.shape_cast %43 : vector<1x2x2xbf16> to vector<2x2xbf16>
    %cst_46 = arith.constant dense<0.000000e+00> : vector<2x3xf32>
    %45 = tpu.matmul %44, %42, %cst_46 {dimension_numbers = #tpu.dot_dimension_numbers<[1], [0], [0], [1], [0, 0, 1, 1], [], []>} : vector<2x2xbf16>, vector<2x3xbf16>, vector<2x3xf32> -> vector<2x3xf32>
    %46 = arith.addf %40, %45 : vector<2x3xf32>
    %c0_47 = arith.constant 0 : index
    %c0_48 = arith.constant 0 : index
    %c8 = arith.constant 8 : index
    %47 = vector.load %arg1[%c0_47, %c0_48, %c8] : memref<1x2x11xbf16, #tpu.memory_space<vmem>>, vector<1x2x3xbf16>
    %48 = vector.shape_cast %47 : vector<1x2x3xbf16> to vector<2x3xbf16>
    %c8_49 = arith.constant 8 : index
    %c0_50 = arith.constant 0 : index
    %c0_51 = arith.constant 0 : index
    %49 = vector.load %arg2[%c8_49, %c0_50, %c0_51] : memref<9x2x2xbf16, #tpu.memory_space<vmem>>, vector<1x2x2xbf16>
    %50 = vector.shape_cast %49 : vector<1x2x2xbf16> to vector<2x2xbf16>
    %cst_52 = arith.constant dense<0.000000e+00> : vector<2x3xf32>
    %51 = tpu.matmul %50, %48, %cst_52 {dimension_numbers = #tpu.dot_dimension_numbers<[1], [0], [0], [1], [0, 0, 1, 1], [], []>} : vector<2x2xbf16>, vector<2x3xbf16>, vector<2x3xf32> -> vector<2x3xf32>
    %52 = arith.addf %46, %51 : vector<2x3xf32>
    %c0_53 = arith.constant 0 : index
    %c0_54 = arith.constant 0 : index
    %53 = vector.load %arg3[%c0_53, %c0_54] : memref<2x1xf32, #tpu.memory_space<vmem>>, vector<2x1xf32>
    %54 = vector.broadcast %53 : vector<2x1xf32> to vector<2x3xf32>
    %55 = arith.addf %52, %54 : vector<2x3xf32>
    %56 = arith.truncf %55 : vector<2x3xf32> to vector<2x3xbf16>
    %c0_55 = arith.constant 0 : index
    %c0_56 = arith.constant 0 : index
    %c0_57 = arith.constant 0 : index
    %57 = vector.load %arg4[%c0_55, %c0_56, %c0_57] : memref<1x2x3xbf16, #tpu.memory_space<vmem>>, vector<1x2x3xbf16>
    %58 = vector.shape_cast %57 : vector<1x2x3xbf16> to vector<2x3xbf16>
    %59 = vector.shape_cast %56 : vector<2x3xbf16> to vector<1x2x3xbf16>
    tpu.vector_store %arg4[%c0_55, %c0_56, %c0_57], %59 {strides = array<i32>} : memref<1x2x3xbf16, #tpu.memory_space<vmem>>, vector<1x2x3xbf16>,
    return
  }
  func.func @transform_0(%arg0: i32) -> (i32, i32, i32) {
    %c0_i32 = arith.constant 0 : i32
    %c0_i32_0 = arith.constant 0 : i32
    %c0_i32_1 = arith.constant 0 : i32
    return %arg0, %c0_i32, %c0_i32_0 : i32, i32, i32
  }
  func.func @transform_1(%arg0: i32) -> (i32, i32, i32) {
    %c0_i32 = arith.constant 0 : i32
    %c0_i32_0 = arith.constant 0 : i32
    %c0_i32_1 = arith.constant 0 : i32
    %c0_i32_2 = arith.constant 0 : i32
    return %c0_i32, %c0_i32_0, %c0_i32_1 : i32, i32, i32
  }
  func.func @transform_2(%arg0: i32) -> (i32, i32) {
    %c0_i32 = arith.constant 0 : i32
    %c0_i32_0 = arith.constant 0 : i32
    %c0_i32_1 = arith.constant 0 : i32
    return %c0_i32, %c0_i32_0 : i32, i32
  }
  func.func @transform_3(%arg0: i32) -> (i32, i32, i32) {
    %c0_i32 = arith.constant 0 : i32
    %c0_i32_0 = arith.constant 0 : i32
    %c0_i32_1 = arith.constant 0 : i32
    return %arg0, %c0_i32, %c0_i32_0 : i32, i32, i32
  }
}

module attributes {stable_mosaic.version = 11 : i64} {
  func.func @_mm_bc_kernel(%arg0: i32, %arg1: i32, %arg2: memref<2x2xbf16, #tpu.memory_space<vmem>>, %arg3: memref<1x2x256xbf16, #tpu.memory_space<vmem>>, %arg4: memref<2x1xf32, #tpu.memory_space<vmem>>, %arg5: memref<1x2x256xbf16, #tpu.memory_space<vmem>>) attributes {dimension_semantics = [#tpu.dimension_semantics<parallel>, #tpu.dimension_semantics<parallel>], iteration_bounds = array<i64: 2, 1>, scalar_prefetch = 0 : i64, scratch_operands = 0 : i64, tpu.core_type = #tpu.core_type<tc>, window_params = [{pipeline_mode = #tpu.pipeline_mode<synchronous>, transform_indices = @transform_0, window_bounds = array<i64: 2, 2>}, {transform_indices = @transform_1, window_bounds = array<i64: 1, 2, 256>}, {pipeline_mode = #tpu.pipeline_mode<synchronous>, transform_indices = @transform_2, window_bounds = array<i64: 2, 1>}, {transform_indices = @transform_3, window_bounds = array<i64: 1, 2, 256>}]} {
    %c0 = arith.constant 0 : index
    %c0_0 = arith.constant 0 : index
    %c0_1 = arith.constant 0 : index
    %0 = vector.load %arg3[%c0, %c0_0, %c0_1] : memref<1x2x256xbf16, #tpu.memory_space<vmem>>, vector<1x2x256xbf16>
    %1 = vector.shape_cast %0 : vector<1x2x256xbf16> to vector<2x256xbf16>
    %c0_2 = arith.constant 0 : index
    %c0_3 = arith.constant 0 : index
    %2 = vector.load %arg2[%c0_2, %c0_3] : memref<2x2xbf16, #tpu.memory_space<vmem>>, vector<2x2xbf16>
    %cst = arith.constant dense<0.000000e+00> : vector<2x256xf32>
    %3 = tpu.matmul %2, %1, %cst {dimension_numbers = #tpu.dot_dimension_numbers<[1], [0], [0], [1], [0, 0, 1, 1], [], []>} : vector<2x2xbf16>, vector<2x256xbf16>, vector<2x256xf32> -> vector<2x256xf32>
    %c0_4 = arith.constant 0 : index
    %c0_5 = arith.constant 0 : index
    %4 = vector.load %arg4[%c0_4, %c0_5] : memref<2x1xf32, #tpu.memory_space<vmem>>, vector<2x1xf32>
    %5 = vector.broadcast %4 : vector<2x1xf32> to vector<2x256xf32>
    %6 = arith.addf %3, %5 : vector<2x256xf32>
    %7 = arith.truncf %6 : vector<2x256xf32> to vector<2x256xbf16>
    %c0_6 = arith.constant 0 : index
    %c0_7 = arith.constant 0 : index
    %c0_8 = arith.constant 0 : index
    %8 = vector.load %arg5[%c0_6, %c0_7, %c0_8] : memref<1x2x256xbf16, #tpu.memory_space<vmem>>, vector<1x2x256xbf16>
    %9 = vector.shape_cast %8 : vector<1x2x256xbf16> to vector<2x256xbf16>
    %10 = vector.shape_cast %7 : vector<2x256xbf16> to vector<1x2x256xbf16>
    tpu.vector_store %arg5[%c0_6, %c0_7, %c0_8], %10 {strides = array<i32>} : memref<1x2x256xbf16, #tpu.memory_space<vmem>>, vector<1x2x256xbf16>,
    return
  }
  func.func @transform_0(%arg0: i32, %arg1: i32) -> (i32, i32) {
    %c0_i32 = arith.constant 0 : i32
    %c0_i32_0 = arith.constant 0 : i32
    %c0_i32_1 = arith.constant 0 : i32
    return %c0_i32, %c0_i32_0 : i32, i32
  }
  func.func @transform_1(%arg0: i32, %arg1: i32) -> (i32, i32, i32) {
    %c0_i32 = arith.constant 0 : i32
    %c0_i32_0 = arith.constant 0 : i32
    return %arg0, %c0_i32, %arg1 : i32, i32, i32
  }
  func.func @transform_2(%arg0: i32, %arg1: i32) -> (i32, i32) {
    %c0_i32 = arith.constant 0 : i32
    %c0_i32_0 = arith.constant 0 : i32
    %c0_i32_1 = arith.constant 0 : i32
    return %c0_i32, %c0_i32_0 : i32, i32
  }
  func.func @transform_3(%arg0: i32, %arg1: i32) -> (i32, i32, i32) {
    %c0_i32 = arith.constant 0 : i32
    %c0_i32_0 = arith.constant 0 : i32
    return %arg0, %c0_i32, %arg1 : i32, i32, i32
  }
}

module attributes {stable_mosaic.version = 11 : i64} {
  func.func @_mm_bc_kernel(%arg0: i32, %arg1: i32, %arg2: memref<8x2xbf16, #tpu.memory_space<vmem>>, %arg3: memref<1x2x256xbf16, #tpu.memory_space<vmem>>, %arg4: memref<8x1xf32, #tpu.memory_space<vmem>>, %arg5: memref<1x2x256xbf16, #tpu.memory_space<vmem>>, %arg6: memref<1x8x256xbf16, #tpu.memory_space<vmem>>, %arg7: memref<1x8x256xf32, #tpu.memory_space<vmem>>) attributes {dimension_semantics = [#tpu.dimension_semantics<parallel>, #tpu.dimension_semantics<parallel>], iteration_bounds = array<i64: 2, 1>, scalar_prefetch = 0 : i64, scratch_operands = 0 : i64, tpu.core_type = #tpu.core_type<tc>, window_params = [{pipeline_mode = #tpu.pipeline_mode<synchronous>, transform_indices = @transform_0, window_bounds = array<i64: 8, 2>}, {transform_indices = @transform_1, window_bounds = array<i64: 1, 2, 256>}, {pipeline_mode = #tpu.pipeline_mode<synchronous>, transform_indices = @transform_2, window_bounds = array<i64: 8, 1>}, {transform_indices = @transform_3, window_bounds = array<i64: 1, 2, 256>}, {transform_indices = @transform_4, window_bounds = array<i64: 1, 8, 256>}, {transform_indices = @transform_5, window_bounds = array<i64: 1, 8, 256>}]} {
    %c0 = arith.constant 0 : index
    %c0_0 = arith.constant 0 : index
    %c0_1 = arith.constant 0 : index
    %0 = vector.load %arg3[%c0, %c0_0, %c0_1] : memref<1x2x256xbf16, #tpu.memory_space<vmem>>, vector<1x2x256xbf16>
    %1 = vector.shape_cast %0 : vector<1x2x256xbf16> to vector<2x256xbf16>
    %c0_2 = arith.constant 0 : index
    %c0_3 = arith.constant 0 : index
    %c0_4 = arith.constant 0 : index
    %2 = vector.load %arg5[%c0_2, %c0_3, %c0_4] : memref<1x2x256xbf16, #tpu.memory_space<vmem>>, vector<1x2x256xbf16>
    %3 = vector.shape_cast %2 : vector<1x2x256xbf16> to vector<2x256xbf16>
    %4 = arith.addf %1, %3 : vector<2x256xbf16>
    %c0_5 = arith.constant 0 : index
    %c0_6 = arith.constant 0 : index
    %5 = vector.load %arg2[%c0_5, %c0_6] : memref<8x2xbf16, #tpu.memory_space<vmem>>, vector<8x2xbf16>
    %cst = arith.constant dense<0.000000e+00> : vector<8x256xf32>
    %6 = tpu.matmul %5, %4, %cst {dimension_numbers = #tpu.dot_dimension_numbers<[1], [0], [0], [1], [0, 0, 1, 1], [], []>} : vector<8x2xbf16>, vector<2x256xbf16>, vector<8x256xf32> -> vector<8x256xf32>
    %c0_7 = arith.constant 0 : index
    %c0_8 = arith.constant 0 : index
    %7 = vector.load %arg4[%c0_7, %c0_8] : memref<8x1xf32, #tpu.memory_space<vmem>>, vector<8x1xf32>
    %8 = vector.broadcast %7 : vector<8x1xf32> to vector<8x256xf32>
    %9 = arith.addf %6, %8 : vector<8x256xf32>
    %10 = arith.negf %9 : vector<8x256xf32>
    %11 = math.exp %10 : vector<8x256xf32>
    %cst_9 = arith.constant 1.000000e+00 : f32
    %12 = vector.broadcast %cst_9 : f32 to vector<8x256xf32>
    %13 = arith.addf %12, %11 : vector<8x256xf32>
    %14 = arith.divf %12, %13 : vector<8x256xf32>
    %c0_10 = arith.constant 0 : index
    %c0_11 = arith.constant 0 : index
    %c0_12 = arith.constant 0 : index
    %15 = vector.load %arg6[%c0_10, %c0_11, %c0_12] : memref<1x8x256xbf16, #tpu.memory_space<vmem>>, vector<1x8x256xbf16>
    %16 = vector.shape_cast %15 : vector<1x8x256xbf16> to vector<8x256xbf16>
    %17 = arith.extf %16 : vector<8x256xbf16> to vector<8x256xf32>
    %18 = arith.mulf %17, %14 : vector<8x256xf32>
    %c0_13 = arith.constant 0 : index
    %c0_14 = arith.constant 0 : index
    %c0_15 = arith.constant 0 : index
    %19 = vector.load %arg7[%c0_13, %c0_14, %c0_15] : memref<1x8x256xf32, #tpu.memory_space<vmem>>, vector<1x8x256xf32>
    %20 = vector.shape_cast %19 : vector<1x8x256xf32> to vector<8x256xf32>
    %21 = vector.shape_cast %18 : vector<8x256xf32> to vector<1x8x256xf32>
    tpu.vector_store %arg7[%c0_13, %c0_14, %c0_15], %21 {strides = array<i32>} : memref<1x8x256xf32, #tpu.memory_space<vmem>>, vector<1x8x256xf32>,
    return
  }
  func.func @transform_0(%arg0: i32, %arg1: i32) -> (i32, i32) {
    %c0_i32 = arith.constant 0 : i32
    %c0_i32_0 = arith.constant 0 : i32
    %c0_i32_1 = arith.constant 0 : i32
    return %c0_i32, %c0_i32_0 : i32, i32
  }
  func.func @transform_1(%arg0: i32, %arg1: i32) -> (i32, i32, i32) {
    %c0_i32 = arith.constant 0 : i32
    %c0_i32_0 = arith.constant 0 : i32
    return %arg0, %c0_i32, %arg1 : i32, i32, i32
  }
  func.func @transform_2(%arg0: i32, %arg1: i32) -> (i32, i32) {
    %c0_i32 = arith.constant 0 : i32
    %c0_i32_0 = arith.constant 0 : i32
    %c0_i32_1 = arith.constant 0 : i32
    return %c0_i32, %c0_i32_0 : i32, i32
  }
  func.func @transform_3(%arg0: i32, %arg1: i32) -> (i32, i32, i32) {
    %c0_i32 = arith.constant 0 : i32
    %c0_i32_0 = arith.constant 0 : i32
    return %arg0, %c0_i32, %arg1 : i32, i32, i32
  }
  func.func @transform_4(%arg0: i32, %arg1: i32) -> (i32, i32, i32) {
    %c0_i32 = arith.constant 0 : i32
    %c0_i32_0 = arith.constant 0 : i32
    return %arg0, %c0_i32, %arg1 : i32, i32, i32
  }
  func.func @transform_5(%arg0: i32, %arg1: i32) -> (i32, i32, i32) {
    %c0_i32 = arith.constant 0 : i32
    %c0_i32_0 = arith.constant 0 : i32
    return %arg0, %c0_i32, %arg1 : i32, i32, i32
  }
}

module attributes {stable_mosaic.version = 11 : i64} {
  func.func @_swin_attn_kernel(%arg0: i32, %arg1: i32, %arg2: i32, %arg3: memref<1x8x8x8xf32, #tpu.memory_space<vmem>>, %arg4: memref<1x8xf32, #tpu.memory_space<vmem>>, %arg5: memref<1x8xf32, #tpu.memory_space<vmem>>, %arg6: memref<8x24xf32, #tpu.memory_space<vmem>>, %arg7: memref<1x24xf32, #tpu.memory_space<vmem>>, %arg8: memref<2x64x64xf32, #tpu.memory_space<vmem>>, %arg9: memref<1x64x64xf32, #tpu.memory_space<vmem>>, %arg10: memref<8x8xf32, #tpu.memory_space<vmem>>, %arg11: memref<1x8xf32, #tpu.memory_space<vmem>>, %arg12: memref<1x8x8x8xf32, #tpu.memory_space<vmem>>) attributes {dimension_semantics = [#tpu.dimension_semantics<parallel>, #tpu.dimension_semantics<parallel>, #tpu.dimension_semantics<parallel>], iteration_bounds = array<i64: 2, 2, 2>, scalar_prefetch = 0 : i64, scratch_operands = 0 : i64, tpu.core_type = #tpu.core_type<tc>, window_params = [{transform_indices = @transform_0, window_bounds = array<i64: 1, 8, 8, 8>}, {pipeline_mode = #tpu.pipeline_mode<synchronous>, transform_indices = @transform_1, window_bounds = array<i64: 1, 8>}, {pipeline_mode = #tpu.pipeline_mode<synchronous>, transform_indices = @transform_2, window_bounds = array<i64: 1, 8>}, {pipeline_mode = #tpu.pipeline_mode<synchronous>, transform_indices = @transform_3, window_bounds = array<i64: 8, 24>}, {pipeline_mode = #tpu.pipeline_mode<synchronous>, transform_indices = @transform_4, window_bounds = array<i64: 1, 24>}, {pipeline_mode = #tpu.pipeline_mode<synchronous>, transform_indices = @transform_5, window_bounds = array<i64: 2, 64, 64>}, {transform_indices = @transform_6, window_bounds = array<i64: 1, 64, 64>}, {pipeline_mode = #tpu.pipeline_mode<synchronous>, transform_indices = @transform_7, window_bounds = array<i64: 8, 8>}, {pipeline_mode = #tpu.pipeline_mode<synchronous>, transform_indices = @transform_8, window_bounds = array<i64: 1, 8>}, {transform_indices = @transform_9, window_bounds = array<i64: 1, 8, 8, 8>}]} {
    %c0 = arith.constant 0 : index
    %c0_0 = arith.constant 0 : index
    %c0_1 = arith.constant 0 : index
    %c0_2 = arith.constant 0 : index
    %0 = vector.load %arg3[%c0, %c0_0, %c0_1, %c0_2] : memref<1x8x8x8xf32, #tpu.memory_space<vmem>>, vector<1x8x8x8xf32>
    %1 = vector.shape_cast %0 : vector<1x8x8x8xf32> to vector<8x8x8xf32>
    %2 = vector.shape_cast %1 : vector<8x8x8xf32> to vector<64x8xf32>
    %cst = arith.constant dense<0.000000e+00> : vector<64xf32>
    %3 = vector.multi_reduction <add>, %2, %cst [1] : vector<64x8xf32> to vector<64xf32>
    %4 = vector.shape_cast %3 : vector<64xf32> to vector<64x1xf32>
    %cst_3 = arith.constant 8.000000e+00 : f32
    %5 = vector.broadcast %cst_3 : f32 to vector<64x1xf32>
    %6 = arith.divf %4, %5 : vector<64x1xf32>
    %7 = vector.broadcast %6 : vector<64x1xf32> to vector<64x8xf32>
    %8 = arith.subf %2, %7 : vector<64x8xf32>
    %9 = arith.mulf %8, %8 : vector<64x8xf32>
    %cst_4 = arith.constant dense<0.000000e+00> : vector<64xf32>
    %10 = vector.multi_reduction <add>, %9, %cst_4 [1] : vector<64x8xf32> to vector<64xf32>
    %11 = vector.shape_cast %10 : vector<64xf32> to vector<64x1xf32>
    %cst_5 = arith.constant 8.000000e+00 : f32
    %12 = vector.broadcast %cst_5 : f32 to vector<64x1xf32>
    %13 = arith.divf %11, %12 : vector<64x1xf32>
    %14 = vector.broadcast %6 : vector<64x1xf32> to vector<64x8xf32>
    %15 = arith.subf %2, %14 : vector<64x8xf32>
    %cst_6 = arith.constant 9.99999974E-6 : f32
    %16 = vector.broadcast %cst_6 : f32 to vector<64x1xf32>
    %17 = arith.addf %13, %16 : vector<64x1xf32>
    %18 = math.rsqrt %17 : vector<64x1xf32>
    %19 = vector.broadcast %18 : vector<64x1xf32> to vector<64x8xf32>
    %20 = arith.mulf %15, %19 : vector<64x8xf32>
    %c0_7 = arith.constant 0 : index
    %c0_8 = arith.constant 0 : index
    %21 = vector.load %arg4[%c0_7, %c0_8] : memref<1x8xf32, #tpu.memory_space<vmem>>, vector<1x8xf32>
    %22 = vector.broadcast %21 : vector<1x8xf32> to vector<64x8xf32>
    %23 = arith.mulf %20, %22 : vector<64x8xf32>
    %c0_9 = arith.constant 0 : index
    %c0_10 = arith.constant 0 : index
    %24 = vector.load %arg5[%c0_9, %c0_10] : memref<1x8xf32, #tpu.memory_space<vmem>>, vector<1x8xf32>
    %25 = vector.broadcast %24 : vector<1x8xf32> to vector<64x8xf32>
    %26 = arith.addf %23, %25 : vector<64x8xf32>
    %c0_11 = arith.constant 0 : index
    %c0_12 = arith.constant 0 : index
    %27 = vector.load %arg6[%c0_11, %c0_12] : memref<8x24xf32, #tpu.memory_space<vmem>>, vector<8x24xf32>
    %cst_13 = arith.constant dense<0.000000e+00> : vector<64x24xf32>
    %28 = tpu.matmul %26, %27, %cst_13 {dimension_numbers = #tpu.dot_dimension_numbers<[1], [0], [0], [1], [0, 0, 1, 1], [], []>} : vector<64x8xf32>, vector<8x24xf32>, vector<64x24xf32> -> vector<64x24xf32>
    %c0_14 = arith.constant 0 : index
    %c0_15 = arith.constant 0 : index
    %29 = vector.load %arg7[%c0_14, %c0_15] : memref<1x24xf32, #tpu.memory_space<vmem>>, vector<1x24xf32>
    %30 = vector.broadcast %29 : vector<1x24xf32> to vector<64x24xf32>
    %31 = arith.addf %28, %30 : vector<64x24xf32>
    %c0_16 = arith.constant 0 : index
    %c0_17 = arith.constant 0 : index
    %c0_18 = arith.constant 0 : index
    %32 = vector.load %arg8[%c0_16, %c0_17, %c0_18] : memref<2x64x64xf32, #tpu.memory_space<vmem>>, vector<2x64x64xf32>
    %c0_19 = arith.constant 0 : index
    %c0_20 = arith.constant 0 : index
    %c0_21 = arith.constant 0 : index
    %33 = vector.load %arg9[%c0_19, %c0_20, %c0_21] : memref<1x64x64xf32, #tpu.memory_space<vmem>>, vector<1x64x64xf32>
    %34 = vector.shape_cast %33 : vector<1x64x64xf32> to vector<64x64xf32>
    %35 = vector.shape_cast %34 : vector<64x64xf32> to vector<1x64x64xf32>
    %36 = vector.broadcast %35 : vector<1x64x64xf32> to vector<2x64x64xf32>
    %37 = arith.addf %32, %36 : vector<2x64x64xf32>
    %c0_22 = arith.constant 0 : index
    %c0_23 = arith.constant 0 : index
    %38 = vector.load %arg10[%c0_22, %c0_23] : memref<8x8xf32, #tpu.memory_space<vmem>>, vector<8x8xf32>
    %cst_24 = arith.constant 0.000000e+00 : f32
    %39 = vector.broadcast %cst_24 : f32 to vector<64x8xf32>
    %40 = vector.extract_strided_slice %31 {offsets = [0, 0], sizes = [64, 4], strides = [1, 1]} : vector<64x24xf32> to vector<64x4xf32>
    %cst_25 = arith.constant 5.000000e-01 : f32
    %41 = vector.broadcast %cst_25 : f32 to vector<64x4xf32>
    %42 = arith.mulf %40, %41 : vector<64x4xf32>
    %43 = vector.extract_strided_slice %31 {offsets = [0, 8], sizes = [64, 4], strides = [1, 1]} : vector<64x24xf32> to vector<64x4xf32>
    %44 = vector.extract_strided_slice %31 {offsets = [0, 16], sizes = [64, 4], strides = [1, 1]} : vector<64x24xf32> to vector<64x4xf32>
    "tpu.trace_start"() <{level = 10 : i32, message = "nd,md->nm"}> : () -> ()
    %cst_26 = arith.constant dense<0.000000e+00> : vector<64x64xf32>
    %45 = tpu.matmul %42, %43, %cst_26 {dimension_numbers = #tpu.dot_dimension_numbers<[1], [1], [0], [0], [0, 0, 1, 0], [], []>} : vector<64x4xf32>, vector<64x4xf32>, vector<64x64xf32> -> vector<64x64xf32>
    "tpu.trace_stop"() : () -> ()
    %46 = vector.extract_strided_slice %37 {offsets = [0, 0, 0], sizes = [1, 64, 64], strides = [1, 1, 1]} : vector<2x64x64xf32> to vector<1x64x64xf32>
    %47 = vector.shape_cast %46 : vector<1x64x64xf32> to vector<64x64xf32>
    %48 = arith.addf %45, %47 : vector<64x64xf32>
    %cst_27 = arith.constant dense<0xFF800000> : vector<64xf32>
    %49 = vector.multi_reduction <maximumf>, %48, %cst_27 [1] : vector<64x64xf32> to vector<64xf32>
    %50 = vector.shape_cast %49 : vector<64xf32> to vector<64x1xf32>
    %51 = vector.broadcast %50 : vector<64x1xf32> to vector<64x64xf32>
    %52 = arith.subf %48, %51 : vector<64x64xf32>
    %53 = math.exp %52 : vector<64x64xf32>
    %cst_28 = arith.constant dense<0.000000e+00> : vector<64xf32>
    %54 = vector.multi_reduction <add>, %53, %cst_28 [1] : vector<64x64xf32> to vector<64xf32>
    %55 = vector.shape_cast %54 : vector<64xf32> to vector<64x1xf32>
    %56 = tpu.reciprocal %55 {approx = true} : vector<64x1xf32> -> vector<64x1xf32>
    %57 = vector.broadcast %56 : vector<64x1xf32> to vector<64x64xf32>
    %58 = arith.mulf %53, %57 : vector<64x64xf32>
    %cst_29 = arith.constant dense<0.000000e+00> : vector<64x4xf32>
    %59 = tpu.matmul %58, %44, %cst_29 {dimension_numbers = #tpu.dot_dimension_numbers<[1], [0], [0], [1], [0, 0, 1, 1], [], []>} : vector<64x64xf32>, vector<64x4xf32>, vector<64x4xf32> -> vector<64x4xf32>
    %60 = vector.extract_strided_slice %38 {offsets = [0, 0], sizes = [4, 8], strides = [1, 1]} : vector<8x8xf32> to vector<4x8xf32>
    %cst_30 = arith.constant dense<0.000000e+00> : vector<64x8xf32>
    %61 = tpu.matmul %59, %60, %cst_30 {dimension_numbers = #tpu.dot_dimension_numbers<[1], [0], [0], [1], [0, 0, 1, 1], [], []>} : vector<64x4xf32>, vector<4x8xf32>, vector<64x8xf32> -> vector<64x8xf32>
    %62 = arith.addf %39, %61 : vector<64x8xf32>
    %63 = vector.extract_strided_slice %31 {offsets = [0, 4], sizes = [64, 4], strides = [1, 1]} : vector<64x24xf32> to vector<64x4xf32>
    %cst_31 = arith.constant 5.000000e-01 : f32
    %64 = vector.broadcast %cst_31 : f32 to vector<64x4xf32>
    %65 = arith.mulf %63, %64 : vector<64x4xf32>
    %66 = vector.extract_strided_slice %31 {offsets = [0, 12], sizes = [64, 4], strides = [1, 1]} : vector<64x24xf32> to vector<64x4xf32>
    %67 = vector.extract_strided_slice %31 {offsets = [0, 20], sizes = [64, 4], strides = [1, 1]} : vector<64x24xf32> to vector<64x4xf32>
    "tpu.trace_start"() <{level = 10 : i32, message = "nd,md->nm"}> : () -> ()
    %cst_32 = arith.constant dense<0.000000e+00> : vector<64x64xf32>
    %68 = tpu.matmul %65, %66, %cst_32 {dimension_numbers = #tpu.dot_dimension_numbers<[1], [1], [0], [0], [0, 0, 1, 0], [], []>} : vector<64x4xf32>, vector<64x4xf32>, vector<64x64xf32> -> vector<64x64xf32>
    "tpu.trace_stop"() : () -> ()
    %69 = vector.extract_strided_slice %37 {offsets = [1, 0, 0], sizes = [1, 64, 64], strides = [1, 1, 1]} : vector<2x64x64xf32> to vector<1x64x64xf32>
    %70 = vector.shape_cast %69 : vector<1x64x64xf32> to vector<64x64xf32>
    %71 = arith.addf %68, %70 : vector<64x64xf32>
    %cst_33 = arith.constant dense<0xFF800000> : vector<64xf32>
    %72 = vector.multi_reduction <maximumf>, %71, %cst_33 [1] : vector<64x64xf32> to vector<64xf32>
    %73 = vector.shape_cast %72 : vector<64xf32> to vector<64x1xf32>
    %74 = vector.broadcast %73 : vector<64x1xf32> to vector<64x64xf32>
    %75 = arith.subf %71, %74 : vector<64x64xf32>
    %76 = math.exp %75 : vector<64x64xf32>
    %cst_34 = arith.constant dense<0.000000e+00> : vector<64xf32>
    %77 = vector.multi_reduction <add>, %76, %cst_34 [1] : vector<64x64xf32> to vector<64xf32>
    %78 = vector.shape_cast %77 : vector<64xf32> to vector<64x1xf32>
    %79 = tpu.reciprocal %78 {approx = true} : vector<64x1xf32> -> vector<64x1xf32>
    %80 = vector.broadcast %79 : vector<64x1xf32> to vector<64x64xf32>
    %81 = arith.mulf %76, %80 : vector<64x64xf32>
    %cst_35 = arith.constant dense<0.000000e+00> : vector<64x4xf32>
    %82 = tpu.matmul %81, %67, %cst_35 {dimension_numbers = #tpu.dot_dimension_numbers<[1], [0], [0], [1], [0, 0, 1, 1], [], []>} : vector<64x64xf32>, vector<64x4xf32>, vector<64x4xf32> -> vector<64x4xf32>
    %83 = vector.extract_strided_slice %38 {offsets = [4, 0], sizes = [4, 8], strides = [1, 1]} : vector<8x8xf32> to vector<4x8xf32>
    %cst_36 = arith.constant dense<0.000000e+00> : vector<64x8xf32>
    %84 = tpu.matmul %82, %83, %cst_36 {dimension_numbers = #tpu.dot_dimension_numbers<[1], [0], [0], [1], [0, 0, 1, 1], [], []>} : vector<64x4xf32>, vector<4x8xf32>, vector<64x8xf32> -> vector<64x8xf32>
    %85 = arith.addf %62, %84 : vector<64x8xf32>
    %86 = arith.addf %2, %85 : vector<64x8xf32>
    %c0_37 = arith.constant 0 : index
    %c0_38 = arith.constant 0 : index
    %87 = vector.load %arg11[%c0_37, %c0_38] : memref<1x8xf32, #tpu.memory_space<vmem>>, vector<1x8xf32>
    %88 = vector.broadcast %87 : vector<1x8xf32> to vector<64x8xf32>
    %89 = arith.addf %86, %88 : vector<64x8xf32>
    %90 = vector.shape_cast %89 : vector<64x8xf32> to vector<8x8x8xf32>
    %c0_39 = arith.constant 0 : index
    %c0_40 = arith.constant 0 : index
    %c0_41 = arith.constant 0 : index
    %c0_42 = arith.constant 0 : index
    %91 = vector.load %arg12[%c0_39, %c0_40, %c0_41, %c0_42] : memref<1x8x8x8xf32, #tpu.memory_space<vmem>>, vector<1x8x8x8xf32>
    %92 = vector.shape_cast %91 : vector<1x8x8x8xf32> to vector<8x8x8xf32>
    %93 = vector.shape_cast %90 : vector<8x8x8xf32> to vector<1x8x8x8xf32>
    tpu.vector_store %arg12[%c0_39, %c0_40, %c0_41, %c0_42], %93 {strides = array<i32>} : memref<1x8x8x8xf32, #tpu.memory_space<vmem>>, vector<1x8x8x8xf32>,
    return
  }
  func.func @transform_0(%arg0: i32, %arg1: i32, %arg2: i32) -> (i32, i32, i32, i32) {
    %c0_i32 = arith.constant 0 : i32
    %c0_i32_0 = arith.constant 0 : i32
    return %arg0, %arg1, %arg2, %c0_i32 : i32, i32, i32, i32
  }
  func.func @transform_1(%arg0: i32, %arg1: i32, %arg2: i32) -> (i32, i32) {
    %c0_i32 = arith.constant 0 : i32
    %c0_i32_0 = arith.constant 0 : i32
    %c0_i32_1 = arith.constant 0 : i32
    return %c0_i32, %c0_i32_0 : i32, i32
  }
  func.func @transform_2(%arg0: i32, %arg1: i32, %arg2: i32) -> (i32, i32) {
    %c0_i32 = arith.constant 0 : i32
    %c0_i32_0 = arith.constant 0 : i32
    %c0_i32_1 = arith.constant 0 : i32
    return %c0_i32, %c0_i32_0 : i32, i32
  }
  func.func @transform_3(%arg0: i32, %arg1: i32, %arg2: i32) -> (i32, i32) {
    %c0_i32 = arith.constant 0 : i32
    %c0_i32_0 = arith.constant 0 : i32
    %c0_i32_1 = arith.constant 0 : i32
    return %c0_i32, %c0_i32_0 : i32, i32
  }
  func.func @transform_4(%arg0: i32, %arg1: i32, %arg2: i32) -> (i32, i32) {
    %c0_i32 = arith.constant 0 : i32
    %c0_i32_0 = arith.constant 0 : i32
    %c0_i32_1 = arith.constant 0 : i32
    return %c0_i32, %c0_i32_0 : i32, i32
  }
  func.func @transform_5(%arg0: i32, %arg1: i32, %arg2: i32) -> (i32, i32, i32) {
    %c0_i32 = arith.constant 0 : i32
    %c0_i32_0 = arith.constant 0 : i32
    %c0_i32_1 = arith.constant 0 : i32
    %c0_i32_2 = arith.constant 0 : i32
    return %c0_i32, %c0_i32_0, %c0_i32_1 : i32, i32, i32
  }
  func.func @transform_6(%arg0: i32, %arg1: i32, %arg2: i32) -> (i32, i32, i32) {
    %c2_i32 = arith.constant 2 : i32
    %0 = arith.muli %arg1, %c2_i32 : i32
    %1 = arith.addi %0, %arg2 : i32
    %c0_i32 = arith.constant 0 : i32
    %c0_i32_0 = arith.constant 0 : i32
    %c0_i32_1 = arith.constant 0 : i32
    return %1, %c0_i32, %c0_i32_0 : i32, i32, i32
  }
  func.func @transform_7(%arg0: i32, %arg1: i32, %arg2: i32) -> (i32, i32) {
    %c0_i32 = arith.constant 0 : i32
    %c0_i32_0 = arith.constant 0 : i32
    %c0_i32_1 = arith.constant 0 : i32
    return %c0_i32, %c0_i32_0 : i32, i32
  }
  func.func @transform_8(%arg0: i32, %arg1: i32, %arg2: i32) -> (i32, i32) {
    %c0_i32 = arith.constant 0 : i32
    %c0_i32_0 = arith.constant 0 : i32
    %c0_i32_1 = arith.constant 0 : i32
    return %c0_i32, %c0_i32_0 : i32, i32
  }
  func.func @transform_9(%arg0: i32, %arg1: i32, %arg2: i32) -> (i32, i32, i32, i32) {
    %c0_i32 = arith.constant 0 : i32
    %c0_i32_0 = arith.constant 0 : i32
    return %arg0, %arg1, %arg2, %c0_i32 : i32, i32, i32, i32
  }
}

module attributes {stable_mosaic.version = 11 : i64} {
  func.func @_swin_mlp_kernel(%arg0: i32, %arg1: i32, %arg2: memref<1x8x256xf32, #tpu.memory_space<vmem>>, %arg3: memref<8x1xf32, #tpu.memory_space<vmem>>, %arg4: memref<8x1xf32, #tpu.memory_space<vmem>>, %arg5: memref<16x8xf32, #tpu.memory_space<vmem>>, %arg6: memref<16x1xf32, #tpu.memory_space<vmem>>, %arg7: memref<8x16xf32, #tpu.memory_space<vmem>>, %arg8: memref<8x1xf32, #tpu.memory_space<vmem>>, %arg9: memref<1x8x256xf32, #tpu.memory_space<vmem>>) attributes {dimension_semantics = [#tpu.dimension_semantics<parallel>, #tpu.dimension_semantics<parallel>], iteration_bounds = array<i64: 2, 1>, scalar_prefetch = 0 : i64, scratch_operands = 0 : i64, tpu.core_type = #tpu.core_type<tc>, window_params = [{transform_indices = @transform_0, window_bounds = array<i64: 1, 8, 256>}, {pipeline_mode = #tpu.pipeline_mode<synchronous>, transform_indices = @transform_1, window_bounds = array<i64: 8, 1>}, {pipeline_mode = #tpu.pipeline_mode<synchronous>, transform_indices = @transform_2, window_bounds = array<i64: 8, 1>}, {pipeline_mode = #tpu.pipeline_mode<synchronous>, transform_indices = @transform_3, window_bounds = array<i64: 16, 8>}, {pipeline_mode = #tpu.pipeline_mode<synchronous>, transform_indices = @transform_4, window_bounds = array<i64: 16, 1>}, {pipeline_mode = #tpu.pipeline_mode<synchronous>, transform_indices = @transform_5, window_bounds = array<i64: 8, 16>}, {pipeline_mode = #tpu.pipeline_mode<synchronous>, transform_indices = @transform_6, window_bounds = array<i64: 8, 1>}, {transform_indices = @transform_7, window_bounds = array<i64: 1, 8, 256>}]} {
    %c0 = arith.constant 0 : index
    %c0_0 = arith.constant 0 : index
    %c0_1 = arith.constant 0 : index
    %0 = vector.load %arg2[%c0, %c0_0, %c0_1] : memref<1x8x256xf32, #tpu.memory_space<vmem>>, vector<1x8x256xf32>
    %1 = vector.shape_cast %0 : vector<1x8x256xf32> to vector<8x256xf32>
    %cst = arith.constant dense<0.000000e+00> : vector<256xf32>
    %2 = vector.multi_reduction <add>, %1, %cst [0] : vector<8x256xf32> to vector<256xf32>
    %3 = vector.shape_cast %2 : vector<256xf32> to vector<1x256xf32>
    %cst_2 = arith.constant 8.000000e+00 : f32
    %4 = vector.broadcast %cst_2 : f32 to vector<1x256xf32>
    %5 = arith.divf %3, %4 : vector<1x256xf32>
    %6 = vector.broadcast %5 : vector<1x256xf32> to vector<8x256xf32>
    %7 = arith.subf %1, %6 : vector<8x256xf32>
    %8 = arith.mulf %7, %7 : vector<8x256xf32>
    %cst_3 = arith.constant dense<0.000000e+00> : vector<256xf32>
    %9 = vector.multi_reduction <add>, %8, %cst_3 [0] : vector<8x256xf32> to vector<256xf32>
    %10 = vector.shape_cast %9 : vector<256xf32> to vector<1x256xf32>
    %cst_4 = arith.constant 8.000000e+00 : f32
    %11 = vector.broadcast %cst_4 : f32 to vector<1x256xf32>
    %12 = arith.divf %10, %11 : vector<1x256xf32>
    %13 = vector.broadcast %5 : vector<1x256xf32> to vector<8x256xf32>
    %14 = arith.subf %1, %13 : vector<8x256xf32>
    %cst_5 = arith.constant 9.99999974E-6 : f32
    %15 = vector.broadcast %cst_5 : f32 to vector<1x256xf32>
    %16 = arith.addf %12, %15 : vector<1x256xf32>
    %17 = math.rsqrt %16 : vector<1x256xf32>
    %18 = vector.broadcast %17 : vector<1x256xf32> to vector<8x256xf32>
    %19 = arith.mulf %14, %18 : vector<8x256xf32>
    %c0_6 = arith.constant 0 : index
    %c0_7 = arith.constant 0 : index
    %20 = vector.load %arg3[%c0_6, %c0_7] : memref<8x1xf32, #tpu.memory_space<vmem>>, vector<8x1xf32>
    %21 = vector.broadcast %20 : vector<8x1xf32> to vector<8x256xf32>
    %22 = arith.mulf %19, %21 : vector<8x256xf32>
    %c0_8 = arith.constant 0 : index
    %c0_9 = arith.constant 0 : index
    %23 = vector.load %arg4[%c0_8, %c0_9] : memref<8x1xf32, #tpu.memory_space<vmem>>, vector<8x1xf32>
    %24 = vector.broadcast %23 : vector<8x1xf32> to vector<8x256xf32>
    %25 = arith.addf %22, %24 : vector<8x256xf32>
    %c0_10 = arith.constant 0 : index
    %c0_11 = arith.constant 0 : index
    %26 = vector.load %arg5[%c0_10, %c0_11] : memref<16x8xf32, #tpu.memory_space<vmem>>, vector<16x8xf32>
    %cst_12 = arith.constant dense<0.000000e+00> : vector<16x256xf32>
    %27 = tpu.matmul %26, %25, %cst_12 {dimension_numbers = #tpu.dot_dimension_numbers<[1], [0], [0], [1], [0, 0, 1, 1], [], []>} : vector<16x8xf32>, vector<8x256xf32>, vector<16x256xf32> -> vector<16x256xf32>
    %c0_13 = arith.constant 0 : index
    %c0_14 = arith.constant 0 : index
    %28 = vector.load %arg6[%c0_13, %c0_14] : memref<16x1xf32, #tpu.memory_space<vmem>>, vector<16x1xf32>
    %29 = vector.broadcast %28 : vector<16x1xf32> to vector<16x256xf32>
    %30 = arith.addf %27, %29 : vector<16x256xf32>
    %cst_15 = arith.constant 5.000000e-01 : f32
    %31 = vector.broadcast %cst_15 : f32 to vector<16x256xf32>
    %32 = arith.mulf %31, %30 : vector<16x256xf32>
    %cst_16 = arith.constant 4.471500e-02 : f32
    %33 = vector.broadcast %cst_16 : f32 to vector<16x256xf32>
    %34 = arith.mulf %33, %30 : vector<16x256xf32>
    %35 = arith.mulf %34, %30 : vector<16x256xf32>
    %36 = arith.mulf %35, %30 : vector<16x256xf32>
    %37 = arith.addf %30, %36 : vector<16x256xf32>
    %cst_17 = arith.constant 0.797884583 : f32
    %38 = vector.broadcast %cst_17 : f32 to vector<16x256xf32>
    %39 = arith.mulf %38, %37 : vector<16x256xf32>
    %40 = math.tanh %39 : vector<16x256xf32>
    %cst_18 = arith.constant 1.000000e+00 : f32
    %41 = vector.broadcast %cst_18 : f32 to vector<16x256xf32>
    %42 = arith.addf %41, %40 : vector<16x256xf32>
    %43 = arith.mulf %32, %42 : vector<16x256xf32>
    %c0_19 = arith.constant 0 : index
    %c0_20 = arith.constant 0 : index
    %44 = vector.load %arg7[%c0_19, %c0_20] : memref<8x16xf32, #tpu.memory_space<vmem>>, vector<8x16xf32>
    %cst_21 = arith.constant dense<0.000000e+00> : vector<8x256xf32>
    %45 = tpu.matmul %44, %43, %cst_21 {dimension_numbers = #tpu.dot_dimension_numbers<[1], [0], [0], [1], [0, 0, 1, 1], [], []>} : vector<8x16xf32>, vector<16x256xf32>, vector<8x256xf32> -> vector<8x256xf32>
    %c0_22 = arith.constant 0 : index
    %c0_23 = arith.constant 0 : index
    %46 = vector.load %arg8[%c0_22, %c0_23] : memref<8x1xf32, #tpu.memory_space<vmem>>, vector<8x1xf32>
    %47 = vector.broadcast %46 : vector<8x1xf32> to vector<8x256xf32>
    %48 = arith.addf %45, %47 : vector<8x256xf32>
    %49 = arith.addf %1, %48 : vector<8x256xf32>
    %c0_24 = arith.constant 0 : index
    %c0_25 = arith.constant 0 : index
    %c0_26 = arith.constant 0 : index
    %50 = vector.load %arg9[%c0_24, %c0_25, %c0_26] : memref<1x8x256xf32, #tpu.memory_space<vmem>>, vector<1x8x256xf32>
    %51 = vector.shape_cast %50 : vector<1x8x256xf32> to vector<8x256xf32>
    %52 = vector.shape_cast %49 : vector<8x256xf32> to vector<1x8x256xf32>
    tpu.vector_store %arg9[%c0_24, %c0_25, %c0_26], %52 {strides = array<i32>} : memref<1x8x256xf32, #tpu.memory_space<vmem>>, vector<1x8x256xf32>,
    return
  }
  func.func @transform_0(%arg0: i32, %arg1: i32) -> (i32, i32, i32) {
    %c0_i32 = arith.constant 0 : i32
    %c0_i32_0 = arith.constant 0 : i32
    return %arg0, %c0_i32, %arg1 : i32, i32, i32
  }
  func.func @transform_1(%arg0: i32, %arg1: i32) -> (i32, i32) {
    %c0_i32 = arith.constant 0 : i32
    %c0_i32_0 = arith.constant 0 : i32
    %c0_i32_1 = arith.constant 0 : i32
    return %c0_i32, %c0_i32_0 : i32, i32
  }
  func.func @transform_2(%arg0: i32, %arg1: i32) -> (i32, i32) {
    %c0_i32 = arith.constant 0 : i32
    %c0_i32_0 = arith.constant 0 : i32
    %c0_i32_1 = arith.constant 0 : i32
    return %c0_i32, %c0_i32_0 : i32, i32
  }
  func.func @transform_3(%arg0: i32, %arg1: i32) -> (i32, i32) {
    %c0_i32 = arith.constant 0 : i32
    %c0_i32_0 = arith.constant 0 : i32
    %c0_i32_1 = arith.constant 0 : i32
    return %c0_i32, %c0_i32_0 : i32, i32
  }
  func.func @transform_4(%arg0: i32, %arg1: i32) -> (i32, i32) {
    %c0_i32 = arith.constant 0 : i32
    %c0_i32_0 = arith.constant 0 : i32
    %c0_i32_1 = arith.constant 0 : i32
    return %c0_i32, %c0_i32_0 : i32, i32
  }
  func.func @transform_5(%arg0: i32, %arg1: i32) -> (i32, i32) {
    %c0_i32 = arith.constant 0 : i32
    %c0_i32_0 = arith.constant 0 : i32
    %c0_i32_1 = arith.constant 0 : i32
    return %c0_i32, %c0_i32_0 : i32, i32
  }
  func.func @transform_6(%arg0: i32, %arg1: i32) -> (i32, i32) {
    %c0_i32 = arith.constant 0 : i32
    %c0_i32_0 = arith.constant 0 : i32
    %c0_i32_1 = arith.constant 0 : i32
    return %c0_i32, %c0_i32_0 : i32, i32
  }
  func.func @transform_7(%arg0: i32, %arg1: i32) -> (i32, i32, i32) {
    %c0_i32 = arith.constant 0 : i32
    %c0_i32_0 = arith.constant 0 : i32
    return %arg0, %c0_i32, %arg1 : i32, i32, i32
  }
}

module attributes {stable_mosaic.version = 11 : i64} {
  func.func @_conv_cf_kernel(%arg0: i32, %arg1: memref<1x8x326xbf16, #tpu.memory_space<vmem>>, %arg2: memref<9x8x8xbf16, #tpu.memory_space<vmem>>, %arg3: memref<8x1xf32, #tpu.memory_space<vmem>>, %arg4: memref<1x8x288xbf16, #tpu.memory_space<vmem>>) attributes {dimension_semantics = [#tpu.dimension_semantics<parallel>], iteration_bounds = array<i64: 2>, scalar_prefetch = 0 : i64, scratch_operands = 0 : i64, tpu.core_type = #tpu.core_type<tc>, window_params = [{transform_indices = @transform_0, window_bounds = array<i64: 1, 8, 326>}, {pipeline_mode = #tpu.pipeline_mode<synchronous>, transform_indices = @transform_1, window_bounds = array<i64: 9, 8, 8>}, {pipeline_mode = #tpu.pipeline_mode<synchronous>, transform_indices = @transform_2, window_bounds = array<i64: 8, 1>}, {transform_indices = @transform_3, window_bounds = array<i64: 1, 8, 288>}]} {
    %c0 = arith.constant 0 : index
    %c0_0 = arith.constant 0 : index
    %c0_1 = arith.constant 0 : index
    %0 = vector.load %arg1[%c0, %c0_0, %c0_1] : memref<1x8x326xbf16, #tpu.memory_space<vmem>>, vector<1x8x288xbf16>
    %1 = vector.shape_cast %0 : vector<1x8x288xbf16> to vector<8x288xbf16>
    %c0_2 = arith.constant 0 : index
    %c0_3 = arith.constant 0 : index
    %c0_4 = arith.constant 0 : index
    %2 = vector.load %arg2[%c0_2, %c0_3, %c0_4] : memref<9x8x8xbf16, #tpu.memory_space<vmem>>, vector<1x8x8xbf16>
    %3 = vector.shape_cast %2 : vector<1x8x8xbf16> to vector<8x8xbf16>
    %cst = arith.constant dense<0.000000e+00> : vector<8x288xf32>
    %4 = tpu.matmul %3, %1, %cst {dimension_numbers = #tpu.dot_dimension_numbers<[1], [0], [0], [1], [0, 0, 1, 1], [], []>} : vector<8x8xbf16>, vector<8x288xbf16>, vector<8x288xf32> -> vector<8x288xf32>
    %c0_5 = arith.constant 0 : index
    %c0_6 = arith.constant 0 : index
    %c1 = arith.constant 1 : index
    %5 = vector.load %arg1[%c0_5, %c0_6, %c1] : memref<1x8x326xbf16, #tpu.memory_space<vmem>>, vector<1x8x288xbf16>
    %6 = vector.shape_cast %5 : vector<1x8x288xbf16> to vector<8x288xbf16>
    %c1_7 = arith.constant 1 : index
    %c0_8 = arith.constant 0 : index
    %c0_9 = arith.constant 0 : index
    %7 = vector.load %arg2[%c1_7, %c0_8, %c0_9] : memref<9x8x8xbf16, #tpu.memory_space<vmem>>, vector<1x8x8xbf16>
    %8 = vector.shape_cast %7 : vector<1x8x8xbf16> to vector<8x8xbf16>
    %cst_10 = arith.constant dense<0.000000e+00> : vector<8x288xf32>
    %9 = tpu.matmul %8, %6, %cst_10 {dimension_numbers = #tpu.dot_dimension_numbers<[1], [0], [0], [1], [0, 0, 1, 1], [], []>} : vector<8x8xbf16>, vector<8x288xbf16>, vector<8x288xf32> -> vector<8x288xf32>
    %10 = arith.addf %4, %9 : vector<8x288xf32>
    %c0_11 = arith.constant 0 : index
    %c0_12 = arith.constant 0 : index
    %c2 = arith.constant 2 : index
    %11 = vector.load %arg1[%c0_11, %c0_12, %c2] : memref<1x8x326xbf16, #tpu.memory_space<vmem>>, vector<1x8x288xbf16>
    %12 = vector.shape_cast %11 : vector<1x8x288xbf16> to vector<8x288xbf16>
    %c2_13 = arith.constant 2 : index
    %c0_14 = arith.constant 0 : index
    %c0_15 = arith.constant 0 : index
    %13 = vector.load %arg2[%c2_13, %c0_14, %c0_15] : memref<9x8x8xbf16, #tpu.memory_space<vmem>>, vector<1x8x8xbf16>
    %14 = vector.shape_cast %13 : vector<1x8x8xbf16> to vector<8x8xbf16>
    %cst_16 = arith.constant dense<0.000000e+00> : vector<8x288xf32>
    %15 = tpu.matmul %14, %12, %cst_16 {dimension_numbers = #tpu.dot_dimension_numbers<[1], [0], [0], [1], [0, 0, 1, 1], [], []>} : vector<8x8xbf16>, vector<8x288xbf16>, vector<8x288xf32> -> vector<8x288xf32>
    %16 = arith.addf %10, %15 : vector<8x288xf32>
    %c0_17 = arith.constant 0 : index
    %c0_18 = arith.constant 0 : index
    %c18 = arith.constant 18 : index
    %17 = vector.load %arg1[%c0_17, %c0_18, %c18] : memref<1x8x326xbf16, #tpu.memory_space<vmem>>, vector<1x8x288xbf16>
    %18 = vector.shape_cast %17 : vector<1x8x288xbf16> to vector<8x288xbf16>
    %c3 = arith.constant 3 : index
    %c0_19 = arith.constant 0 : index
    %c0_20 = arith.constant 0 : index
    %19 = vector.load %arg2[%c3, %c0_19, %c0_20] : memref<9x8x8xbf16, #tpu.memory_space<vmem>>, vector<1x8x8xbf16>
    %20 = vector.shape_cast %19 : vector<1x8x8xbf16> to vector<8x8xbf16>
    %cst_21 = arith.constant dense<0.000000e+00> : vector<8x288xf32>
    %21 = tpu.matmul %20, %18, %cst_21 {dimension_numbers = #tpu.dot_dimension_numbers<[1], [0], [0], [1], [0, 0, 1, 1], [], []>} : vector<8x8xbf16>, vector<8x288xbf16>, vector<8x288xf32> -> vector<8x288xf32>
    %22 = arith.addf %16, %21 : vector<8x288xf32>
    %c0_22 = arith.constant 0 : index
    %c0_23 = arith.constant 0 : index
    %c19 = arith.constant 19 : index
    %23 = vector.load %arg1[%c0_22, %c0_23, %c19] : memref<1x8x326xbf16, #tpu.memory_space<vmem>>, vector<1x8x288xbf16>
    %24 = vector.shape_cast %23 : vector<1x8x288xbf16> to vector<8x288xbf16>
    %c4 = arith.constant 4 : index
    %c0_24 = arith.constant 0 : index
    %c0_25 = arith.constant 0 : index
    %25 = vector.load %arg2[%c4, %c0_24, %c0_25] : memref<9x8x8xbf16, #tpu.memory_space<vmem>>, vector<1x8x8xbf16>
    %26 = vector.shape_cast %25 : vector<1x8x8xbf16> to vector<8x8xbf16>
    %cst_26 = arith.constant dense<0.000000e+00> : vector<8x288xf32>
    %27 = tpu.matmul %26, %24, %cst_26 {dimension_numbers = #tpu.dot_dimension_numbers<[1], [0], [0], [1], [0, 0, 1, 1], [], []>} : vector<8x8xbf16>, vector<8x288xbf16>, vector<8x288xf32> -> vector<8x288xf32>
    %28 = arith.addf %22, %27 : vector<8x288xf32>
    %c0_27 = arith.constant 0 : index
    %c0_28 = arith.constant 0 : index
    %c20 = arith.constant 20 : index
    %29 = vector.load %arg1[%c0_27, %c0_28, %c20] : memref<1x8x326xbf16, #tpu.memory_space<vmem>>, vector<1x8x288xbf16>
    %30 = vector.shape_cast %29 : vector<1x8x288xbf16> to vector<8x288xbf16>
    %c5 = arith.constant 5 : index
    %c0_29 = arith.constant 0 : index
    %c0_30 = arith.constant 0 : index
    %31 = vector.load %arg2[%c5, %c0_29, %c0_30] : memref<9x8x8xbf16, #tpu.memory_space<vmem>>, vector<1x8x8xbf16>
    %32 = vector.shape_cast %31 : vector<1x8x8xbf16> to vector<8x8xbf16>
    %cst_31 = arith.constant dense<0.000000e+00> : vector<8x288xf32>
    %33 = tpu.matmul %32, %30, %cst_31 {dimension_numbers = #tpu.dot_dimension_numbers<[1], [0], [0], [1], [0, 0, 1, 1], [], []>} : vector<8x8xbf16>, vector<8x288xbf16>, vector<8x288xf32> -> vector<8x288xf32>
    %34 = arith.addf %28, %33 : vector<8x288xf32>
    %c0_32 = arith.constant 0 : index
    %c0_33 = arith.constant 0 : index
    %c36 = arith.constant 36 : index
    %35 = vector.load %arg1[%c0_32, %c0_33, %c36] : memref<1x8x326xbf16, #tpu.memory_space<vmem>>, vector<1x8x288xbf16>
    %36 = vector.shape_cast %35 : vector<1x8x288xbf16> to vector<8x288xbf16>
    %c6 = arith.constant 6 : index
    %c0_34 = arith.constant 0 : index
    %c0_35 = arith.constant 0 : index
    %37 = vector.load %arg2[%c6, %c0_34, %c0_35] : memref<9x8x8xbf16, #tpu.memory_space<vmem>>, vector<1x8x8xbf16>
    %38 = vector.shape_cast %37 : vector<1x8x8xbf16> to vector<8x8xbf16>
    %cst_36 = arith.constant dense<0.000000e+00> : vector<8x288xf32>
    %39 = tpu.matmul %38, %36, %cst_36 {dimension_numbers = #tpu.dot_dimension_numbers<[1], [0], [0], [1], [0, 0, 1, 1], [], []>} : vector<8x8xbf16>, vector<8x288xbf16>, vector<8x288xf32> -> vector<8x288xf32>
    %40 = arith.addf %34, %39 : vector<8x288xf32>
    %c0_37 = arith.constant 0 : index
    %c0_38 = arith.constant 0 : index
    %c37 = arith.constant 37 : index
    %41 = vector.load %arg1[%c0_37, %c0_38, %c37] : memref<1x8x326xbf16, #tpu.memory_space<vmem>>, vector<1x8x288xbf16>
    %42 = vector.shape_cast %41 : vector<1x8x288xbf16> to vector<8x288xbf16>
    %c7 = arith.constant 7 : index
    %c0_39 = arith.constant 0 : index
    %c0_40 = arith.constant 0 : index
    %43 = vector.load %arg2[%c7, %c0_39, %c0_40] : memref<9x8x8xbf16, #tpu.memory_space<vmem>>, vector<1x8x8xbf16>
    %44 = vector.shape_cast %43 : vector<1x8x8xbf16> to vector<8x8xbf16>
    %cst_41 = arith.constant dense<0.000000e+00> : vector<8x288xf32>
    %45 = tpu.matmul %44, %42, %cst_41 {dimension_numbers = #tpu.dot_dimension_numbers<[1], [0], [0], [1], [0, 0, 1, 1], [], []>} : vector<8x8xbf16>, vector<8x288xbf16>, vector<8x288xf32> -> vector<8x288xf32>
    %46 = arith.addf %40, %45 : vector<8x288xf32>
    %c0_42 = arith.constant 0 : index
    %c0_43 = arith.constant 0 : index
    %c38 = arith.constant 38 : index
    %47 = vector.load %arg1[%c0_42, %c0_43, %c38] : memref<1x8x326xbf16, #tpu.memory_space<vmem>>, vector<1x8x288xbf16>
    %48 = vector.shape_cast %47 : vector<1x8x288xbf16> to vector<8x288xbf16>
    %c8 = arith.constant 8 : index
    %c0_44 = arith.constant 0 : index
    %c0_45 = arith.constant 0 : index
    %49 = vector.load %arg2[%c8, %c0_44, %c0_45] : memref<9x8x8xbf16, #tpu.memory_space<vmem>>, vector<1x8x8xbf16>
    %50 = vector.shape_cast %49 : vector<1x8x8xbf16> to vector<8x8xbf16>
    %cst_46 = arith.constant dense<0.000000e+00> : vector<8x288xf32>
    %51 = tpu.matmul %50, %48, %cst_46 {dimension_numbers = #tpu.dot_dimension_numbers<[1], [0], [0], [1], [0, 0, 1, 1], [], []>} : vector<8x8xbf16>, vector<8x288xbf16>, vector<8x288xf32> -> vector<8x288xf32>
    %52 = arith.addf %46, %51 : vector<8x288xf32>
    %c0_47 = arith.constant 0 : index
    %c0_48 = arith.constant 0 : index
    %53 = vector.load %arg3[%c0_47, %c0_48] : memref<8x1xf32, #tpu.memory_space<vmem>>, vector<8x1xf32>
    %54 = vector.broadcast %53 : vector<8x1xf32> to vector<8x288xf32>
    %55 = arith.addf %52, %54 : vector<8x288xf32>
    %56 = arith.truncf %55 : vector<8x288xf32> to vector<8x288xbf16>
    %c0_49 = arith.constant 0 : index
    %c0_50 = arith.constant 0 : index
    %c0_51 = arith.constant 0 : index
    %57 = vector.load %arg4[%c0_49, %c0_50, %c0_51] : memref<1x8x288xbf16, #tpu.memory_space<vmem>>, vector<1x8x288xbf16>
    %58 = vector.shape_cast %57 : vector<1x8x288xbf16> to vector<8x288xbf16>
    %59 = vector.shape_cast %56 : vector<8x288xbf16> to vector<1x8x288xbf16>
    tpu.vector_store %arg4[%c0_49, %c0_50, %c0_51], %59 {strides = array<i32>} : memref<1x8x288xbf16, #tpu.memory_space<vmem>>, vector<1x8x288xbf16>,
    return
  }
  func.func @transform_0(%arg0: i32) -> (i32, i32, i32) {
    %c0_i32 = arith.constant 0 : i32
    %c0_i32_0 = arith.constant 0 : i32
    %c0_i32_1 = arith.constant 0 : i32
    return %arg0, %c0_i32, %c0_i32_0 : i32, i32, i32
  }
  func.func @transform_1(%arg0: i32) -> (i32, i32, i32) {
    %c0_i32 = arith.constant 0 : i32
    %c0_i32_0 = arith.constant 0 : i32
    %c0_i32_1 = arith.constant 0 : i32
    %c0_i32_2 = arith.constant 0 : i32
    return %c0_i32, %c0_i32_0, %c0_i32_1 : i32, i32, i32
  }
  func.func @transform_2(%arg0: i32) -> (i32, i32) {
    %c0_i32 = arith.constant 0 : i32
    %c0_i32_0 = arith.constant 0 : i32
    %c0_i32_1 = arith.constant 0 : i32
    return %c0_i32, %c0_i32_0 : i32, i32
  }
  func.func @transform_3(%arg0: i32) -> (i32, i32, i32) {
    %c0_i32 = arith.constant 0 : i32
    %c0_i32_0 = arith.constant 0 : i32
    %c0_i32_1 = arith.constant 0 : i32
    return %arg0, %c0_i32, %c0_i32_0 : i32, i32, i32
  }
}

</mosaic_0001>

<llo_original>
// kernel: _lambda_.19
$region0: #{_lambda_.19}
  #allocation0 [shape = 'u32[]', space=smem, size = 0x4, offset = 0x4, fixed_abs, tag = 'smem constant byte address 0x4 - core index']
  #allocation1 [shape = 'u32[144,128]{1,0:T(1,128)}', space=vmem, size = 0x12000, scoped, tag = 'internal scratch']
  %s0 = inlined_call_operand.vmem [shape: bf16[2,8], index: 0, kind: input, shape index: {}]
  %s1 = inlined_call_operand.vmem [shape: bf16[2,8,256], index: 1, kind: input, shape index: {}]
  %s2 = inlined_call_operand.vmem [shape: f32[2,1], index: 2, kind: input, shape index: {}]
  %s3 = inlined_call_operand.vmem [shape: bf16[2,2,256], index: 3, kind: output, shape index: {}]
  %s4 = sld [smem:[#allocation0]]
  $region45: #{_lambda_.19} parent=0
    _
  %s6 = ssub.s32 1, %s4
  %s7 = scalar_select 0, %s6, %s4
  loop: start=0, step=1, limit=4
  $region2: #{_lambda_.19} parent=0 // loop_pre_header
    _
  $region3: #{_lambda_.19} parent=0 // loop_header
    %s9 = sphi 0, %s13
    %p10 = scmp.ge.s32.totalorder %s9, 4
    %s16 = sphi 0, %s28
    %s17 = sphi 0, %s24
    %s18 = sphi 0, %s16
    %s19 = sphi 0, %s17
    %s20 = sphi 0, %s18
    %s21 = sphi 0, %s19
    %s29 = sphi 0, %s29
    %s31 = sphi 0, %s29
    %s32 = sphi 0, %s31
    %s46 = sphi 0, %s32
    %s54 = sphi 0, %s56
    %s57 = sphi 0, %s54
    %s58 = sphi 0, %s57
    %s74 = sphi 0, %s58
    %s78 = sphi 0, %s78
    %s80 = sphi 0, %s78
    %s81 = sphi 0, %s80
    %s95 = sphi 0, %s81
    %s103 = sphi 0, %s105
    %s106 = sphi 0, %s103
    %s107 = sphi 0, %s106
    %s123 = sphi 0, %s107
  $region4: #{_lambda_.19} parent=0 // loop_header_branch
    %12 = sbr.rel (%p10) target = $region8
  $region5: #{_lambda_.19} parent=0 // loop_body
    %s14 = ssub.s32 %s9, 1
    %s15 = ssub.s32 %s9, 2
    %s22 = sadd.s32 1, %s17
    %p23 = scmp.ge.s32.totalorder %s22, 1
    %s24 = scalar_select %p23, 0, %s22
    %s25 = sadd.s32 1, %s16
    %s26 = scalar_select %p23, %s25, %s16
    %p27 = scmp.ge.s32.totalorder %s26, 2
    %s28 = scalar_select %p27, 0, %s26
    %s30 = sadd.s32 %s29, 1
    %p33 = scmp.eq.s32.totalorder %s9, 1
    %p34 = scmp.ne.s32.totalorder %s29, %s31
    %p35 = scmp.eq.s32.totalorder %s9, 0
    %p36 = por %p34, %p35
    %p37 = scmp.ne.s32.totalorder %s29, %s31
    %p38 = scmp.eq.s32.totalorder %s14, 1
    %p39 = por %p37, %p38
    %p40 = scmp.ne.s32.totalorder %s31, %s32
    %p41 = scmp.eq.s32.totalorder %s14, 0
    %p42 = por %p40, %p41
    %p43 = scmp.ne.s32.totalorder %s31, %s32
    %p44 = scmp.eq.s32.totalorder %s15, 1
    %p45 = por %p43, %p44
    %p47 = scmp.ne.s32.totalorder %s32, %s46
    %p48 = scmp.eq.s32.totalorder %s15, 0
    %p49 = por %p47, %p48
    %s50 = ssub.s32 %s16, %s28
    %s51 = ssub.s32 %s17, %s24
    %s52 = sor.u32 %s50, %s51
    %p53 = scmp.eq.s32.totalorder %s52, 0
    %s55 = sadd.s32 %s54, 1
    %s56 = scalar_select %p53, %s54, %s55
    %p59 = pneg %p53
    %p60 = scmp.eq.s32.totalorder %s9, 1
    %p61 = por %p59, %p60
    %p62 = scmp.ne.s32.totalorder %s54, %s57
    %p63 = scmp.eq.s32.totalorder %s9, 0
    %p64 = por %p62, %p63
    %p65 = scmp.ne.s32.totalorder %s54, %s57
    %p66 = scmp.eq.s32.totalorder %s14, 1
    %p67 = por %p65, %p66
    %p68 = scmp.ne.s32.totalorder %s57, %s58
    %p69 = scmp.eq.s32.totalorder %s14, 0
    %p70 = por %p68, %p69
    %p71 = scmp.ne.s32.totalorder %s57, %s58
    %p72 = scmp.eq.s32.totalorder %s15, 1
    %p73 = por %p71, %p72
    %p75 = scmp.ne.s32.totalorder %s58, %s74
    %p76 = scmp.eq.s32.totalorder %s15, 0
    %p77 = por %p75, %p76
    %s79 = sadd.s32 %s78, 1
    %p82 = scmp.eq.s32.totalorder %s9, 1
    %p83 = scmp.ne.s32.totalorder %s78, %s80
    %p84 = scmp.eq.s32.totalorder %s9, 0
    %p85 = por %p83, %p84
    %p86 = scmp.ne.s32.totalorder %s78, %s80
    %p87 = scmp.eq.s32.totalorder %s14, 1
    %p88 = por %p86, %p87
    %p89 = scmp.ne.s32.totalorder %s80, %s81
    %p90 = scmp.eq.s32.totalorder %s14, 0
    %p91 = por %p89, %p90
    %p92 = scmp.ne.s32.totalorder %s80, %s81
    %p93 = scmp.eq.s32.totalorder %s15, 1
    %p94 = por %p92, %p93
    %p96 = scmp.ne.s32.totalorder %s81, %s95
    %p97 = scmp.eq.s32.totalorder %s15, 0
    %p98 = por %p96, %p97
    %s99 = ssub.s32 %s16, %s28
    %s100 = ssub.s32 %s17, %s24
    %s101 = sor.u32 %s99, %s100
    %p102 = scmp.eq.s32.totalorder %s101, 0
    %s104 = sadd.s32 %s103, 1
    %s105 = scalar_select %p102, %s103, %s104
    %p108 = pneg %p102
    %p109 = scmp.eq.s32.totalorder %s9, 1
    %p110 = por %p108, %p109
    %p111 = scmp.ne.s32.totalorder %s103, %s106
    %p112 = scmp.eq.s32.totalorder %s9, 0
    %p113 = por %p111, %p112
    %p114 = scmp.ne.s32.totalorder %s103, %s106
    %p115 = scmp.eq.s32.totalorder %s14, 1
    %p116 = por %p114, %p115
    %p117 = scmp.ne.s32.totalorder %s106, %s107
    %p118 = scmp.eq.s32.totalorder %s14, 0
    %p119 = por %p117, %p118
    %p120 = scmp.ne.s32.totalorder %s106, %s107
    %p121 = scmp.eq.s32.totalorder %s15, 1
    %p122 = por %p120, %p121
    %p124 = scmp.ne.s32.totalorder %s107, %s123
    %p125 = scmp.eq.s32.totalorder %s15, 0
    %p126 = por %p124, %p125
    %p127 = scmp.le.s32.totalorder 1, %s9
    %p128 = scmp.lt.s32.totalorder %s9, 3
    %p129 = pnand %p127, %p128
    %p130 = pneg %p129
    // Predicated region
    $region9: #{_lambda_.19} parent=5 // pred_check
      _
    $region10: #{_lambda_.19} parent=5 // pred_check_branch
      %132 = sbr.rel (%p129) target = $region12
    $region11: #{_lambda_.19} parent=5 // pred_region
      %s133 = ssub.s32 %s9, 1
      // Predicated region
      $region13: #{_lambda_.19} parent=11 // pred_check
        %p134 = pneg %p42
      $region14: #{_lambda_.19} parent=11 // pred_check_branch
        %136 = sbr.rel (%p134) target = $region16
      $region15: #{_lambda_.19} parent=11 // pred_region
        _
      $region16: #{_lambda_.19} parent=11 // pred_fallthru
        _
      // Predicated region
      $region17: #{_lambda_.19} parent=11 // pred_check
        %p137 = pneg %p91
      $region18: #{_lambda_.19} parent=11 // pred_check_branch
        %139 = sbr.rel (%p137) target = $region20
      $region19: #{_lambda_.19} parent=11 // pred_region
        _
      $region20: #{_lambda_.19} parent=11 // pred_fallthru
        _
    $region12: #{_lambda_.19} parent=5 // pred_fallthru
      _
    %p140 = scmp.lt.s32.totalorder %s9, 2
    // Predicated region
    $region21: #{_lambda_.19} parent=5 // pred_check
      %p141 = pneg %p140
    $region22: #{_lambda_.19} parent=5 // pred_check_branch
      %143 = sbr.rel (%p141) target = $region24
    $region23: #{_lambda_.19} parent=5 // pred_region
      // Predicated region
      $region25: #{_lambda_.19} parent=23 // pred_check
        %p144 = pneg %p64
      $region26: #{_lambda_.19} parent=23 // pred_check_branch
        %146 = sbr.rel (%p144) target = $region28
      $region27: #{_lambda_.19} parent=23 // pred_region
        %s147 = smul.u32 2, %s17
        %p148 = scmp.lt.s32.totalorder %s16, 1
        %s149 = scalar_select %p148, %s16, 1
        %p150 = scmp.lt.s32.totalorder %s147, 1
        %s151 = scalar_select %p150, %s147, 1
        %s152 = smul.addr %s149, 2
        %s153 = sadd.s32 %s151, %s152
        %s154 = smul.addr %s153, 4
        %s155 = scalar_lea.vmem %s1, %s154
        %s156 = smul.u32 2, %s17
      $region28: #{_lambda_.19} parent=23 // pred_fallthru
        _
    $region24: #{_lambda_.19} parent=5 // pred_fallthru
      _
    %p157 = scmp.le.s32.totalorder 1, %s9
    %p158 = scmp.lt.s32.totalorder %s9, 3
    %p159 = pnand %p157, %p158
    %p160 = pneg %p159
    // Predicated region
    $region29: #{_lambda_.19} parent=5 // pred_check
      _
    $region30: #{_lambda_.19} parent=5 // pred_check_branch
      %162 = sbr.rel (%p159) target = $region32
    $region31: #{_lambda_.19} parent=5 // pred_region
      %s163 = ssub.s32 %s9, 1
      %p164 = pneg %p42
      %p165 = pneg %p39
      %s166 = smul.u32 2, %s19
      %p167 = scmp.lt.s32.totalorder %s18, 1
      %s168 = scalar_select %p167, %s18, 1
      %p169 = scmp.lt.s32.totalorder %s166, 1
      %s170 = scalar_select %p169, %s166, 1
      %s171 = smul.addr %s168, 2
      %s172 = sadd.s32 %s170, %s171
      %s173 = smul.addr %s172, 4
      %s174 = scalar_lea.vmem %s1, %s173
      %p175 = pneg %p70
      %p176 = pneg %p67
      %p177 = pneg %p91
      %p178 = pneg %p88
      %p179 = pneg %p119
      %p180 = pneg %p116
      %s181 = smul.u32 2, %s19
      %p182 = scmp.lt.s32.totalorder %s18, 1
      %s183 = scalar_select %p182, %s18, 1
      %p184 = scmp.lt.s32.totalorder %s181, 1
      %s185 = scalar_select %p184, %s181, 1
      %s186 = smul.addr %s183, 2
      %s187 = sadd.s32 %s185, %s186
      %s188 = scalar_lea.vmem %s3, %s187
      %s189 = smul.u32 2, %s19
      %p190 = scmp.lt.s32.totalorder %s18, 1
      %s191 = scalar_select %p190, %s18, 1
      %p192 = scmp.lt.s32.totalorder %s189, 1
      %s193 = scalar_select %p192, %s189, 1
      %s194 = smul.addr %s191, 2
      %s195 = sadd.s32 %s193, %s194
      %s196 = smul.addr %s195, 4
      %s197 = scalar_lea.vmem %s1, %s196
      %s198 = smul.u32 2, %s19
      %s199 = smul.u32 2, %s19
      %p200 = scmp.lt.s32.totalorder %s18, 1
      %s201 = scalar_select %p200, %s18, 1
      %p202 = scmp.lt.s32.totalorder %s199, 1
      %s203 = scalar_select %p202, %s199, 1
      %s204 = smul.addr %s201, 2
      %s205 = sadd.s32 %s203, %s204
      %s206 = scalar_lea.vmem %s3, %s205
      %s207 = smul.u32 2, %s19
      %v209 = vld [vmem:[%s197] sm:$0xff]
      %v210 = vld [vmem:[%s0] sm:$0x1]
      %v211 = vld [vmem:[%s2] sm:$0x3]
      %213 = vset.pattern.permute.xlu0 0
      %214 = vperm.xlu0 %213, %v211
      %v215 = vpop.permute.xlu0 %214
      %v218 = vunpack.c.l.b16 %v209
      %v219 = vunpack.c.h.b16 %v209
      %v220 = vpack.c.b16 %v218, %v218
      %v221 = vpack.c.b16 %v219, %v219
      %vm222 = vcmask 64512
      %v224 = vsel %vm222, %v210, 0
      %vm226 = vcmask 1043456
      %v228 = vsel %vm226, %v220, 0
      %v231 = vsel %vm226, %v221, 0
      %233 = vmatprep.subr.bf16.mxu0 %v231
      %234 = vmatpush1.bf16.msra.mxu0 %v228
      %235 = vmatprep.subr.bf16.mxu0 0
      %236 = vmatpush1.bf16.msra.mxu0 0
      %237 = vmatprep.subr.bf16.mxu0 0
      %238 = vmatpush1.bf16.msra.mxu0 0
      %239 = vmatprep.subr.bf16.mxu0 0
      %240 = vmatpush1.bf16.msra.mxu0 0
      %241 = vmatprep.subr.bf16.mxu0 0
      %242 = vmatpush1.bf16.msra.mxu0 0
      %243 = vmatprep.subr.bf16.mxu0 0
      %244 = vmatpush1.bf16.msra.mxu0 0
      %245 = vmatprep.subr.bf16.mxu0 0
      %246 = vmatpush1.bf16.msra.mxu0 0
      %247 = vmatprep.subr.bf16.mxu0 0
      %248 = vmatpush1.bf16.msra.mxu0 0
      %249 = vmatprep.subr.bf16.mxu0 0
      %250 = vmatpush1.bf16.msra.mxu0 0
      %251 = vmatprep.subr.bf16.mxu0 0
      %252 = vmatpush1.bf16.msra.mxu0 0
      %253 = vmatprep.subr.bf16.mxu0 0
      %254 = vmatpush1.bf16.msra.mxu0 0
      %255 = vmatprep.subr.bf16.mxu0 0
      %256 = vmatpush1.bf16.msra.mxu0 0
      %257 = vmatprep.subr.bf16.mxu0 0
      %258 = vmatpush1.bf16.msra.mxu0 0
      %259 = vmatprep.subr.bf16.mxu0 0
      %260 = vmatpush1.bf16.msra.mxu0 0
      %261 = vmatprep.subr.bf16.mxu0 0
      %262 = vmatpush1.bf16.msra.mxu0 0
      %263 = vmatprep.subr.bf16.mxu0 0
      %264 = vmatpush1.bf16.msra.mxu0 0
      %265 = vmatprep.mubr.bf16.mxu0 0
      %266 = vmatmul.mubr.bf16.gmra.mrb[0].mxu0 %v224
      %v267 = vpop.f32.mrb[0].mxu0
      %v268 = vadd.f32 %v215, %v267
      %v269 = vpop.f32.mrb[0].mxu0
      %v270 = vadd.f32 %v215, %v269
      %v271 = vpop.f32.mrb[0].mxu0
      %v272 = vpop.f32.mrb[0].mxu0
      %273 = vdwg.mxu0
      %v274 = vpack.c.bf16 %v268, %v268
      %v275 = vpack.c.bf16 %v270, %v270
      %v278 = vcombine.low %v274, %v275
      %v280 = vunpack.c.l.s4 1966171168
      %v281 = vunpack.c.0.s8 %v280
      %v282 = vlaneseq
      %v283 = vshrl.u32 %v282, 7
      %v284 = vsub.s32 %v281, %v283
      %v285 = vrot.slane %v278, %v284
      %v287 = vunpack.c.l.s4 1966171168
      %v288 = vunpack.c.0.s8 %v287
      %v289 = vlaneseq
      %v290 = vshrl.u32 %v289, 7
      %v291 = vsub.s32 %v288, %v290
      %v292 = vrot.slane %v285, %v291
      %294 = vst [vmem:[%s206] sm:$0x3] %v292
      %s295 = smul.u32 2, %s19
      %p296 = scmp.lt.s32.totalorder %s18, 1
      %s297 = scalar_select %p296, %s18, 1
      %p298 = scmp.lt.s32.totalorder %s295, 1
      %s299 = scalar_select %p298, %s295, 1
      %s300 = smul.addr %s297, 2
      %s301 = sadd.s32 %s299, %s300
      %s302 = scalar_lea.vmem %s3, %s301
      // Predicated region
      $region33: #{_lambda_.19} parent=31 // pred_check
        %p303 = pneg %p116
      $region34: #{_lambda_.19} parent=31 // pred_check_branch
        %305 = sbr.rel (%p303) target = $region36
      $region35: #{_lambda_.19} parent=31 // pred_region
        %s306 = smul.u32 2, %s19
      $region36: #{_lambda_.19} parent=31 // pred_fallthru
        _
    $region32: #{_lambda_.19} parent=5 // pred_fallthru
      _
    %p307 = scmp.le.s32.totalorder 2, %s9
    // Predicated region
    $region37: #{_lambda_.19} parent=5 // pred_check
      %p308 = pneg %p307
    $region38: #{_lambda_.19} parent=5 // pred_check_branch
      %310 = sbr.rel (%p308) target = $region40
    $region39: #{_lambda_.19} parent=5 // pred_region
      %s311 = ssub.s32 %s9, 2
      // Predicated region
      $region41: #{_lambda_.19} parent=39 // pred_check
        %p312 = pneg %p122
      $region42: #{_lambda_.19} parent=39 // pred_check_branch
        %314 = sbr.rel (%p312) target = $region44
      $region43: #{_lambda_.19} parent=39 // pred_region
        %s315 = smul.u32 2, %s21
        %p316 = scmp.lt.s32.totalorder %s20, 1
        %s317 = scalar_select %p316, %s20, 1
        %p318 = scmp.lt.s32.totalorder %s315, 1
        %s319 = scalar_select %p318, %s315, 1
        %s320 = smul.addr %s317, 2
        %s321 = sadd.s32 %s319, %s320
        %s322 = scalar_lea.vmem %s3, %s321
      $region44: #{_lambda_.19} parent=39 // pred_fallthru
        _
    $region40: #{_lambda_.19} parent=5 // pred_fallthru
      _
  $region6: #{_lambda_.19} parent=0 // loop_footer
    %s13 = sadd.s32 1, %s9
  $region7: #{_lambda_.19} parent=0 // loop_footer_branch
    %8 = sbr.rel target = $region3
  $region8: #{_lambda_.19} parent=0 // loop_exit
    _

// kernel: _lambda_.20
$region0: #{_lambda_.20}
  #allocation0 [shape = 'u32[]', space=smem, size = 0x4, offset = 0x4, fixed_abs, tag = 'smem constant byte address 0x4 - core index']
  #allocation1 [shape = 'u32[144,128]{1,0:T(1,128)}', space=vmem, size = 0x12000, scoped, tag = 'internal scratch']
  %s0 = inlined_call_operand.vmem [shape: bf16[2,18], index: 0, kind: input, shape index: {}]
  %s1 = inlined_call_operand.vmem [shape: bf16[2,18,128], index: 1, kind: input, shape index: {}]
  %s2 = inlined_call_operand.vmem [shape: f32[2,1], index: 2, kind: input, shape index: {}]
  %s3 = inlined_call_operand.vmem [shape: bf16[2,2,128], index: 3, kind: output, shape index: {}]
  %s4 = sld [smem:[#allocation0]]
  $region45: #{_lambda_.20} parent=0
    _
  %s6 = ssub.s32 1, %s4
  %s7 = scalar_select 0, %s6, %s4
  loop: start=0, step=1, limit=4
  $region2: #{_lambda_.20} parent=0 // loop_pre_header
    _
  $region3: #{_lambda_.20} parent=0 // loop_header
    %s9 = sphi 0, %s13
    %p10 = scmp.ge.s32.totalorder %s9, 4
    %s16 = sphi 0, %s28
    %s17 = sphi 0, %s24
    %s18 = sphi 0, %s16
    %s19 = sphi 0, %s17
    %s20 = sphi 0, %s18
    %s21 = sphi 0, %s19
    %s29 = sphi 0, %s29
    %s31 = sphi 0, %s29
    %s32 = sphi 0, %s31
    %s46 = sphi 0, %s32
    %s54 = sphi 0, %s56
    %s57 = sphi 0, %s54
    %s58 = sphi 0, %s57
    %s74 = sphi 0, %s58
    %s78 = sphi 0, %s78
    %s80 = sphi 0, %s78
    %s81 = sphi 0, %s80
    %s95 = sphi 0, %s81
    %s103 = sphi 0, %s105
    %s106 = sphi 0, %s103
    %s107 = sphi 0, %s106
    %s123 = sphi 0, %s107
  $region4: #{_lambda_.20} parent=0 // loop_header_branch
    %12 = sbr.rel (%p10) target = $region8
  $region5: #{_lambda_.20} parent=0 // loop_body
    %s14 = ssub.s32 %s9, 1
    %s15 = ssub.s32 %s9, 2
    %s22 = sadd.s32 1, %s17
    %p23 = scmp.ge.s32.totalorder %s22, 1
    %s24 = scalar_select %p23, 0, %s22
    %s25 = sadd.s32 1, %s16
    %s26 = scalar_select %p23, %s25, %s16
    %p27 = scmp.ge.s32.totalorder %s26, 2
    %s28 = scalar_select %p27, 0, %s26
    %s30 = sadd.s32 %s29, 1
    %p33 = scmp.eq.s32.totalorder %s9, 1
    %p34 = scmp.ne.s32.totalorder %s29, %s31
    %p35 = scmp.eq.s32.totalorder %s9, 0
    %p36 = por %p34, %p35
    %p37 = scmp.ne.s32.totalorder %s29, %s31
    %p38 = scmp.eq.s32.totalorder %s14, 1
    %p39 = por %p37, %p38
    %p40 = scmp.ne.s32.totalorder %s31, %s32
    %p41 = scmp.eq.s32.totalorder %s14, 0
    %p42 = por %p40, %p41
    %p43 = scmp.ne.s32.totalorder %s31, %s32
    %p44 = scmp.eq.s32.totalorder %s15, 1
    %p45 = por %p43, %p44
    %p47 = scmp.ne.s32.totalorder %s32, %s46
    %p48 = scmp.eq.s32.totalorder %s15, 0
    %p49 = por %p47, %p48
    %s50 = ssub.s32 %s16, %s28
    %s51 = ssub.s32 %s17, %s24
    %s52 = sor.u32 %s50, %s51
    %p53 = scmp.eq.s32.totalorder %s52, 0
    %s55 = sadd.s32 %s54, 1
    %s56 = scalar_select %p53, %s54, %s55
    %p59 = pneg %p53
    %p60 = scmp.eq.s32.totalorder %s9, 1
    %p61 = por %p59, %p60
    %p62 = scmp.ne.s32.totalorder %s54, %s57
    %p63 = scmp.eq.s32.totalorder %s9, 0
    %p64 = por %p62, %p63
    %p65 = scmp.ne.s32.totalorder %s54, %s57
    %p66 = scmp.eq.s32.totalorder %s14, 1
    %p67 = por %p65, %p66
    %p68 = scmp.ne.s32.totalorder %s57, %s58
    %p69 = scmp.eq.s32.totalorder %s14, 0
    %p70 = por %p68, %p69
    %p71 = scmp.ne.s32.totalorder %s57, %s58
    %p72 = scmp.eq.s32.totalorder %s15, 1
    %p73 = por %p71, %p72
    %p75 = scmp.ne.s32.totalorder %s58, %s74
    %p76 = scmp.eq.s32.totalorder %s15, 0
    %p77 = por %p75, %p76
    %s79 = sadd.s32 %s78, 1
    %p82 = scmp.eq.s32.totalorder %s9, 1
    %p83 = scmp.ne.s32.totalorder %s78, %s80
    %p84 = scmp.eq.s32.totalorder %s9, 0
    %p85 = por %p83, %p84
    %p86 = scmp.ne.s32.totalorder %s78, %s80
    %p87 = scmp.eq.s32.totalorder %s14, 1
    %p88 = por %p86, %p87
    %p89 = scmp.ne.s32.totalorder %s80, %s81
    %p90 = scmp.eq.s32.totalorder %s14, 0
    %p91 = por %p89, %p90
    %p92 = scmp.ne.s32.totalorder %s80, %s81
    %p93 = scmp.eq.s32.totalorder %s15, 1
    %p94 = por %p92, %p93
    %p96 = scmp.ne.s32.totalorder %s81, %s95
    %p97 = scmp.eq.s32.totalorder %s15, 0
    %p98 = por %p96, %p97
    %s99 = ssub.s32 %s16, %s28
    %s100 = ssub.s32 %s17, %s24
    %s101 = sor.u32 %s99, %s100
    %p102 = scmp.eq.s32.totalorder %s101, 0
    %s104 = sadd.s32 %s103, 1
    %s105 = scalar_select %p102, %s103, %s104
    %p108 = pneg %p102
    %p109 = scmp.eq.s32.totalorder %s9, 1
    %p110 = por %p108, %p109
    %p111 = scmp.ne.s32.totalorder %s103, %s106
    %p112 = scmp.eq.s32.totalorder %s9, 0
    %p113 = por %p111, %p112
    %p114 = scmp.ne.s32.totalorder %s103, %s106
    %p115 = scmp.eq.s32.totalorder %s14, 1
    %p116 = por %p114, %p115
    %p117 = scmp.ne.s32.totalorder %s106, %s107
    %p118 = scmp.eq.s32.totalorder %s14, 0
    %p119 = por %p117, %p118
    %p120 = scmp.ne.s32.totalorder %s106, %s107
    %p121 = scmp.eq.s32.totalorder %s15, 1
    %p122 = por %p120, %p121
    %p124 = scmp.ne.s32.totalorder %s107, %s123
    %p125 = scmp.eq.s32.totalorder %s15, 0
    %p126 = por %p124, %p125
    %p127 = scmp.le.s32.totalorder 1, %s9
    %p128 = scmp.lt.s32.totalorder %s9, 3
    %p129 = pnand %p127, %p128
    %p130 = pneg %p129
    // Predicated region
    $region9: #{_lambda_.20} parent=5 // pred_check
      _
    $region10: #{_lambda_.20} parent=5 // pred_check_branch
      %132 = sbr.rel (%p129) target = $region12
    $region11: #{_lambda_.20} parent=5 // pred_region
      %s133 = ssub.s32 %s9, 1
      // Predicated region
      $region13: #{_lambda_.20} parent=11 // pred_check
        %p134 = pneg %p42
      $region14: #{_lambda_.20} parent=11 // pred_check_branch
        %136 = sbr.rel (%p134) target = $region16
      $region15: #{_lambda_.20} parent=11 // pred_region
        _
      $region16: #{_lambda_.20} parent=11 // pred_fallthru
        _
      // Predicated region
      $region17: #{_lambda_.20} parent=11 // pred_check
        %p137 = pneg %p91
      $region18: #{_lambda_.20} parent=11 // pred_check_branch
        %139 = sbr.rel (%p137) target = $region20
      $region19: #{_lambda_.20} parent=11 // pred_region
        _
      $region20: #{_lambda_.20} parent=11 // pred_fallthru
        _
    $region12: #{_lambda_.20} parent=5 // pred_fallthru
      _
    %p140 = scmp.lt.s32.totalorder %s9, 2
    // Predicated region
    $region21: #{_lambda_.20} parent=5 // pred_check
      %p141 = pneg %p140
    $region22: #{_lambda_.20} parent=5 // pred_check_branch
      %143 = sbr.rel (%p141) target = $region24
    $region23: #{_lambda_.20} parent=5 // pred_region
      // Predicated region
      $region25: #{_lambda_.20} parent=23 // pred_check
        %p144 = pneg %p64
      $region26: #{_lambda_.20} parent=23 // pred_check_branch
        %146 = sbr.rel (%p144) target = $region28
      $region27: #{_lambda_.20} parent=23 // pred_region
        %p147 = scmp.lt.s32.totalorder %s16, 1
        %s148 = scalar_select %p147, %s16, 1
        %p149 = scmp.lt.s32.totalorder %s17, 0
        %s150 = scalar_select %p149, %s17, 0
        %s151 = smul.addr %s148, 3
        %s152 = sadd.s32 %s150, %s151
        %s153 = smul.addr %s152, 4
        %s154 = scalar_lea.vmem %s1, %s153
      $region28: #{_lambda_.20} parent=23 // pred_fallthru
        _
    $region24: #{_lambda_.20} parent=5 // pred_fallthru
      _
    %p155 = scmp.le.s32.totalorder 1, %s9
    %p156 = scmp.lt.s32.totalorder %s9, 3
    %p157 = pnand %p155, %p156
    %p158 = pneg %p157
    // Predicated region
    $region29: #{_lambda_.20} parent=5 // pred_check
      _
    $region30: #{_lambda_.20} parent=5 // pred_check_branch
      %160 = sbr.rel (%p157) target = $region32
    $region31: #{_lambda_.20} parent=5 // pred_region
      %s161 = ssub.s32 %s9, 1
      %p162 = pneg %p42
      %p163 = pneg %p39
      %p164 = scmp.lt.s32.totalorder %s18, 1
      %s165 = scalar_select %p164, %s18, 1
      %p166 = scmp.lt.s32.totalorder %s19, 0
      %s167 = scalar_select %p166, %s19, 0
      %s168 = smul.addr %s165, 3
      %s169 = sadd.s32 %s167, %s168
      %s170 = smul.addr %s169, 4
      %s171 = scalar_lea.vmem %s1, %s170
      %p172 = pneg %p70
      %p173 = pneg %p67
      %p174 = pneg %p91
      %p175 = pneg %p88
      %p176 = pneg %p119
      %p177 = pneg %p116
      %p178 = scmp.lt.s32.totalorder %s18, 1
      %s179 = scalar_select %p178, %s18, 1
      %p180 = scmp.lt.s32.totalorder %s19, 0
      %s181 = scalar_select %p180, %s19, 0
      %s182 = sadd.s32 %s181, %s179
      %s183 = scalar_lea.vmem %s3, %s182
      %p184 = scmp.lt.s32.totalorder %s18, 1
      %s185 = scalar_select %p184, %s18, 1
      %p186 = scmp.lt.s32.totalorder %s19, 0
      %s187 = scalar_select %p186, %s19, 0
      %s188 = smul.addr %s185, 3
      %s189 = sadd.s32 %s187, %s188
      %s190 = smul.addr %s189, 4
      %s191 = scalar_lea.vmem %s1, %s190
      %p192 = scmp.lt.s32.totalorder %s18, 1
      %s193 = scalar_select %p192, %s18, 1
      %p194 = scmp.lt.s32.totalorder %s19, 0
      %s195 = scalar_select %p194, %s19, 0
      %s196 = sadd.s32 %s195, %s193
      %s197 = scalar_lea.vmem %s3, %s196
      %v199 = vld [vmem:[%s191] sm:$0xf]
      %v200 = vld [vmem:[%s191 + $0x4] sm:$0xf]
      %v201 = vld [vmem:[%s191 + $0x8] sm:$0x1]
      %v202 = vld [vmem:[%s0] sm:$0x1]
      %v203 = vld [vmem:[%s2] sm:$0x3]
      %205 = vset.pattern.permute.xlu0 0
      %206 = vperm.xlu0 %205, %v203
      %v207 = vpop.permute.xlu0 %206
      %v212 = vunpack.c.l.b16 %v199
      %v213 = vunpack.c.l.b16 %v200
      %v214 = vunpack.c.l.b16 %v201
      %v215 = vpack.c.b16 %v213, %v212
      %v216 = vpack.c.b16 %v214, %v214
      %vm218 = vcmask 146432
      %v220 = vsel %vm218, %v202, 0
      %vm222 = vcmask 1040384
      %v224 = vsel %vm222, %v216, 0
      %226 = vmatprep.subr.bf16.mxu0 0
      %227 = vmatpush1.bf16.msra.mxu0 %v215
      %228 = vmatprep.subr.bf16.mxu0 0
      %229 = vmatpush1.bf16.msra.mxu0 %v224
      %230 = vmatprep.subr.bf16.mxu0 0
      %231 = vmatpush1.bf16.msra.mxu0 0
      %232 = vmatprep.subr.bf16.mxu0 0
      %233 = vmatpush1.bf16.msra.mxu0 0
      %234 = vmatprep.subr.bf16.mxu0 0
      %235 = vmatpush1.bf16.msra.mxu0 0
      %236 = vmatprep.subr.bf16.mxu0 0
      %237 = vmatpush1.bf16.msra.mxu0 0
      %238 = vmatprep.subr.bf16.mxu0 0
      %239 = vmatpush1.bf16.msra.mxu0 0
      %240 = vmatprep.subr.bf16.mxu0 0
      %241 = vmatpush1.bf16.msra.mxu0 0
      %242 = vmatprep.subr.bf16.mxu0 0
      %243 = vmatpush1.bf16.msra.mxu0 0
      %244 = vmatprep.subr.bf16.mxu0 0
      %245 = vmatpush1.bf16.msra.mxu0 0
      %246 = vmatprep.subr.bf16.mxu0 0
      %247 = vmatpush1.bf16.msra.mxu0 0
      %248 = vmatprep.subr.bf16.mxu0 0
      %249 = vmatpush1.bf16.msra.mxu0 0
      %250 = vmatprep.subr.bf16.mxu0 0
      %251 = vmatpush1.bf16.msra.mxu0 0
      %252 = vmatprep.subr.bf16.mxu0 0
      %253 = vmatpush1.bf16.msra.mxu0 0
      %254 = vmatprep.subr.bf16.mxu0 0
      %255 = vmatpush1.bf16.msra.mxu0 0
      %256 = vmatprep.subr.bf16.mxu0 0
      %257 = vmatpush1.bf16.msra.mxu0 0
      %258 = vmatprep.mubr.bf16.mxu0 0
      %259 = vmatmul.mubr.bf16.gmra.mrb[0].mxu0 %v220
      %v260 = vpop.f32.mrb[0].mxu0
      %v261 = vadd.f32 %v207, %v260
      %v262 = vpop.f32.mrb[0].mxu0
      %v263 = vpop.f32.mrb[0].mxu0
      %v264 = vpop.f32.mrb[0].mxu0
      %265 = vdwg.mxu0
      %v266 = vpack.c.bf16 %v261, %v261
      %267 = vst [vmem:[%s197] sm:$0x1] %v266
      %p268 = scmp.lt.s32.totalorder %s18, 1
      %s269 = scalar_select %p268, %s18, 1
      %p270 = scmp.lt.s32.totalorder %s19, 0
      %s271 = scalar_select %p270, %s19, 0
      %s272 = sadd.s32 %s271, %s269
      %s273 = scalar_lea.vmem %s3, %s272
      // Predicated region
      $region33: #{_lambda_.20} parent=31 // pred_check
        %p274 = pneg %p116
      $region34: #{_lambda_.20} parent=31 // pred_check_branch
        %276 = sbr.rel (%p274) target = $region36
      $region35: #{_lambda_.20} parent=31 // pred_region
        _
      $region36: #{_lambda_.20} parent=31 // pred_fallthru
        _
    $region32: #{_lambda_.20} parent=5 // pred_fallthru
      _
    %p277 = scmp.le.s32.totalorder 2, %s9
    // Predicated region
    $region37: #{_lambda_.20} parent=5 // pred_check
      %p278 = pneg %p277
    $region38: #{_lambda_.20} parent=5 // pred_check_branch
      %280 = sbr.rel (%p278) target = $region40
    $region39: #{_lambda_.20} parent=5 // pred_region
      %s281 = ssub.s32 %s9, 2
      // Predicated region
      $region41: #{_lambda_.20} parent=39 // pred_check
        %p282 = pneg %p122
      $region42: #{_lambda_.20} parent=39 // pred_check_branch
        %284 = sbr.rel (%p282) target = $region44
      $region43: #{_lambda_.20} parent=39 // pred_region
        %p285 = scmp.lt.s32.totalorder %s20, 1
        %s286 = scalar_select %p285, %s20, 1
        %p287 = scmp.lt.s32.totalorder %s21, 0
        %s288 = scalar_select %p287, %s21, 0
        %s289 = sadd.s32 %s288, %s286
        %s290 = scalar_lea.vmem %s3, %s289
      $region44: #{_lambda_.20} parent=39 // pred_fallthru
        _
    $region40: #{_lambda_.20} parent=5 // pred_fallthru
      _
  $region6: #{_lambda_.20} parent=0 // loop_footer
    %s13 = sadd.s32 1, %s9
  $region7: #{_lambda_.20} parent=0 // loop_footer_branch
    %8 = sbr.rel target = $region3
  $region8: #{_lambda_.20} parent=0 // loop_exit
    _

// kernel: _lambda_.21
$region0: #{_lambda_.21}
  #allocation0 [shape = 'u32[]', space=smem, size = 0x4, offset = 0x4, fixed_abs, tag = 'smem constant byte address 0x4 - core index']
  #allocation1 [shape = 'u32[144,128]{1,0:T(1,128)}', space=vmem, size = 0x12000, scoped, tag = 'internal scratch']
  %s0 = inlined_call_operand.vmem [shape: bf16[2,2,11], index: 0, kind: input, shape index: {}]
  %s1 = inlined_call_operand.vmem [shape: bf16[9,2,2], index: 1, kind: input, shape index: {}]
  %s2 = inlined_call_operand.vmem [shape: f32[2,1], index: 2, kind: input, shape index: {}]
  %s3 = inlined_call_operand.vmem [shape: bf16[2,2,3], index: 3, kind: output, shape index: {}]
  %s4 = sld [smem:[#allocation0]]
  $region45: #{_lambda_.21} parent=0
    _
  %s6 = ssub.s32 1, %s4
  %s7 = scalar_select 0, %s6, %s4
  loop: start=0, step=1, limit=4
  $region2: #{_lambda_.21} parent=0 // loop_pre_header
    _
  $region3: #{_lambda_.21} parent=0 // loop_header
    %s9 = sphi 0, %s13
    %p10 = scmp.ge.s32.totalorder %s9, 4
    %s19 = sphi 0, %s21
    %s22 = sphi 0, %s19
    %s23 = sphi 0, %s22
    %s39 = sphi 0, %s23
    %s43 = sphi 0, %s43
    %s45 = sphi 0, %s43
    %s46 = sphi 0, %s45
    %s60 = sphi 0, %s46
    %s64 = sphi 0, %s64
    %s66 = sphi 0, %s64
    %s67 = sphi 0, %s66
    %s81 = sphi 0, %s67
    %s87 = sphi 0, %s89
    %s90 = sphi 0, %s87
    %s91 = sphi 0, %s90
    %s107 = sphi 0, %s91
  $region4: #{_lambda_.21} parent=0 // loop_header_branch
    %12 = sbr.rel (%p10) target = $region8
  $region5: #{_lambda_.21} parent=0 // loop_body
    %s14 = ssub.s32 %s9, 1
    %s15 = ssub.s32 %s9, 2
    %s16 = sadd.s32 %s9, 1
    %s17 = ssub.s32 %s9, %s16
    %p18 = scmp.eq.s32.totalorder %s17, 0
    %s20 = sadd.s32 %s19, 1
    %s21 = scalar_select %p18, %s19, %s20
    %p24 = pneg %p18
    %p25 = scmp.eq.s32.totalorder %s9, 1
    %p26 = por %p24, %p25
    %p27 = scmp.ne.s32.totalorder %s19, %s22
    %p28 = scmp.eq.s32.totalorder %s9, 0
    %p29 = por %p27, %p28
    %p30 = scmp.ne.s32.totalorder %s19, %s22
    %p31 = scmp.eq.s32.totalorder %s14, 1
    %p32 = por %p30, %p31
    %p33 = scmp.ne.s32.totalorder %s22, %s23
    %p34 = scmp.eq.s32.totalorder %s14, 0
    %p35 = por %p33, %p34
    %p36 = scmp.ne.s32.totalorder %s22, %s23
    %p37 = scmp.eq.s32.totalorder %s15, 1
    %p38 = por %p36, %p37
    %p40 = scmp.ne.s32.totalorder %s23, %s39
    %p41 = scmp.eq.s32.totalorder %s15, 0
    %p42 = por %p40, %p41
    %s44 = sadd.s32 %s43, 1
    %p47 = scmp.eq.s32.totalorder %s9, 1
    %p48 = scmp.ne.s32.totalorder %s43, %s45
    %p49 = scmp.eq.s32.totalorder %s9, 0
    %p50 = por %p48, %p49
    %p51 = scmp.ne.s32.totalorder %s43, %s45
    %p52 = scmp.eq.s32.totalorder %s14, 1
    %p53 = por %p51, %p52
    %p54 = scmp.ne.s32.totalorder %s45, %s46
    %p55 = scmp.eq.s32.totalorder %s14, 0
    %p56 = por %p54, %p55
    %p57 = scmp.ne.s32.totalorder %s45, %s46
    %p58 = scmp.eq.s32.totalorder %s15, 1
    %p59 = por %p57, %p58
    %p61 = scmp.ne.s32.totalorder %s46, %s60
    %p62 = scmp.eq.s32.totalorder %s15, 0
    %p63 = por %p61, %p62
    %s65 = sadd.s32 %s64, 1
    %p68 = scmp.eq.s32.totalorder %s9, 1
    %p69 = scmp.ne.s32.totalorder %s64, %s66
    %p70 = scmp.eq.s32.totalorder %s9, 0
    %p71 = por %p69, %p70
    %p72 = scmp.ne.s32.totalorder %s64, %s66
    %p73 = scmp.eq.s32.totalorder %s14, 1
    %p74 = por %p72, %p73
    %p75 = scmp.ne.s32.totalorder %s66, %s67
    %p76 = scmp.eq.s32.totalorder %s14, 0
    %p77 = por %p75, %p76
    %p78 = scmp.ne.s32.totalorder %s66, %s67
    %p79 = scmp.eq.s32.totalorder %s15, 1
    %p80 = por %p78, %p79
    %p82 = scmp.ne.s32.totalorder %s67, %s81
    %p83 = scmp.eq.s32.totalorder %s15, 0
    %p84 = por %p82, %p83
    %s85 = ssub.s32 %s9, %s16
    %p86 = scmp.eq.s32.totalorder %s85, 0
    %s88 = sadd.s32 %s87, 1
    %s89 = scalar_select %p86, %s87, %s88
    %p92 = pneg %p86
    %p93 = scmp.eq.s32.totalorder %s9, 1
    %p94 = por %p92, %p93
    %p95 = scmp.ne.s32.totalorder %s87, %s90
    %p96 = scmp.eq.s32.totalorder %s9, 0
    %p97 = por %p95, %p96
    %p98 = scmp.ne.s32.totalorder %s87, %s90
    %p99 = scmp.eq.s32.totalorder %s14, 1
    %p100 = por %p98, %p99
    %p101 = scmp.ne.s32.totalorder %s90, %s91
    %p102 = scmp.eq.s32.totalorder %s14, 0
    %p103 = por %p101, %p102
    %p104 = scmp.ne.s32.totalorder %s90, %s91
    %p105 = scmp.eq.s32.totalorder %s15, 1
    %p106 = por %p104, %p105
    %p108 = scmp.ne.s32.totalorder %s91, %s107
    %p109 = scmp.eq.s32.totalorder %s15, 0
    %p110 = por %p108, %p109
    %p111 = scmp.le.s32.totalorder 1, %s9
    %p112 = scmp.lt.s32.totalorder %s9, 3
    %p113 = pnand %p111, %p112
    %p114 = pneg %p113
    // Predicated region
    $region9: #{_lambda_.21} parent=5 // pred_check
      _
    $region10: #{_lambda_.21} parent=5 // pred_check_branch
      %116 = sbr.rel (%p113) target = $region12
    $region11: #{_lambda_.21} parent=5 // pred_region
      %s117 = ssub.s32 %s9, 1
      // Predicated region
      $region13: #{_lambda_.21} parent=11 // pred_check
        %p118 = pneg %p56
      $region14: #{_lambda_.21} parent=11 // pred_check_branch
        %120 = sbr.rel (%p118) target = $region16
      $region15: #{_lambda_.21} parent=11 // pred_region
        _
      $region16: #{_lambda_.21} parent=11 // pred_fallthru
        _
      // Predicated region
      $region17: #{_lambda_.21} parent=11 // pred_check
        %p121 = pneg %p77
      $region18: #{_lambda_.21} parent=11 // pred_check_branch
        %123 = sbr.rel (%p121) target = $region20
      $region19: #{_lambda_.21} parent=11 // pred_region
        _
      $region20: #{_lambda_.21} parent=11 // pred_fallthru
        _
    $region12: #{_lambda_.21} parent=5 // pred_fallthru
      _
    %p124 = scmp.lt.s32.totalorder %s9, 2
    // Predicated region
    $region21: #{_lambda_.21} parent=5 // pred_check
      %p125 = pneg %p124
    $region22: #{_lambda_.21} parent=5 // pred_check_branch
      %127 = sbr.rel (%p125) target = $region24
    $region23: #{_lambda_.21} parent=5 // pred_region
      // Predicated region
      $region25: #{_lambda_.21} parent=23 // pred_check
        %p128 = pneg %p29
      $region26: #{_lambda_.21} parent=23 // pred_check_branch
        %130 = sbr.rel (%p128) target = $region28
      $region27: #{_lambda_.21} parent=23 // pred_region
        %p131 = scmp.lt.s32.totalorder %s9, 1
        %s132 = scalar_select %p131, %s9, 1
        %s133 = scalar_lea.vmem %s0, %s132
      $region28: #{_lambda_.21} parent=23 // pred_fallthru
        _
    $region24: #{_lambda_.21} parent=5 // pred_fallthru
      _
    %p134 = scmp.le.s32.totalorder 1, %s9
    %p135 = scmp.lt.s32.totalorder %s9, 3
    %p136 = pnand %p134, %p135
    %p137 = pneg %p136
    // Predicated region
    $region29: #{_lambda_.21} parent=5 // pred_check
      _
    $region30: #{_lambda_.21} parent=5 // pred_check_branch
      %139 = sbr.rel (%p136) target = $region32
    $region31: #{_lambda_.21} parent=5 // pred_region
      %s140 = ssub.s32 %s9, 1
      %p141 = scmp.lt.s32.totalorder %s14, 1
      %s142 = scalar_select %p141, %s14, 1
      %s143 = scalar_lea.vmem %s0, %s142
      %p144 = pneg %p35
      %p145 = pneg %p32
      %p146 = pneg %p56
      %p147 = pneg %p53
      %p148 = pneg %p77
      %p149 = pneg %p74
      %p150 = pneg %p103
      %p151 = pneg %p100
      %p152 = scmp.lt.s32.totalorder %s14, 1
      %s153 = scalar_select %p152, %s14, 1
      %s154 = scalar_lea.vmem %s3, %s153
      %p155 = scmp.lt.s32.totalorder %s14, 1
      %s156 = scalar_select %p155, %s14, 1
      %s157 = scalar_lea.vmem %s0, %s156
      %p158 = scmp.lt.s32.totalorder %s14, 1
      %s159 = scalar_select %p158, %s14, 1
      %s160 = scalar_lea.vmem %s3, %s159
      %v162 = vld [vmem:[%s157] sm:$0x1]
      %v163 = vld [vmem:[%s1] sm:$0x1]
      %s164 = scalar_lea.vmem %s1, 1
      %v165 = vld [vmem:[%s164] sm:$0x1]
      %v168 = vunpack.c.l.s4 1966171168
      %v169 = vunpack.c.0.s8 %v168
      %v170 = vlaneseq
      %v171 = vshrl.u32 %v170, 7
      %v172 = vsub.s32 %v169, %v171
      %v173 = vrot.slane %v162, %v172
      %v175 = vunpack.c.l.s4 1966171168
      %v176 = vunpack.c.0.s8 %v175
      %v177 = vlaneseq
      %v178 = vshrl.u32 %v177, 7
      %v179 = vsub.s32 %v176, %v178
      %v180 = vrot.slane %v173, %v179
      %181 = vrot.lane.b32.xlu0 %v180, 127
      %v182 = vpop.permute.xlu0 %181
      %vm183 = vcmask 15360
      %v185 = vsel %vm183, %v165, 0
      %vm187 = vcmask 1040384
      %v189 = vsel %vm187, %v182, 0
      %191 = vmatprep.subr.bf16.mxu0 0
      %192 = vmatpush1.bf16.msra.mxu0 %v189
      %193 = vmatprep.subr.bf16.mxu0 0
      %194 = vmatpush1.bf16.msra.mxu0 0
      %195 = vmatprep.subr.bf16.mxu0 0
      %196 = vmatpush1.bf16.msra.mxu0 0
      %197 = vmatprep.subr.bf16.mxu0 0
      %198 = vmatpush1.bf16.msra.mxu0 0
      %199 = vmatprep.subr.bf16.mxu0 0
      %200 = vmatpush1.bf16.msra.mxu0 0
      %201 = vmatprep.subr.bf16.mxu0 0
      %202 = vmatpush1.bf16.msra.mxu0 0
      %203 = vmatprep.subr.bf16.mxu0 0
      %204 = vmatpush1.bf16.msra.mxu0 0
      %205 = vmatprep.subr.bf16.mxu0 0
      %206 = vmatpush1.bf16.msra.mxu0 0
      %207 = vmatprep.subr.bf16.mxu0 0
      %208 = vmatpush1.bf16.msra.mxu0 0
      %209 = vmatprep.subr.bf16.mxu0 0
      %210 = vmatpush1.bf16.msra.mxu0 0
      %211 = vmatprep.subr.bf16.mxu0 0
      %212 = vmatpush1.bf16.msra.mxu0 0
      %213 = vmatprep.subr.bf16.mxu0 0
      %214 = vmatpush1.bf16.msra.mxu0 0
      %215 = vmatprep.subr.bf16.mxu0 0
      %216 = vmatpush1.bf16.msra.mxu0 0
      %217 = vmatprep.subr.bf16.mxu0 0
      %218 = vmatpush1.bf16.msra.mxu0 0
      %219 = vmatprep.subr.bf16.mxu0 0
      %220 = vmatpush1.bf16.msra.mxu0 0
      %221 = vmatprep.subr.bf16.mxu0 0
      %222 = vmatpush1.bf16.msra.mxu0 0
      %223 = vmatprep.mubr.bf16.mxu0 0
      %224 = vmatmul.mubr.bf16.gmra.mrb[0].mxu0 %v185
      %v225 = vpop.f32.mrb[0].mxu0
      %v226 = vadd.f32 0.0, %v225
      %v227 = vpop.f32.mrb[0].mxu0
      %v228 = vpop.f32.mrb[0].mxu0
      %v229 = vpop.f32.mrb[0].mxu0
      %230 = vdwg.mxu0
      %v232 = vsel %vm183, %v163, 0
      %v235 = vsel %vm187, %v162, 0
      %237 = vmatprep.subr.bf16.mxu0 0
      %238 = vmatpush1.bf16.msra.mxu0 %v235
      %239 = vmatprep.subr.bf16.mxu0 0
      %240 = vmatpush1.bf16.msra.mxu0 0
      %241 = vmatprep.subr.bf16.mxu0 0
      %242 = vmatpush1.bf16.msra.mxu0 0
      %243 = vmatprep.subr.bf16.mxu0 0
      %244 = vmatpush1.bf16.msra.mxu0 0
      %245 = vmatprep.subr.bf16.mxu0 0
      %246 = vmatpush1.bf16.msra.mxu0 0
      %247 = vmatprep.subr.bf16.mxu0 0
      %248 = vmatpush1.bf16.msra.mxu0 0
      %249 = vmatprep.subr.bf16.mxu0 0
      %250 = vmatpush1.bf16.msra.mxu0 0
      %251 = vmatprep.subr.bf16.mxu0 0
      %252 = vmatpush1.bf16.msra.mxu0 0
      %253 = vmatprep.subr.bf16.mxu0 0
      %254 = vmatpush1.bf16.msra.mxu0 0
      %255 = vmatprep.subr.bf16.mxu0 0
      %256 = vmatpush1.bf16.msra.mxu0 0
      %257 = vmatprep.subr.bf16.mxu0 0
      %258 = vmatpush1.bf16.msra.mxu0 0
      %259 = vmatprep.subr.bf16.mxu0 0
      %260 = vmatpush1.bf16.msra.mxu0 0
      %261 = vmatprep.subr.bf16.mxu0 0
      %262 = vmatpush1.bf16.msra.mxu0 0
      %263 = vmatprep.subr.bf16.mxu0 0
      %264 = vmatpush1.bf16.msra.mxu0 0
      %265 = vmatprep.subr.bf16.mxu0 0
      %266 = vmatpush1.bf16.msra.mxu0 0
      %267 = vmatprep.subr.bf16.mxu0 0
      %268 = vmatpush1.bf16.msra.mxu0 0
      %269 = vmatprep.mubr.bf16.mxu0 0
      %270 = vmatmul.mubr.bf16.gmra.mrb[0].mxu0 %v232
      %v271 = vpop.f32.mrb[0].mxu0
      %v272 = vadd.f32 %v226, %v271
      %v273 = vpop.f32.mrb[0].mxu0
      %v274 = vpop.f32.mrb[0].mxu0
      %v275 = vpop.f32.mrb[0].mxu0
      %276 = vdwg.mxu0
      %v277 = vld [vmem:[%s157] sm:$0x1]
      %s278 = scalar_lea.vmem %s1, 2
      %v279 = vld [vmem:[%s278] sm:$0x1]
      %v282 = vunpack.c.l.s4 1966171168
      %v283 = vunpack.c.0.s8 %v282
      %v284 = vlaneseq
      %v285 = vshrl.u32 %v284, 7
      %v286 = vsub.s32 %v283, %v285
      %v287 = vrot.slane %v277, %v286
      %v289 = vunpack.c.l.s4 1966171168
      %v290 = vunpack.c.0.s8 %v289
      %v291 = vlaneseq
      %v292 = vshrl.u32 %v291, 7
      %v293 = vsub.s32 %v290, %v292
      %v294 = vrot.slane %v287, %v293
      %295 = vrot.lane.b32.xlu0 %v294, 126
      %v296 = vpop.permute.xlu0 %295
      %v298 = vsel %vm183, %v279, 0
      %v301 = vsel %vm187, %v296, 0
      %303 = vmatprep.subr.bf16.mxu0 0
      %304 = vmatpush1.bf16.msra.mxu0 %v301
      %305 = vmatprep.subr.bf16.mxu0 0
      %306 = vmatpush1.bf16.msra.mxu0 0
      %307 = vmatprep.subr.bf16.mxu0 0
      %308 = vmatpush1.bf16.msra.mxu0 0
      %309 = vmatprep.subr.bf16.mxu0 0
      %310 = vmatpush1.bf16.msra.mxu0 0
      %311 = vmatprep.subr.bf16.mxu0 0
      %312 = vmatpush1.bf16.msra.mxu0 0
      %313 = vmatprep.subr.bf16.mxu0 0
      %314 = vmatpush1.bf16.msra.mxu0 0
      %315 = vmatprep.subr.bf16.mxu0 0
      %316 = vmatpush1.bf16.msra.mxu0 0
      %317 = vmatprep.subr.bf16.mxu0 0
      %318 = vmatpush1.bf16.msra.mxu0 0
      %319 = vmatprep.subr.bf16.mxu0 0
      %320 = vmatpush1.bf16.msra.mxu0 0
      %321 = vmatprep.subr.bf16.mxu0 0
      %322 = vmatpush1.bf16.msra.mxu0 0
      %323 = vmatprep.subr.bf16.mxu0 0
      %324 = vmatpush1.bf16.msra.mxu0 0
      %325 = vmatprep.subr.bf16.mxu0 0
      %326 = vmatpush1.bf16.msra.mxu0 0
      %327 = vmatprep.subr.bf16.mxu0 0
      %328 = vmatpush1.bf16.msra.mxu0 0
      %329 = vmatprep.subr.bf16.mxu0 0
      %330 = vmatpush1.bf16.msra.mxu0 0
      %331 = vmatprep.subr.bf16.mxu0 0
      %332 = vmatpush1.bf16.msra.mxu0 0
      %333 = vmatprep.subr.bf16.mxu0 0
      %334 = vmatpush1.bf16.msra.mxu0 0
      %335 = vmatprep.mubr.bf16.mxu0 0
      %336 = vmatmul.mubr.bf16.gmra.mrb[0].mxu0 %v298
      %v337 = vpop.f32.mrb[0].mxu0
      %v338 = vadd.f32 0.0, %v337
      %v339 = vpop.f32.mrb[0].mxu0
      %v340 = vpop.f32.mrb[0].mxu0
      %v341 = vpop.f32.mrb[0].mxu0
      %342 = vdwg.mxu0
      %v343 = vadd.f32 %v272, %v338
      %v344 = vld [vmem:[%s157] sm:$0x1]
      %s345 = scalar_lea.vmem %s1, 3
      %v346 = vld [vmem:[%s345] sm:$0x1]
      %v349 = vunpack.c.l.s4 1966171168
      %v350 = vunpack.c.0.s8 %v349
      %v351 = vlaneseq
      %v352 = vshrl.u32 %v351, 7
      %v353 = vsub.s32 %v350, %v352
      %v354 = vrot.slane %v344, %v353
      %v356 = vunpack.c.l.s4 1966171168
      %v357 = vunpack.c.0.s8 %v356
      %v358 = vlaneseq
      %v359 = vshrl.u32 %v358, 7
      %v360 = vsub.s32 %v357, %v359
      %v361 = vrot.slane %v354, %v360
      %362 = vrot.lane.b32.xlu0 %v361, 125
      %v363 = vpop.permute.xlu0 %362
      %v365 = vsel %vm183, %v346, 0
      %v368 = vsel %vm187, %v363, 0
      %370 = vmatprep.subr.bf16.mxu0 0
      %371 = vmatpush1.bf16.msra.mxu0 %v368
      %372 = vmatprep.subr.bf16.mxu0 0
      %373 = vmatpush1.bf16.msra.mxu0 0
      %374 = vmatprep.subr.bf16.mxu0 0
      %375 = vmatpush1.bf16.msra.mxu0 0
      %376 = vmatprep.subr.bf16.mxu0 0
      %377 = vmatpush1.bf16.msra.mxu0 0
      %378 = vmatprep.subr.bf16.mxu0 0
      %379 = vmatpush1.bf16.msra.mxu0 0
      %380 = vmatprep.subr.bf16.mxu0 0
      %381 = vmatpush1.bf16.msra.mxu0 0
      %382 = vmatprep.subr.bf16.mxu0 0
      %383 = vmatpush1.bf16.msra.mxu0 0
      %384 = vmatprep.subr.bf16.mxu0 0
      %385 = vmatpush1.bf16.msra.mxu0 0
      %386 = vmatprep.subr.bf16.mxu0 0
      %387 = vmatpush1.bf16.msra.mxu0 0
      %388 = vmatprep.subr.bf16.mxu0 0
      %389 = vmatpush1.bf16.msra.mxu0 0
      %390 = vmatprep.subr.bf16.mxu0 0
      %391 = vmatpush1.bf16.msra.mxu0 0
      %392 = vmatprep.subr.bf16.mxu0 0
      %393 = vmatpush1.bf16.msra.mxu0 0
      %394 = vmatprep.subr.bf16.mxu0 0
      %395 = vmatpush1.bf16.msra.mxu0 0
      %396 = vmatprep.subr.bf16.mxu0 0
      %397 = vmatpush1.bf16.msra.mxu0 0
      %398 = vmatprep.subr.bf16.mxu0 0
      %399 = vmatpush1.bf16.msra.mxu0 0
      %400 = vmatprep.subr.bf16.mxu0 0
      %401 = vmatpush1.bf16.msra.mxu0 0
      %402 = vmatprep.mubr.bf16.mxu0 0
      %403 = vmatmul.mubr.bf16.gmra.mrb[0].mxu0 %v365
      %v404 = vpop.f32.mrb[0].mxu0
      %v405 = vadd.f32 0.0, %v404
      %v406 = vpop.f32.mrb[0].mxu0
      %v407 = vpop.f32.mrb[0].mxu0
      %v408 = vpop.f32.mrb[0].mxu0
      %409 = vdwg.mxu0
      %v410 = vadd.f32 %v343, %v405
      %v411 = vld [vmem:[%s157] sm:$0x1]
      %s412 = scalar_lea.vmem %s1, 4
      %v413 = vld [vmem:[%s412] sm:$0x1]
      %v416 = vunpack.c.l.s4 1966171168
      %v417 = vunpack.c.0.s8 %v416
      %v418 = vlaneseq
      %v419 = vshrl.u32 %v418, 7
      %v420 = vsub.s32 %v417, %v419
      %v421 = vrot.slane %v411, %v420
      %v423 = vunpack.c.l.s4 1966171168
      %v424 = vunpack.c.0.s8 %v423
      %v425 = vlaneseq
      %v426 = vshrl.u32 %v425, 7
      %v427 = vsub.s32 %v424, %v426
      %v428 = vrot.slane %v421, %v427
      %429 = vrot.lane.b32.xlu0 %v428, 124
      %v430 = vpop.permute.xlu0 %429
      %v432 = vsel %vm183, %v413, 0
      %v435 = vsel %vm187, %v430, 0
      %437 = vmatprep.subr.bf16.mxu0 0
      %438 = vmatpush1.bf16.msra.mxu0 %v435
      %439 = vmatprep.subr.bf16.mxu0 0
      %440 = vmatpush1.bf16.msra.mxu0 0
      %441 = vmatprep.subr.bf16.mxu0 0
      %442 = vmatpush1.bf16.msra.mxu0 0
      %443 = vmatprep.subr.bf16.mxu0 0
      %444 = vmatpush1.bf16.msra.mxu0 0
      %445 = vmatprep.subr.bf16.mxu0 0
      %446 = vmatpush1.bf16.msra.mxu0 0
      %447 = vmatprep.subr.bf16.mxu0 0
      %448 = vmatpush1.bf16.msra.mxu0 0
      %449 = vmatprep.subr.bf16.mxu0 0
      %450 = vmatpush1.bf16.msra.mxu0 0
      %451 = vmatprep.subr.bf16.mxu0 0
      %452 = vmatpush1.bf16.msra.mxu0 0
      %453 = vmatprep.subr.bf16.mxu0 0
      %454 = vmatpush1.bf16.msra.mxu0 0
      %455 = vmatprep.subr.bf16.mxu0 0
      %456 = vmatpush1.bf16.msra.mxu0 0
      %457 = vmatprep.subr.bf16.mxu0 0
      %458 = vmatpush1.bf16.msra.mxu0 0
      %459 = vmatprep.subr.bf16.mxu0 0
      %460 = vmatpush1.bf16.msra.mxu0 0
      %461 = vmatprep.subr.bf16.mxu0 0
      %462 = vmatpush1.bf16.msra.mxu0 0
      %463 = vmatprep.subr.bf16.mxu0 0
      %464 = vmatpush1.bf16.msra.mxu0 0
      %465 = vmatprep.subr.bf16.mxu0 0
      %466 = vmatpush1.bf16.msra.mxu0 0
      %467 = vmatprep.subr.bf16.mxu0 0
      %468 = vmatpush1.bf16.msra.mxu0 0
      %469 = vmatprep.mubr.bf16.mxu0 0
      %470 = vmatmul.mubr.bf16.gmra.mrb[0].mxu0 %v432
      %v471 = vpop.f32.mrb[0].mxu0
      %v472 = vadd.f32 0.0, %v471
      %v473 = vpop.f32.mrb[0].mxu0
      %v474 = vpop.f32.mrb[0].mxu0
      %v475 = vpop.f32.mrb[0].mxu0
      %476 = vdwg.mxu0
      %v477 = vadd.f32 %v410, %v472
      %v478 = vld [vmem:[%s157] sm:$0x1]
      %s479 = scalar_lea.vmem %s1, 5
      %v480 = vld [vmem:[%s479] sm:$0x1]
      %v483 = vunpack.c.l.s4 1966171168
      %v484 = vunpack.c.0.s8 %v483
      %v485 = vlaneseq
      %v486 = vshrl.u32 %v485, 7
      %v487 = vsub.s32 %v484, %v486
      %v488 = vrot.slane %v478, %v487
      %v490 = vunpack.c.l.s4 1966171168
      %v491 = vunpack.c.0.s8 %v490
      %v492 = vlaneseq
      %v493 = vshrl.u32 %v492, 7
      %v494 = vsub.s32 %v491, %v493
      %v495 = vrot.slane %v488, %v494
      %496 = vrot.lane.b32.xlu0 %v495, 123
      %v497 = vpop.permute.xlu0 %496
      %v499 = vsel %vm183, %v480, 0
      %v502 = vsel %vm187, %v497, 0
      %504 = vmatprep.subr.bf16.mxu0 0
      %505 = vmatpush1.bf16.msra.mxu0 %v502
      %506 = vmatprep.subr.bf16.mxu0 0
      %507 = vmatpush1.bf16.msra.mxu0 0
      %508 = vmatprep.subr.bf16.mxu0 0
      %509 = vmatpush1.bf16.msra.mxu0 0
      %510 = vmatprep.subr.bf16.mxu0 0
      %511 = vmatpush1.bf16.msra.mxu0 0
      %512 = vmatprep.subr.bf16.mxu0 0
      %513 = vmatpush1.bf16.msra.mxu0 0
      %514 = vmatprep.subr.bf16.mxu0 0
      %515 = vmatpush1.bf16.msra.mxu0 0
      %516 = vmatprep.subr.bf16.mxu0 0
      %517 = vmatpush1.bf16.msra.mxu0 0
      %518 = vmatprep.subr.bf16.mxu0 0
      %519 = vmatpush1.bf16.msra.mxu0 0
      %520 = vmatprep.subr.bf16.mxu0 0
      %521 = vmatpush1.bf16.msra.mxu0 0
      %522 = vmatprep.subr.bf16.mxu0 0
      %523 = vmatpush1.bf16.msra.mxu0 0
      %524 = vmatprep.subr.bf16.mxu0 0
      %525 = vmatpush1.bf16.msra.mxu0 0
      %526 = vmatprep.subr.bf16.mxu0 0
      %527 = vmatpush1.bf16.msra.mxu0 0
      %528 = vmatprep.subr.bf16.mxu0 0
      %529 = vmatpush1.bf16.msra.mxu0 0
      %530 = vmatprep.subr.bf16.mxu0 0
      %531 = vmatpush1.bf16.msra.mxu0 0
      %532 = vmatprep.subr.bf16.mxu0 0
      %533 = vmatpush1.bf16.msra.mxu0 0
      %534 = vmatprep.subr.bf16.mxu0 0
      %535 = vmatpush1.bf16.msra.mxu0 0
      %536 = vmatprep.mubr.bf16.mxu0 0
      %537 = vmatmul.mubr.bf16.gmra.mrb[0].mxu0 %v499
      %v538 = vpop.f32.mrb[0].mxu0
      %v539 = vadd.f32 0.0, %v538
      %v540 = vpop.f32.mrb[0].mxu0
      %v541 = vpop.f32.mrb[0].mxu0
      %v542 = vpop.f32.mrb[0].mxu0
      %543 = vdwg.mxu0
      %v544 = vadd.f32 %v477, %v539
      %v545 = vld [vmem:[%s157] sm:$0x1]
      %s546 = scalar_lea.vmem %s1, 6
      %v547 = vld [vmem:[%s546] sm:$0x1]
      %v550 = vunpack.c.l.s4 1966171168
      %v551 = vunpack.c.0.s8 %v550
      %v552 = vlaneseq
      %v553 = vshrl.u32 %v552, 7
      %v554 = vsub.s32 %v551, %v553
      %v555 = vrot.slane %v545, %v554
      %v557 = vunpack.c.l.s4 1966171168
      %v558 = vunpack.c.0.s8 %v557
      %v559 = vlaneseq
      %v560 = vshrl.u32 %v559, 7
      %v561 = vsub.s32 %v558, %v560
      %v562 = vrot.slane %v555, %v561
      %563 = vrot.lane.b32.xlu0 %v562, 122
      %v564 = vpop.permute.xlu0 %563
      %v566 = vsel %vm183, %v547, 0
      %v569 = vsel %vm187, %v564, 0
      %571 = vmatprep.subr.bf16.mxu0 0
      %572 = vmatpush1.bf16.msra.mxu0 %v569
      %573 = vmatprep.subr.bf16.mxu0 0
      %574 = vmatpush1.bf16.msra.mxu0 0
      %575 = vmatprep.subr.bf16.mxu0 0
      %576 = vmatpush1.bf16.msra.mxu0 0
      %577 = vmatprep.subr.bf16.mxu0 0
      %578 = vmatpush1.bf16.msra.mxu0 0
      %579 = vmatprep.subr.bf16.mxu0 0
      %580 = vmatpush1.bf16.msra.mxu0 0
      %581 = vmatprep.subr.bf16.mxu0 0
      %582 = vmatpush1.bf16.msra.mxu0 0
      %583 = vmatprep.subr.bf16.mxu0 0
      %584 = vmatpush1.bf16.msra.mxu0 0
      %585 = vmatprep.subr.bf16.mxu0 0
      %586 = vmatpush1.bf16.msra.mxu0 0
      %587 = vmatprep.subr.bf16.mxu0 0
      %588 = vmatpush1.bf16.msra.mxu0 0
      %589 = vmatprep.subr.bf16.mxu0 0
      %590 = vmatpush1.bf16.msra.mxu0 0
      %591 = vmatprep.subr.bf16.mxu0 0
      %592 = vmatpush1.bf16.msra.mxu0 0
      %593 = vmatprep.subr.bf16.mxu0 0
      %594 = vmatpush1.bf16.msra.mxu0 0
      %595 = vmatprep.subr.bf16.mxu0 0
      %596 = vmatpush1.bf16.msra.mxu0 0
      %597 = vmatprep.subr.bf16.mxu0 0
      %598 = vmatpush1.bf16.msra.mxu0 0
      %599 = vmatprep.subr.bf16.mxu0 0
      %600 = vmatpush1.bf16.msra.mxu0 0
      %601 = vmatprep.subr.bf16.mxu0 0
      %602 = vmatpush1.bf16.msra.mxu0 0
      %603 = vmatprep.mubr.bf16.mxu0 0
      %604 = vmatmul.mubr.bf16.gmra.mrb[0].mxu0 %v566
      %v605 = vpop.f32.mrb[0].mxu0
      %v606 = vadd.f32 0.0, %v605
      %v607 = vpop.f32.mrb[0].mxu0
      %v608 = vpop.f32.mrb[0].mxu0
      %v609 = vpop.f32.mrb[0].mxu0
      %610 = vdwg.mxu0
      %v611 = vadd.f32 %v544, %v606
      %v612 = vld [vmem:[%s157] sm:$0x1]
      %s613 = scalar_lea.vmem %s1, 7
      %v614 = vld [vmem:[%s613] sm:$0x1]
      %v617 = vunpack.c.l.s4 1966171168
      %v618 = vunpack.c.0.s8 %v617
      %v619 = vlaneseq
      %v620 = vshrl.u32 %v619, 7
      %v621 = vsub.s32 %v618, %v620
      %v622 = vrot.slane %v612, %v621
      %v624 = vunpack.c.l.s4 1966171168
      %v625 = vunpack.c.0.s8 %v624
      %v626 = vlaneseq
      %v627 = vshrl.u32 %v626, 7
      %v628 = vsub.s32 %v625, %v627
      %v629 = vrot.slane %v622, %v628
      %630 = vrot.lane.b32.xlu0 %v629, 121
      %v631 = vpop.permute.xlu0 %630
      %v633 = vsel %vm183, %v614, 0
      %v636 = vsel %vm187, %v631, 0
      %638 = vmatprep.subr.bf16.mxu0 0
      %639 = vmatpush1.bf16.msra.mxu0 %v636
      %640 = vmatprep.subr.bf16.mxu0 0
      %641 = vmatpush1.bf16.msra.mxu0 0
      %642 = vmatprep.subr.bf16.mxu0 0
      %643 = vmatpush1.bf16.msra.mxu0 0
      %644 = vmatprep.subr.bf16.mxu0 0
      %645 = vmatpush1.bf16.msra.mxu0 0
      %646 = vmatprep.subr.bf16.mxu0 0
      %647 = vmatpush1.bf16.msra.mxu0 0
      %648 = vmatprep.subr.bf16.mxu0 0
      %649 = vmatpush1.bf16.msra.mxu0 0
      %650 = vmatprep.subr.bf16.mxu0 0
      %651 = vmatpush1.bf16.msra.mxu0 0
      %652 = vmatprep.subr.bf16.mxu0 0
      %653 = vmatpush1.bf16.msra.mxu0 0
      %654 = vmatprep.subr.bf16.mxu0 0
      %655 = vmatpush1.bf16.msra.mxu0 0
      %656 = vmatprep.subr.bf16.mxu0 0
      %657 = vmatpush1.bf16.msra.mxu0 0
      %658 = vmatprep.subr.bf16.mxu0 0
      %659 = vmatpush1.bf16.msra.mxu0 0
      %660 = vmatprep.subr.bf16.mxu0 0
      %661 = vmatpush1.bf16.msra.mxu0 0
      %662 = vmatprep.subr.bf16.mxu0 0
      %663 = vmatpush1.bf16.msra.mxu0 0
      %664 = vmatprep.subr.bf16.mxu0 0
      %665 = vmatpush1.bf16.msra.mxu0 0
      %666 = vmatprep.subr.bf16.mxu0 0
      %667 = vmatpush1.bf16.msra.mxu0 0
      %668 = vmatprep.subr.bf16.mxu0 0
      %669 = vmatpush1.bf16.msra.mxu0 0
      %670 = vmatprep.mubr.bf16.mxu0 0
      %671 = vmatmul.mubr.bf16.gmra.mrb[0].mxu0 %v633
      %v672 = vpop.f32.mrb[0].mxu0
      %v673 = vadd.f32 0.0, %v672
      %v674 = vpop.f32.mrb[0].mxu0
      %v675 = vpop.f32.mrb[0].mxu0
      %v676 = vpop.f32.mrb[0].mxu0
      %677 = vdwg.mxu0
      %v678 = vadd.f32 %v611, %v673
      %v679 = vld [vmem:[%s157] sm:$0x1]
      %s680 = scalar_lea.vmem %s1, 8
      %v681 = vld [vmem:[%s680] sm:$0x1]
      %v684 = vunpack.c.l.s4 1966171168
      %v685 = vunpack.c.0.s8 %v684
      %v686 = vlaneseq
      %v687 = vshrl.u32 %v686, 7
      %v688 = vsub.s32 %v685, %v687
      %v689 = vrot.slane %v679, %v688
      %v691 = vunpack.c.l.s4 1966171168
      %v692 = vunpack.c.0.s8 %v691
      %v693 = vlaneseq
      %v694 = vshrl.u32 %v693, 7
      %v695 = vsub.s32 %v692, %v694
      %v696 = vrot.slane %v689, %v695
      %697 = vrot.lane.b32.xlu0 %v696, 120
      %v698 = vpop.permute.xlu0 %697
      %v700 = vsel %vm183, %v681, 0
      %v703 = vsel %vm187, %v698, 0
      %705 = vmatprep.subr.bf16.mxu0 0
      %706 = vmatpush1.bf16.msra.mxu0 %v703
      %707 = vmatprep.subr.bf16.mxu0 0
      %708 = vmatpush1.bf16.msra.mxu0 0
      %709 = vmatprep.subr.bf16.mxu0 0
      %710 = vmatpush1.bf16.msra.mxu0 0
      %711 = vmatprep.subr.bf16.mxu0 0
      %712 = vmatpush1.bf16.msra.mxu0 0
      %713 = vmatprep.subr.bf16.mxu0 0
      %714 = vmatpush1.bf16.msra.mxu0 0
      %715 = vmatprep.subr.bf16.mxu0 0
      %716 = vmatpush1.bf16.msra.mxu0 0
      %717 = vmatprep.subr.bf16.mxu0 0
      %718 = vmatpush1.bf16.msra.mxu0 0
      %719 = vmatprep.subr.bf16.mxu0 0
      %720 = vmatpush1.bf16.msra.mxu0 0
      %721 = vmatprep.subr.bf16.mxu0 0
      %722 = vmatpush1.bf16.msra.mxu0 0
      %723 = vmatprep.subr.bf16.mxu0 0
      %724 = vmatpush1.bf16.msra.mxu0 0
      %725 = vmatprep.subr.bf16.mxu0 0
      %726 = vmatpush1.bf16.msra.mxu0 0
      %727 = vmatprep.subr.bf16.mxu0 0
      %728 = vmatpush1.bf16.msra.mxu0 0
      %729 = vmatprep.subr.bf16.mxu0 0
      %730 = vmatpush1.bf16.msra.mxu0 0
      %731 = vmatprep.subr.bf16.mxu0 0
      %732 = vmatpush1.bf16.msra.mxu0 0
      %733 = vmatprep.subr.bf16.mxu0 0
      %734 = vmatpush1.bf16.msra.mxu0 0
      %735 = vmatprep.subr.bf16.mxu0 0
      %736 = vmatpush1.bf16.msra.mxu0 0
      %737 = vmatprep.mubr.bf16.mxu0 0
      %738 = vmatmul.mubr.bf16.gmra.mrb[0].mxu0 %v700
      %v739 = vpop.f32.mrb[0].mxu0
      %v740 = vadd.f32 0.0, %v739
      %v741 = vpop.f32.mrb[0].mxu0
      %v742 = vpop.f32.mrb[0].mxu0
      %v743 = vpop.f32.mrb[0].mxu0
      %744 = vdwg.mxu0
      %v745 = vadd.f32 %v678, %v740
      %v746 = vld [vmem:[%s2] sm:$0x3]
      %748 = vset.pattern.permute.xlu0 0
      %749 = vperm.xlu0 %748, %v746
      %v750 = vpop.permute.xlu0 %749
      %v752 = vadd.f32 %v745, %v750
      %v753 = vmax.f32 %v752, 0.0
      %v754 = vpack.c.bf16 %v753, %v753
      %vm755 = vcmask 16384
      %756 = vst.msk [vmem:[%s160] sm:$0x1] %vm755, %v754
      %p757 = scmp.lt.s32.totalorder %s14, 1
      %s758 = scalar_select %p757, %s14, 1
      %s759 = scalar_lea.vmem %s3, %s758
      // Predicated region
      $region33: #{_lambda_.21} parent=31 // pred_check
        %p760 = pneg %p100
      $region34: #{_lambda_.21} parent=31 // pred_check_branch
        %762 = sbr.rel (%p760) target = $region36
      $region35: #{_lambda_.21} parent=31 // pred_region
        _
      $region36: #{_lambda_.21} parent=31 // pred_fallthru
        _
    $region32: #{_lambda_.21} parent=5 // pred_fallthru
      _
    %p763 = scmp.le.s32.totalorder 2, %s9
    // Predicated region
    $region37: #{_lambda_.21} parent=5 // pred_check
      %p764 = pneg %p763
    $region38: #{_lambda_.21} parent=5 // pred_check_branch
      %766 = sbr.rel (%p764) target = $region40
    $region39: #{_lambda_.21} parent=5 // pred_region
      %s767 = ssub.s32 %s9, 2
      // Predicated region
      $region41: #{_lambda_.21} parent=39 // pred_check
        %p768 = pneg %p106
      $region42: #{_lambda_.21} parent=39 // pred_check_branch
        %770 = sbr.rel (%p768) target = $region44
      $region43: #{_lambda_.21} parent=39 // pred_region
        %p771 = scmp.lt.s32.totalorder %s15, 1
        %s772 = scalar_select %p771, %s15, 1
        %s773 = scalar_lea.vmem %s3, %s772
      $region44: #{_lambda_.21} parent=39 // pred_fallthru
        _
    $region40: #{_lambda_.21} parent=5 // pred_fallthru
      _
  $region6: #{_lambda_.21} parent=0 // loop_footer
    %s13 = sadd.s32 1, %s9
  $region7: #{_lambda_.21} parent=0 // loop_footer_branch
    %8 = sbr.rel target = $region3
  $region8: #{_lambda_.21} parent=0 // loop_exit
    _

// kernel: _lambda_.23
$region0: #{_lambda_.23}
  #allocation0 [shape = 'u32[]', space=smem, size = 0x4, offset = 0x4, fixed_abs, tag = 'smem constant byte address 0x4 - core index']
  #allocation1 [shape = 'u32[144,128]{1,0:T(1,128)}', space=vmem, size = 0x12000, scoped, tag = 'internal scratch']
  %s0 = inlined_call_operand.vmem [shape: bf16[2,2,11], index: 0, kind: input, shape index: {}]
  %s1 = inlined_call_operand.vmem [shape: bf16[9,2,2], index: 1, kind: input, shape index: {}]
  %s2 = inlined_call_operand.vmem [shape: f32[2,1], index: 2, kind: input, shape index: {}]
  %s3 = inlined_call_operand.vmem [shape: bf16[2,2,3], index: 3, kind: output, shape index: {}]
  %s4 = sld [smem:[#allocation0]]
  $region45: #{_lambda_.23} parent=0
    _
  %s6 = ssub.s32 1, %s4
  %s7 = scalar_select 0, %s6, %s4
  loop: start=0, step=1, limit=4
  $region2: #{_lambda_.23} parent=0 // loop_pre_header
    _
  $region3: #{_lambda_.23} parent=0 // loop_header
    %s9 = sphi 0, %s13
    %p10 = scmp.ge.s32.totalorder %s9, 4
    %s19 = sphi 0, %s21
    %s22 = sphi 0, %s19
    %s23 = sphi 0, %s22
    %s39 = sphi 0, %s23
    %s43 = sphi 0, %s43
    %s45 = sphi 0, %s43
    %s46 = sphi 0, %s45
    %s60 = sphi 0, %s46
    %s64 = sphi 0, %s64
    %s66 = sphi 0, %s64
    %s67 = sphi 0, %s66
    %s81 = sphi 0, %s67
    %s87 = sphi 0, %s89
    %s90 = sphi 0, %s87
    %s91 = sphi 0, %s90
    %s107 = sphi 0, %s91
  $region4: #{_lambda_.23} parent=0 // loop_header_branch
    %12 = sbr.rel (%p10) target = $region8
  $region5: #{_lambda_.23} parent=0 // loop_body
    %s14 = ssub.s32 %s9, 1
    %s15 = ssub.s32 %s9, 2
    %s16 = sadd.s32 %s9, 1
    %s17 = ssub.s32 %s9, %s16
    %p18 = scmp.eq.s32.totalorder %s17, 0
    %s20 = sadd.s32 %s19, 1
    %s21 = scalar_select %p18, %s19, %s20
    %p24 = pneg %p18
    %p25 = scmp.eq.s32.totalorder %s9, 1
    %p26 = por %p24, %p25
    %p27 = scmp.ne.s32.totalorder %s19, %s22
    %p28 = scmp.eq.s32.totalorder %s9, 0
    %p29 = por %p27, %p28
    %p30 = scmp.ne.s32.totalorder %s19, %s22
    %p31 = scmp.eq.s32.totalorder %s14, 1
    %p32 = por %p30, %p31
    %p33 = scmp.ne.s32.totalorder %s22, %s23
    %p34 = scmp.eq.s32.totalorder %s14, 0
    %p35 = por %p33, %p34
    %p36 = scmp.ne.s32.totalorder %s22, %s23
    %p37 = scmp.eq.s32.totalorder %s15, 1
    %p38 = por %p36, %p37
    %p40 = scmp.ne.s32.totalorder %s23, %s39
    %p41 = scmp.eq.s32.totalorder %s15, 0
    %p42 = por %p40, %p41
    %s44 = sadd.s32 %s43, 1
    %p47 = scmp.eq.s32.totalorder %s9, 1
    %p48 = scmp.ne.s32.totalorder %s43, %s45
    %p49 = scmp.eq.s32.totalorder %s9, 0
    %p50 = por %p48, %p49
    %p51 = scmp.ne.s32.totalorder %s43, %s45
    %p52 = scmp.eq.s32.totalorder %s14, 1
    %p53 = por %p51, %p52
    %p54 = scmp.ne.s32.totalorder %s45, %s46
    %p55 = scmp.eq.s32.totalorder %s14, 0
    %p56 = por %p54, %p55
    %p57 = scmp.ne.s32.totalorder %s45, %s46
    %p58 = scmp.eq.s32.totalorder %s15, 1
    %p59 = por %p57, %p58
    %p61 = scmp.ne.s32.totalorder %s46, %s60
    %p62 = scmp.eq.s32.totalorder %s15, 0
    %p63 = por %p61, %p62
    %s65 = sadd.s32 %s64, 1
    %p68 = scmp.eq.s32.totalorder %s9, 1
    %p69 = scmp.ne.s32.totalorder %s64, %s66
    %p70 = scmp.eq.s32.totalorder %s9, 0
    %p71 = por %p69, %p70
    %p72 = scmp.ne.s32.totalorder %s64, %s66
    %p73 = scmp.eq.s32.totalorder %s14, 1
    %p74 = por %p72, %p73
    %p75 = scmp.ne.s32.totalorder %s66, %s67
    %p76 = scmp.eq.s32.totalorder %s14, 0
    %p77 = por %p75, %p76
    %p78 = scmp.ne.s32.totalorder %s66, %s67
    %p79 = scmp.eq.s32.totalorder %s15, 1
    %p80 = por %p78, %p79
    %p82 = scmp.ne.s32.totalorder %s67, %s81
    %p83 = scmp.eq.s32.totalorder %s15, 0
    %p84 = por %p82, %p83
    %s85 = ssub.s32 %s9, %s16
    %p86 = scmp.eq.s32.totalorder %s85, 0
    %s88 = sadd.s32 %s87, 1
    %s89 = scalar_select %p86, %s87, %s88
    %p92 = pneg %p86
    %p93 = scmp.eq.s32.totalorder %s9, 1
    %p94 = por %p92, %p93
    %p95 = scmp.ne.s32.totalorder %s87, %s90
    %p96 = scmp.eq.s32.totalorder %s9, 0
    %p97 = por %p95, %p96
    %p98 = scmp.ne.s32.totalorder %s87, %s90
    %p99 = scmp.eq.s32.totalorder %s14, 1
    %p100 = por %p98, %p99
    %p101 = scmp.ne.s32.totalorder %s90, %s91
    %p102 = scmp.eq.s32.totalorder %s14, 0
    %p103 = por %p101, %p102
    %p104 = scmp.ne.s32.totalorder %s90, %s91
    %p105 = scmp.eq.s32.totalorder %s15, 1
    %p106 = por %p104, %p105
    %p108 = scmp.ne.s32.totalorder %s91, %s107
    %p109 = scmp.eq.s32.totalorder %s15, 0
    %p110 = por %p108, %p109
    %p111 = scmp.le.s32.totalorder 1, %s9
    %p112 = scmp.lt.s32.totalorder %s9, 3
    %p113 = pnand %p111, %p112
    %p114 = pneg %p113
    // Predicated region
    $region9: #{_lambda_.23} parent=5 // pred_check
      _
    $region10: #{_lambda_.23} parent=5 // pred_check_branch
      %116 = sbr.rel (%p113) target = $region12
    $region11: #{_lambda_.23} parent=5 // pred_region
      %s117 = ssub.s32 %s9, 1
      // Predicated region
      $region13: #{_lambda_.23} parent=11 // pred_check
        %p118 = pneg %p56
      $region14: #{_lambda_.23} parent=11 // pred_check_branch
        %120 = sbr.rel (%p118) target = $region16
      $region15: #{_lambda_.23} parent=11 // pred_region
        _
      $region16: #{_lambda_.23} parent=11 // pred_fallthru
        _
      // Predicated region
      $region17: #{_lambda_.23} parent=11 // pred_check
        %p121 = pneg %p77
      $region18: #{_lambda_.23} parent=11 // pred_check_branch
        %123 = sbr.rel (%p121) target = $region20
      $region19: #{_lambda_.23} parent=11 // pred_region
        _
      $region20: #{_lambda_.23} parent=11 // pred_fallthru
        _
    $region12: #{_lambda_.23} parent=5 // pred_fallthru
      _
    %p124 = scmp.lt.s32.totalorder %s9, 2
    // Predicated region
    $region21: #{_lambda_.23} parent=5 // pred_check
      %p125 = pneg %p124
    $region22: #{_lambda_.23} parent=5 // pred_check_branch
      %127 = sbr.rel (%p125) target = $region24
    $region23: #{_lambda_.23} parent=5 // pred_region
      // Predicated region
      $region25: #{_lambda_.23} parent=23 // pred_check
        %p128 = pneg %p29
      $region26: #{_lambda_.23} parent=23 // pred_check_branch
        %130 = sbr.rel (%p128) target = $region28
      $region27: #{_lambda_.23} parent=23 // pred_region
        %p131 = scmp.lt.s32.totalorder %s9, 1
        %s132 = scalar_select %p131, %s9, 1
        %s133 = scalar_lea.vmem %s0, %s132
      $region28: #{_lambda_.23} parent=23 // pred_fallthru
        _
    $region24: #{_lambda_.23} parent=5 // pred_fallthru
      _
    %p134 = scmp.le.s32.totalorder 1, %s9
    %p135 = scmp.lt.s32.totalorder %s9, 3
    %p136 = pnand %p134, %p135
    %p137 = pneg %p136
    // Predicated region
    $region29: #{_lambda_.23} parent=5 // pred_check
      _
    $region30: #{_lambda_.23} parent=5 // pred_check_branch
      %139 = sbr.rel (%p136) target = $region32
    $region31: #{_lambda_.23} parent=5 // pred_region
      %s140 = ssub.s32 %s9, 1
      %p141 = scmp.lt.s32.totalorder %s14, 1
      %s142 = scalar_select %p141, %s14, 1
      %s143 = scalar_lea.vmem %s0, %s142
      %p144 = pneg %p35
      %p145 = pneg %p32
      %p146 = pneg %p56
      %p147 = pneg %p53
      %p148 = pneg %p77
      %p149 = pneg %p74
      %p150 = pneg %p103
      %p151 = pneg %p100
      %p152 = scmp.lt.s32.totalorder %s14, 1
      %s153 = scalar_select %p152, %s14, 1
      %s154 = scalar_lea.vmem %s3, %s153
      %p155 = scmp.lt.s32.totalorder %s14, 1
      %s156 = scalar_select %p155, %s14, 1
      %s157 = scalar_lea.vmem %s0, %s156
      %p158 = scmp.lt.s32.totalorder %s14, 1
      %s159 = scalar_select %p158, %s14, 1
      %s160 = scalar_lea.vmem %s3, %s159
      %v162 = vld [vmem:[%s157] sm:$0x1]
      %v163 = vld [vmem:[%s1] sm:$0x1]
      %s164 = scalar_lea.vmem %s1, 1
      %v165 = vld [vmem:[%s164] sm:$0x1]
      %v168 = vunpack.c.l.s4 1966171168
      %v169 = vunpack.c.0.s8 %v168
      %v170 = vlaneseq
      %v171 = vshrl.u32 %v170, 7
      %v172 = vsub.s32 %v169, %v171
      %v173 = vrot.slane %v162, %v172
      %v175 = vunpack.c.l.s4 1966171168
      %v176 = vunpack.c.0.s8 %v175
      %v177 = vlaneseq
      %v178 = vshrl.u32 %v177, 7
      %v179 = vsub.s32 %v176, %v178
      %v180 = vrot.slane %v173, %v179
      %181 = vrot.lane.b32.xlu0 %v180, 127
      %v182 = vpop.permute.xlu0 %181
      %vm183 = vcmask 15360
      %v185 = vsel %vm183, %v165, 0
      %vm187 = vcmask 1040384
      %v189 = vsel %vm187, %v182, 0
      %191 = vmatprep.subr.bf16.mxu0 0
      %192 = vmatpush1.bf16.msra.mxu0 %v189
      %193 = vmatprep.subr.bf16.mxu0 0
      %194 = vmatpush1.bf16.msra.mxu0 0
      %195 = vmatprep.subr.bf16.mxu0 0
      %196 = vmatpush1.bf16.msra.mxu0 0
      %197 = vmatprep.subr.bf16.mxu0 0
      %198 = vmatpush1.bf16.msra.mxu0 0
      %199 = vmatprep.subr.bf16.mxu0 0
      %200 = vmatpush1.bf16.msra.mxu0 0
      %201 = vmatprep.subr.bf16.mxu0 0
      %202 = vmatpush1.bf16.msra.mxu0 0
      %203 = vmatprep.subr.bf16.mxu0 0
      %204 = vmatpush1.bf16.msra.mxu0 0
      %205 = vmatprep.subr.bf16.mxu0 0
      %206 = vmatpush1.bf16.msra.mxu0 0
      %207 = vmatprep.subr.bf16.mxu0 0
      %208 = vmatpush1.bf16.msra.mxu0 0
      %209 = vmatprep.subr.bf16.mxu0 0
      %210 = vmatpush1.bf16.msra.mxu0 0
      %211 = vmatprep.subr.bf16.mxu0 0
      %212 = vmatpush1.bf16.msra.mxu0 0
      %213 = vmatprep.subr.bf16.mxu0 0
      %214 = vmatpush1.bf16.msra.mxu0 0
      %215 = vmatprep.subr.bf16.mxu0 0
      %216 = vmatpush1.bf16.msra.mxu0 0
      %217 = vmatprep.subr.bf16.mxu0 0
      %218 = vmatpush1.bf16.msra.mxu0 0
      %219 = vmatprep.subr.bf16.mxu0 0
      %220 = vmatpush1.bf16.msra.mxu0 0
      %221 = vmatprep.subr.bf16.mxu0 0
      %222 = vmatpush1.bf16.msra.mxu0 0
      %223 = vmatprep.mubr.bf16.mxu0 0
      %224 = vmatmul.mubr.bf16.gmra.mrb[0].mxu0 %v185
      %v225 = vpop.f32.mrb[0].mxu0
      %v226 = vadd.f32 0.0, %v225
      %v227 = vpop.f32.mrb[0].mxu0
      %v228 = vpop.f32.mrb[0].mxu0
      %v229 = vpop.f32.mrb[0].mxu0
      %230 = vdwg.mxu0
      %v232 = vsel %vm183, %v163, 0
      %v235 = vsel %vm187, %v162, 0
      %237 = vmatprep.subr.bf16.mxu0 0
      %238 = vmatpush1.bf16.msra.mxu0 %v235
      %239 = vmatprep.subr.bf16.mxu0 0
      %240 = vmatpush1.bf16.msra.mxu0 0
      %241 = vmatprep.subr.bf16.mxu0 0
      %242 = vmatpush1.bf16.msra.mxu0 0
      %243 = vmatprep.subr.bf16.mxu0 0
      %244 = vmatpush1.bf16.msra.mxu0 0
      %245 = vmatprep.subr.bf16.mxu0 0
      %246 = vmatpush1.bf16.msra.mxu0 0
      %247 = vmatprep.subr.bf16.mxu0 0
      %248 = vmatpush1.bf16.msra.mxu0 0
      %249 = vmatprep.subr.bf16.mxu0 0
      %250 = vmatpush1.bf16.msra.mxu0 0
      %251 = vmatprep.subr.bf16.mxu0 0
      %252 = vmatpush1.bf16.msra.mxu0 0
      %253 = vmatprep.subr.bf16.mxu0 0
      %254 = vmatpush1.bf16.msra.mxu0 0
      %255 = vmatprep.subr.bf16.mxu0 0
      %256 = vmatpush1.bf16.msra.mxu0 0
      %257 = vmatprep.subr.bf16.mxu0 0
      %258 = vmatpush1.bf16.msra.mxu0 0
      %259 = vmatprep.subr.bf16.mxu0 0
      %260 = vmatpush1.bf16.msra.mxu0 0
      %261 = vmatprep.subr.bf16.mxu0 0
      %262 = vmatpush1.bf16.msra.mxu0 0
      %263 = vmatprep.subr.bf16.mxu0 0
      %264 = vmatpush1.bf16.msra.mxu0 0
      %265 = vmatprep.subr.bf16.mxu0 0
      %266 = vmatpush1.bf16.msra.mxu0 0
      %267 = vmatprep.subr.bf16.mxu0 0
      %268 = vmatpush1.bf16.msra.mxu0 0
      %269 = vmatprep.mubr.bf16.mxu0 0
      %270 = vmatmul.mubr.bf16.gmra.mrb[0].mxu0 %v232
      %v271 = vpop.f32.mrb[0].mxu0
      %v272 = vadd.f32 %v226, %v271
      %v273 = vpop.f32.mrb[0].mxu0
      %v274 = vpop.f32.mrb[0].mxu0
      %v275 = vpop.f32.mrb[0].mxu0
      %276 = vdwg.mxu0
      %v277 = vld [vmem:[%s157] sm:$0x1]
      %s278 = scalar_lea.vmem %s1, 2
      %v279 = vld [vmem:[%s278] sm:$0x1]
      %v282 = vunpack.c.l.s4 1966171168
      %v283 = vunpack.c.0.s8 %v282
      %v284 = vlaneseq
      %v285 = vshrl.u32 %v284, 7
      %v286 = vsub.s32 %v283, %v285
      %v287 = vrot.slane %v277, %v286
      %v289 = vunpack.c.l.s4 1966171168
      %v290 = vunpack.c.0.s8 %v289
      %v291 = vlaneseq
      %v292 = vshrl.u32 %v291, 7
      %v293 = vsub.s32 %v290, %v292
      %v294 = vrot.slane %v287, %v293
      %295 = vrot.lane.b32.xlu0 %v294, 126
      %v296 = vpop.permute.xlu0 %295
      %v298 = vsel %vm183, %v279, 0
      %v301 = vsel %vm187, %v296, 0
      %303 = vmatprep.subr.bf16.mxu0 0
      %304 = vmatpush1.bf16.msra.mxu0 %v301
      %305 = vmatprep.subr.bf16.mxu0 0
      %306 = vmatpush1.bf16.msra.mxu0 0
      %307 = vmatprep.subr.bf16.mxu0 0
      %308 = vmatpush1.bf16.msra.mxu0 0
      %309 = vmatprep.subr.bf16.mxu0 0
      %310 = vmatpush1.bf16.msra.mxu0 0
      %311 = vmatprep.subr.bf16.mxu0 0
      %312 = vmatpush1.bf16.msra.mxu0 0
      %313 = vmatprep.subr.bf16.mxu0 0
      %314 = vmatpush1.bf16.msra.mxu0 0
      %315 = vmatprep.subr.bf16.mxu0 0
      %316 = vmatpush1.bf16.msra.mxu0 0
      %317 = vmatprep.subr.bf16.mxu0 0
      %318 = vmatpush1.bf16.msra.mxu0 0
      %319 = vmatprep.subr.bf16.mxu0 0
      %320 = vmatpush1.bf16.msra.mxu0 0
      %321 = vmatprep.subr.bf16.mxu0 0
      %322 = vmatpush1.bf16.msra.mxu0 0
      %323 = vmatprep.subr.bf16.mxu0 0
      %324 = vmatpush1.bf16.msra.mxu0 0
      %325 = vmatprep.subr.bf16.mxu0 0
      %326 = vmatpush1.bf16.msra.mxu0 0
      %327 = vmatprep.subr.bf16.mxu0 0
      %328 = vmatpush1.bf16.msra.mxu0 0
      %329 = vmatprep.subr.bf16.mxu0 0
      %330 = vmatpush1.bf16.msra.mxu0 0
      %331 = vmatprep.subr.bf16.mxu0 0
      %332 = vmatpush1.bf16.msra.mxu0 0
      %333 = vmatprep.subr.bf16.mxu0 0
      %334 = vmatpush1.bf16.msra.mxu0 0
      %335 = vmatprep.mubr.bf16.mxu0 0
      %336 = vmatmul.mubr.bf16.gmra.mrb[0].mxu0 %v298
      %v337 = vpop.f32.mrb[0].mxu0
      %v338 = vadd.f32 0.0, %v337
      %v339 = vpop.f32.mrb[0].mxu0
      %v340 = vpop.f32.mrb[0].mxu0
      %v341 = vpop.f32.mrb[0].mxu0
      %342 = vdwg.mxu0
      %v343 = vadd.f32 %v272, %v338
      %v344 = vld [vmem:[%s157] sm:$0x1]
      %s345 = scalar_lea.vmem %s1, 3
      %v346 = vld [vmem:[%s345] sm:$0x1]
      %v349 = vunpack.c.l.s4 1966171168
      %v350 = vunpack.c.0.s8 %v349
      %v351 = vlaneseq
      %v352 = vshrl.u32 %v351, 7
      %v353 = vsub.s32 %v350, %v352
      %v354 = vrot.slane %v344, %v353
      %v356 = vunpack.c.l.s4 1966171168
      %v357 = vunpack.c.0.s8 %v356
      %v358 = vlaneseq
      %v359 = vshrl.u32 %v358, 7
      %v360 = vsub.s32 %v357, %v359
      %v361 = vrot.slane %v354, %v360
      %362 = vrot.lane.b32.xlu0 %v361, 125
      %v363 = vpop.permute.xlu0 %362
      %v365 = vsel %vm183, %v346, 0
      %v368 = vsel %vm187, %v363, 0
      %370 = vmatprep.subr.bf16.mxu0 0
      %371 = vmatpush1.bf16.msra.mxu0 %v368
      %372 = vmatprep.subr.bf16.mxu0 0
      %373 = vmatpush1.bf16.msra.mxu0 0
      %374 = vmatprep.subr.bf16.mxu0 0
      %375 = vmatpush1.bf16.msra.mxu0 0
      %376 = vmatprep.subr.bf16.mxu0 0
      %377 = vmatpush1.bf16.msra.mxu0 0
      %378 = vmatprep.subr.bf16.mxu0 0
      %379 = vmatpush1.bf16.msra.mxu0 0
      %380 = vmatprep.subr.bf16.mxu0 0
      %381 = vmatpush1.bf16.msra.mxu0 0
      %382 = vmatprep.subr.bf16.mxu0 0
      %383 = vmatpush1.bf16.msra.mxu0 0
      %384 = vmatprep.subr.bf16.mxu0 0
      %385 = vmatpush1.bf16.msra.mxu0 0
      %386 = vmatprep.subr.bf16.mxu0 0
      %387 = vmatpush1.bf16.msra.mxu0 0
      %388 = vmatprep.subr.bf16.mxu0 0
      %389 = vmatpush1.bf16.msra.mxu0 0
      %390 = vmatprep.subr.bf16.mxu0 0
      %391 = vmatpush1.bf16.msra.mxu0 0
      %392 = vmatprep.subr.bf16.mxu0 0
      %393 = vmatpush1.bf16.msra.mxu0 0
      %394 = vmatprep.subr.bf16.mxu0 0
      %395 = vmatpush1.bf16.msra.mxu0 0
      %396 = vmatprep.subr.bf16.mxu0 0
      %397 = vmatpush1.bf16.msra.mxu0 0
      %398 = vmatprep.subr.bf16.mxu0 0
      %399 = vmatpush1.bf16.msra.mxu0 0
      %400 = vmatprep.subr.bf16.mxu0 0
      %401 = vmatpush1.bf16.msra.mxu0 0
      %402 = vmatprep.mubr.bf16.mxu0 0
      %403 = vmatmul.mubr.bf16.gmra.mrb[0].mxu0 %v365
      %v404 = vpop.f32.mrb[0].mxu0
      %v405 = vadd.f32 0.0, %v404
      %v406 = vpop.f32.mrb[0].mxu0
      %v407 = vpop.f32.mrb[0].mxu0
      %v408 = vpop.f32.mrb[0].mxu0
      %409 = vdwg.mxu0
      %v410 = vadd.f32 %v343, %v405
      %v411 = vld [vmem:[%s157] sm:$0x1]
      %s412 = scalar_lea.vmem %s1, 4
      %v413 = vld [vmem:[%s412] sm:$0x1]
      %v416 = vunpack.c.l.s4 1966171168
      %v417 = vunpack.c.0.s8 %v416
      %v418 = vlaneseq
      %v419 = vshrl.u32 %v418, 7
      %v420 = vsub.s32 %v417, %v419
      %v421 = vrot.slane %v411, %v420
      %v423 = vunpack.c.l.s4 1966171168
      %v424 = vunpack.c.0.s8 %v423
      %v425 = vlaneseq
      %v426 = vshrl.u32 %v425, 7
      %v427 = vsub.s32 %v424, %v426
      %v428 = vrot.slane %v421, %v427
      %429 = vrot.lane.b32.xlu0 %v428, 124
      %v430 = vpop.permute.xlu0 %429
      %v432 = vsel %vm183, %v413, 0
      %v435 = vsel %vm187, %v430, 0
      %437 = vmatprep.subr.bf16.mxu0 0
      %438 = vmatpush1.bf16.msra.mxu0 %v435
      %439 = vmatprep.subr.bf16.mxu0 0
      %440 = vmatpush1.bf16.msra.mxu0 0
      %441 = vmatprep.subr.bf16.mxu0 0
      %442 = vmatpush1.bf16.msra.mxu0 0
      %443 = vmatprep.subr.bf16.mxu0 0
      %444 = vmatpush1.bf16.msra.mxu0 0
      %445 = vmatprep.subr.bf16.mxu0 0
      %446 = vmatpush1.bf16.msra.mxu0 0
      %447 = vmatprep.subr.bf16.mxu0 0
      %448 = vmatpush1.bf16.msra.mxu0 0
      %449 = vmatprep.subr.bf16.mxu0 0
      %450 = vmatpush1.bf16.msra.mxu0 0
      %451 = vmatprep.subr.bf16.mxu0 0
      %452 = vmatpush1.bf16.msra.mxu0 0
      %453 = vmatprep.subr.bf16.mxu0 0
      %454 = vmatpush1.bf16.msra.mxu0 0
      %455 = vmatprep.subr.bf16.mxu0 0
      %456 = vmatpush1.bf16.msra.mxu0 0
      %457 = vmatprep.subr.bf16.mxu0 0
      %458 = vmatpush1.bf16.msra.mxu0 0
      %459 = vmatprep.subr.bf16.mxu0 0
      %460 = vmatpush1.bf16.msra.mxu0 0
      %461 = vmatprep.subr.bf16.mxu0 0
      %462 = vmatpush1.bf16.msra.mxu0 0
      %463 = vmatprep.subr.bf16.mxu0 0
      %464 = vmatpush1.bf16.msra.mxu0 0
      %465 = vmatprep.subr.bf16.mxu0 0
      %466 = vmatpush1.bf16.msra.mxu0 0
      %467 = vmatprep.subr.bf16.mxu0 0
      %468 = vmatpush1.bf16.msra.mxu0 0
      %469 = vmatprep.mubr.bf16.mxu0 0
      %470 = vmatmul.mubr.bf16.gmra.mrb[0].mxu0 %v432
      %v471 = vpop.f32.mrb[0].mxu0
      %v472 = vadd.f32 0.0, %v471
      %v473 = vpop.f32.mrb[0].mxu0
      %v474 = vpop.f32.mrb[0].mxu0
      %v475 = vpop.f32.mrb[0].mxu0
      %476 = vdwg.mxu0
      %v477 = vadd.f32 %v410, %v472
      %v478 = vld [vmem:[%s157] sm:$0x1]
      %s479 = scalar_lea.vmem %s1, 5
      %v480 = vld [vmem:[%s479] sm:$0x1]
      %v483 = vunpack.c.l.s4 1966171168
      %v484 = vunpack.c.0.s8 %v483
      %v485 = vlaneseq
      %v486 = vshrl.u32 %v485, 7
      %v487 = vsub.s32 %v484, %v486
      %v488 = vrot.slane %v478, %v487
      %v490 = vunpack.c.l.s4 1966171168
      %v491 = vunpack.c.0.s8 %v490
      %v492 = vlaneseq
      %v493 = vshrl.u32 %v492, 7
      %v494 = vsub.s32 %v491, %v493
      %v495 = vrot.slane %v488, %v494
      %496 = vrot.lane.b32.xlu0 %v495, 123
      %v497 = vpop.permute.xlu0 %496
      %v499 = vsel %vm183, %v480, 0
      %v502 = vsel %vm187, %v497, 0
      %504 = vmatprep.subr.bf16.mxu0 0
      %505 = vmatpush1.bf16.msra.mxu0 %v502
      %506 = vmatprep.subr.bf16.mxu0 0
      %507 = vmatpush1.bf16.msra.mxu0 0
      %508 = vmatprep.subr.bf16.mxu0 0
      %509 = vmatpush1.bf16.msra.mxu0 0
      %510 = vmatprep.subr.bf16.mxu0 0
      %511 = vmatpush1.bf16.msra.mxu0 0
      %512 = vmatprep.subr.bf16.mxu0 0
      %513 = vmatpush1.bf16.msra.mxu0 0
      %514 = vmatprep.subr.bf16.mxu0 0
      %515 = vmatpush1.bf16.msra.mxu0 0
      %516 = vmatprep.subr.bf16.mxu0 0
      %517 = vmatpush1.bf16.msra.mxu0 0
      %518 = vmatprep.subr.bf16.mxu0 0
      %519 = vmatpush1.bf16.msra.mxu0 0
      %520 = vmatprep.subr.bf16.mxu0 0
      %521 = vmatpush1.bf16.msra.mxu0 0
      %522 = vmatprep.subr.bf16.mxu0 0
      %523 = vmatpush1.bf16.msra.mxu0 0
      %524 = vmatprep.subr.bf16.mxu0 0
      %525 = vmatpush1.bf16.msra.mxu0 0
      %526 = vmatprep.subr.bf16.mxu0 0
      %527 = vmatpush1.bf16.msra.mxu0 0
      %528 = vmatprep.subr.bf16.mxu0 0
      %529 = vmatpush1.bf16.msra.mxu0 0
      %530 = vmatprep.subr.bf16.mxu0 0
      %531 = vmatpush1.bf16.msra.mxu0 0
      %532 = vmatprep.subr.bf16.mxu0 0
      %533 = vmatpush1.bf16.msra.mxu0 0
      %534 = vmatprep.subr.bf16.mxu0 0
      %535 = vmatpush1.bf16.msra.mxu0 0
      %536 = vmatprep.mubr.bf16.mxu0 0
      %537 = vmatmul.mubr.bf16.gmra.mrb[0].mxu0 %v499
      %v538 = vpop.f32.mrb[0].mxu0
      %v539 = vadd.f32 0.0, %v538
      %v540 = vpop.f32.mrb[0].mxu0
      %v541 = vpop.f32.mrb[0].mxu0
      %v542 = vpop.f32.mrb[0].mxu0
      %543 = vdwg.mxu0
      %v544 = vadd.f32 %v477, %v539
      %v545 = vld [vmem:[%s157] sm:$0x1]
      %s546 = scalar_lea.vmem %s1, 6
      %v547 = vld [vmem:[%s546] sm:$0x1]
      %v550 = vunpack.c.l.s4 1966171168
      %v551 = vunpack.c.0.s8 %v550
      %v552 = vlaneseq
      %v553 = vshrl.u32 %v552, 7
      %v554 = vsub.s32 %v551, %v553
      %v555 = vrot.slane %v545, %v554
      %v557 = vunpack.c.l.s4 1966171168
      %v558 = vunpack.c.0.s8 %v557
      %v559 = vlaneseq
      %v560 = vshrl.u32 %v559, 7
      %v561 = vsub.s32 %v558, %v560
      %v562 = vrot.slane %v555, %v561
      %563 = vrot.lane.b32.xlu0 %v562, 122
      %v564 = vpop.permute.xlu0 %563
      %v566 = vsel %vm183, %v547, 0
      %v569 = vsel %vm187, %v564, 0
      %571 = vmatprep.subr.bf16.mxu0 0
      %572 = vmatpush1.bf16.msra.mxu0 %v569
      %573 = vmatprep.subr.bf16.mxu0 0
      %574 = vmatpush1.bf16.msra.mxu0 0
      %575 = vmatprep.subr.bf16.mxu0 0
      %576 = vmatpush1.bf16.msra.mxu0 0
      %577 = vmatprep.subr.bf16.mxu0 0
      %578 = vmatpush1.bf16.msra.mxu0 0
      %579 = vmatprep.subr.bf16.mxu0 0
      %580 = vmatpush1.bf16.msra.mxu0 0
      %581 = vmatprep.subr.bf16.mxu0 0
      %582 = vmatpush1.bf16.msra.mxu0 0
      %583 = vmatprep.subr.bf16.mxu0 0
      %584 = vmatpush1.bf16.msra.mxu0 0
      %585 = vmatprep.subr.bf16.mxu0 0
      %586 = vmatpush1.bf16.msra.mxu0 0
      %587 = vmatprep.subr.bf16.mxu0 0
      %588 = vmatpush1.bf16.msra.mxu0 0
      %589 = vmatprep.subr.bf16.mxu0 0
      %590 = vmatpush1.bf16.msra.mxu0 0
      %591 = vmatprep.subr.bf16.mxu0 0
      %592 = vmatpush1.bf16.msra.mxu0 0
      %593 = vmatprep.subr.bf16.mxu0 0
      %594 = vmatpush1.bf16.msra.mxu0 0
      %595 = vmatprep.subr.bf16.mxu0 0
      %596 = vmatpush1.bf16.msra.mxu0 0
      %597 = vmatprep.subr.bf16.mxu0 0
      %598 = vmatpush1.bf16.msra.mxu0 0
      %599 = vmatprep.subr.bf16.mxu0 0
      %600 = vmatpush1.bf16.msra.mxu0 0
      %601 = vmatprep.subr.bf16.mxu0 0
      %602 = vmatpush1.bf16.msra.mxu0 0
      %603 = vmatprep.mubr.bf16.mxu0 0
      %604 = vmatmul.mubr.bf16.gmra.mrb[0].mxu0 %v566
      %v605 = vpop.f32.mrb[0].mxu0
      %v606 = vadd.f32 0.0, %v605
      %v607 = vpop.f32.mrb[0].mxu0
      %v608 = vpop.f32.mrb[0].mxu0
      %v609 = vpop.f32.mrb[0].mxu0
      %610 = vdwg.mxu0
      %v611 = vadd.f32 %v544, %v606
      %v612 = vld [vmem:[%s157] sm:$0x1]
      %s613 = scalar_lea.vmem %s1, 7
      %v614 = vld [vmem:[%s613] sm:$0x1]
      %v617 = vunpack.c.l.s4 1966171168
      %v618 = vunpack.c.0.s8 %v617
      %v619 = vlaneseq
      %v620 = vshrl.u32 %v619, 7
      %v621 = vsub.s32 %v618, %v620
      %v622 = vrot.slane %v612, %v621
      %v624 = vunpack.c.l.s4 1966171168
      %v625 = vunpack.c.0.s8 %v624
      %v626 = vlaneseq
      %v627 = vshrl.u32 %v626, 7
      %v628 = vsub.s32 %v625, %v627
      %v629 = vrot.slane %v622, %v628
      %630 = vrot.lane.b32.xlu0 %v629, 121
      %v631 = vpop.permute.xlu0 %630
      %v633 = vsel %vm183, %v614, 0
      %v636 = vsel %vm187, %v631, 0
      %638 = vmatprep.subr.bf16.mxu0 0
      %639 = vmatpush1.bf16.msra.mxu0 %v636
      %640 = vmatprep.subr.bf16.mxu0 0
      %641 = vmatpush1.bf16.msra.mxu0 0
      %642 = vmatprep.subr.bf16.mxu0 0
      %643 = vmatpush1.bf16.msra.mxu0 0
      %644 = vmatprep.subr.bf16.mxu0 0
      %645 = vmatpush1.bf16.msra.mxu0 0
      %646 = vmatprep.subr.bf16.mxu0 0
      %647 = vmatpush1.bf16.msra.mxu0 0
      %648 = vmatprep.subr.bf16.mxu0 0
      %649 = vmatpush1.bf16.msra.mxu0 0
      %650 = vmatprep.subr.bf16.mxu0 0
      %651 = vmatpush1.bf16.msra.mxu0 0
      %652 = vmatprep.subr.bf16.mxu0 0
      %653 = vmatpush1.bf16.msra.mxu0 0
      %654 = vmatprep.subr.bf16.mxu0 0
      %655 = vmatpush1.bf16.msra.mxu0 0
      %656 = vmatprep.subr.bf16.mxu0 0
      %657 = vmatpush1.bf16.msra.mxu0 0
      %658 = vmatprep.subr.bf16.mxu0 0
      %659 = vmatpush1.bf16.msra.mxu0 0
      %660 = vmatprep.subr.bf16.mxu0 0
      %661 = vmatpush1.bf16.msra.mxu0 0
      %662 = vmatprep.subr.bf16.mxu0 0
      %663 = vmatpush1.bf16.msra.mxu0 0
      %664 = vmatprep.subr.bf16.mxu0 0
      %665 = vmatpush1.bf16.msra.mxu0 0
      %666 = vmatprep.subr.bf16.mxu0 0
      %667 = vmatpush1.bf16.msra.mxu0 0
      %668 = vmatprep.subr.bf16.mxu0 0
      %669 = vmatpush1.bf16.msra.mxu0 0
      %670 = vmatprep.mubr.bf16.mxu0 0
      %671 = vmatmul.mubr.bf16.gmra.mrb[0].mxu0 %v633
      %v672 = vpop.f32.mrb[0].mxu0
      %v673 = vadd.f32 0.0, %v672
      %v674 = vpop.f32.mrb[0].mxu0
      %v675 = vpop.f32.mrb[0].mxu0
      %v676 = vpop.f32.mrb[0].mxu0
      %677 = vdwg.mxu0
      %v678 = vadd.f32 %v611, %v673
      %v679 = vld [vmem:[%s157] sm:$0x1]
      %s680 = scalar_lea.vmem %s1, 8
      %v681 = vld [vmem:[%s680] sm:$0x1]
      %v684 = vunpack.c.l.s4 1966171168
      %v685 = vunpack.c.0.s8 %v684
      %v686 = vlaneseq
      %v687 = vshrl.u32 %v686, 7
      %v688 = vsub.s32 %v685, %v687
      %v689 = vrot.slane %v679, %v688
      %v691 = vunpack.c.l.s4 1966171168
      %v692 = vunpack.c.0.s8 %v691
      %v693 = vlaneseq
      %v694 = vshrl.u32 %v693, 7
      %v695 = vsub.s32 %v692, %v694
      %v696 = vrot.slane %v689, %v695
      %697 = vrot.lane.b32.xlu0 %v696, 120
      %v698 = vpop.permute.xlu0 %697
      %v700 = vsel %vm183, %v681, 0
      %v703 = vsel %vm187, %v698, 0
      %705 = vmatprep.subr.bf16.mxu0 0
      %706 = vmatpush1.bf16.msra.mxu0 %v703
      %707 = vmatprep.subr.bf16.mxu0 0
      %708 = vmatpush1.bf16.msra.mxu0 0
      %709 = vmatprep.subr.bf16.mxu0 0
      %710 = vmatpush1.bf16.msra.mxu0 0
      %711 = vmatprep.subr.bf16.mxu0 0
      %712 = vmatpush1.bf16.msra.mxu0 0
      %713 = vmatprep.subr.bf16.mxu0 0
      %714 = vmatpush1.bf16.msra.mxu0 0
      %715 = vmatprep.subr.bf16.mxu0 0
      %716 = vmatpush1.bf16.msra.mxu0 0
      %717 = vmatprep.subr.bf16.mxu0 0
      %718 = vmatpush1.bf16.msra.mxu0 0
      %719 = vmatprep.subr.bf16.mxu0 0
      %720 = vmatpush1.bf16.msra.mxu0 0
      %721 = vmatprep.subr.bf16.mxu0 0
      %722 = vmatpush1.bf16.msra.mxu0 0
      %723 = vmatprep.subr.bf16.mxu0 0
      %724 = vmatpush1.bf16.msra.mxu0 0
      %725 = vmatprep.subr.bf16.mxu0 0
      %726 = vmatpush1.bf16.msra.mxu0 0
      %727 = vmatprep.subr.bf16.mxu0 0
      %728 = vmatpush1.bf16.msra.mxu0 0
      %729 = vmatprep.subr.bf16.mxu0 0
      %730 = vmatpush1.bf16.msra.mxu0 0
      %731 = vmatprep.subr.bf16.mxu0 0
      %732 = vmatpush1.bf16.msra.mxu0 0
      %733 = vmatprep.subr.bf16.mxu0 0
      %734 = vmatpush1.bf16.msra.mxu0 0
      %735 = vmatprep.subr.bf16.mxu0 0
      %736 = vmatpush1.bf16.msra.mxu0 0
      %737 = vmatprep.mubr.bf16.mxu0 0
      %738 = vmatmul.mubr.bf16.gmra.mrb[0].mxu0 %v700
      %v739 = vpop.f32.mrb[0].mxu0
      %v740 = vadd.f32 0.0, %v739
      %v741 = vpop.f32.mrb[0].mxu0
      %v742 = vpop.f32.mrb[0].mxu0
      %v743 = vpop.f32.mrb[0].mxu0
      %744 = vdwg.mxu0
      %v745 = vadd.f32 %v678, %v740
      %v746 = vld [vmem:[%s2] sm:$0x3]
      %748 = vset.pattern.permute.xlu0 0
      %749 = vperm.xlu0 %748, %v746
      %v750 = vpop.permute.xlu0 %749
      %v752 = vadd.f32 %v745, %v750
      %v753 = vpack.c.bf16 %v752, %v752
      %vm754 = vcmask 16384
      %755 = vst.msk [vmem:[%s160] sm:$0x1] %vm754, %v753
      %p756 = scmp.lt.s32.totalorder %s14, 1
      %s757 = scalar_select %p756, %s14, 1
      %s758 = scalar_lea.vmem %s3, %s757
      // Predicated region
      $region33: #{_lambda_.23} parent=31 // pred_check
        %p759 = pneg %p100
      $region34: #{_lambda_.23} parent=31 // pred_check_branch
        %761 = sbr.rel (%p759) target = $region36
      $region35: #{_lambda_.23} parent=31 // pred_region
        _
      $region36: #{_lambda_.23} parent=31 // pred_fallthru
        _
    $region32: #{_lambda_.23} parent=5 // pred_fallthru
      _
    %p762 = scmp.le.s32.totalorder 2, %s9
    // Predicated region
    $region37: #{_lambda_.23} parent=5 // pred_check
      %p763 = pneg %p762
    $region38: #{_lambda_.23} parent=5 // pred_check_branch
      %765 = sbr.rel (%p763) target = $region40
    $region39: #{_lambda_.23} parent=5 // pred_region
      %s766 = ssub.s32 %s9, 2
      // Predicated region
      $region41: #{_lambda_.23} parent=39 // pred_check
        %p767 = pneg %p106
      $region42: #{_lambda_.23} parent=39 // pred_check_branch
        %769 = sbr.rel (%p767) target = $region44
      $region43: #{_lambda_.23} parent=39 // pred_region
        %p770 = scmp.lt.s32.totalorder %s15, 1
        %s771 = scalar_select %p770, %s15, 1
        %s772 = scalar_lea.vmem %s3, %s771
      $region44: #{_lambda_.23} parent=39 // pred_fallthru
        _
    $region40: #{_lambda_.23} parent=5 // pred_fallthru
      _
  $region6: #{_lambda_.23} parent=0 // loop_footer
    %s13 = sadd.s32 1, %s9
  $region7: #{_lambda_.23} parent=0 // loop_footer_branch
    %8 = sbr.rel target = $region3
  $region8: #{_lambda_.23} parent=0 // loop_exit
    _

// kernel: _lambda_.24
$region0: #{_lambda_.24}
  #allocation0 [shape = 'u32[]', space=smem, size = 0x4, offset = 0x4, fixed_abs, tag = 'smem constant byte address 0x4 - core index']
  #allocation1 [shape = 'u32[144,128]{1,0:T(1,128)}', space=vmem, size = 0x12000, scoped, tag = 'internal scratch']
  %s0 = inlined_call_operand.vmem [shape: bf16[2,2], index: 0, kind: input, shape index: {}]
  %s1 = inlined_call_operand.vmem [shape: bf16[2,2,256], index: 1, kind: input, shape index: {}]
  %s2 = inlined_call_operand.vmem [shape: f32[2,1], index: 2, kind: input, shape index: {}]
  %s3 = inlined_call_operand.vmem [shape: bf16[2,2,256], index: 3, kind: output, shape index: {}]
  %s4 = sld [smem:[#allocation0]]
  $region45: #{_lambda_.24} parent=0
    _
  %s6 = ssub.s32 1, %s4
  %s7 = scalar_select 0, %s6, %s4
  loop: start=0, step=1, limit=4
  $region2: #{_lambda_.24} parent=0 // loop_pre_header
    _
  $region3: #{_lambda_.24} parent=0 // loop_header
    %s9 = sphi 0, %s13
    %p10 = scmp.ge.s32.totalorder %s9, 4
    %s16 = sphi 0, %s28
    %s17 = sphi 0, %s24
    %s18 = sphi 0, %s16
    %s19 = sphi 0, %s17
    %s20 = sphi 0, %s18
    %s21 = sphi 0, %s19
    %s29 = sphi 0, %s29
    %s31 = sphi 0, %s29
    %s32 = sphi 0, %s31
    %s46 = sphi 0, %s32
    %s54 = sphi 0, %s56
    %s57 = sphi 0, %s54
    %s58 = sphi 0, %s57
    %s74 = sphi 0, %s58
    %s78 = sphi 0, %s78
    %s80 = sphi 0, %s78
    %s81 = sphi 0, %s80
    %s95 = sphi 0, %s81
    %s103 = sphi 0, %s105
    %s106 = sphi 0, %s103
    %s107 = sphi 0, %s106
    %s123 = sphi 0, %s107
  $region4: #{_lambda_.24} parent=0 // loop_header_branch
    %12 = sbr.rel (%p10) target = $region8
  $region5: #{_lambda_.24} parent=0 // loop_body
    %s14 = ssub.s32 %s9, 1
    %s15 = ssub.s32 %s9, 2
    %s22 = sadd.s32 1, %s17
    %p23 = scmp.ge.s32.totalorder %s22, 1
    %s24 = scalar_select %p23, 0, %s22
    %s25 = sadd.s32 1, %s16
    %s26 = scalar_select %p23, %s25, %s16
    %p27 = scmp.ge.s32.totalorder %s26, 2
    %s28 = scalar_select %p27, 0, %s26
    %s30 = sadd.s32 %s29, 1
    %p33 = scmp.eq.s32.totalorder %s9, 1
    %p34 = scmp.ne.s32.totalorder %s29, %s31
    %p35 = scmp.eq.s32.totalorder %s9, 0
    %p36 = por %p34, %p35
    %p37 = scmp.ne.s32.totalorder %s29, %s31
    %p38 = scmp.eq.s32.totalorder %s14, 1
    %p39 = por %p37, %p38
    %p40 = scmp.ne.s32.totalorder %s31, %s32
    %p41 = scmp.eq.s32.totalorder %s14, 0
    %p42 = por %p40, %p41
    %p43 = scmp.ne.s32.totalorder %s31, %s32
    %p44 = scmp.eq.s32.totalorder %s15, 1
    %p45 = por %p43, %p44
    %p47 = scmp.ne.s32.totalorder %s32, %s46
    %p48 = scmp.eq.s32.totalorder %s15, 0
    %p49 = por %p47, %p48
    %s50 = ssub.s32 %s16, %s28
    %s51 = ssub.s32 %s17, %s24
    %s52 = sor.u32 %s50, %s51
    %p53 = scmp.eq.s32.totalorder %s52, 0
    %s55 = sadd.s32 %s54, 1
    %s56 = scalar_select %p53, %s54, %s55
    %p59 = pneg %p53
    %p60 = scmp.eq.s32.totalorder %s9, 1
    %p61 = por %p59, %p60
    %p62 = scmp.ne.s32.totalorder %s54, %s57
    %p63 = scmp.eq.s32.totalorder %s9, 0
    %p64 = por %p62, %p63
    %p65 = scmp.ne.s32.totalorder %s54, %s57
    %p66 = scmp.eq.s32.totalorder %s14, 1
    %p67 = por %p65, %p66
    %p68 = scmp.ne.s32.totalorder %s57, %s58
    %p69 = scmp.eq.s32.totalorder %s14, 0
    %p70 = por %p68, %p69
    %p71 = scmp.ne.s32.totalorder %s57, %s58
    %p72 = scmp.eq.s32.totalorder %s15, 1
    %p73 = por %p71, %p72
    %p75 = scmp.ne.s32.totalorder %s58, %s74
    %p76 = scmp.eq.s32.totalorder %s15, 0
    %p77 = por %p75, %p76
    %s79 = sadd.s32 %s78, 1
    %p82 = scmp.eq.s32.totalorder %s9, 1
    %p83 = scmp.ne.s32.totalorder %s78, %s80
    %p84 = scmp.eq.s32.totalorder %s9, 0
    %p85 = por %p83, %p84
    %p86 = scmp.ne.s32.totalorder %s78, %s80
    %p87 = scmp.eq.s32.totalorder %s14, 1
    %p88 = por %p86, %p87
    %p89 = scmp.ne.s32.totalorder %s80, %s81
    %p90 = scmp.eq.s32.totalorder %s14, 0
    %p91 = por %p89, %p90
    %p92 = scmp.ne.s32.totalorder %s80, %s81
    %p93 = scmp.eq.s32.totalorder %s15, 1
    %p94 = por %p92, %p93
    %p96 = scmp.ne.s32.totalorder %s81, %s95
    %p97 = scmp.eq.s32.totalorder %s15, 0
    %p98 = por %p96, %p97
    %s99 = ssub.s32 %s16, %s28
    %s100 = ssub.s32 %s17, %s24
    %s101 = sor.u32 %s99, %s100
    %p102 = scmp.eq.s32.totalorder %s101, 0
    %s104 = sadd.s32 %s103, 1
    %s105 = scalar_select %p102, %s103, %s104
    %p108 = pneg %p102
    %p109 = scmp.eq.s32.totalorder %s9, 1
    %p110 = por %p108, %p109
    %p111 = scmp.ne.s32.totalorder %s103, %s106
    %p112 = scmp.eq.s32.totalorder %s9, 0
    %p113 = por %p111, %p112
    %p114 = scmp.ne.s32.totalorder %s103, %s106
    %p115 = scmp.eq.s32.totalorder %s14, 1
    %p116 = por %p114, %p115
    %p117 = scmp.ne.s32.totalorder %s106, %s107
    %p118 = scmp.eq.s32.totalorder %s14, 0
    %p119 = por %p117, %p118
    %p120 = scmp.ne.s32.totalorder %s106, %s107
    %p121 = scmp.eq.s32.totalorder %s15, 1
    %p122 = por %p120, %p121
    %p124 = scmp.ne.s32.totalorder %s107, %s123
    %p125 = scmp.eq.s32.totalorder %s15, 0
    %p126 = por %p124, %p125
    %p127 = scmp.le.s32.totalorder 1, %s9
    %p128 = scmp.lt.s32.totalorder %s9, 3
    %p129 = pnand %p127, %p128
    %p130 = pneg %p129
    // Predicated region
    $region9: #{_lambda_.24} parent=5 // pred_check
      _
    $region10: #{_lambda_.24} parent=5 // pred_check_branch
      %132 = sbr.rel (%p129) target = $region12
    $region11: #{_lambda_.24} parent=5 // pred_region
      %s133 = ssub.s32 %s9, 1
      // Predicated region
      $region13: #{_lambda_.24} parent=11 // pred_check
        %p134 = pneg %p42
      $region14: #{_lambda_.24} parent=11 // pred_check_branch
        %136 = sbr.rel (%p134) target = $region16
      $region15: #{_lambda_.24} parent=11 // pred_region
        _
      $region16: #{_lambda_.24} parent=11 // pred_fallthru
        _
      // Predicated region
      $region17: #{_lambda_.24} parent=11 // pred_check
        %p137 = pneg %p91
      $region18: #{_lambda_.24} parent=11 // pred_check_branch
        %139 = sbr.rel (%p137) target = $region20
      $region19: #{_lambda_.24} parent=11 // pred_region
        _
      $region20: #{_lambda_.24} parent=11 // pred_fallthru
        _
    $region12: #{_lambda_.24} parent=5 // pred_fallthru
      _
    %p140 = scmp.lt.s32.totalorder %s9, 2
    // Predicated region
    $region21: #{_lambda_.24} parent=5 // pred_check
      %p141 = pneg %p140
    $region22: #{_lambda_.24} parent=5 // pred_check_branch
      %143 = sbr.rel (%p141) target = $region24
    $region23: #{_lambda_.24} parent=5 // pred_region
      // Predicated region
      $region25: #{_lambda_.24} parent=23 // pred_check
        %p144 = pneg %p64
      $region26: #{_lambda_.24} parent=23 // pred_check_branch
        %146 = sbr.rel (%p144) target = $region28
      $region27: #{_lambda_.24} parent=23 // pred_region
        %s147 = smul.u32 2, %s17
        %p148 = scmp.lt.s32.totalorder %s16, 1
        %s149 = scalar_select %p148, %s16, 1
        %p150 = scmp.lt.s32.totalorder %s147, 1
        %s151 = scalar_select %p150, %s147, 1
        %s152 = smul.addr %s149, 2
        %s153 = sadd.s32 %s151, %s152
        %s154 = scalar_lea.vmem %s1, %s153
        %s155 = smul.u32 2, %s17
      $region28: #{_lambda_.24} parent=23 // pred_fallthru
        _
    $region24: #{_lambda_.24} parent=5 // pred_fallthru
      _
    %p156 = scmp.le.s32.totalorder 1, %s9
    %p157 = scmp.lt.s32.totalorder %s9, 3
    %p158 = pnand %p156, %p157
    %p159 = pneg %p158
    // Predicated region
    $region29: #{_lambda_.24} parent=5 // pred_check
      _
    $region30: #{_lambda_.24} parent=5 // pred_check_branch
      %161 = sbr.rel (%p158) target = $region32
    $region31: #{_lambda_.24} parent=5 // pred_region
      %s162 = ssub.s32 %s9, 1
      %p163 = pneg %p42
      %p164 = pneg %p39
      %s165 = smul.u32 2, %s19
      %p166 = scmp.lt.s32.totalorder %s18, 1
      %s167 = scalar_select %p166, %s18, 1
      %p168 = scmp.lt.s32.totalorder %s165, 1
      %s169 = scalar_select %p168, %s165, 1
      %s170 = smul.addr %s167, 2
      %s171 = sadd.s32 %s169, %s170
      %s172 = scalar_lea.vmem %s1, %s171
      %p173 = pneg %p70
      %p174 = pneg %p67
      %p175 = pneg %p91
      %p176 = pneg %p88
      %p177 = pneg %p119
      %p178 = pneg %p116
      %s179 = smul.u32 2, %s19
      %p180 = scmp.lt.s32.totalorder %s18, 1
      %s181 = scalar_select %p180, %s18, 1
      %p182 = scmp.lt.s32.totalorder %s179, 1
      %s183 = scalar_select %p182, %s179, 1
      %s184 = smul.addr %s181, 2
      %s185 = sadd.s32 %s183, %s184
      %s186 = scalar_lea.vmem %s3, %s185
      %s187 = smul.u32 2, %s19
      %p188 = scmp.lt.s32.totalorder %s18, 1
      %s189 = scalar_select %p188, %s18, 1
      %p190 = scmp.lt.s32.totalorder %s187, 1
      %s191 = scalar_select %p190, %s187, 1
      %s192 = smul.addr %s189, 2
      %s193 = sadd.s32 %s191, %s192
      %s194 = scalar_lea.vmem %s1, %s193
      %s195 = smul.u32 2, %s19
      %s196 = smul.u32 2, %s19
      %p197 = scmp.lt.s32.totalorder %s18, 1
      %s198 = scalar_select %p197, %s18, 1
      %p199 = scmp.lt.s32.totalorder %s196, 1
      %s200 = scalar_select %p199, %s196, 1
      %s201 = smul.addr %s198, 2
      %s202 = sadd.s32 %s200, %s201
      %s203 = scalar_lea.vmem %s3, %s202
      %s204 = smul.u32 2, %s19
      %v206 = vld [vmem:[%s194] sm:$0x3]
      %v207 = vld [vmem:[%s0] sm:$0x1]
      %v208 = vld [vmem:[%s2] sm:$0x3]
      %210 = vset.pattern.permute.xlu0 0
      %211 = vperm.xlu0 %210, %v208
      %v212 = vpop.permute.xlu0 %211
      %v216 = vunpack.c.l.s4 1966171168
      %v217 = vunpack.c.0.s8 %v216
      %v218 = vlaneseq
      %v219 = vshrl.u32 %v218, 7
      %v220 = vsub.s32 %v217, %v219
      %v221 = vrot.slane %v206, %v220
      %v222 = vcombine.high %v221, %v221
      %v224 = vunpack.c.l.s4 1966171168
      %v225 = vunpack.c.0.s8 %v224
      %v226 = vlaneseq
      %v227 = vshrl.u32 %v226, 7
      %v228 = vsub.s32 %v225, %v227
      %v229 = vrot.slane %v221, %v228
      %v231 = vunpack.c.l.s4 1966171168
      %v232 = vunpack.c.0.s8 %v231
      %v233 = vlaneseq
      %v234 = vshrl.u32 %v233, 7
      %v235 = vsub.s32 %v232, %v234
      %v236 = vrot.slane %v222, %v235
      %vm237 = vcmask 15360
      %v239 = vsel %vm237, %v207, 0
      %vm241 = vcmask 1040384
      %v243 = vsel %vm241, %v229, 0
      %v246 = vsel %vm241, %v236, 0
      %248 = vmatprep.subr.bf16.mxu0 %v246
      %249 = vmatpush1.bf16.msra.mxu0 %v243
      %250 = vmatprep.subr.bf16.mxu0 0
      %251 = vmatpush1.bf16.msra.mxu0 0
      %252 = vmatprep.subr.bf16.mxu0 0
      %253 = vmatpush1.bf16.msra.mxu0 0
      %254 = vmatprep.subr.bf16.mxu0 0
      %255 = vmatpush1.bf16.msra.mxu0 0
      %256 = vmatprep.subr.bf16.mxu0 0
      %257 = vmatpush1.bf16.msra.mxu0 0
      %258 = vmatprep.subr.bf16.mxu0 0
      %259 = vmatpush1.bf16.msra.mxu0 0
      %260 = vmatprep.subr.bf16.mxu0 0
      %261 = vmatpush1.bf16.msra.mxu0 0
      %262 = vmatprep.subr.bf16.mxu0 0
      %263 = vmatpush1.bf16.msra.mxu0 0
      %264 = vmatprep.subr.bf16.mxu0 0
      %265 = vmatpush1.bf16.msra.mxu0 0
      %266 = vmatprep.subr.bf16.mxu0 0
      %267 = vmatpush1.bf16.msra.mxu0 0
      %268 = vmatprep.subr.bf16.mxu0 0
      %269 = vmatpush1.bf16.msra.mxu0 0
      %270 = vmatprep.subr.bf16.mxu0 0
      %271 = vmatpush1.bf16.msra.mxu0 0
      %272 = vmatprep.subr.bf16.mxu0 0
      %273 = vmatpush1.bf16.msra.mxu0 0
      %274 = vmatprep.subr.bf16.mxu0 0
      %275 = vmatpush1.bf16.msra.mxu0 0
      %276 = vmatprep.subr.bf16.mxu0 0
      %277 = vmatpush1.bf16.msra.mxu0 0
      %278 = vmatprep.subr.bf16.mxu0 0
      %279 = vmatpush1.bf16.msra.mxu0 0
      %280 = vmatprep.mubr.bf16.mxu0 0
      %281 = vmatmul.mubr.bf16.gmra.mrb[0].mxu0 %v239
      %v282 = vpop.f32.mrb[0].mxu0
      %v283 = vadd.f32 %v212, %v282
      %v284 = vpop.f32.mrb[0].mxu0
      %v285 = vadd.f32 %v212, %v284
      %v286 = vpop.f32.mrb[0].mxu0
      %v287 = vpop.f32.mrb[0].mxu0
      %288 = vdwg.mxu0
      %v289 = vpack.c.bf16 %v283, %v283
      %v290 = vpack.c.bf16 %v285, %v285
      %v293 = vcombine.low %v289, %v290
      %v295 = vunpack.c.l.s4 1966171168
      %v296 = vunpack.c.0.s8 %v295
      %v297 = vlaneseq
      %v298 = vshrl.u32 %v297, 7
      %v299 = vsub.s32 %v296, %v298
      %v300 = vrot.slane %v293, %v299
      %v302 = vunpack.c.l.s4 1966171168
      %v303 = vunpack.c.0.s8 %v302
      %v304 = vlaneseq
      %v305 = vshrl.u32 %v304, 7
      %v306 = vsub.s32 %v303, %v305
      %v307 = vrot.slane %v300, %v306
      %309 = vst [vmem:[%s203] sm:$0x3] %v307
      %s310 = smul.u32 2, %s19
      %p311 = scmp.lt.s32.totalorder %s18, 1
      %s312 = scalar_select %p311, %s18, 1
      %p313 = scmp.lt.s32.totalorder %s310, 1
      %s314 = scalar_select %p313, %s310, 1
      %s315 = smul.addr %s312, 2
      %s316 = sadd.s32 %s314, %s315
      %s317 = scalar_lea.vmem %s3, %s316
      // Predicated region
      $region33: #{_lambda_.24} parent=31 // pred_check
        %p318 = pneg %p116
      $region34: #{_lambda_.24} parent=31 // pred_check_branch
        %320 = sbr.rel (%p318) target = $region36
      $region35: #{_lambda_.24} parent=31 // pred_region
        %s321 = smul.u32 2, %s19
      $region36: #{_lambda_.24} parent=31 // pred_fallthru
        _
    $region32: #{_lambda_.24} parent=5 // pred_fallthru
      _
    %p322 = scmp.le.s32.totalorder 2, %s9
    // Predicated region
    $region37: #{_lambda_.24} parent=5 // pred_check
      %p323 = pneg %p322
    $region38: #{_lambda_.24} parent=5 // pred_check_branch
      %325 = sbr.rel (%p323) target = $region40
    $region39: #{_lambda_.24} parent=5 // pred_region
      %s326 = ssub.s32 %s9, 2
      // Predicated region
      $region41: #{_lambda_.24} parent=39 // pred_check
        %p327 = pneg %p122
      $region42: #{_lambda_.24} parent=39 // pred_check_branch
        %329 = sbr.rel (%p327) target = $region44
      $region43: #{_lambda_.24} parent=39 // pred_region
        %s330 = smul.u32 2, %s21
        %p331 = scmp.lt.s32.totalorder %s20, 1
        %s332 = scalar_select %p331, %s20, 1
        %p333 = scmp.lt.s32.totalorder %s330, 1
        %s334 = scalar_select %p333, %s330, 1
        %s335 = smul.addr %s332, 2
        %s336 = sadd.s32 %s334, %s335
        %s337 = scalar_lea.vmem %s3, %s336
      $region44: #{_lambda_.24} parent=39 // pred_fallthru
        _
    $region40: #{_lambda_.24} parent=5 // pred_fallthru
      _
  $region6: #{_lambda_.24} parent=0 // loop_footer
    %s13 = sadd.s32 1, %s9
  $region7: #{_lambda_.24} parent=0 // loop_footer_branch
    %8 = sbr.rel target = $region3
  $region8: #{_lambda_.24} parent=0 // loop_exit
    _

// kernel: _lambda_.25
$region0: #{_lambda_.25}
  #allocation0 [shape = 'u32[]', space=smem, size = 0x4, offset = 0x4, fixed_abs, tag = 'smem constant byte address 0x4 - core index']
  #allocation1 [shape = 'u32[144,128]{1,0:T(1,128)}', space=vmem, size = 0x12000, scoped, tag = 'internal scratch']
  %s0 = inlined_call_operand.vmem [shape: bf16[8,2], index: 0, kind: input, shape index: {}]
  %s1 = inlined_call_operand.vmem [shape: bf16[2,2,256], index: 1, kind: input, shape index: {}]
  %s2 = inlined_call_operand.vmem [shape: f32[8,1], index: 2, kind: input, shape index: {}]
  %s3 = inlined_call_operand.vmem [shape: bf16[2,2,256], index: 3, kind: input, shape index: {}]
  %s4 = inlined_call_operand.vmem [shape: bf16[2,8,256], index: 4, kind: input, shape index: {}]
  %s5 = inlined_call_operand.vmem [shape: f32[2,8,256], index: 5, kind: output, shape index: {}]
  %s6 = sld [smem:[#allocation0]]
  $region53: #{_lambda_.25} parent=0
    _
  %s8 = ssub.s32 1, %s6
  %s9 = scalar_select 0, %s8, %s6
  loop: start=0, step=1, limit=4
  $region2: #{_lambda_.25} parent=0 // loop_pre_header
    _
  $region3: #{_lambda_.25} parent=0 // loop_header
    %s11 = sphi 0, %s15
    %p12 = scmp.ge.s32.totalorder %s11, 4
    %s18 = sphi 0, %s30
    %s19 = sphi 0, %s26
    %s20 = sphi 0, %s18
    %s21 = sphi 0, %s19
    %s22 = sphi 0, %s20
    %s23 = sphi 0, %s21
    %s31 = sphi 0, %s31
    %s33 = sphi 0, %s31
    %s34 = sphi 0, %s33
    %s48 = sphi 0, %s34
    %s56 = sphi 0, %s58
    %s59 = sphi 0, %s56
    %s60 = sphi 0, %s59
    %s76 = sphi 0, %s60
    %s80 = sphi 0, %s80
    %s82 = sphi 0, %s80
    %s83 = sphi 0, %s82
    %s97 = sphi 0, %s83
    %s105 = sphi 0, %s107
    %s108 = sphi 0, %s105
    %s109 = sphi 0, %s108
    %s125 = sphi 0, %s109
    %s133 = sphi 0, %s135
    %s136 = sphi 0, %s133
    %s137 = sphi 0, %s136
    %s153 = sphi 0, %s137
    %s161 = sphi 0, %s163
    %s164 = sphi 0, %s161
    %s165 = sphi 0, %s164
    %s181 = sphi 0, %s165
  $region4: #{_lambda_.25} parent=0 // loop_header_branch
    %14 = sbr.rel (%p12) target = $region8
  $region5: #{_lambda_.25} parent=0 // loop_body
    %s16 = ssub.s32 %s11, 1
    %s17 = ssub.s32 %s11, 2
    %s24 = sadd.s32 1, %s19
    %p25 = scmp.ge.s32.totalorder %s24, 1
    %s26 = scalar_select %p25, 0, %s24
    %s27 = sadd.s32 1, %s18
    %s28 = scalar_select %p25, %s27, %s18
    %p29 = scmp.ge.s32.totalorder %s28, 2
    %s30 = scalar_select %p29, 0, %s28
    %s32 = sadd.s32 %s31, 1
    %p35 = scmp.eq.s32.totalorder %s11, 1
    %p36 = scmp.ne.s32.totalorder %s31, %s33
    %p37 = scmp.eq.s32.totalorder %s11, 0
    %p38 = por %p36, %p37
    %p39 = scmp.ne.s32.totalorder %s31, %s33
    %p40 = scmp.eq.s32.totalorder %s16, 1
    %p41 = por %p39, %p40
    %p42 = scmp.ne.s32.totalorder %s33, %s34
    %p43 = scmp.eq.s32.totalorder %s16, 0
    %p44 = por %p42, %p43
    %p45 = scmp.ne.s32.totalorder %s33, %s34
    %p46 = scmp.eq.s32.totalorder %s17, 1
    %p47 = por %p45, %p46
    %p49 = scmp.ne.s32.totalorder %s34, %s48
    %p50 = scmp.eq.s32.totalorder %s17, 0
    %p51 = por %p49, %p50
    %s52 = ssub.s32 %s18, %s30
    %s53 = ssub.s32 %s19, %s26
    %s54 = sor.u32 %s52, %s53
    %p55 = scmp.eq.s32.totalorder %s54, 0
    %s57 = sadd.s32 %s56, 1
    %s58 = scalar_select %p55, %s56, %s57
    %p61 = pneg %p55
    %p62 = scmp.eq.s32.totalorder %s11, 1
    %p63 = por %p61, %p62
    %p64 = scmp.ne.s32.totalorder %s56, %s59
    %p65 = scmp.eq.s32.totalorder %s11, 0
    %p66 = por %p64, %p65
    %p67 = scmp.ne.s32.totalorder %s56, %s59
    %p68 = scmp.eq.s32.totalorder %s16, 1
    %p69 = por %p67, %p68
    %p70 = scmp.ne.s32.totalorder %s59, %s60
    %p71 = scmp.eq.s32.totalorder %s16, 0
    %p72 = por %p70, %p71
    %p73 = scmp.ne.s32.totalorder %s59, %s60
    %p74 = scmp.eq.s32.totalorder %s17, 1
    %p75 = por %p73, %p74
    %p77 = scmp.ne.s32.totalorder %s60, %s76
    %p78 = scmp.eq.s32.totalorder %s17, 0
    %p79 = por %p77, %p78
    %s81 = sadd.s32 %s80, 1
    %p84 = scmp.eq.s32.totalorder %s11, 1
    %p85 = scmp.ne.s32.totalorder %s80, %s82
    %p86 = scmp.eq.s32.totalorder %s11, 0
    %p87 = por %p85, %p86
    %p88 = scmp.ne.s32.totalorder %s80, %s82
    %p89 = scmp.eq.s32.totalorder %s16, 1
    %p90 = por %p88, %p89
    %p91 = scmp.ne.s32.totalorder %s82, %s83
    %p92 = scmp.eq.s32.totalorder %s16, 0
    %p93 = por %p91, %p92
    %p94 = scmp.ne.s32.totalorder %s82, %s83
    %p95 = scmp.eq.s32.totalorder %s17, 1
    %p96 = por %p94, %p95
    %p98 = scmp.ne.s32.totalorder %s83, %s97
    %p99 = scmp.eq.s32.totalorder %s17, 0
    %p100 = por %p98, %p99
    %s101 = ssub.s32 %s18, %s30
    %s102 = ssub.s32 %s19, %s26
    %s103 = sor.u32 %s101, %s102
    %p104 = scmp.eq.s32.totalorder %s103, 0
    %s106 = sadd.s32 %s105, 1
    %s107 = scalar_select %p104, %s105, %s106
    %p110 = pneg %p104
    %p111 = scmp.eq.s32.totalorder %s11, 1
    %p112 = por %p110, %p111
    %p113 = scmp.ne.s32.totalorder %s105, %s108
    %p114 = scmp.eq.s32.totalorder %s11, 0
    %p115 = por %p113, %p114
    %p116 = scmp.ne.s32.totalorder %s105, %s108
    %p117 = scmp.eq.s32.totalorder %s16, 1
    %p118 = por %p116, %p117
    %p119 = scmp.ne.s32.totalorder %s108, %s109
    %p120 = scmp.eq.s32.totalorder %s16, 0
    %p121 = por %p119, %p120
    %p122 = scmp.ne.s32.totalorder %s108, %s109
    %p123 = scmp.eq.s32.totalorder %s17, 1
    %p124 = por %p122, %p123
    %p126 = scmp.ne.s32.totalorder %s109, %s125
    %p127 = scmp.eq.s32.totalorder %s17, 0
    %p128 = por %p126, %p127
    %s129 = ssub.s32 %s18, %s30
    %s130 = ssub.s32 %s19, %s26
    %s131 = sor.u32 %s129, %s130
    %p132 = scmp.eq.s32.totalorder %s131, 0
    %s134 = sadd.s32 %s133, 1
    %s135 = scalar_select %p132, %s133, %s134
    %p138 = pneg %p132
    %p139 = scmp.eq.s32.totalorder %s11, 1
    %p140 = por %p138, %p139
    %p141 = scmp.ne.s32.totalorder %s133, %s136
    %p142 = scmp.eq.s32.totalorder %s11, 0
    %p143 = por %p141, %p142
    %p144 = scmp.ne.s32.totalorder %s133, %s136
    %p145 = scmp.eq.s32.totalorder %s16, 1
    %p146 = por %p144, %p145
    %p147 = scmp.ne.s32.totalorder %s136, %s137
    %p148 = scmp.eq.s32.totalorder %s16, 0
    %p149 = por %p147, %p148
    %p150 = scmp.ne.s32.totalorder %s136, %s137
    %p151 = scmp.eq.s32.totalorder %s17, 1
    %p152 = por %p150, %p151
    %p154 = scmp.ne.s32.totalorder %s137, %s153
    %p155 = scmp.eq.s32.totalorder %s17, 0
    %p156 = por %p154, %p155
    %s157 = ssub.s32 %s18, %s30
    %s158 = ssub.s32 %s19, %s26
    %s159 = sor.u32 %s157, %s158
    %p160 = scmp.eq.s32.totalorder %s159, 0
    %s162 = sadd.s32 %s161, 1
    %s163 = scalar_select %p160, %s161, %s162
    %p166 = pneg %p160
    %p167 = scmp.eq.s32.totalorder %s11, 1
    %p168 = por %p166, %p167
    %p169 = scmp.ne.s32.totalorder %s161, %s164
    %p170 = scmp.eq.s32.totalorder %s11, 0
    %p171 = por %p169, %p170
    %p172 = scmp.ne.s32.totalorder %s161, %s164
    %p173 = scmp.eq.s32.totalorder %s16, 1
    %p174 = por %p172, %p173
    %p175 = scmp.ne.s32.totalorder %s164, %s165
    %p176 = scmp.eq.s32.totalorder %s16, 0
    %p177 = por %p175, %p176
    %p178 = scmp.ne.s32.totalorder %s164, %s165
    %p179 = scmp.eq.s32.totalorder %s17, 1
    %p180 = por %p178, %p179
    %p182 = scmp.ne.s32.totalorder %s165, %s181
    %p183 = scmp.eq.s32.totalorder %s17, 0
    %p184 = por %p182, %p183
    %p185 = scmp.le.s32.totalorder 1, %s11
    %p186 = scmp.lt.s32.totalorder %s11, 3
    %p187 = pnand %p185, %p186
    %p188 = pneg %p187
    // Predicated region
    $region9: #{_lambda_.25} parent=5 // pred_check
      _
    $region10: #{_lambda_.25} parent=5 // pred_check_branch
      %190 = sbr.rel (%p187) target = $region12
    $region11: #{_lambda_.25} parent=5 // pred_region
      %s191 = ssub.s32 %s11, 1
      // Predicated region
      $region13: #{_lambda_.25} parent=11 // pred_check
        %p192 = pneg %p44
      $region14: #{_lambda_.25} parent=11 // pred_check_branch
        %194 = sbr.rel (%p192) target = $region16
      $region15: #{_lambda_.25} parent=11 // pred_region
        _
      $region16: #{_lambda_.25} parent=11 // pred_fallthru
        _
      // Predicated region
      $region17: #{_lambda_.25} parent=11 // pred_check
        %p195 = pneg %p93
      $region18: #{_lambda_.25} parent=11 // pred_check_branch
        %197 = sbr.rel (%p195) target = $region20
      $region19: #{_lambda_.25} parent=11 // pred_region
        _
      $region20: #{_lambda_.25} parent=11 // pred_fallthru
        _
    $region12: #{_lambda_.25} parent=5 // pred_fallthru
      _
    %p198 = scmp.lt.s32.totalorder %s11, 2
    // Predicated region
    $region21: #{_lambda_.25} parent=5 // pred_check
      %p199 = pneg %p198
    $region22: #{_lambda_.25} parent=5 // pred_check_branch
      %201 = sbr.rel (%p199) target = $region24
    $region23: #{_lambda_.25} parent=5 // pred_region
      // Predicated region
      $region25: #{_lambda_.25} parent=23 // pred_check
        %p202 = pneg %p66
      $region26: #{_lambda_.25} parent=23 // pred_check_branch
        %204 = sbr.rel (%p202) target = $region28
      $region27: #{_lambda_.25} parent=23 // pred_region
        %s205 = smul.u32 2, %s19
        %p206 = scmp.lt.s32.totalorder %s18, 1
        %s207 = scalar_select %p206, %s18, 1
        %p208 = scmp.lt.s32.totalorder %s205, 1
        %s209 = scalar_select %p208, %s205, 1
        %s210 = smul.addr %s207, 2
        %s211 = sadd.s32 %s209, %s210
        %s212 = scalar_lea.vmem %s1, %s211
        %s213 = smul.u32 2, %s19
      $region28: #{_lambda_.25} parent=23 // pred_fallthru
        _
      // Predicated region
      $region29: #{_lambda_.25} parent=23 // pred_check
        %p214 = pneg %p115
      $region30: #{_lambda_.25} parent=23 // pred_check_branch
        %216 = sbr.rel (%p214) target = $region32
      $region31: #{_lambda_.25} parent=23 // pred_region
        %s217 = smul.u32 2, %s19
        %p218 = scmp.lt.s32.totalorder %s18, 1
        %s219 = scalar_select %p218, %s18, 1
        %p220 = scmp.lt.s32.totalorder %s217, 1
        %s221 = scalar_select %p220, %s217, 1
        %s222 = smul.addr %s219, 2
        %s223 = sadd.s32 %s221, %s222
        %s224 = scalar_lea.vmem %s3, %s223
        %s225 = smul.u32 2, %s19
      $region32: #{_lambda_.25} parent=23 // pred_fallthru
        _
      // Predicated region
      $region33: #{_lambda_.25} parent=23 // pred_check
        %p226 = pneg %p143
      $region34: #{_lambda_.25} parent=23 // pred_check_branch
        %228 = sbr.rel (%p226) target = $region36
      $region35: #{_lambda_.25} parent=23 // pred_region
        %s229 = smul.u32 2, %s19
        %p230 = scmp.lt.s32.totalorder %s18, 1
        %s231 = scalar_select %p230, %s18, 1
        %p232 = scmp.lt.s32.totalorder %s229, 1
        %s233 = scalar_select %p232, %s229, 1
        %s234 = smul.addr %s231, 2
        %s235 = sadd.s32 %s233, %s234
        %s236 = smul.addr %s235, 4
        %s237 = scalar_lea.vmem %s4, %s236
        %s238 = smul.u32 2, %s19
      $region36: #{_lambda_.25} parent=23 // pred_fallthru
        _
    $region24: #{_lambda_.25} parent=5 // pred_fallthru
      _
    %p239 = scmp.le.s32.totalorder 1, %s11
    %p240 = scmp.lt.s32.totalorder %s11, 3
    %p241 = pnand %p239, %p240
    %p242 = pneg %p241
    // Predicated region
    $region37: #{_lambda_.25} parent=5 // pred_check
      _
    $region38: #{_lambda_.25} parent=5 // pred_check_branch
      %244 = sbr.rel (%p241) target = $region40
    $region39: #{_lambda_.25} parent=5 // pred_region
      %s245 = ssub.s32 %s11, 1
      %p246 = pneg %p44
      %p247 = pneg %p41
      %s248 = smul.u32 2, %s21
      %p249 = scmp.lt.s32.totalorder %s20, 1
      %s250 = scalar_select %p249, %s20, 1
      %p251 = scmp.lt.s32.totalorder %s248, 1
      %s252 = scalar_select %p251, %s248, 1
      %s253 = smul.addr %s250, 2
      %s254 = sadd.s32 %s252, %s253
      %s255 = scalar_lea.vmem %s1, %s254
      %p256 = pneg %p72
      %p257 = pneg %p69
      %p258 = pneg %p93
      %p259 = pneg %p90
      %s260 = smul.u32 2, %s21
      %p261 = scmp.lt.s32.totalorder %s20, 1
      %s262 = scalar_select %p261, %s20, 1
      %p263 = scmp.lt.s32.totalorder %s260, 1
      %s264 = scalar_select %p263, %s260, 1
      %s265 = smul.addr %s262, 2
      %s266 = sadd.s32 %s264, %s265
      %s267 = scalar_lea.vmem %s3, %s266
      %p268 = pneg %p121
      %p269 = pneg %p118
      %s270 = smul.u32 2, %s21
      %p271 = scmp.lt.s32.totalorder %s20, 1
      %s272 = scalar_select %p271, %s20, 1
      %p273 = scmp.lt.s32.totalorder %s270, 1
      %s274 = scalar_select %p273, %s270, 1
      %s275 = smul.addr %s272, 2
      %s276 = sadd.s32 %s274, %s275
      %s277 = smul.addr %s276, 4
      %s278 = scalar_lea.vmem %s4, %s277
      %p279 = pneg %p149
      %p280 = pneg %p146
      %p281 = pneg %p177
      %p282 = pneg %p174
      %s283 = smul.u32 2, %s21
      %p284 = scmp.lt.s32.totalorder %s20, 1
      %s285 = scalar_select %p284, %s20, 1
      %p286 = scmp.lt.s32.totalorder %s283, 1
      %s287 = scalar_select %p286, %s283, 1
      %s288 = smul.addr %s285, 2
      %s289 = sadd.s32 %s287, %s288
      %s290 = smul.addr %s289, 8
      %s291 = scalar_lea.vmem %s5, %s290
      %s292 = smul.u32 2, %s21
      %p293 = scmp.lt.s32.totalorder %s20, 1
      %s294 = scalar_select %p293, %s20, 1
      %p295 = scmp.lt.s32.totalorder %s292, 1
      %s296 = scalar_select %p295, %s292, 1
      %s297 = smul.addr %s294, 2
      %s298 = sadd.s32 %s296, %s297
      %s299 = scalar_lea.vmem %s1, %s298
      %s300 = smul.u32 2, %s21
      %s301 = smul.u32 2, %s21
      %p302 = scmp.lt.s32.totalorder %s20, 1
      %s303 = scalar_select %p302, %s20, 1
      %p304 = scmp.lt.s32.totalorder %s301, 1
      %s305 = scalar_select %p304, %s301, 1
      %s306 = smul.addr %s303, 2
      %s307 = sadd.s32 %s305, %s306
      %s308 = scalar_lea.vmem %s3, %s307
      %s309 = smul.u32 2, %s21
      %s310 = smul.u32 2, %s21
      %p311 = scmp.lt.s32.totalorder %s20, 1
      %s312 = scalar_select %p311, %s20, 1
      %p313 = scmp.lt.s32.totalorder %s310, 1
      %s314 = scalar_select %p313, %s310, 1
      %s315 = smul.addr %s312, 2
      %s316 = sadd.s32 %s314, %s315
      %s317 = smul.addr %s316, 4
      %s318 = scalar_lea.vmem %s4, %s317
      %s319 = smul.u32 2, %s21
      %s320 = smul.u32 2, %s21
      %p321 = scmp.lt.s32.totalorder %s20, 1
      %s322 = scalar_select %p321, %s20, 1
      %p323 = scmp.lt.s32.totalorder %s320, 1
      %s324 = scalar_select %p323, %s320, 1
      %s325 = smul.addr %s322, 2
      %s326 = sadd.s32 %s324, %s325
      %s327 = smul.addr %s326, 8
      %s328 = scalar_lea.vmem %s5, %s327
      %s329 = smul.u32 2, %s21
      %v331 = vld [vmem:[%s299] sm:$0x3]
      %v332 = vld [vmem:[%s308] sm:$0x3]
      %v333 = vadd.bf16 %v331, %v332
      %v334 = vld [vmem:[%s0] sm:$0xf]
      %v335 = vld [vmem:[%s2] sm:$0xff]
      %337 = vset.pattern.permute.xlu0 0
      %338 = vperm.xlu0 %337, %v335
      %v339 = vpop.permute.xlu0 %338
      %v343 = vunpack.c.l.s4 1966171168
      %v344 = vunpack.c.0.s8 %v343
      %v345 = vlaneseq
      %v346 = vshrl.u32 %v345, 7
      %v347 = vsub.s32 %v344, %v346
      %v348 = vrot.slane %v333, %v347
      %v349 = vcombine.high %v348, %v348
      %v351 = vunpack.c.l.s4 1966171168
      %v352 = vunpack.c.0.s8 %v351
      %v353 = vlaneseq
      %v354 = vshrl.u32 %v353, 7
      %v355 = vsub.s32 %v352, %v354
      %v356 = vrot.slane %v348, %v355
      %v358 = vunpack.c.l.s4 1966171168
      %v359 = vunpack.c.0.s8 %v358
      %v360 = vlaneseq
      %v361 = vshrl.u32 %v360, 7
      %v362 = vsub.s32 %v359, %v361
      %v363 = vrot.slane %v349, %v362
      %vm364 = vcmask 15360
      %v366 = vsel %vm364, %v334, 0
      %vm368 = vcmask 1040384
      %v370 = vsel %vm368, %v356, 0
      %v373 = vsel %vm368, %v363, 0
      %375 = vmatprep.subr.bf16.mxu0 %v373
      %376 = vmatpush1.bf16.msra.mxu0 %v370
      %377 = vmatprep.subr.bf16.mxu0 0
      %378 = vmatpush1.bf16.msra.mxu0 0
      %379 = vmatprep.subr.bf16.mxu0 0
      %380 = vmatpush1.bf16.msra.mxu0 0
      %381 = vmatprep.subr.bf16.mxu0 0
      %382 = vmatpush1.bf16.msra.mxu0 0
      %383 = vmatprep.subr.bf16.mxu0 0
      %384 = vmatpush1.bf16.msra.mxu0 0
      %385 = vmatprep.subr.bf16.mxu0 0
      %386 = vmatpush1.bf16.msra.mxu0 0
      %387 = vmatprep.subr.bf16.mxu0 0
      %388 = vmatpush1.bf16.msra.mxu0 0
      %389 = vmatprep.subr.bf16.mxu0 0
      %390 = vmatpush1.bf16.msra.mxu0 0
      %391 = vmatprep.subr.bf16.mxu0 0
      %392 = vmatpush1.bf16.msra.mxu0 0
      %393 = vmatprep.subr.bf16.mxu0 0
      %394 = vmatpush1.bf16.msra.mxu0 0
      %395 = vmatprep.subr.bf16.mxu0 0
      %396 = vmatpush1.bf16.msra.mxu0 0
      %397 = vmatprep.subr.bf16.mxu0 0
      %398 = vmatpush1.bf16.msra.mxu0 0
      %399 = vmatprep.subr.bf16.mxu0 0
      %400 = vmatpush1.bf16.msra.mxu0 0
      %401 = vmatprep.subr.bf16.mxu0 0
      %402 = vmatpush1.bf16.msra.mxu0 0
      %403 = vmatprep.subr.bf16.mxu0 0
      %404 = vmatpush1.bf16.msra.mxu0 0
      %405 = vmatprep.subr.bf16.mxu0 0
      %406 = vmatpush1.bf16.msra.mxu0 0
      %407 = vmatprep.mubr.bf16.mxu0 0
      %408 = vmatmul.mubr.bf16.gmra.mrb[0].mxu0 %v366
      %v409 = vpop.f32.mrb[0].mxu0
      %v410 = vadd.f32 %v339, %v409
      %v411 = vpop.f32.mrb[0].mxu0
      %v412 = vadd.f32 %v339, %v411
      %v413 = vpop.f32.mrb[0].mxu0
      %v414 = vpop.f32.mrb[0].mxu0
      %415 = vdwg.mxu0
      %v416 = vxor.u32 %v410, 2147483648
      %v417 = vxor.u32 %v412, 2147483648
      %v418 = vmul.f32 %v416, 1.442695
      %v419 = vpow.pop %v418
      %v420 = vmul.f32 %v417, 1.442695
      %v421 = vpow.pop %v420
      %v422 = vadd.f32 %v419, 1.0
      %v423 = vadd.f32 %v421, 1.0
      %v424 = vrcp.pop %v422
      %v425 = vmul.f32 1.0, %v424
      %v426 = vrcp.pop %v423
      %v427 = vmul.f32 1.0, %v426
      %v428 = vld [vmem:[%s318] sm:$0xff]
      %v429 = vunpack.c.l.bf16 %v428
      %v430 = vunpack.c.h.bf16 %v428
      %v431 = vmul.f32 %v429, %v425
      %v432 = vmul.f32 %v430, %v427
      %433 = vst [vmem:[%s328] sm:$0xff] %v431
      %434 = vst [vmem:[%s328 + $0x8] sm:$0xff] %v432
      %s435 = smul.u32 2, %s21
      %p436 = scmp.lt.s32.totalorder %s20, 1
      %s437 = scalar_select %p436, %s20, 1
      %p438 = scmp.lt.s32.totalorder %s435, 1
      %s439 = scalar_select %p438, %s435, 1
      %s440 = smul.addr %s437, 2
      %s441 = sadd.s32 %s439, %s440
      %s442 = smul.addr %s441, 8
      %s443 = scalar_lea.vmem %s5, %s442
      // Predicated region
      $region41: #{_lambda_.25} parent=39 // pred_check
        %p444 = pneg %p174
      $region42: #{_lambda_.25} parent=39 // pred_check_branch
        %446 = sbr.rel (%p444) target = $region44
      $region43: #{_lambda_.25} parent=39 // pred_region
        %s447 = smul.u32 2, %s21
      $region44: #{_lambda_.25} parent=39 // pred_fallthru
        _
    $region40: #{_lambda_.25} parent=5 // pred_fallthru
      _
    %p448 = scmp.le.s32.totalorder 2, %s11
    // Predicated region
    $region45: #{_lambda_.25} parent=5 // pred_check
      %p449 = pneg %p448
    $region46: #{_lambda_.25} parent=5 // pred_check_branch
      %451 = sbr.rel (%p449) target = $region48
    $region47: #{_lambda_.25} parent=5 // pred_region
      %s452 = ssub.s32 %s11, 2
      // Predicated region
      $region49: #{_lambda_.25} parent=47 // pred_check
        %p453 = pneg %p180
      $region50: #{_lambda_.25} parent=47 // pred_check_branch
        %455 = sbr.rel (%p453) target = $region52
      $region51: #{_lambda_.25} parent=47 // pred_region
        %s456 = smul.u32 2, %s23
        %p457 = scmp.lt.s32.totalorder %s22, 1
        %s458 = scalar_select %p457, %s22, 1
        %p459 = scmp.lt.s32.totalorder %s456, 1
        %s460 = scalar_select %p459, %s456, 1
        %s461 = smul.addr %s458, 2
        %s462 = sadd.s32 %s460, %s461
        %s463 = smul.addr %s462, 8
        %s464 = scalar_lea.vmem %s5, %s463
      $region52: #{_lambda_.25} parent=47 // pred_fallthru
        _
    $region48: #{_lambda_.25} parent=5 // pred_fallthru
      _
  $region6: #{_lambda_.25} parent=0 // loop_footer
    %s15 = sadd.s32 1, %s11
  $region7: #{_lambda_.25} parent=0 // loop_footer_branch
    %10 = sbr.rel target = $region3
  $region8: #{_lambda_.25} parent=0 // loop_exit
    _

// kernel: _lambda_.27
$region0: #{_lambda_.27}
  #allocation0 [shape = 'u32[]', space=smem, size = 0x4, offset = 0x4, fixed_abs, tag = 'smem constant byte address 0x4 - core index']
  #allocation1 [shape = 'u32[144,128]{1,0:T(1,128)}', space=vmem, size = 0x12000, scoped, tag = 'internal scratch']
  %s0 = inlined_call_operand.vmem [shape: f32[2,8,256], index: 0, kind: input, shape index: {}]
  %s1 = inlined_call_operand.vmem [shape: f32[8,1], index: 1, kind: input, shape index: {}]
  %s2 = inlined_call_operand.vmem [shape: f32[8,1], index: 2, kind: input, shape index: {}]
  %s3 = inlined_call_operand.vmem [shape: f32[16,8], index: 3, kind: input, shape index: {}]
  %s4 = inlined_call_operand.vmem [shape: f32[16,1], index: 4, kind: input, shape index: {}]
  %s5 = inlined_call_operand.vmem [shape: f32[8,16], index: 5, kind: input, shape index: {}]
  %s6 = inlined_call_operand.vmem [shape: f32[8,1], index: 6, kind: input, shape index: {}]
  %s7 = inlined_call_operand.vmem [shape: f32[2,8,256], index: 7, kind: output, shape index: {}]
  %s8 = sld [smem:[#allocation0]]
  $region61: #{_lambda_.27} parent=0
    _
  %s10 = ssub.s32 1, %s8
  %s11 = scalar_select 0, %s10, %s8
  loop: start=0, step=1, limit=4
  $region2: #{_lambda_.27} parent=0 // loop_pre_header
    _
  $region3: #{_lambda_.27} parent=0 // loop_header
    %s13 = sphi 0, %s17
    %p14 = scmp.ge.s32.totalorder %s13, 4
    %s20 = sphi 0, %s32
    %s21 = sphi 0, %s28
    %s22 = sphi 0, %s20
    %s23 = sphi 0, %s21
    %s24 = sphi 0, %s22
    %s25 = sphi 0, %s23
    %s37 = sphi 0, %s39
    %s40 = sphi 0, %s37
    %s41 = sphi 0, %s40
    %s57 = sphi 0, %s41
    %s61 = sphi 0, %s61
    %s63 = sphi 0, %s61
    %s64 = sphi 0, %s63
    %s78 = sphi 0, %s64
    %s82 = sphi 0, %s82
    %s84 = sphi 0, %s82
    %s85 = sphi 0, %s84
    %s99 = sphi 0, %s85
    %s103 = sphi 0, %s103
    %s105 = sphi 0, %s103
    %s106 = sphi 0, %s105
    %s120 = sphi 0, %s106
    %s124 = sphi 0, %s124
    %s126 = sphi 0, %s124
    %s127 = sphi 0, %s126
    %s141 = sphi 0, %s127
    %s145 = sphi 0, %s145
    %s147 = sphi 0, %s145
    %s148 = sphi 0, %s147
    %s162 = sphi 0, %s148
    %s166 = sphi 0, %s166
    %s168 = sphi 0, %s166
    %s169 = sphi 0, %s168
    %s183 = sphi 0, %s169
    %s191 = sphi 0, %s193
    %s194 = sphi 0, %s191
    %s195 = sphi 0, %s194
    %s211 = sphi 0, %s195
  $region4: #{_lambda_.27} parent=0 // loop_header_branch
    %16 = sbr.rel (%p14) target = $region8
  $region5: #{_lambda_.27} parent=0 // loop_body
    %s18 = ssub.s32 %s13, 1
    %s19 = ssub.s32 %s13, 2
    %s26 = sadd.s32 1, %s21
    %p27 = scmp.ge.s32.totalorder %s26, 1
    %s28 = scalar_select %p27, 0, %s26
    %s29 = sadd.s32 1, %s20
    %s30 = scalar_select %p27, %s29, %s20
    %p31 = scmp.ge.s32.totalorder %s30, 2
    %s32 = scalar_select %p31, 0, %s30
    %s33 = ssub.s32 %s20, %s32
    %s34 = ssub.s32 %s21, %s28
    %s35 = sor.u32 %s33, %s34
    %p36 = scmp.eq.s32.totalorder %s35, 0
    %s38 = sadd.s32 %s37, 1
    %s39 = scalar_select %p36, %s37, %s38
    %p42 = pneg %p36
    %p43 = scmp.eq.s32.totalorder %s13, 1
    %p44 = por %p42, %p43
    %p45 = scmp.ne.s32.totalorder %s37, %s40
    %p46 = scmp.eq.s32.totalorder %s13, 0
    %p47 = por %p45, %p46
    %p48 = scmp.ne.s32.totalorder %s37, %s40
    %p49 = scmp.eq.s32.totalorder %s18, 1
    %p50 = por %p48, %p49
    %p51 = scmp.ne.s32.totalorder %s40, %s41
    %p52 = scmp.eq.s32.totalorder %s18, 0
    %p53 = por %p51, %p52
    %p54 = scmp.ne.s32.totalorder %s40, %s41
    %p55 = scmp.eq.s32.totalorder %s19, 1
    %p56 = por %p54, %p55
    %p58 = scmp.ne.s32.totalorder %s41, %s57
    %p59 = scmp.eq.s32.totalorder %s19, 0
    %p60 = por %p58, %p59
    %s62 = sadd.s32 %s61, 1
    %p65 = scmp.eq.s32.totalorder %s13, 1
    %p66 = scmp.ne.s32.totalorder %s61, %s63
    %p67 = scmp.eq.s32.totalorder %s13, 0
    %p68 = por %p66, %p67
    %p69 = scmp.ne.s32.totalorder %s61, %s63
    %p70 = scmp.eq.s32.totalorder %s18, 1
    %p71 = por %p69, %p70
    %p72 = scmp.ne.s32.totalorder %s63, %s64
    %p73 = scmp.eq.s32.totalorder %s18, 0
    %p74 = por %p72, %p73
    %p75 = scmp.ne.s32.totalorder %s63, %s64
    %p76 = scmp.eq.s32.totalorder %s19, 1
    %p77 = por %p75, %p76
    %p79 = scmp.ne.s32.totalorder %s64, %s78
    %p80 = scmp.eq.s32.totalorder %s19, 0
    %p81 = por %p79, %p80
    %s83 = sadd.s32 %s82, 1
    %p86 = scmp.eq.s32.totalorder %s13, 1
    %p87 = scmp.ne.s32.totalorder %s82, %s84
    %p88 = scmp.eq.s32.totalorder %s13, 0
    %p89 = por %p87, %p88
    %p90 = scmp.ne.s32.totalorder %s82, %s84
    %p91 = scmp.eq.s32.totalorder %s18, 1
    %p92 = por %p90, %p91
    %p93 = scmp.ne.s32.totalorder %s84, %s85
    %p94 = scmp.eq.s32.totalorder %s18, 0
    %p95 = por %p93, %p94
    %p96 = scmp.ne.s32.totalorder %s84, %s85
    %p97 = scmp.eq.s32.totalorder %s19, 1
    %p98 = por %p96, %p97
    %p100 = scmp.ne.s32.totalorder %s85, %s99
    %p101 = scmp.eq.s32.totalorder %s19, 0
    %p102 = por %p100, %p101
    %s104 = sadd.s32 %s103, 1
    %p107 = scmp.eq.s32.totalorder %s13, 1
    %p108 = scmp.ne.s32.totalorder %s103, %s105
    %p109 = scmp.eq.s32.totalorder %s13, 0
    %p110 = por %p108, %p109
    %p111 = scmp.ne.s32.totalorder %s103, %s105
    %p112 = scmp.eq.s32.totalorder %s18, 1
    %p113 = por %p111, %p112
    %p114 = scmp.ne.s32.totalorder %s105, %s106
    %p115 = scmp.eq.s32.totalorder %s18, 0
    %p116 = por %p114, %p115
    %p117 = scmp.ne.s32.totalorder %s105, %s106
    %p118 = scmp.eq.s32.totalorder %s19, 1
    %p119 = por %p117, %p118
    %p121 = scmp.ne.s32.totalorder %s106, %s120
    %p122 = scmp.eq.s32.totalorder %s19, 0
    %p123 = por %p121, %p122
    %s125 = sadd.s32 %s124, 1
    %p128 = scmp.eq.s32.totalorder %s13, 1
    %p129 = scmp.ne.s32.totalorder %s124, %s126
    %p130 = scmp.eq.s32.totalorder %s13, 0
    %p131 = por %p129, %p130
    %p132 = scmp.ne.s32.totalorder %s124, %s126
    %p133 = scmp.eq.s32.totalorder %s18, 1
    %p134 = por %p132, %p133
    %p135 = scmp.ne.s32.totalorder %s126, %s127
    %p136 = scmp.eq.s32.totalorder %s18, 0
    %p137 = por %p135, %p136
    %p138 = scmp.ne.s32.totalorder %s126, %s127
    %p139 = scmp.eq.s32.totalorder %s19, 1
    %p140 = por %p138, %p139
    %p142 = scmp.ne.s32.totalorder %s127, %s141
    %p143 = scmp.eq.s32.totalorder %s19, 0
    %p144 = por %p142, %p143
    %s146 = sadd.s32 %s145, 1
    %p149 = scmp.eq.s32.totalorder %s13, 1
    %p150 = scmp.ne.s32.totalorder %s145, %s147
    %p151 = scmp.eq.s32.totalorder %s13, 0
    %p152 = por %p150, %p151
    %p153 = scmp.ne.s32.totalorder %s145, %s147
    %p154 = scmp.eq.s32.totalorder %s18, 1
    %p155 = por %p153, %p154
    %p156 = scmp.ne.s32.totalorder %s147, %s148
    %p157 = scmp.eq.s32.totalorder %s18, 0
    %p158 = por %p156, %p157
    %p159 = scmp.ne.s32.totalorder %s147, %s148
    %p160 = scmp.eq.s32.totalorder %s19, 1
    %p161 = por %p159, %p160
    %p163 = scmp.ne.s32.totalorder %s148, %s162
    %p164 = scmp.eq.s32.totalorder %s19, 0
    %p165 = por %p163, %p164
    %s167 = sadd.s32 %s166, 1
    %p170 = scmp.eq.s32.totalorder %s13, 1
    %p171 = scmp.ne.s32.totalorder %s166, %s168
    %p172 = scmp.eq.s32.totalorder %s13, 0
    %p173 = por %p171, %p172
    %p174 = scmp.ne.s32.totalorder %s166, %s168
    %p175 = scmp.eq.s32.totalorder %s18, 1
    %p176 = por %p174, %p175
    %p177 = scmp.ne.s32.totalorder %s168, %s169
    %p178 = scmp.eq.s32.totalorder %s18, 0
    %p179 = por %p177, %p178
    %p180 = scmp.ne.s32.totalorder %s168, %s169
    %p181 = scmp.eq.s32.totalorder %s19, 1
    %p182 = por %p180, %p181
    %p184 = scmp.ne.s32.totalorder %s169, %s183
    %p185 = scmp.eq.s32.totalorder %s19, 0
    %p186 = por %p184, %p185
    %s187 = ssub.s32 %s20, %s32
    %s188 = ssub.s32 %s21, %s28
    %s189 = sor.u32 %s187, %s188
    %p190 = scmp.eq.s32.totalorder %s189, 0
    %s192 = sadd.s32 %s191, 1
    %s193 = scalar_select %p190, %s191, %s192
    %p196 = pneg %p190
    %p197 = scmp.eq.s32.totalorder %s13, 1
    %p198 = por %p196, %p197
    %p199 = scmp.ne.s32.totalorder %s191, %s194
    %p200 = scmp.eq.s32.totalorder %s13, 0
    %p201 = por %p199, %p200
    %p202 = scmp.ne.s32.totalorder %s191, %s194
    %p203 = scmp.eq.s32.totalorder %s18, 1
    %p204 = por %p202, %p203
    %p205 = scmp.ne.s32.totalorder %s194, %s195
    %p206 = scmp.eq.s32.totalorder %s18, 0
    %p207 = por %p205, %p206
    %p208 = scmp.ne.s32.totalorder %s194, %s195
    %p209 = scmp.eq.s32.totalorder %s19, 1
    %p210 = por %p208, %p209
    %p212 = scmp.ne.s32.totalorder %s195, %s211
    %p213 = scmp.eq.s32.totalorder %s19, 0
    %p214 = por %p212, %p213
    %p215 = scmp.le.s32.totalorder 1, %s13
    %p216 = scmp.lt.s32.totalorder %s13, 3
    %p217 = pnand %p215, %p216
    %p218 = pneg %p217
    // Predicated region
    $region9: #{_lambda_.27} parent=5 // pred_check
      _
    $region10: #{_lambda_.27} parent=5 // pred_check_branch
      %220 = sbr.rel (%p217) target = $region12
    $region11: #{_lambda_.27} parent=5 // pred_region
      %s221 = ssub.s32 %s13, 1
      // Predicated region
      $region13: #{_lambda_.27} parent=11 // pred_check
        %p222 = pneg %p74
      $region14: #{_lambda_.27} parent=11 // pred_check_branch
        %224 = sbr.rel (%p222) target = $region16
      $region15: #{_lambda_.27} parent=11 // pred_region
        _
      $region16: #{_lambda_.27} parent=11 // pred_fallthru
        _
      // Predicated region
      $region17: #{_lambda_.27} parent=11 // pred_check
        %p225 = pneg %p95
      $region18: #{_lambda_.27} parent=11 // pred_check_branch
        %227 = sbr.rel (%p225) target = $region20
      $region19: #{_lambda_.27} parent=11 // pred_region
        _
      $region20: #{_lambda_.27} parent=11 // pred_fallthru
        _
      // Predicated region
      $region21: #{_lambda_.27} parent=11 // pred_check
        %p228 = pneg %p116
      $region22: #{_lambda_.27} parent=11 // pred_check_branch
        %230 = sbr.rel (%p228) target = $region24
      $region23: #{_lambda_.27} parent=11 // pred_region
        _
      $region24: #{_lambda_.27} parent=11 // pred_fallthru
        _
      // Predicated region
      $region25: #{_lambda_.27} parent=11 // pred_check
        %p231 = pneg %p137
      $region26: #{_lambda_.27} parent=11 // pred_check_branch
        %233 = sbr.rel (%p231) target = $region28
      $region27: #{_lambda_.27} parent=11 // pred_region
        _
      $region28: #{_lambda_.27} parent=11 // pred_fallthru
        _
      // Predicated region
      $region29: #{_lambda_.27} parent=11 // pred_check
        %p234 = pneg %p158
      $region30: #{_lambda_.27} parent=11 // pred_check_branch
        %236 = sbr.rel (%p234) target = $region32
      $region31: #{_lambda_.27} parent=11 // pred_region
        _
      $region32: #{_lambda_.27} parent=11 // pred_fallthru
        _
      // Predicated region
      $region33: #{_lambda_.27} parent=11 // pred_check
        %p237 = pneg %p179
      $region34: #{_lambda_.27} parent=11 // pred_check_branch
        %239 = sbr.rel (%p237) target = $region36
      $region35: #{_lambda_.27} parent=11 // pred_region
        _
      $region36: #{_lambda_.27} parent=11 // pred_fallthru
        _
    $region12: #{_lambda_.27} parent=5 // pred_fallthru
      _
    %p240 = scmp.lt.s32.totalorder %s13, 2
    // Predicated region
    $region37: #{_lambda_.27} parent=5 // pred_check
      %p241 = pneg %p240
    $region38: #{_lambda_.27} parent=5 // pred_check_branch
      %243 = sbr.rel (%p241) target = $region40
    $region39: #{_lambda_.27} parent=5 // pred_region
      // Predicated region
      $region41: #{_lambda_.27} parent=39 // pred_check
        %p244 = pneg %p47
      $region42: #{_lambda_.27} parent=39 // pred_check_branch
        %246 = sbr.rel (%p244) target = $region44
      $region43: #{_lambda_.27} parent=39 // pred_region
        %s247 = smul.u32 2, %s21
        %p248 = scmp.lt.s32.totalorder %s20, 1
        %s249 = scalar_select %p248, %s20, 1
        %p250 = scmp.lt.s32.totalorder %s247, 1
        %s251 = scalar_select %p250, %s247, 1
        %s252 = smul.addr %s249, 2
        %s253 = sadd.s32 %s251, %s252
        %s254 = smul.addr %s253, 8
        %s255 = scalar_lea.vmem %s0, %s254
        %s256 = smul.u32 2, %s21
      $region44: #{_lambda_.27} parent=39 // pred_fallthru
        _
    $region40: #{_lambda_.27} parent=5 // pred_fallthru
      _
    %p257 = scmp.le.s32.totalorder 1, %s13
    %p258 = scmp.lt.s32.totalorder %s13, 3
    %p259 = pnand %p257, %p258
    %p260 = pneg %p259
    // Predicated region
    $region45: #{_lambda_.27} parent=5 // pred_check
      _
    $region46: #{_lambda_.27} parent=5 // pred_check_branch
      %262 = sbr.rel (%p259) target = $region48
    $region47: #{_lambda_.27} parent=5 // pred_region
      %s263 = ssub.s32 %s13, 1
      %s264 = smul.u32 2, %s23
      %p265 = scmp.lt.s32.totalorder %s22, 1
      %s266 = scalar_select %p265, %s22, 1
      %p267 = scmp.lt.s32.totalorder %s264, 1
      %s268 = scalar_select %p267, %s264, 1
      %s269 = smul.addr %s266, 2
      %s270 = sadd.s32 %s268, %s269
      %s271 = smul.addr %s270, 8
      %s272 = scalar_lea.vmem %s0, %s271
      %p273 = pneg %p53
      %p274 = pneg %p50
      %p275 = pneg %p74
      %p276 = pneg %p71
      %p277 = pneg %p95
      %p278 = pneg %p92
      %p279 = pneg %p116
      %p280 = pneg %p113
      %p281 = pneg %p137
      %p282 = pneg %p134
      %p283 = pneg %p158
      %p284 = pneg %p155
      %p285 = pneg %p179
      %p286 = pneg %p176
      %p287 = pneg %p207
      %p288 = pneg %p204
      %s289 = smul.u32 2, %s23
      %p290 = scmp.lt.s32.totalorder %s22, 1
      %s291 = scalar_select %p290, %s22, 1
      %p292 = scmp.lt.s32.totalorder %s289, 1
      %s293 = scalar_select %p292, %s289, 1
      %s294 = smul.addr %s291, 2
      %s295 = sadd.s32 %s293, %s294
      %s296 = smul.addr %s295, 8
      %s297 = scalar_lea.vmem %s7, %s296
      %s298 = smul.u32 2, %s23
      %p299 = scmp.lt.s32.totalorder %s22, 1
      %s300 = scalar_select %p299, %s22, 1
      %p301 = scmp.lt.s32.totalorder %s298, 1
      %s302 = scalar_select %p301, %s298, 1
      %s303 = smul.addr %s300, 2
      %s304 = sadd.s32 %s302, %s303
      %s305 = smul.addr %s304, 8
      %s306 = scalar_lea.vmem %s0, %s305
      %s307 = smul.u32 2, %s23
      %s308 = smul.u32 2, %s23
      %p309 = scmp.lt.s32.totalorder %s22, 1
      %s310 = scalar_select %p309, %s22, 1
      %p311 = scmp.lt.s32.totalorder %s308, 1
      %s312 = scalar_select %p311, %s308, 1
      %s313 = smul.addr %s310, 2
      %s314 = sadd.s32 %s312, %s313
      %s315 = smul.addr %s314, 8
      %s316 = scalar_lea.vmem %s7, %s315
      %s317 = smul.u32 2, %s23
      %v318 = vld [vmem:[%s306] sm:$0xff]
      %v319 = vld [vmem:[%s306 + $0x8] sm:$0xff]
      %v320 = vrot.slane %v318, 4
      %v321 = vadd.f32 %v318, %v320
      %v322 = vrot.slane %v321, 2
      %v323 = vadd.f32 %v321, %v322
      %v324 = vrot.slane %v323, 1
      %v325 = vadd.f32 %v323, %v324
      %v326 = vrot.slane %v319, 4
      %v327 = vadd.f32 %v319, %v326
      %v328 = vrot.slane %v327, 2
      %v329 = vadd.f32 %v327, %v328
      %v330 = vrot.slane %v329, 1
      %v331 = vadd.f32 %v329, %v330
      %v332 = vrcp.pop 8.0
      %v333 = vmul.f32 %v325, %v332
      %v334 = vmul.f32 %v331, %v332
      %v335 = vsub.f32 %v318, %v333
      %v336 = vsub.f32 %v319, %v334
      %v337 = vmul.f32 %v335, %v335
      %v338 = vmul.f32 %v336, %v336
      %v339 = vrot.slane %v337, 4
      %v340 = vadd.f32 %v337, %v339
      %v341 = vrot.slane %v340, 2
      %v342 = vadd.f32 %v340, %v341
      %v343 = vrot.slane %v342, 1
      %v344 = vadd.f32 %v342, %v343
      %v345 = vrot.slane %v338, 4
      %v346 = vadd.f32 %v338, %v345
      %v347 = vrot.slane %v346, 2
      %v348 = vadd.f32 %v346, %v347
      %v349 = vrot.slane %v348, 1
      %v350 = vadd.f32 %v348, %v349
      %v351 = vmul.f32 %v344, %v332
      %v352 = vmul.f32 %v350, %v332
      %v353 = vadd.f32 %v351, 1e-05
      %v354 = vadd.f32 %v352, 1e-05
      %v355 = vrsqrt.pop %v353
      %v356 = vrsqrt.pop %v354
      %v357 = vmul.f32 %v335, %v355
      %v358 = vmul.f32 %v336, %v356
      %v359 = vld [vmem:[%s1] sm:$0xff]
      %361 = vset.pattern.permute.xlu0 0
      %362 = vperm.xlu0 %361, %v359
      %v363 = vpop.permute.xlu0 %362
      %v365 = vmul.f32 %v357, %v363
      %v366 = vmul.f32 %v358, %v363
      %v367 = vld [vmem:[%s2] sm:$0xff]
      %369 = vset.pattern.permute.xlu0 0
      %370 = vperm.xlu0 %369, %v367
      %v371 = vpop.permute.xlu0 %370
      %v373 = vadd.f32 %v365, %v371
      %v374 = vadd.f32 %v366, %v371
      %v375 = vld [vmem:[%s3] sm:$0xff]
      %v376 = vld [vmem:[%s3 + $0x8] sm:$0xff]
      %v377 = vld [vmem:[%s4] sm:$0xff]
      %v378 = vld [vmem:[%s4 + $0x8] sm:$0xff]
      %380 = vset.pattern.permute.xlu0 0
      %381 = vperm.xlu0 %380, %v377
      %v382 = vpop.permute.xlu0 %381
      %385 = vset.pattern.permute.xlu0 0
      %386 = vperm.xlu0 %385, %v378
      %v387 = vpop.permute.xlu0 %386
      %vm389 = vcmask 64512
      %v391 = vsel %vm389, %v375, 0
      %v394 = vsel %vm389, %v376, 0
      %396 = vmatprep.subr.mxu0 %v374
      %397 = vmatpush1.msra.mxu0 %v373
      %398 = vmatprep.subr.mxu0 0.0
      %399 = vmatpush1.msra.mxu0 0.0
      %400 = vmatprep.subr.mxu0 0.0
      %401 = vmatpush1.msra.mxu0 0.0
      %402 = vmatprep.subr.mxu0 0.0
      %403 = vmatpush1.msra.mxu0 0.0
      %404 = vmatprep.subr.mxu0 0.0
      %405 = vmatpush1.msra.mxu0 0.0
      %406 = vmatprep.subr.mxu0 0.0
      %407 = vmatpush1.msra.mxu0 0.0
      %408 = vmatprep.subr.mxu0 0.0
      %409 = vmatpush1.msra.mxu0 0.0
      %410 = vmatprep.subr.mxu0 0.0
      %411 = vmatpush1.msra.mxu0 0.0
      %412 = vmatprep.subr.mxu0 0.0
      %413 = vmatpush1.msra.mxu0 0.0
      %414 = vmatprep.subr.mxu0 0.0
      %415 = vmatpush1.msra.mxu0 0.0
      %416 = vmatprep.subr.mxu0 0.0
      %417 = vmatpush1.msra.mxu0 0.0
      %418 = vmatprep.subr.mxu0 0.0
      %419 = vmatpush1.msra.mxu0 0.0
      %420 = vmatprep.subr.mxu0 0.0
      %421 = vmatpush1.msra.mxu0 0.0
      %422 = vmatprep.subr.mxu0 0.0
      %423 = vmatpush1.msra.mxu0 0.0
      %424 = vmatprep.subr.mxu0 0.0
      %425 = vmatpush1.msra.mxu0 0.0
      %426 = vmatprep.subr.mxu0 0.0
      %427 = vmatpush1.msra.mxu0 0.0
      %428 = vmatprep.subr.mxu0 0.0
      %429 = vmatpush1.msra.mxu0 0.0
      %430 = vmatprep.subr.mxu0 0.0
      %431 = vmatpush1.msra.mxu0 0.0
      %432 = vmatprep.subr.mxu0 0.0
      %433 = vmatpush1.msra.mxu0 0.0
      %434 = vmatprep.subr.mxu0 0.0
      %435 = vmatpush1.msra.mxu0 0.0
      %436 = vmatprep.subr.mxu0 0.0
      %437 = vmatpush1.msra.mxu0 0.0
      %438 = vmatprep.subr.mxu0 0.0
      %439 = vmatpush1.msra.mxu0 0.0
      %440 = vmatprep.subr.mxu0 0.0
      %441 = vmatpush1.msra.mxu0 0.0
      %442 = vmatprep.subr.mxu0 0.0
      %443 = vmatpush1.msra.mxu0 0.0
      %444 = vmatprep.subr.mxu0 0.0
      %445 = vmatpush1.msra.mxu0 0.0
      %446 = vmatprep.subr.mxu0 0.0
      %447 = vmatpush1.msra.mxu0 0.0
      %448 = vmatprep.subr.mxu0 0.0
      %449 = vmatpush1.msra.mxu0 0.0
      %450 = vmatprep.subr.mxu0 0.0
      %451 = vmatpush1.msra.mxu0 0.0
      %452 = vmatprep.subr.mxu0 0.0
      %453 = vmatpush1.msra.mxu0 0.0
      %454 = vmatprep.subr.mxu0 0.0
      %455 = vmatpush1.msra.mxu0 0.0
      %456 = vmatprep.subr.mxu0 0.0
      %457 = vmatpush1.msra.mxu0 0.0
      %458 = vmatprep.subr.mxu0 0.0
      %459 = vmatpush1.msra.mxu0 0.0
      %460 = vmatprep.mubr.f32.mxu0 0.0
      %461 = vmatmul.mubr.f32.gmra.mrb[0].mxu0 %v391
      %v462 = vpop.f32.mrb[0].mxu0
      %v463 = vadd.f32 %v382, %v462
      %v464 = vpop.f32.mrb[0].mxu0
      %v465 = vadd.f32 %v382, %v464
      %466 = vmatprep.mubr.f32.mxu0 0.0
      %467 = vmatmul.mubr.f32.gmra.mrb[0].mxu0 %v394
      %v468 = vpop.f32.mrb[0].mxu0
      %v469 = vadd.f32 %v387, %v468
      %v470 = vpop.f32.mrb[0].mxu0
      %v471 = vadd.f32 %v387, %v470
      %472 = vdwg.mxu0
      %v473 = vmul.f32 %v463, 0.5
      %v474 = vmul.f32 %v465, 0.5
      %v475 = vmul.f32 %v469, 0.5
      %v476 = vmul.f32 %v471, 0.5
      %v477 = vmul.f32 %v463, 0.044715
      %v478 = vmul.f32 %v465, 0.044715
      %v479 = vmul.f32 %v469, 0.044715
      %v480 = vmul.f32 %v471, 0.044715
      %v481 = vmul.f32 %v477, %v463
      %v482 = vmul.f32 %v478, %v465
      %v483 = vmul.f32 %v479, %v469
      %v484 = vmul.f32 %v480, %v471
      %v485 = vmul.f32 %v481, %v463
      %v486 = vmul.f32 %v482, %v465
      %v487 = vmul.f32 %v483, %v469
      %v488 = vmul.f32 %v484, %v471
      %v489 = vadd.f32 %v463, %v485
      %v490 = vadd.f32 %v465, %v486
      %v491 = vadd.f32 %v469, %v487
      %v492 = vadd.f32 %v471, %v488
      %v493 = vmul.f32 %v489, 0.7978846
      %v494 = vmul.f32 %v490, 0.7978846
      %v495 = vmul.f32 %v491, 0.7978846
      %v496 = vmul.f32 %v492, 0.7978846
      %v497 = vtanh.pop %v493
      %v498 = vtanh.pop %v494
      %v499 = vtanh.pop %v495
      %v500 = vtanh.pop %v496
      %v501 = vadd.f32 %v497, 1.0
      %v502 = vadd.f32 %v498, 1.0
      %v503 = vadd.f32 %v499, 1.0
      %v504 = vadd.f32 %v500, 1.0
      %v505 = vmul.f32 %v473, %v501
      %v506 = vmul.f32 %v474, %v502
      %v507 = vmul.f32 %v475, %v503
      %v508 = vmul.f32 %v476, %v504
      %v509 = vld [vmem:[%s5] sm:$0xff]
      %v510 = vld [vmem:[%s6] sm:$0xff]
      %512 = vset.pattern.permute.xlu0 0
      %513 = vperm.xlu0 %512, %v510
      %v514 = vpop.permute.xlu0 %513
      %vm516 = vcmask 130048
      %v518 = vsel %vm516, %v509, 0
      %520 = vmatprep.subr.mxu0 %v506
      %521 = vmatpush1.msra.mxu0 %v505
      %522 = vmatprep.subr.mxu0 %v508
      %523 = vmatpush1.msra.mxu0 %v507
      %524 = vmatprep.subr.mxu0 0.0
      %525 = vmatpush1.msra.mxu0 0.0
      %526 = vmatprep.subr.mxu0 0.0
      %527 = vmatpush1.msra.mxu0 0.0
      %528 = vmatprep.subr.mxu0 0.0
      %529 = vmatpush1.msra.mxu0 0.0
      %530 = vmatprep.subr.mxu0 0.0
      %531 = vmatpush1.msra.mxu0 0.0
      %532 = vmatprep.subr.mxu0 0.0
      %533 = vmatpush1.msra.mxu0 0.0
      %534 = vmatprep.subr.mxu0 0.0
      %535 = vmatpush1.msra.mxu0 0.0
      %536 = vmatprep.subr.mxu0 0.0
      %537 = vmatpush1.msra.mxu0 0.0
      %538 = vmatprep.subr.mxu0 0.0
      %539 = vmatpush1.msra.mxu0 0.0
      %540 = vmatprep.subr.mxu0 0.0
      %541 = vmatpush1.msra.mxu0 0.0
      %542 = vmatprep.subr.mxu0 0.0
      %543 = vmatpush1.msra.mxu0 0.0
      %544 = vmatprep.subr.mxu0 0.0
      %545 = vmatpush1.msra.mxu0 0.0
      %546 = vmatprep.subr.mxu0 0.0
      %547 = vmatpush1.msra.mxu0 0.0
      %548 = vmatprep.subr.mxu0 0.0
      %549 = vmatpush1.msra.mxu0 0.0
      %550 = vmatprep.subr.mxu0 0.0
      %551 = vmatpush1.msra.mxu0 0.0
      %552 = vmatprep.subr.mxu0 0.0
      %553 = vmatpush1.msra.mxu0 0.0
      %554 = vmatprep.subr.mxu0 0.0
      %555 = vmatpush1.msra.mxu0 0.0
      %556 = vmatprep.subr.mxu0 0.0
      %557 = vmatpush1.msra.mxu0 0.0
      %558 = vmatprep.subr.mxu0 0.0
      %559 = vmatpush1.msra.mxu0 0.0
      %560 = vmatprep.subr.mxu0 0.0
      %561 = vmatpush1.msra.mxu0 0.0
      %562 = vmatprep.subr.mxu0 0.0
      %563 = vmatpush1.msra.mxu0 0.0
      %564 = vmatprep.subr.mxu0 0.0
      %565 = vmatpush1.msra.mxu0 0.0
      %566 = vmatprep.subr.mxu0 0.0
      %567 = vmatpush1.msra.mxu0 0.0
      %568 = vmatprep.subr.mxu0 0.0
      %569 = vmatpush1.msra.mxu0 0.0
      %570 = vmatprep.subr.mxu0 0.0
      %571 = vmatpush1.msra.mxu0 0.0
      %572 = vmatprep.subr.mxu0 0.0
      %573 = vmatpush1.msra.mxu0 0.0
      %574 = vmatprep.subr.mxu0 0.0
      %575 = vmatpush1.msra.mxu0 0.0
      %576 = vmatprep.subr.mxu0 0.0
      %577 = vmatpush1.msra.mxu0 0.0
      %578 = vmatprep.subr.mxu0 0.0
      %579 = vmatpush1.msra.mxu0 0.0
      %580 = vmatprep.subr.mxu0 0.0
      %581 = vmatpush1.msra.mxu0 0.0
      %582 = vmatprep.subr.mxu0 0.0
      %583 = vmatpush1.msra.mxu0 0.0
      %584 = vmatprep.mubr.f32.mxu0 0.0
      %585 = vmatmul.mubr.f32.gmra.mrb[0].mxu0 %v518
      %v586 = vpop.f32.mrb[0].mxu0
      %v587 = vadd.f32 %v514, %v586
      %v588 = vpop.f32.mrb[0].mxu0
      %v589 = vadd.f32 %v514, %v588
      %590 = vdwg.mxu0
      %v591 = vadd.f32 %v318, %v587
      %v592 = vadd.f32 %v319, %v589
      %593 = vst [vmem:[%s316] sm:$0xff] %v591
      %594 = vst [vmem:[%s316 + $0x8] sm:$0xff] %v592
      %s595 = smul.u32 2, %s23
      %p596 = scmp.lt.s32.totalorder %s22, 1
      %s597 = scalar_select %p596, %s22, 1
      %p598 = scmp.lt.s32.totalorder %s595, 1
      %s599 = scalar_select %p598, %s595, 1
      %s600 = smul.addr %s597, 2
      %s601 = sadd.s32 %s599, %s600
      %s602 = smul.addr %s601, 8
      %s603 = scalar_lea.vmem %s7, %s602
      // Predicated region
      $region49: #{_lambda_.27} parent=47 // pred_check
        %p604 = pneg %p204
      $region50: #{_lambda_.27} parent=47 // pred_check_branch
        %606 = sbr.rel (%p604) target = $region52
      $region51: #{_lambda_.27} parent=47 // pred_region
        %s607 = smul.u32 2, %s23
      $region52: #{_lambda_.27} parent=47 // pred_fallthru
        _
    $region48: #{_lambda_.27} parent=5 // pred_fallthru
      _
    %p608 = scmp.le.s32.totalorder 2, %s13
    // Predicated region
    $region53: #{_lambda_.27} parent=5 // pred_check
      %p609 = pneg %p608
    $region54: #{_lambda_.27} parent=5 // pred_check_branch
      %611 = sbr.rel (%p609) target = $region56
    $region55: #{_lambda_.27} parent=5 // pred_region
      %s612 = ssub.s32 %s13, 2
      // Predicated region
      $region57: #{_lambda_.27} parent=55 // pred_check
        %p613 = pneg %p210
      $region58: #{_lambda_.27} parent=55 // pred_check_branch
        %615 = sbr.rel (%p613) target = $region60
      $region59: #{_lambda_.27} parent=55 // pred_region
        %s616 = smul.u32 2, %s25
        %p617 = scmp.lt.s32.totalorder %s24, 1
        %s618 = scalar_select %p617, %s24, 1
        %p619 = scmp.lt.s32.totalorder %s616, 1
        %s620 = scalar_select %p619, %s616, 1
        %s621 = smul.addr %s618, 2
        %s622 = sadd.s32 %s620, %s621
        %s623 = smul.addr %s622, 8
        %s624 = scalar_lea.vmem %s7, %s623
      $region60: #{_lambda_.27} parent=55 // pred_fallthru
        _
    $region56: #{_lambda_.27} parent=5 // pred_fallthru
      _
  $region6: #{_lambda_.27} parent=0 // loop_footer
    %s17 = sadd.s32 1, %s13
  $region7: #{_lambda_.27} parent=0 // loop_footer_branch
    %12 = sbr.rel target = $region3
  $region8: #{_lambda_.27} parent=0 // loop_exit
    _

// kernel: _lambda_.26
$region0: #{_lambda_.26}
  #allocation0 [shape = 'u32[]', space=smem, size = 0x4, offset = 0x4, fixed_abs, tag = 'smem constant byte address 0x4 - core index']
  #allocation1 [shape = 'u32[144,128]{1,0:T(1,128)}', space=vmem, size = 0x12000, scoped, tag = 'internal scratch']
  %s0 = inlined_call_operand.vmem [shape: f32[2,16,16,8], index: 0, kind: input, shape index: {}]
  %s1 = inlined_call_operand.vmem [shape: f32[1,8], index: 1, kind: input, shape index: {}]
  %s2 = inlined_call_operand.vmem [shape: f32[1,8], index: 2, kind: input, shape index: {}]
  %s3 = inlined_call_operand.vmem [shape: f32[8,24], index: 3, kind: input, shape index: {}]
  %s4 = inlined_call_operand.vmem [shape: f32[1,24], index: 4, kind: input, shape index: {}]
  %s5 = inlined_call_operand.vmem [shape: f32[2,64,64], index: 5, kind: input, shape index: {}]
  %s6 = inlined_call_operand.vmem [shape: f32[4,64,64], index: 6, kind: input, shape index: {}]
  %s7 = inlined_call_operand.vmem [shape: f32[8,8], index: 7, kind: input, shape index: {}]
  %s8 = inlined_call_operand.vmem [shape: f32[1,8], index: 8, kind: input, shape index: {}]
  %s9 = inlined_call_operand.vmem [shape: f32[2,16,16,8], index: 9, kind: output, shape index: {}]
  %s10 = sld [smem:[#allocation0]]
  $region141: #{_lambda_.26} parent=0
    _
  %s12 = ssub.s32 1, %s10
  %s13 = scalar_select 0, %s12, %s10
  $region1: #{_lambda_.26} parent=0
    #allocation2 [shape = 'u8[65536]{0}', space=vmem, size = 0x10000, scoped, tag = 'input window, operand 0']
    #allocation3 [shape = 'u8[65536]{0}', space=vmem, size = 0x10000, scoped, tag = 'output window, operand 0']
    loop: start=0, step=1, limit=10
    $region2: #{_lambda_.26} parent=1 // loop_pre_header
      _
    $region3: #{_lambda_.26} parent=1 // loop_header
      %s15 = sphi 0, %s19
      %p16 = scmp.ge.s32.totalorder %s15, 10
      %s22 = sphi 0, %s41
      %s23 = sphi 0, %s37
      %s24 = sphi 0, %s33
      %s25 = sphi 0, %s22
      %s26 = sphi 0, %s23
      %s27 = sphi 0, %s24
      %s28 = sphi 0, %s25
      %s29 = sphi 0, %s26
      %s30 = sphi 0, %s27
      %s48 = sphi 0, %s50
      %s51 = sphi 0, %s48
      %s52 = sphi 0, %s51
      %s68 = sphi 0, %s52
      %s72 = sphi 0, %s72
      %s74 = sphi 0, %s72
      %s75 = sphi 0, %s74
      %s89 = sphi 0, %s75
      %s93 = sphi 0, %s93
      %s95 = sphi 0, %s93
      %s96 = sphi 0, %s95
      %s110 = sphi 0, %s96
      %s114 = sphi 0, %s114
      %s116 = sphi 0, %s114
      %s117 = sphi 0, %s116
      %s131 = sphi 0, %s117
      %s135 = sphi 0, %s135
      %s137 = sphi 0, %s135
      %s138 = sphi 0, %s137
      %s152 = sphi 0, %s138
      %s156 = sphi 0, %s156
      %s158 = sphi 0, %s156
      %s159 = sphi 0, %s158
      %s173 = sphi 0, %s159
      %s183 = sphi 0, %s185
      %s186 = sphi 0, %s183
      %s187 = sphi 0, %s186
      %s203 = sphi 0, %s187
      %s207 = sphi 0, %s207
      %s209 = sphi 0, %s207
      %s210 = sphi 0, %s209
      %s224 = sphi 0, %s210
      %s228 = sphi 0, %s228
      %s230 = sphi 0, %s228
      %s231 = sphi 0, %s230
      %s245 = sphi 0, %s231
      %s255 = sphi 0, %s257
      %s258 = sphi 0, %s255
      %s259 = sphi 0, %s258
      %s275 = sphi 0, %s259
    $region4: #{_lambda_.26} parent=1 // loop_header_branch
      %18 = sbr.rel (%p16) target = $region8
    $region5: #{_lambda_.26} parent=1 // loop_body
      %s20 = ssub.s32 %s15, 1
      %s21 = ssub.s32 %s15, 2
      %s31 = sadd.s32 1, %s24
      %p32 = scmp.ge.s32.totalorder %s31, 2
      %s33 = scalar_select %p32, 0, %s31
      %s34 = sadd.s32 1, %s23
      %s35 = scalar_select %p32, %s34, %s23
      %p36 = scmp.ge.s32.totalorder %s35, 2
      %s37 = scalar_select %p36, 0, %s35
      %s38 = sadd.s32 1, %s22
      %s39 = scalar_select %p36, %s38, %s22
      %p40 = scmp.ge.s32.totalorder %s39, 2
      %s41 = scalar_select %p40, 0, %s39
      %s42 = ssub.s32 %s22, %s41
      %s43 = ssub.s32 %s23, %s37
      %s44 = sor.u32 %s42, %s43
      %s45 = ssub.s32 %s24, %s33
      %s46 = sor.u32 %s44, %s45
      %p47 = scmp.eq.s32.totalorder %s46, 0
      %s49 = sadd.s32 %s48, 1
      %s50 = scalar_select %p47, %s48, %s49
      %p53 = pneg %p47
      %p54 = scmp.eq.s32.totalorder %s15, 7
      %p55 = por %p53, %p54
      %p56 = scmp.ne.s32.totalorder %s48, %s51
      %p57 = scmp.eq.s32.totalorder %s15, 0
      %p58 = por %p56, %p57
      %p59 = scmp.ne.s32.totalorder %s48, %s51
      %p60 = scmp.eq.s32.totalorder %s20, 7
      %p61 = por %p59, %p60
      %p62 = scmp.ne.s32.totalorder %s51, %s52
      %p63 = scmp.eq.s32.totalorder %s20, 0
      %p64 = por %p62, %p63
      %p65 = scmp.ne.s32.totalorder %s51, %s52
      %p66 = scmp.eq.s32.totalorder %s21, 7
      %p67 = por %p65, %p66
      %p69 = scmp.ne.s32.totalorder %s52, %s68
      %p70 = scmp.eq.s32.totalorder %s21, 0
      %p71 = por %p69, %p70
      %s73 = sadd.s32 %s72, 1
      %p76 = scmp.eq.s32.totalorder %s15, 7
      %p77 = scmp.ne.s32.totalorder %s72, %s74
      %p78 = scmp.eq.s32.totalorder %s15, 0
      %p79 = por %p77, %p78
      %p80 = scmp.ne.s32.totalorder %s72, %s74
      %p81 = scmp.eq.s32.totalorder %s20, 7
      %p82 = por %p80, %p81
      %p83 = scmp.ne.s32.totalorder %s74, %s75
      %p84 = scmp.eq.s32.totalorder %s20, 0
      %p85 = por %p83, %p84
      %p86 = scmp.ne.s32.totalorder %s74, %s75
      %p87 = scmp.eq.s32.totalorder %s21, 7
      %p88 = por %p86, %p87
      %p90 = scmp.ne.s32.totalorder %s75, %s89
      %p91 = scmp.eq.s32.totalorder %s21, 0
      %p92 = por %p90, %p91
      %s94 = sadd.s32 %s93, 1
      %p97 = scmp.eq.s32.totalorder %s15, 7
      %p98 = scmp.ne.s32.totalorder %s93, %s95
      %p99 = scmp.eq.s32.totalorder %s15, 0
      %p100 = por %p98, %p99
      %p101 = scmp.ne.s32.totalorder %s93, %s95
      %p102 = scmp.eq.s32.totalorder %s20, 7
      %p103 = por %p101, %p102
      %p104 = scmp.ne.s32.totalorder %s95, %s96
      %p105 = scmp.eq.s32.totalorder %s20, 0
      %p106 = por %p104, %p105
      %p107 = scmp.ne.s32.totalorder %s95, %s96
      %p108 = scmp.eq.s32.totalorder %s21, 7
      %p109 = por %p107, %p108
      %p111 = scmp.ne.s32.totalorder %s96, %s110
      %p112 = scmp.eq.s32.totalorder %s21, 0
      %p113 = por %p111, %p112
      %s115 = sadd.s32 %s114, 1
      %p118 = scmp.eq.s32.totalorder %s15, 7
      %p119 = scmp.ne.s32.totalorder %s114, %s116
      %p120 = scmp.eq.s32.totalorder %s15, 0
      %p121 = por %p119, %p120
      %p122 = scmp.ne.s32.totalorder %s114, %s116
      %p123 = scmp.eq.s32.totalorder %s20, 7
      %p124 = por %p122, %p123
      %p125 = scmp.ne.s32.totalorder %s116, %s117
      %p126 = scmp.eq.s32.totalorder %s20, 0
      %p127 = por %p125, %p126
      %p128 = scmp.ne.s32.totalorder %s116, %s117
      %p129 = scmp.eq.s32.totalorder %s21, 7
      %p130 = por %p128, %p129
      %p132 = scmp.ne.s32.totalorder %s117, %s131
      %p133 = scmp.eq.s32.totalorder %s21, 0
      %p134 = por %p132, %p133
      %s136 = sadd.s32 %s135, 1
      %p139 = scmp.eq.s32.totalorder %s15, 7
      %p140 = scmp.ne.s32.totalorder %s135, %s137
      %p141 = scmp.eq.s32.totalorder %s15, 0
      %p142 = por %p140, %p141
      %p143 = scmp.ne.s32.totalorder %s135, %s137
      %p144 = scmp.eq.s32.totalorder %s20, 7
      %p145 = por %p143, %p144
      %p146 = scmp.ne.s32.totalorder %s137, %s138
      %p147 = scmp.eq.s32.totalorder %s20, 0
      %p148 = por %p146, %p147
      %p149 = scmp.ne.s32.totalorder %s137, %s138
      %p150 = scmp.eq.s32.totalorder %s21, 7
      %p151 = por %p149, %p150
      %p153 = scmp.ne.s32.totalorder %s138, %s152
      %p154 = scmp.eq.s32.totalorder %s21, 0
      %p155 = por %p153, %p154
      %s157 = sadd.s32 %s156, 1
      %p160 = scmp.eq.s32.totalorder %s15, 7
      %p161 = scmp.ne.s32.totalorder %s156, %s158
      %p162 = scmp.eq.s32.totalorder %s15, 0
      %p163 = por %p161, %p162
      %p164 = scmp.ne.s32.totalorder %s156, %s158
      %p165 = scmp.eq.s32.totalorder %s20, 7
      %p166 = por %p164, %p165
      %p167 = scmp.ne.s32.totalorder %s158, %s159
      %p168 = scmp.eq.s32.totalorder %s20, 0
      %p169 = por %p167, %p168
      %p170 = scmp.ne.s32.totalorder %s158, %s159
      %p171 = scmp.eq.s32.totalorder %s21, 7
      %p172 = por %p170, %p171
      %p174 = scmp.ne.s32.totalorder %s159, %s173
      %p175 = scmp.eq.s32.totalorder %s21, 0
      %p176 = por %p174, %p175
      %s177 = smul.u32 %s23, 2
      %s178 = sadd.s32 %s177, %s24
      %s179 = smul.u32 %s37, 2
      %s180 = sadd.s32 %s179, %s33
      %s181 = ssub.s32 %s178, %s180
      %p182 = scmp.eq.s32.totalorder %s181, 0
      %s184 = sadd.s32 %s183, 1
      %s185 = scalar_select %p182, %s183, %s184
      %p188 = pneg %p182
      %p189 = scmp.eq.s32.totalorder %s15, 7
      %p190 = por %p188, %p189
      %p191 = scmp.ne.s32.totalorder %s183, %s186
      %p192 = scmp.eq.s32.totalorder %s15, 0
      %p193 = por %p191, %p192
      %p194 = scmp.ne.s32.totalorder %s183, %s186
      %p195 = scmp.eq.s32.totalorder %s20, 7
      %p196 = por %p194, %p195
      %p197 = scmp.ne.s32.totalorder %s186, %s187
      %p198 = scmp.eq.s32.totalorder %s20, 0
      %p199 = por %p197, %p198
      %p200 = scmp.ne.s32.totalorder %s186, %s187
      %p201 = scmp.eq.s32.totalorder %s21, 7
      %p202 = por %p200, %p201
      %p204 = scmp.ne.s32.totalorder %s187, %s203
      %p205 = scmp.eq.s32.totalorder %s21, 0
      %p206 = por %p204, %p205
      %s208 = sadd.s32 %s207, 1
      %p211 = scmp.eq.s32.totalorder %s15, 7
      %p212 = scmp.ne.s32.totalorder %s207, %s209
      %p213 = scmp.eq.s32.totalorder %s15, 0
      %p214 = por %p212, %p213
      %p215 = scmp.ne.s32.totalorder %s207, %s209
      %p216 = scmp.eq.s32.totalorder %s20, 7
      %p217 = por %p215, %p216
      %p218 = scmp.ne.s32.totalorder %s209, %s210
      %p219 = scmp.eq.s32.totalorder %s20, 0
      %p220 = por %p218, %p219
      %p221 = scmp.ne.s32.totalorder %s209, %s210
      %p222 = scmp.eq.s32.totalorder %s21, 7
      %p223 = por %p221, %p222
      %p225 = scmp.ne.s32.totalorder %s210, %s224
      %p226 = scmp.eq.s32.totalorder %s21, 0
      %p227 = por %p225, %p226
      %s229 = sadd.s32 %s228, 1
      %p232 = scmp.eq.s32.totalorder %s15, 7
      %p233 = scmp.ne.s32.totalorder %s228, %s230
      %p234 = scmp.eq.s32.totalorder %s15, 0
      %p235 = por %p233, %p234
      %p236 = scmp.ne.s32.totalorder %s228, %s230
      %p237 = scmp.eq.s32.totalorder %s20, 7
      %p238 = por %p236, %p237
      %p239 = scmp.ne.s32.totalorder %s230, %s231
      %p240 = scmp.eq.s32.totalorder %s20, 0
      %p241 = por %p239, %p240
      %p242 = scmp.ne.s32.totalorder %s230, %s231
      %p243 = scmp.eq.s32.totalorder %s21, 7
      %p244 = por %p242, %p243
      %p246 = scmp.ne.s32.totalorder %s231, %s245
      %p247 = scmp.eq.s32.totalorder %s21, 0
      %p248 = por %p246, %p247
      %s249 = ssub.s32 %s22, %s41
      %s250 = ssub.s32 %s23, %s37
      %s251 = sor.u32 %s249, %s250
      %s252 = ssub.s32 %s24, %s33
      %s253 = sor.u32 %s251, %s252
      %p254 = scmp.eq.s32.totalorder %s253, 0
      %s256 = sadd.s32 %s255, 1
      %s257 = scalar_select %p254, %s255, %s256
      %p260 = pneg %p254
      %p261 = scmp.eq.s32.totalorder %s15, 7
      %p262 = por %p260, %p261
      %p263 = scmp.ne.s32.totalorder %s255, %s258
      %p264 = scmp.eq.s32.totalorder %s15, 0
      %p265 = por %p263, %p264
      %p266 = scmp.ne.s32.totalorder %s255, %s258
      %p267 = scmp.eq.s32.totalorder %s20, 7
      %p268 = por %p266, %p267
      %p269 = scmp.ne.s32.totalorder %s258, %s259
      %p270 = scmp.eq.s32.totalorder %s20, 0
      %p271 = por %p269, %p270
      %p272 = scmp.ne.s32.totalorder %s258, %s259
      %p273 = scmp.eq.s32.totalorder %s21, 7
      %p274 = por %p272, %p273
      %p276 = scmp.ne.s32.totalorder %s259, %s275
      %p277 = scmp.eq.s32.totalorder %s21, 0
      %p278 = por %p276, %p277
      %p279 = scmp.le.s32.totalorder 1, %s15
      %p280 = scmp.lt.s32.totalorder %s15, 9
      %p281 = pnand %p279, %p280
      %p282 = pneg %p281
      // Predicated region
      $region9: #{_lambda_.26} parent=5 // pred_check
        _
      $region10: #{_lambda_.26} parent=5 // pred_check_branch
        %284 = sbr.rel (%p281) target = $region12
      $region11: #{_lambda_.26} parent=5 // pred_region
        %s285 = ssub.s32 %s15, 1
        // Predicated region
        $region13: #{_lambda_.26} parent=11 // pred_check
          %p286 = pneg %p85
        $region14: #{_lambda_.26} parent=11 // pred_check_branch
          %288 = sbr.rel (%p286) target = $region16
        $region15: #{_lambda_.26} parent=11 // pred_region
          _
        $region16: #{_lambda_.26} parent=11 // pred_fallthru
          _
        // Predicated region
        $region17: #{_lambda_.26} parent=11 // pred_check
          %p289 = pneg %p106
        $region18: #{_lambda_.26} parent=11 // pred_check_branch
          %291 = sbr.rel (%p289) target = $region20
        $region19: #{_lambda_.26} parent=11 // pred_region
          _
        $region20: #{_lambda_.26} parent=11 // pred_fallthru
          _
        // Predicated region
        $region21: #{_lambda_.26} parent=11 // pred_check
          %p292 = pneg %p127
        $region22: #{_lambda_.26} parent=11 // pred_check_branch
          %294 = sbr.rel (%p292) target = $region24
        $region23: #{_lambda_.26} parent=11 // pred_region
          _
        $region24: #{_lambda_.26} parent=11 // pred_fallthru
          _
        // Predicated region
        $region25: #{_lambda_.26} parent=11 // pred_check
          %p295 = pneg %p148
        $region26: #{_lambda_.26} parent=11 // pred_check_branch
          %297 = sbr.rel (%p295) target = $region28
        $region27: #{_lambda_.26} parent=11 // pred_region
          _
        $region28: #{_lambda_.26} parent=11 // pred_fallthru
          _
        // Predicated region
        $region29: #{_lambda_.26} parent=11 // pred_check
          %p298 = pneg %p169
        $region30: #{_lambda_.26} parent=11 // pred_check_branch
          %300 = sbr.rel (%p298) target = $region32
        $region31: #{_lambda_.26} parent=11 // pred_region
          _
        $region32: #{_lambda_.26} parent=11 // pred_fallthru
          _
        // Predicated region
        $region33: #{_lambda_.26} parent=11 // pred_check
          %p301 = pneg %p220
        $region34: #{_lambda_.26} parent=11 // pred_check_branch
          %303 = sbr.rel (%p301) target = $region36
        $region35: #{_lambda_.26} parent=11 // pred_region
          _
        $region36: #{_lambda_.26} parent=11 // pred_fallthru
          _
        // Predicated region
        $region37: #{_lambda_.26} parent=11 // pred_check
          %p304 = pneg %p241
        $region38: #{_lambda_.26} parent=11 // pred_check_branch
          %306 = sbr.rel (%p304) target = $region40
        $region39: #{_lambda_.26} parent=11 // pred_region
          _
        $region40: #{_lambda_.26} parent=11 // pred_fallthru
          _
      $region12: #{_lambda_.26} parent=5 // pred_fallthru
        _
      %p307 = scmp.lt.s32.totalorder %s15, 8
      // Predicated region
      $region41: #{_lambda_.26} parent=5 // pred_check
        %p308 = pneg %p307
      $region42: #{_lambda_.26} parent=5 // pred_check_branch
        %310 = sbr.rel (%p308) target = $region44
      $region43: #{_lambda_.26} parent=5 // pred_region
        // Predicated region
        $region45: #{_lambda_.26} parent=43 // pred_check
          %p311 = pneg %p58
        $region46: #{_lambda_.26} parent=43 // pred_check_branch
          %313 = sbr.rel (%p311) target = $region48
        $region47: #{_lambda_.26} parent=43 // pred_region
          %s314 = sand.u32 %s48, 1
          %s315 = sand.u32 %s48, 1
          %s316 = smul.addr %s315, 64
          %s317 = scalar_lea.vmem [#allocation2], %s316
          %s318 = smul.u32 8, %s23
          %s319 = smul.addr %s318, 2
          %s320 = sadd.s32 %s24, %s319
          %s321 = smul.addr %s22, 32
          %s322 = sadd.s32 %s320, %s321
          %s323 = smul.addr %s322, 8
          %s324 = scalar_lea.vmem %s0, %s323
          // Predicated region
          $region49: #{_lambda_.26} parent=47 // pred_check
            _
          $region50: #{_lambda_.26} parent=47 // pred_check_branch
            %326 = sbr.rel (0) target = $region52
          $region51: #{_lambda_.26} parent=47 // pred_region
            // Predicated region
            $region53: #{_lambda_.26} parent=51 // pred_check
              _
            $region54: #{_lambda_.26} parent=51 // pred_check_branch
              %328 = sbr.rel (0) target = $region56
            $region55: #{_lambda_.26} parent=51 // pred_region
              // Predicated region
              $region68: #{_lambda_.26} parent=55 // pred_check
                _
              $region69: #{_lambda_.26} parent=55 // pred_check_branch
                %357 = sbr.rel (0) target = $region71
              $region70: #{_lambda_.26} parent=55 // pred_region
                loop: start=0, step=1, limit=1
                $region72: #{_lambda_.26} parent=70 // loop_pre_header
                  _
                $region73: #{_lambda_.26} parent=70 // loop_header
                  %s359 = sphi 0, %s363
                  %p360 = scmp.ge.s32.totalorder %s359, 1
                  %s364 = sphi %s324, %s324
                  %s365 = sphi %s317, %s317
                $region74: #{_lambda_.26} parent=70 // loop_header_branch
                  %362 = sbr.rel (%p360) target = $region78
                $region75: #{_lambda_.26} parent=70 // loop_body
                  %v366 = vld [vmem:[%s364] sm:$0xff]
                  %367 = vst [vmem:[%s365] sm:$0xff] %v366
                  %v368 = vld [vmem:[%s364 + $0x10] sm:$0xff]
                  %369 = vst [vmem:[%s365 + $0x8] sm:$0xff] %v368
                  %v370 = vld [vmem:[%s364 + $0x20] sm:$0xff]
                  %371 = vst [vmem:[%s365 + $0x10] sm:$0xff] %v370
                  %v372 = vld [vmem:[%s364 + $0x30] sm:$0xff]
                  %373 = vst [vmem:[%s365 + $0x18] sm:$0xff] %v372
                  %v374 = vld [vmem:[%s364 + $0x40] sm:$0xff]
                  %375 = vst [vmem:[%s365 + $0x20] sm:$0xff] %v374
                  %v376 = vld [vmem:[%s364 + $0x50] sm:$0xff]
                  %377 = vst [vmem:[%s365 + $0x28] sm:$0xff] %v376
                  %v378 = vld [vmem:[%s364 + $0x60] sm:$0xff]
                  %379 = vst [vmem:[%s365 + $0x30] sm:$0xff] %v378
                  %v380 = vld [vmem:[%s364 + $0x70] sm:$0xff]
                  %381 = vst [vmem:[%s365 + $0x38] sm:$0xff] %v380
                $region76: #{_lambda_.26} parent=70 // loop_footer
                  %s363 = sadd.s32 1, %s359
                $region77: #{_lambda_.26} parent=70 // loop_footer_branch
                  %358 = sbr.rel target = $region73
                $region78: #{_lambda_.26} parent=70 // loop_exit
                  _
              $region71: #{_lambda_.26} parent=55 // pred_fallthru
                _
              // Predicated region
              $region79: #{_lambda_.26} parent=55 // pred_check
                _
              $region80: #{_lambda_.26} parent=55 // pred_check_branch
                %383 = sbr.rel target = $region82
              $region81: #{_lambda_.26} parent=55 // pred_region
                _
              $region82: #{_lambda_.26} parent=55 // pred_fallthru
                _
            $region56: #{_lambda_.26} parent=51 // pred_fallthru
              _
            // Predicated region
            $region57: #{_lambda_.26} parent=51 // pred_check
              _
            $region58: #{_lambda_.26} parent=51 // pred_check_branch
              %330 = sbr.rel target = $region60
            $region59: #{_lambda_.26} parent=51 // pred_region
              loop: start=0, step=1, limit=1
              $region61: #{_lambda_.26} parent=59 // loop_pre_header
                _
              $region62: #{_lambda_.26} parent=59 // loop_header
                %s333 = sphi 0, %s337
                %p334 = scmp.ge.s32.totalorder %s333, 1
                %s338 = sphi %s324, %s324
                %s339 = sphi %s317, %s317
              $region63: #{_lambda_.26} parent=59 // loop_header_branch
                %336 = sbr.rel (%p334) target = $region67
              $region64: #{_lambda_.26} parent=59 // loop_body
                %v340 = vld [vmem:[%s338] sm:$0xff]
                %341 = vst [vmem:[%s339] sm:$0xff] %v340
                %v342 = vld [vmem:[%s338 + $0x10] sm:$0xff]
                %343 = vst [vmem:[%s339 + $0x8] sm:$0xff] %v342
                %v344 = vld [vmem:[%s338 + $0x20] sm:$0xff]
                %345 = vst [vmem:[%s339 + $0x10] sm:$0xff] %v344
                %v346 = vld [vmem:[%s338 + $0x30] sm:$0xff]
                %347 = vst [vmem:[%s339 + $0x18] sm:$0xff] %v346
                %v348 = vld [vmem:[%s338 + $0x40] sm:$0xff]
                %349 = vst [vmem:[%s339 + $0x20] sm:$0xff] %v348
                %v350 = vld [vmem:[%s338 + $0x50] sm:$0xff]
                %351 = vst [vmem:[%s339 + $0x28] sm:$0xff] %v350
                %v352 = vld [vmem:[%s338 + $0x60] sm:$0xff]
                %353 = vst [vmem:[%s339 + $0x30] sm:$0xff] %v352
                %v354 = vld [vmem:[%s338 + $0x70] sm:$0xff]
                %355 = vst [vmem:[%s339 + $0x38] sm:$0xff] %v354
              $region65: #{_lambda_.26} parent=59 // loop_footer
                %s337 = sadd.s32 1, %s333
              $region66: #{_lambda_.26} parent=59 // loop_footer_branch
                %332 = sbr.rel target = $region62
              $region67: #{_lambda_.26} parent=59 // loop_exit
                _
            $region60: #{_lambda_.26} parent=51 // pred_fallthru
              _
          $region52: #{_lambda_.26} parent=47 // pred_fallthru
            _
          %384 = vnop
        $region48: #{_lambda_.26} parent=43 // pred_fallthru
          _
        // Predicated region
        $region83: #{_lambda_.26} parent=43 // pred_check
          %p385 = pneg %p193
        $region84: #{_lambda_.26} parent=43 // pred_check_branch
          %387 = sbr.rel (%p385) target = $region86
        $region85: #{_lambda_.26} parent=43 // pred_region
          %s388 = smul.u32 %s23, 2
          %s389 = sadd.s32 %s388, %s24
          %p390 = scmp.lt.s32.totalorder %s389, 3
          %s391 = scalar_select %p390, %s389, 3
          %s392 = smul.addr %s391, 8
          %s393 = smul.addr %s392, 8
          %s394 = scalar_lea.vmem %s6, %s393
          %s395 = smul.u32 %s23, 2
          %s396 = sadd.s32 %s395, %s24
        $region86: #{_lambda_.26} parent=43 // pred_fallthru
          _
      $region44: #{_lambda_.26} parent=5 // pred_fallthru
        _
      %p397 = scmp.le.s32.totalorder 1, %s15
      %p398 = scmp.lt.s32.totalorder %s15, 9
      %p399 = pnand %p397, %p398
      %p400 = pneg %p399
      // Predicated region
      $region87: #{_lambda_.26} parent=5 // pred_check
        _
      $region88: #{_lambda_.26} parent=5 // pred_check_branch
        %402 = sbr.rel (%p399) target = $region90
      $region89: #{_lambda_.26} parent=5 // pred_region
        %s403 = ssub.s32 %s15, 1
        %s404 = sand.u32 %s51, 1
        %s405 = sand.u32 %s51, 1
        %s406 = smul.addr %s405, 64
        %s407 = scalar_lea.vmem [#allocation2], %s406
        // Predicated region
        $region91: #{_lambda_.26} parent=89 // pred_check
          %p408 = pneg %p64
        $region92: #{_lambda_.26} parent=89 // pred_check_branch
          %410 = sbr.rel (%p408) target = $region94
        $region93: #{_lambda_.26} parent=89 // pred_region
          _
        $region94: #{_lambda_.26} parent=89 // pred_fallthru
          _
        %s411 = sand.u32 %s51, 1
        %s412 = sand.u32 %s51, 1
        %s413 = smul.addr %s412, 64
        %s414 = scalar_lea.vmem [#allocation2], %s413
        %p415 = pneg %p64
        %p416 = pneg %p61
        %p417 = pneg %p85
        %p418 = pneg %p82
        %p419 = pneg %p106
        %p420 = pneg %p103
        %p421 = pneg %p127
        %p422 = pneg %p124
        %p423 = pneg %p148
        %p424 = pneg %p145
        %p425 = pneg %p169
        %p426 = pneg %p166
        %s427 = smul.u32 %s26, 2
        %s428 = sadd.s32 %s427, %s27
        %p429 = scmp.lt.s32.totalorder %s428, 3
        %s430 = scalar_select %p429, %s428, 3
        %s431 = smul.addr %s430, 8
        %s432 = smul.addr %s431, 8
        %s433 = scalar_lea.vmem %s6, %s432
        %p434 = pneg %p199
        %p435 = pneg %p196
        %p436 = pneg %p220
        %p437 = pneg %p217
        %p438 = pneg %p241
        %p439 = pneg %p238
        %p440 = pneg %p271
        %p441 = pneg %p268
        %s442 = sand.u32 %s258, 1
        %s443 = sand.u32 %s258, 1
        %s444 = smul.addr %s443, 64
        %s445 = scalar_lea.vmem [#allocation3], %s444
        %s446 = smul.u32 8, %s26
        %s447 = smul.u32 %s26, 2
        %s448 = sadd.s32 %s447, %s27
        %p449 = scmp.lt.s32.totalorder %s448, 3
        %s450 = scalar_select %p449, %s448, 3
        %s451 = smul.addr %s450, 8
        %s452 = smul.addr %s451, 8
        %s453 = scalar_lea.vmem %s6, %s452
        %s454 = smul.u32 %s26, 2
        %s455 = sadd.s32 %s454, %s27
        %s456 = smul.u32 8, %s26
        %v457 = vld [vmem:[%s407] sm:$0xff]
        %v458 = vld [vmem:[%s407 + $0x8] sm:$0xff]
        %v459 = vld [vmem:[%s407 + $0x10] sm:$0xff]
        %v460 = vld [vmem:[%s407 + $0x18] sm:$0xff]
        %v461 = vld [vmem:[%s407 + $0x20] sm:$0xff]
        %v462 = vld [vmem:[%s407 + $0x28] sm:$0xff]
        %v463 = vld [vmem:[%s407 + $0x30] sm:$0xff]
        %v464 = vld [vmem:[%s407 + $0x38] sm:$0xff]
        %vm465 = vcmask 64512
        %v466 = vsel %vm465, %v457, 0.0
        %467 = vadd.xlane.f32.xlu0 %v466
        %v468 = vpop.xlane.xlu0 %467
        %v469 = vsel %vm465, %v458, 0.0
        %470 = vadd.xlane.f32.xlu0 %v469
        %v471 = vpop.xlane.xlu0 %470
        %v472 = vsel %vm465, %v459, 0.0
        %473 = vadd.xlane.f32.xlu0 %v472
        %v474 = vpop.xlane.xlu0 %473
        %v475 = vsel %vm465, %v460, 0.0
        %476 = vadd.xlane.f32.xlu0 %v475
        %v477 = vpop.xlane.xlu0 %476
        %v478 = vsel %vm465, %v461, 0.0
        %479 = vadd.xlane.f32.xlu0 %v478
        %v480 = vpop.xlane.xlu0 %479
        %v481 = vsel %vm465, %v462, 0.0
        %482 = vadd.xlane.f32.xlu0 %v481
        %v483 = vpop.xlane.xlu0 %482
        %v484 = vsel %vm465, %v463, 0.0
        %485 = vadd.xlane.f32.xlu0 %v484
        %v486 = vpop.xlane.xlu0 %485
        %v487 = vsel %vm465, %v464, 0.0
        %488 = vadd.xlane.f32.xlu0 %v487
        %v489 = vpop.xlane.xlu0 %488
        %v490 = vrcp.pop 8.0
        %v491 = vmul.f32 %v468, %v490
        %v492 = vmul.f32 %v471, %v490
        %v493 = vmul.f32 %v474, %v490
        %v494 = vmul.f32 %v477, %v490
        %v495 = vmul.f32 %v480, %v490
        %v496 = vmul.f32 %v483, %v490
        %v497 = vmul.f32 %v486, %v490
        %v498 = vmul.f32 %v489, %v490
        %v499 = vsub.f32 %v457, %v491
        %v500 = vsub.f32 %v458, %v492
        %v501 = vsub.f32 %v459, %v493
        %v502 = vsub.f32 %v460, %v494
        %v503 = vsub.f32 %v461, %v495
        %v504 = vsub.f32 %v462, %v496
        %v505 = vsub.f32 %v463, %v497
        %v506 = vsub.f32 %v464, %v498
        %v507 = vmul.f32 %v499, %v499
        %v508 = vmul.f32 %v500, %v500
        %v509 = vmul.f32 %v501, %v501
        %v510 = vmul.f32 %v502, %v502
        %v511 = vmul.f32 %v503, %v503
        %v512 = vmul.f32 %v504, %v504
        %v513 = vmul.f32 %v505, %v505
        %v514 = vmul.f32 %v506, %v506
        %v515 = vsel %vm465, %v507, 0.0
        %516 = vadd.xlane.f32.xlu0 %v515
        %v517 = vpop.xlane.xlu0 %516
        %v518 = vsel %vm465, %v508, 0.0
        %519 = vadd.xlane.f32.xlu0 %v518
        %v520 = vpop.xlane.xlu0 %519
        %v521 = vsel %vm465, %v509, 0.0
        %522 = vadd.xlane.f32.xlu0 %v521
        %v523 = vpop.xlane.xlu0 %522
        %v524 = vsel %vm465, %v510, 0.0
        %525 = vadd.xlane.f32.xlu0 %v524
        %v526 = vpop.xlane.xlu0 %525
        %v527 = vsel %vm465, %v511, 0.0
        %528 = vadd.xlane.f32.xlu0 %v527
        %v529 = vpop.xlane.xlu0 %528
        %v530 = vsel %vm465, %v512, 0.0
        %531 = vadd.xlane.f32.xlu0 %v530
        %v532 = vpop.xlane.xlu0 %531
        %v533 = vsel %vm465, %v513, 0.0
        %534 = vadd.xlane.f32.xlu0 %v533
        %v535 = vpop.xlane.xlu0 %534
        %v536 = vsel %vm465, %v514, 0.0
        %537 = vadd.xlane.f32.xlu0 %v536
        %v538 = vpop.xlane.xlu0 %537
        %v539 = vmul.f32 %v517, %v490
        %v540 = vmul.f32 %v520, %v490
        %v541 = vmul.f32 %v523, %v490
        %v542 = vmul.f32 %v526, %v490
        %v543 = vmul.f32 %v529, %v490
        %v544 = vmul.f32 %v532, %v490
        %v545 = vmul.f32 %v535, %v490
        %v546 = vmul.f32 %v538, %v490
        %v547 = vadd.f32 %v539, 1e-05
        %v548 = vadd.f32 %v540, 1e-05
        %v549 = vadd.f32 %v541, 1e-05
        %v550 = vadd.f32 %v542, 1e-05
        %v551 = vadd.f32 %v543, 1e-05
        %v552 = vadd.f32 %v544, 1e-05
        %v553 = vadd.f32 %v545, 1e-05
        %v554 = vadd.f32 %v546, 1e-05
        %v555 = vrsqrt.pop %v547
        %v556 = vrsqrt.pop %v548
        %v557 = vrsqrt.pop %v549
        %v558 = vrsqrt.pop %v550
        %v559 = vrsqrt.pop %v551
        %v560 = vrsqrt.pop %v552
        %v561 = vrsqrt.pop %v553
        %v562 = vrsqrt.pop %v554
        %v563 = vmul.f32 %v499, %v555
        %v564 = vmul.f32 %v500, %v556
        %v565 = vmul.f32 %v501, %v557
        %v566 = vmul.f32 %v502, %v558
        %v567 = vmul.f32 %v503, %v559
        %v568 = vmul.f32 %v504, %v560
        %v569 = vmul.f32 %v505, %v561
        %v570 = vmul.f32 %v506, %v562
        %v571 = vld [vmem:[%s1] sm:$0x1]
        %v573 = vlaneseq
        %v574 = vshrl.u32 %v573, 7
        %v575 = vsub.s32 0, %v574
        %v576 = vrot.slane %v571, %v575
        %v578 = vmul.f32 %v563, %v576
        %v579 = vmul.f32 %v564, %v576
        %v580 = vmul.f32 %v565, %v576
        %v581 = vmul.f32 %v566, %v576
        %v582 = vmul.f32 %v567, %v576
        %v583 = vmul.f32 %v568, %v576
        %v584 = vmul.f32 %v569, %v576
        %v585 = vmul.f32 %v570, %v576
        %v586 = vld [vmem:[%s2] sm:$0x1]
        %v588 = vlaneseq
        %v589 = vshrl.u32 %v588, 7
        %v590 = vsub.s32 0, %v589
        %v591 = vrot.slane %v586, %v590
        %v593 = vadd.f32 %v578, %v591
        %v594 = vadd.f32 %v579, %v591
        %v595 = vadd.f32 %v580, %v591
        %v596 = vadd.f32 %v581, %v591
        %v597 = vadd.f32 %v582, %v591
        %v598 = vadd.f32 %v583, %v591
        %v599 = vadd.f32 %v584, %v591
        %v600 = vadd.f32 %v585, %v591
        %v601 = vld [vmem:[%s3] sm:$0xff]
        %v602 = vld [vmem:[%s4] sm:$0x1]
        %v604 = vlaneseq
        %v605 = vshrl.u32 %v604, 7
        %v606 = vsub.s32 0, %v605
        %v607 = vrot.slane %v602, %v606
        %v610 = vsel %vm465, %v593, 0
        %v613 = vsel %vm465, %v594, 0
        %v616 = vsel %vm465, %v595, 0
        %v619 = vsel %vm465, %v596, 0
        %v622 = vsel %vm465, %v597, 0
        %v625 = vsel %vm465, %v598, 0
        %v628 = vsel %vm465, %v599, 0
        %v631 = vsel %vm465, %v600, 0
        %633 = vmatprep.subr.mxu0 0.0
        %634 = vmatpush1.msra.mxu0 %v601
        %635 = vmatprep.subr.mxu0 0.0
        %636 = vmatpush1.msra.mxu0 0.0
        %637 = vmatprep.subr.mxu0 0.0
        %638 = vmatpush1.msra.mxu0 0.0
        %639 = vmatprep.subr.mxu0 0.0
        %640 = vmatpush1.msra.mxu0 0.0
        %641 = vmatprep.subr.mxu0 0.0
        %642 = vmatpush1.msra.mxu0 0.0
        %643 = vmatprep.subr.mxu0 0.0
        %644 = vmatpush1.msra.mxu0 0.0
        %645 = vmatprep.subr.mxu0 0.0
        %646 = vmatpush1.msra.mxu0 0.0
        %647 = vmatprep.subr.mxu0 0.0
        %648 = vmatpush1.msra.mxu0 0.0
        %649 = vmatprep.subr.mxu0 0.0
        %650 = vmatpush1.msra.mxu0 0.0
        %651 = vmatprep.subr.mxu0 0.0
        %652 = vmatpush1.msra.mxu0 0.0
        %653 = vmatprep.subr.mxu0 0.0
        %654 = vmatpush1.msra.mxu0 0.0
        %655 = vmatprep.subr.mxu0 0.0
        %656 = vmatpush1.msra.mxu0 0.0
        %657 = vmatprep.subr.mxu0 0.0
        %658 = vmatpush1.msra.mxu0 0.0
        %659 = vmatprep.subr.mxu0 0.0
        %660 = vmatpush1.msra.mxu0 0.0
        %661 = vmatprep.subr.mxu0 0.0
        %662 = vmatpush1.msra.mxu0 0.0
        %663 = vmatprep.subr.mxu0 0.0
        %664 = vmatpush1.msra.mxu0 0.0
        %665 = vmatprep.subr.mxu0 0.0
        %666 = vmatpush1.msra.mxu0 0.0
        %667 = vmatprep.subr.mxu0 0.0
        %668 = vmatpush1.msra.mxu0 0.0
        %669 = vmatprep.subr.mxu0 0.0
        %670 = vmatpush1.msra.mxu0 0.0
        %671 = vmatprep.subr.mxu0 0.0
        %672 = vmatpush1.msra.mxu0 0.0
        %673 = vmatprep.subr.mxu0 0.0
        %674 = vmatpush1.msra.mxu0 0.0
        %675 = vmatprep.subr.mxu0 0.0
        %676 = vmatpush1.msra.mxu0 0.0
        %677 = vmatprep.subr.mxu0 0.0
        %678 = vmatpush1.msra.mxu0 0.0
        %679 = vmatprep.subr.mxu0 0.0
        %680 = vmatpush1.msra.mxu0 0.0
        %681 = vmatprep.subr.mxu0 0.0
        %682 = vmatpush1.msra.mxu0 0.0
        %683 = vmatprep.subr.mxu0 0.0
        %684 = vmatpush1.msra.mxu0 0.0
        %685 = vmatprep.subr.mxu0 0.0
        %686 = vmatpush1.msra.mxu0 0.0
        %687 = vmatprep.subr.mxu0 0.0
        %688 = vmatpush1.msra.mxu0 0.0
        %689 = vmatprep.subr.mxu0 0.0
        %690 = vmatpush1.msra.mxu0 0.0
        %691 = vmatprep.subr.mxu0 0.0
        %692 = vmatpush1.msra.mxu0 0.0
        %693 = vmatprep.subr.mxu0 0.0
        %694 = vmatpush1.msra.mxu0 0.0
        %695 = vmatprep.subr.mxu0 0.0
        %696 = vmatpush1.msra.mxu0 0.0
        %697 = vmatprep.mubr.f32.mxu0 0.0
        %698 = vmatmul.mubr.f32.gmra.mrb[0].mxu0 %v610
        %v699 = vpop.f32.mrb[0].mxu0
        %v700 = vadd.f32 %v607, %v699
        %v701 = vpop.f32.mrb[0].mxu0
        %702 = vmatprep.mubr.f32.mxu0 0.0
        %703 = vmatmul.mubr.f32.gmra.mrb[0].mxu0 %v613
        %v704 = vpop.f32.mrb[0].mxu0
        %v705 = vadd.f32 %v607, %v704
        %v706 = vpop.f32.mrb[0].mxu0
        %707 = vmatprep.mubr.f32.mxu0 0.0
        %708 = vmatmul.mubr.f32.gmra.mrb[0].mxu0 %v616
        %v709 = vpop.f32.mrb[0].mxu0
        %v710 = vadd.f32 %v607, %v709
        %v711 = vpop.f32.mrb[0].mxu0
        %712 = vmatprep.mubr.f32.mxu0 0.0
        %713 = vmatmul.mubr.f32.gmra.mrb[0].mxu0 %v619
        %v714 = vpop.f32.mrb[0].mxu0
        %v715 = vadd.f32 %v607, %v714
        %v716 = vpop.f32.mrb[0].mxu0
        %717 = vmatprep.mubr.f32.mxu0 0.0
        %718 = vmatmul.mubr.f32.gmra.mrb[0].mxu0 %v622
        %v719 = vpop.f32.mrb[0].mxu0
        %v720 = vadd.f32 %v607, %v719
        %v721 = vpop.f32.mrb[0].mxu0
        %722 = vmatprep.mubr.f32.mxu0 0.0
        %723 = vmatmul.mubr.f32.gmra.mrb[0].mxu0 %v625
        %v724 = vpop.f32.mrb[0].mxu0
        %v725 = vadd.f32 %v607, %v724
        %v726 = vpop.f32.mrb[0].mxu0
        %727 = vmatprep.mubr.f32.mxu0 0.0
        %728 = vmatmul.mubr.f32.gmra.mrb[0].mxu0 %v628
        %v729 = vpop.f32.mrb[0].mxu0
        %v730 = vadd.f32 %v607, %v729
        %v731 = vpop.f32.mrb[0].mxu0
        %732 = vmatprep.mubr.f32.mxu0 0.0
        %733 = vmatmul.mubr.f32.gmra.mrb[0].mxu0 %v631
        %v734 = vpop.f32.mrb[0].mxu0
        %v735 = vadd.f32 %v607, %v734
        %v736 = vpop.f32.mrb[0].mxu0
        %737 = vdwg.mxu0
        %v738 = vld [vmem:[%s5] sm:$0xff]
        %v739 = vld [vmem:[%s5 + $0x8] sm:$0xff]
        %v740 = vld [vmem:[%s5 + $0x10] sm:$0xff]
        %v741 = vld [vmem:[%s5 + $0x18] sm:$0xff]
        %v742 = vld [vmem:[%s5 + $0x20] sm:$0xff]
        %v743 = vld [vmem:[%s5 + $0x28] sm:$0xff]
        %v744 = vld [vmem:[%s5 + $0x30] sm:$0xff]
        %v745 = vld [vmem:[%s5 + $0x38] sm:$0xff]
        %v746 = vld [vmem:[%s5 + $0x40] sm:$0xff]
        %v747 = vld [vmem:[%s5 + $0x48] sm:$0xff]
        %v748 = vld [vmem:[%s5 + $0x50] sm:$0xff]
        %v749 = vld [vmem:[%s5 + $0x58] sm:$0xff]
        %v750 = vld [vmem:[%s5 + $0x60] sm:$0xff]
        %v751 = vld [vmem:[%s5 + $0x68] sm:$0xff]
        %v752 = vld [vmem:[%s5 + $0x70] sm:$0xff]
        %v753 = vld [vmem:[%s5 + $0x78] sm:$0xff]
        %v754 = vld [vmem:[%s453] sm:$0xff]
        %v755 = vld [vmem:[%s453 + $0x8] sm:$0xff]
        %v756 = vld [vmem:[%s453 + $0x10] sm:$0xff]
        %v757 = vld [vmem:[%s453 + $0x18] sm:$0xff]
        %v758 = vld [vmem:[%s453 + $0x20] sm:$0xff]
        %v759 = vld [vmem:[%s453 + $0x28] sm:$0xff]
        %v760 = vld [vmem:[%s453 + $0x30] sm:$0xff]
        %v761 = vld [vmem:[%s453 + $0x38] sm:$0xff]
        %v762 = vadd.f32 %v738, %v754
        %v763 = vadd.f32 %v739, %v755
        %v764 = vadd.f32 %v740, %v756
        %v765 = vadd.f32 %v741, %v757
        %v766 = vadd.f32 %v742, %v758
        %v767 = vadd.f32 %v743, %v759
        %v768 = vadd.f32 %v744, %v760
        %v769 = vadd.f32 %v745, %v761
        %v770 = vadd.f32 %v746, %v754
        %v771 = vadd.f32 %v747, %v755
        %v772 = vadd.f32 %v748, %v756
        %v773 = vadd.f32 %v749, %v757
        %v774 = vadd.f32 %v750, %v758
        %v775 = vadd.f32 %v751, %v759
        %v776 = vadd.f32 %v752, %v760
        %v777 = vadd.f32 %v753, %v761
        %v778 = vld [vmem:[%s7] sm:$0xff]
        %v779 = vmul.f32 %v700, 0.5
        %v780 = vmul.f32 %v705, 0.5
        %v781 = vmul.f32 %v710, 0.5
        %v782 = vmul.f32 %v715, 0.5
        %v783 = vmul.f32 %v720, 0.5
        %v784 = vmul.f32 %v725, 0.5
        %v785 = vmul.f32 %v730, 0.5
        %v786 = vmul.f32 %v735, 0.5
        %795 = vrot.lane.b32.xlu0 %v700, 120
        %v796 = vpop.permute.xlu0 %795
        %797 = vrot.lane.b32.xlu0 %v705, 120
        %v798 = vpop.permute.xlu0 %797
        %799 = vrot.lane.b32.xlu0 %v710, 120
        %v800 = vpop.permute.xlu0 %799
        %801 = vrot.lane.b32.xlu0 %v715, 120
        %v802 = vpop.permute.xlu0 %801
        %803 = vrot.lane.b32.xlu0 %v720, 120
        %v804 = vpop.permute.xlu0 %803
        %805 = vrot.lane.b32.xlu0 %v725, 120
        %v806 = vpop.permute.xlu0 %805
        %807 = vrot.lane.b32.xlu0 %v730, 120
        %v808 = vpop.permute.xlu0 %807
        %809 = vrot.lane.b32.xlu0 %v735, 120
        %v810 = vpop.permute.xlu0 %809
        %vm811 = vcmask 31744
        %v813 = vsel %vm811, %v779, 0
        %v816 = vsel %vm811, %v780, 0
        %v819 = vsel %vm811, %v781, 0
        %v822 = vsel %vm811, %v782, 0
        %v825 = vsel %vm811, %v783, 0
        %v828 = vsel %vm811, %v784, 0
        %v831 = vsel %vm811, %v785, 0
        %v834 = vsel %vm811, %v786, 0
        %v836 = vsel %vm811, %v796, 0
        %v838 = vsel %vm811, %v798, 0
        %v840 = vsel %vm811, %v800, 0
        %v842 = vsel %vm811, %v802, 0
        %v844 = vsel %vm811, %v804, 0
        %v846 = vsel %vm811, %v806, 0
        %v848 = vsel %vm811, %v808, 0
        %v850 = vsel %vm811, %v810, 0
        %852 = vmatprep.subr.mxu0 0.0
        %853 = vmatpush1.xpose.msra.mxu0 %v836
        %854 = vmatprep.subr.mxu0 0.0
        %855 = vmatpush1.xpose.msra.mxu0 %v838
        %856 = vmatprep.subr.mxu0 0.0
        %857 = vmatpush1.xpose.msra.mxu0 %v840
        %858 = vmatprep.subr.mxu0 0.0
        %859 = vmatpush1.xpose.msra.mxu0 %v842
        %860 = vmatprep.subr.mxu0 0.0
        %861 = vmatpush1.xpose.msra.mxu0 %v844
        %862 = vmatprep.subr.mxu0 0.0
        %863 = vmatpush1.xpose.msra.mxu0 %v846
        %864 = vmatprep.subr.mxu0 0.0
        %865 = vmatpush1.xpose.msra.mxu0 %v848
        %866 = vmatprep.subr.mxu0 0.0
        %867 = vmatpush1.xpose.msra.mxu0 %v850
        %868 = vmatprep.subr.mxu0 0.0
        %869 = vmatpush1.xpose.msra.mxu0 0.0
        %870 = vmatprep.subr.mxu0 0.0
        %871 = vmatpush1.xpose.msra.mxu0 0.0
        %872 = vmatprep.subr.mxu0 0.0
        %873 = vmatpush1.xpose.msra.mxu0 0.0
        %874 = vmatprep.subr.mxu0 0.0
        %875 = vmatpush1.xpose.msra.mxu0 0.0
        %876 = vmatprep.subr.mxu0 0.0
        %877 = vmatpush1.xpose.msra.mxu0 0.0
        %878 = vmatprep.subr.mxu0 0.0
        %879 = vmatpush1.xpose.msra.mxu0 0.0
        %880 = vmatprep.subr.mxu0 0.0
        %881 = vmatpush1.xpose.msra.mxu0 0.0
        %882 = vmatprep.subr.mxu0 0.0
        %883 = vmatpush1.xpose.msra.mxu0 0.0
        %884 = vmatprep.subr.mxu0 0.0
        %885 = vmatpush1.xpose.msra.mxu0 0.0
        %886 = vmatprep.subr.mxu0 0.0
        %887 = vmatpush1.xpose.msra.mxu0 0.0
        %888 = vmatprep.subr.mxu0 0.0
        %889 = vmatpush1.xpose.msra.mxu0 0.0
        %890 = vmatprep.subr.mxu0 0.0
        %891 = vmatpush1.xpose.msra.mxu0 0.0
        %892 = vmatprep.subr.mxu0 0.0
        %893 = vmatpush1.xpose.msra.mxu0 0.0
        %894 = vmatprep.subr.mxu0 0.0
        %895 = vmatpush1.xpose.msra.mxu0 0.0
        %896 = vmatprep.subr.mxu0 0.0
        %897 = vmatpush1.xpose.msra.mxu0 0.0
        %898 = vmatprep.subr.mxu0 0.0
        %899 = vmatpush1.xpose.msra.mxu0 0.0
        %900 = vmatprep.subr.mxu0 0.0
        %901 = vmatpush1.xpose.msra.mxu0 0.0
        %902 = vmatprep.subr.mxu0 0.0
        %903 = vmatpush1.xpose.msra.mxu0 0.0
        %904 = vmatprep.subr.mxu0 0.0
        %905 = vmatpush1.xpose.msra.mxu0 0.0
        %906 = vmatprep.subr.mxu0 0.0
        %907 = vmatpush1.xpose.msra.mxu0 0.0
        %908 = vmatprep.subr.mxu0 0.0
        %909 = vmatpush1.xpose.msra.mxu0 0.0
        %910 = vmatprep.subr.mxu0 0.0
        %911 = vmatpush1.xpose.msra.mxu0 0.0
        %912 = vmatprep.subr.mxu0 0.0
        %913 = vmatpush1.xpose.msra.mxu0 0.0
        %914 = vmatprep.subr.mxu0 0.0
        %915 = vmatpush1.xpose.msra.mxu0 0.0
        %916 = vmatprep.mubr.f32.mxu0 0.0
        %917 = vmatmul.mubr.f32.gmra.mrb[0].mxu0 %v813
        %v918 = vpop.f32.mrb[0].mxu0
        %v919 = vadd.f32 %v762, %v918
        %v920 = vpop.f32.mrb[0].mxu0
        %921 = vmatprep.mubr.f32.mxu0 0.0
        %922 = vmatmul.mubr.f32.gmra.mrb[0].mxu0 %v816
        %v923 = vpop.f32.mrb[0].mxu0
        %v924 = vadd.f32 %v763, %v923
        %v925 = vpop.f32.mrb[0].mxu0
        %926 = vmatprep.mubr.f32.mxu0 0.0
        %927 = vmatmul.mubr.f32.gmra.mrb[0].mxu0 %v819
        %v928 = vpop.f32.mrb[0].mxu0
        %v929 = vadd.f32 %v764, %v928
        %v930 = vpop.f32.mrb[0].mxu0
        %931 = vmatprep.mubr.f32.mxu0 0.0
        %932 = vmatmul.mubr.f32.gmra.mrb[0].mxu0 %v822
        %v933 = vpop.f32.mrb[0].mxu0
        %v934 = vadd.f32 %v765, %v933
        %v935 = vpop.f32.mrb[0].mxu0
        %936 = vmatprep.mubr.f32.mxu0 0.0
        %937 = vmatmul.mubr.f32.gmra.mrb[0].mxu0 %v825
        %v938 = vpop.f32.mrb[0].mxu0
        %v939 = vadd.f32 %v766, %v938
        %v940 = vpop.f32.mrb[0].mxu0
        %941 = vmatprep.mubr.f32.mxu0 0.0
        %942 = vmatmul.mubr.f32.gmra.mrb[0].mxu0 %v828
        %v943 = vpop.f32.mrb[0].mxu0
        %v944 = vadd.f32 %v767, %v943
        %v945 = vpop.f32.mrb[0].mxu0
        %946 = vmatprep.mubr.f32.mxu0 0.0
        %947 = vmatmul.mubr.f32.gmra.mrb[0].mxu0 %v831
        %v948 = vpop.f32.mrb[0].mxu0
        %v949 = vadd.f32 %v768, %v948
        %v950 = vpop.f32.mrb[0].mxu0
        %951 = vmatprep.mubr.f32.mxu0 0.0
        %952 = vmatmul.mubr.f32.gmra.mrb[0].mxu0 %v834
        %v953 = vpop.f32.mrb[0].mxu0
        %v954 = vadd.f32 %v769, %v953
        %v955 = vpop.f32.mrb[0].mxu0
        %956 = vdwg.mxu0
        %vm957 = vcmask 523264
        %v958 = vsel %vm957, %v919, -inf
        %959 = vmax.xlane.f32.xlu0 %v958
        %v960 = vpop.xlane.xlu0 %959
        %v961 = vsel %vm957, %v924, -inf
        %962 = vmax.xlane.f32.xlu0 %v961
        %v963 = vpop.xlane.xlu0 %962
        %v964 = vsel %vm957, %v929, -inf
        %965 = vmax.xlane.f32.xlu0 %v964
        %v966 = vpop.xlane.xlu0 %965
        %v967 = vsel %vm957, %v934, -inf
        %968 = vmax.xlane.f32.xlu0 %v967
        %v969 = vpop.xlane.xlu0 %968
        %v970 = vsel %vm957, %v939, -inf
        %971 = vmax.xlane.f32.xlu0 %v970
        %v972 = vpop.xlane.xlu0 %971
        %v973 = vsel %vm957, %v944, -inf
        %974 = vmax.xlane.f32.xlu0 %v973
        %v975 = vpop.xlane.xlu0 %974
        %v976 = vsel %vm957, %v949, -inf
        %977 = vmax.xlane.f32.xlu0 %v976
        %v978 = vpop.xlane.xlu0 %977
        %v979 = vsel %vm957, %v954, -inf
        %980 = vmax.xlane.f32.xlu0 %v979
        %v981 = vpop.xlane.xlu0 %980
        %v982 = vsub.f32 %v919, %v960
        %v983 = vsub.f32 %v924, %v963
        %v984 = vsub.f32 %v929, %v966
        %v985 = vsub.f32 %v934, %v969
        %v986 = vsub.f32 %v939, %v972
        %v987 = vsub.f32 %v944, %v975
        %v988 = vsub.f32 %v949, %v978
        %v989 = vsub.f32 %v954, %v981
        %v990 = vmul.f32 %v982, 1.442695
        %v991 = vpow.pop %v990
        %v992 = vmul.f32 %v983, 1.442695
        %v993 = vpow.pop %v992
        %v994 = vmul.f32 %v984, 1.442695
        %v995 = vpow.pop %v994
        %v996 = vmul.f32 %v985, 1.442695
        %v997 = vpow.pop %v996
        %v998 = vmul.f32 %v986, 1.442695
        %v999 = vpow.pop %v998
        %v1000 = vmul.f32 %v987, 1.442695
        %v1001 = vpow.pop %v1000
        %v1002 = vmul.f32 %v988, 1.442695
        %v1003 = vpow.pop %v1002
        %v1004 = vmul.f32 %v989, 1.442695
        %v1005 = vpow.pop %v1004
        %v1006 = vsel %vm957, %v991, 0.0
        %1007 = vadd.xlane.f32.xlu0 %v1006
        %v1008 = vpop.xlane.xlu0 %1007
        %v1009 = vsel %vm957, %v993, 0.0
        %1010 = vadd.xlane.f32.xlu0 %v1009
        %v1011 = vpop.xlane.xlu0 %1010
        %v1012 = vsel %vm957, %v995, 0.0
        %1013 = vadd.xlane.f32.xlu0 %v1012
        %v1014 = vpop.xlane.xlu0 %1013
        %v1015 = vsel %vm957, %v997, 0.0
        %1016 = vadd.xlane.f32.xlu0 %v1015
        %v1017 = vpop.xlane.xlu0 %1016
        %v1018 = vsel %vm957, %v999, 0.0
        %1019 = vadd.xlane.f32.xlu0 %v1018
        %v1020 = vpop.xlane.xlu0 %1019
        %v1021 = vsel %vm957, %v1001, 0.0
        %1022 = vadd.xlane.f32.xlu0 %v1021
        %v1023 = vpop.xlane.xlu0 %1022
        %v1024 = vsel %vm957, %v1003, 0.0
        %1025 = vadd.xlane.f32.xlu0 %v1024
        %v1026 = vpop.xlane.xlu0 %1025
        %v1027 = vsel %vm957, %v1005, 0.0
        %1028 = vadd.xlane.f32.xlu0 %v1027
        %v1029 = vpop.xlane.xlu0 %1028
        %v1030 = vrcp.pop %v1008
        %v1031 = vrcp.pop %v1011
        %v1032 = vrcp.pop %v1014
        %v1033 = vrcp.pop %v1017
        %v1034 = vrcp.pop %v1020
        %v1035 = vrcp.pop %v1023
        %v1036 = vrcp.pop %v1026
        %v1037 = vrcp.pop %v1029
        %v1038 = vmul.f32 %v991, %v1030
        %v1039 = vmul.f32 %v993, %v1031
        %v1040 = vmul.f32 %v995, %v1032
        %v1041 = vmul.f32 %v997, %v1033
        %v1042 = vmul.f32 %v999, %v1034
        %v1043 = vmul.f32 %v1001, %v1035
        %v1044 = vmul.f32 %v1003, %v1036
        %v1045 = vmul.f32 %v1005, %v1037
        %1046 = vrot.lane.b32.xlu0 %v700, 112
        %v1047 = vpop.permute.xlu0 %1046
        %1048 = vrot.lane.b32.xlu0 %v705, 112
        %v1049 = vpop.permute.xlu0 %1048
        %1050 = vrot.lane.b32.xlu0 %v710, 112
        %v1051 = vpop.permute.xlu0 %1050
        %1052 = vrot.lane.b32.xlu0 %v715, 112
        %v1053 = vpop.permute.xlu0 %1052
        %1054 = vrot.lane.b32.xlu0 %v720, 112
        %v1055 = vpop.permute.xlu0 %1054
        %1056 = vrot.lane.b32.xlu0 %v725, 112
        %v1057 = vpop.permute.xlu0 %1056
        %1058 = vrot.lane.b32.xlu0 %v730, 112
        %v1059 = vpop.permute.xlu0 %1058
        %1060 = vrot.lane.b32.xlu0 %v735, 112
        %v1061 = vpop.permute.xlu0 %1060
        %v1071 = vsel %vm957, %v1038, 0
        %v1074 = vsel %vm957, %v1039, 0
        %v1077 = vsel %vm957, %v1040, 0
        %v1080 = vsel %vm957, %v1041, 0
        %v1083 = vsel %vm957, %v1042, 0
        %v1086 = vsel %vm957, %v1043, 0
        %v1089 = vsel %vm957, %v1044, 0
        %v1092 = vsel %vm957, %v1045, 0
        %1094 = vmatprep.subr.mxu0 0.0
        %1095 = vmatpush1.msra.mxu0 %v1047
        %1096 = vmatprep.subr.mxu0 0.0
        %1097 = vmatpush1.msra.mxu0 %v1049
        %1098 = vmatprep.subr.mxu0 0.0
        %1099 = vmatpush1.msra.mxu0 %v1051
        %1100 = vmatprep.subr.mxu0 0.0
        %1101 = vmatpush1.msra.mxu0 %v1053
        %1102 = vmatprep.subr.mxu0 0.0
        %1103 = vmatpush1.msra.mxu0 %v1055
        %1104 = vmatprep.subr.mxu0 0.0
        %1105 = vmatpush1.msra.mxu0 %v1057
        %1106 = vmatprep.subr.mxu0 0.0
        %1107 = vmatpush1.msra.mxu0 %v1059
        %1108 = vmatprep.subr.mxu0 0.0
        %1109 = vmatpush1.msra.mxu0 %v1061
        %1110 = vmatprep.subr.mxu0 0.0
        %1111 = vmatpush1.msra.mxu0 0.0
        %1112 = vmatprep.subr.mxu0 0.0
        %1113 = vmatpush1.msra.mxu0 0.0
        %1114 = vmatprep.subr.mxu0 0.0
        %1115 = vmatpush1.msra.mxu0 0.0
        %1116 = vmatprep.subr.mxu0 0.0
        %1117 = vmatpush1.msra.mxu0 0.0
        %1118 = vmatprep.subr.mxu0 0.0
        %1119 = vmatpush1.msra.mxu0 0.0
        %1120 = vmatprep.subr.mxu0 0.0
        %1121 = vmatpush1.msra.mxu0 0.0
        %1122 = vmatprep.subr.mxu0 0.0
        %1123 = vmatpush1.msra.mxu0 0.0
        %1124 = vmatprep.subr.mxu0 0.0
        %1125 = vmatpush1.msra.mxu0 0.0
        %1126 = vmatprep.subr.mxu0 0.0
        %1127 = vmatpush1.msra.mxu0 0.0
        %1128 = vmatprep.subr.mxu0 0.0
        %1129 = vmatpush1.msra.mxu0 0.0
        %1130 = vmatprep.subr.mxu0 0.0
        %1131 = vmatpush1.msra.mxu0 0.0
        %1132 = vmatprep.subr.mxu0 0.0
        %1133 = vmatpush1.msra.mxu0 0.0
        %1134 = vmatprep.subr.mxu0 0.0
        %1135 = vmatpush1.msra.mxu0 0.0
        %1136 = vmatprep.subr.mxu0 0.0
        %1137 = vmatpush1.msra.mxu0 0.0
        %1138 = vmatprep.subr.mxu0 0.0
        %1139 = vmatpush1.msra.mxu0 0.0
        %1140 = vmatprep.subr.mxu0 0.0
        %1141 = vmatpush1.msra.mxu0 0.0
        %1142 = vmatprep.subr.mxu0 0.0
        %1143 = vmatpush1.msra.mxu0 0.0
        %1144 = vmatprep.subr.mxu0 0.0
        %1145 = vmatpush1.msra.mxu0 0.0
        %1146 = vmatprep.subr.mxu0 0.0
        %1147 = vmatpush1.msra.mxu0 0.0
        %1148 = vmatprep.subr.mxu0 0.0
        %1149 = vmatpush1.msra.mxu0 0.0
        %1150 = vmatprep.subr.mxu0 0.0
        %1151 = vmatpush1.msra.mxu0 0.0
        %1152 = vmatprep.subr.mxu0 0.0
        %1153 = vmatpush1.msra.mxu0 0.0
        %1154 = vmatprep.subr.mxu0 0.0
        %1155 = vmatpush1.msra.mxu0 0.0
        %1156 = vmatprep.subr.mxu0 0.0
        %1157 = vmatpush1.msra.mxu0 0.0
        %1158 = vmatprep.mubr.f32.mxu0 0.0
        %1159 = vmatmul.mubr.f32.gmra.mrb[0].mxu0 %v1071
        %v1160 = vpop.f32.mrb[0].mxu0
        %v1161 = vadd.f32 0.0, %v1160
        %v1162 = vpop.f32.mrb[0].mxu0
        %1163 = vmatprep.mubr.f32.mxu0 0.0
        %1164 = vmatmul.mubr.f32.gmra.mrb[0].mxu0 %v1074
        %v1165 = vpop.f32.mrb[0].mxu0
        %v1166 = vadd.f32 0.0, %v1165
        %v1167 = vpop.f32.mrb[0].mxu0
        %1168 = vmatprep.mubr.f32.mxu0 0.0
        %1169 = vmatmul.mubr.f32.gmra.mrb[0].mxu0 %v1077
        %v1170 = vpop.f32.mrb[0].mxu0
        %v1171 = vadd.f32 0.0, %v1170
        %v1172 = vpop.f32.mrb[0].mxu0
        %1173 = vmatprep.mubr.f32.mxu0 0.0
        %1174 = vmatmul.mubr.f32.gmra.mrb[0].mxu0 %v1080
        %v1175 = vpop.f32.mrb[0].mxu0
        %v1176 = vadd.f32 0.0, %v1175
        %v1177 = vpop.f32.mrb[0].mxu0
        %1178 = vmatprep.mubr.f32.mxu0 0.0
        %1179 = vmatmul.mubr.f32.gmra.mrb[0].mxu0 %v1083
        %v1180 = vpop.f32.mrb[0].mxu0
        %v1181 = vadd.f32 0.0, %v1180
        %v1182 = vpop.f32.mrb[0].mxu0
        %1183 = vmatprep.mubr.f32.mxu0 0.0
        %1184 = vmatmul.mubr.f32.gmra.mrb[0].mxu0 %v1086
        %v1185 = vpop.f32.mrb[0].mxu0
        %v1186 = vadd.f32 0.0, %v1185
        %v1187 = vpop.f32.mrb[0].mxu0
        %1188 = vmatprep.mubr.f32.mxu0 0.0
        %1189 = vmatmul.mubr.f32.gmra.mrb[0].mxu0 %v1089
        %v1190 = vpop.f32.mrb[0].mxu0
        %v1191 = vadd.f32 0.0, %v1190
        %v1192 = vpop.f32.mrb[0].mxu0
        %1193 = vmatprep.mubr.f32.mxu0 0.0
        %1194 = vmatmul.mubr.f32.gmra.mrb[0].mxu0 %v1092
        %v1195 = vpop.f32.mrb[0].mxu0
        %v1196 = vadd.f32 0.0, %v1195
        %v1197 = vpop.f32.mrb[0].mxu0
        %1198 = vdwg.mxu0
        %1199 = vrot.lane.b32.xlu0 %v779, 124
        %v1200 = vpop.permute.xlu0 %1199
        %1201 = vrot.lane.b32.xlu0 %v780, 124
        %v1202 = vpop.permute.xlu0 %1201
        %1203 = vrot.lane.b32.xlu0 %v781, 124
        %v1204 = vpop.permute.xlu0 %1203
        %1205 = vrot.lane.b32.xlu0 %v782, 124
        %v1206 = vpop.permute.xlu0 %1205
        %1207 = vrot.lane.b32.xlu0 %v783, 124
        %v1208 = vpop.permute.xlu0 %1207
        %1209 = vrot.lane.b32.xlu0 %v784, 124
        %v1210 = vpop.permute.xlu0 %1209
        %1211 = vrot.lane.b32.xlu0 %v785, 124
        %v1212 = vpop.permute.xlu0 %1211
        %1213 = vrot.lane.b32.xlu0 %v786, 124
        %v1214 = vpop.permute.xlu0 %1213
        %1215 = vrot.lane.b32.xlu0 %v700, 116
        %v1216 = vpop.permute.xlu0 %1215
        %1217 = vrot.lane.b32.xlu0 %v705, 116
        %v1218 = vpop.permute.xlu0 %1217
        %1219 = vrot.lane.b32.xlu0 %v710, 116
        %v1220 = vpop.permute.xlu0 %1219
        %1221 = vrot.lane.b32.xlu0 %v715, 116
        %v1222 = vpop.permute.xlu0 %1221
        %1223 = vrot.lane.b32.xlu0 %v720, 116
        %v1224 = vpop.permute.xlu0 %1223
        %1225 = vrot.lane.b32.xlu0 %v725, 116
        %v1226 = vpop.permute.xlu0 %1225
        %1227 = vrot.lane.b32.xlu0 %v730, 116
        %v1228 = vpop.permute.xlu0 %1227
        %1229 = vrot.lane.b32.xlu0 %v735, 116
        %v1230 = vpop.permute.xlu0 %1229
        %v1231 = vsel %vm811, %v1200, 0
        %v1233 = vsel %vm811, %v1202, 0
        %v1235 = vsel %vm811, %v1204, 0
        %v1237 = vsel %vm811, %v1206, 0
        %v1239 = vsel %vm811, %v1208, 0
        %v1241 = vsel %vm811, %v1210, 0
        %v1243 = vsel %vm811, %v1212, 0
        %v1245 = vsel %vm811, %v1214, 0
        %v1247 = vsel %vm811, %v1216, 0
        %v1249 = vsel %vm811, %v1218, 0
        %v1251 = vsel %vm811, %v1220, 0
        %v1253 = vsel %vm811, %v1222, 0
        %v1255 = vsel %vm811, %v1224, 0
        %v1257 = vsel %vm811, %v1226, 0
        %v1259 = vsel %vm811, %v1228, 0
        %v1261 = vsel %vm811, %v1230, 0
        %1263 = vmatprep.subr.mxu0 0.0
        %1264 = vmatpush1.xpose.msra.mxu0 %v1247
        %1265 = vmatprep.subr.mxu0 0.0
        %1266 = vmatpush1.xpose.msra.mxu0 %v1249
        %1267 = vmatprep.subr.mxu0 0.0
        %1268 = vmatpush1.xpose.msra.mxu0 %v1251
        %1269 = vmatprep.subr.mxu0 0.0
        %1270 = vmatpush1.xpose.msra.mxu0 %v1253
        %1271 = vmatprep.subr.mxu0 0.0
        %1272 = vmatpush1.xpose.msra.mxu0 %v1255
        %1273 = vmatprep.subr.mxu0 0.0
        %1274 = vmatpush1.xpose.msra.mxu0 %v1257
        %1275 = vmatprep.subr.mxu0 0.0
        %1276 = vmatpush1.xpose.msra.mxu0 %v1259
        %1277 = vmatprep.subr.mxu0 0.0
        %1278 = vmatpush1.xpose.msra.mxu0 %v1261
        %1279 = vmatprep.subr.mxu0 0.0
        %1280 = vmatpush1.xpose.msra.mxu0 0.0
        %1281 = vmatprep.subr.mxu0 0.0
        %1282 = vmatpush1.xpose.msra.mxu0 0.0
        %1283 = vmatprep.subr.mxu0 0.0
        %1284 = vmatpush1.xpose.msra.mxu0 0.0
        %1285 = vmatprep.subr.mxu0 0.0
        %1286 = vmatpush1.xpose.msra.mxu0 0.0
        %1287 = vmatprep.subr.mxu0 0.0
        %1288 = vmatpush1.xpose.msra.mxu0 0.0
        %1289 = vmatprep.subr.mxu0 0.0
        %1290 = vmatpush1.xpose.msra.mxu0 0.0
        %1291 = vmatprep.subr.mxu0 0.0
        %1292 = vmatpush1.xpose.msra.mxu0 0.0
        %1293 = vmatprep.subr.mxu0 0.0
        %1294 = vmatpush1.xpose.msra.mxu0 0.0
        %1295 = vmatprep.subr.mxu0 0.0
        %1296 = vmatpush1.xpose.msra.mxu0 0.0
        %1297 = vmatprep.subr.mxu0 0.0
        %1298 = vmatpush1.xpose.msra.mxu0 0.0
        %1299 = vmatprep.subr.mxu0 0.0
        %1300 = vmatpush1.xpose.msra.mxu0 0.0
        %1301 = vmatprep.subr.mxu0 0.0
        %1302 = vmatpush1.xpose.msra.mxu0 0.0
        %1303 = vmatprep.subr.mxu0 0.0
        %1304 = vmatpush1.xpose.msra.mxu0 0.0
        %1305 = vmatprep.subr.mxu0 0.0
        %1306 = vmatpush1.xpose.msra.mxu0 0.0
        %1307 = vmatprep.subr.mxu0 0.0
        %1308 = vmatpush1.xpose.msra.mxu0 0.0
        %1309 = vmatprep.subr.mxu0 0.0
        %1310 = vmatpush1.xpose.msra.mxu0 0.0
        %1311 = vmatprep.subr.mxu0 0.0
        %1312 = vmatpush1.xpose.msra.mxu0 0.0
        %1313 = vmatprep.subr.mxu0 0.0
        %1314 = vmatpush1.xpose.msra.mxu0 0.0
        %1315 = vmatprep.subr.mxu0 0.0
        %1316 = vmatpush1.xpose.msra.mxu0 0.0
        %1317 = vmatprep.subr.mxu0 0.0
        %1318 = vmatpush1.xpose.msra.mxu0 0.0
        %1319 = vmatprep.subr.mxu0 0.0
        %1320 = vmatpush1.xpose.msra.mxu0 0.0
        %1321 = vmatprep.subr.mxu0 0.0
        %1322 = vmatpush1.xpose.msra.mxu0 0.0
        %1323 = vmatprep.subr.mxu0 0.0
        %1324 = vmatpush1.xpose.msra.mxu0 0.0
        %1325 = vmatprep.subr.mxu0 0.0
        %1326 = vmatpush1.xpose.msra.mxu0 0.0
        %1327 = vmatprep.mubr.f32.mxu0 0.0
        %1328 = vmatmul.mubr.f32.gmra.mrb[0].mxu0 %v1231
        %v1329 = vpop.f32.mrb[0].mxu0
        %v1330 = vadd.f32 %v770, %v1329
        %v1331 = vpop.f32.mrb[0].mxu0
        %1332 = vmatprep.mubr.f32.mxu0 0.0
        %1333 = vmatmul.mubr.f32.gmra.mrb[0].mxu0 %v1233
        %v1334 = vpop.f32.mrb[0].mxu0
        %v1335 = vadd.f32 %v771, %v1334
        %v1336 = vpop.f32.mrb[0].mxu0
        %1337 = vmatprep.mubr.f32.mxu0 0.0
        %1338 = vmatmul.mubr.f32.gmra.mrb[0].mxu0 %v1235
        %v1339 = vpop.f32.mrb[0].mxu0
        %v1340 = vadd.f32 %v772, %v1339
        %v1341 = vpop.f32.mrb[0].mxu0
        %1342 = vmatprep.mubr.f32.mxu0 0.0
        %1343 = vmatmul.mubr.f32.gmra.mrb[0].mxu0 %v1237
        %v1344 = vpop.f32.mrb[0].mxu0
        %v1345 = vadd.f32 %v773, %v1344
        %v1346 = vpop.f32.mrb[0].mxu0
        %1347 = vmatprep.mubr.f32.mxu0 0.0
        %1348 = vmatmul.mubr.f32.gmra.mrb[0].mxu0 %v1239
        %v1349 = vpop.f32.mrb[0].mxu0
        %v1350 = vadd.f32 %v774, %v1349
        %v1351 = vpop.f32.mrb[0].mxu0
        %1352 = vmatprep.mubr.f32.mxu0 0.0
        %1353 = vmatmul.mubr.f32.gmra.mrb[0].mxu0 %v1241
        %v1354 = vpop.f32.mrb[0].mxu0
        %v1355 = vadd.f32 %v775, %v1354
        %v1356 = vpop.f32.mrb[0].mxu0
        %1357 = vmatprep.mubr.f32.mxu0 0.0
        %1358 = vmatmul.mubr.f32.gmra.mrb[0].mxu0 %v1243
        %v1359 = vpop.f32.mrb[0].mxu0
        %v1360 = vadd.f32 %v776, %v1359
        %v1361 = vpop.f32.mrb[0].mxu0
        %1362 = vmatprep.mubr.f32.mxu0 0.0
        %1363 = vmatmul.mubr.f32.gmra.mrb[0].mxu0 %v1245
        %v1364 = vpop.f32.mrb[0].mxu0
        %v1365 = vadd.f32 %v777, %v1364
        %v1366 = vpop.f32.mrb[0].mxu0
        %1367 = vdwg.mxu0
        %v1368 = vsel %vm957, %v1330, -inf
        %1369 = vmax.xlane.f32.xlu0 %v1368
        %v1370 = vpop.xlane.xlu0 %1369
        %v1371 = vsel %vm957, %v1335, -inf
        %1372 = vmax.xlane.f32.xlu0 %v1371
        %v1373 = vpop.xlane.xlu0 %1372
        %v1374 = vsel %vm957, %v1340, -inf
        %1375 = vmax.xlane.f32.xlu0 %v1374
        %v1376 = vpop.xlane.xlu0 %1375
        %v1377 = vsel %vm957, %v1345, -inf
        %1378 = vmax.xlane.f32.xlu0 %v1377
        %v1379 = vpop.xlane.xlu0 %1378
        %v1380 = vsel %vm957, %v1350, -inf
        %1381 = vmax.xlane.f32.xlu0 %v1380
        %v1382 = vpop.xlane.xlu0 %1381
        %v1383 = vsel %vm957, %v1355, -inf
        %1384 = vmax.xlane.f32.xlu0 %v1383
        %v1385 = vpop.xlane.xlu0 %1384
        %v1386 = vsel %vm957, %v1360, -inf
        %1387 = vmax.xlane.f32.xlu0 %v1386
        %v1388 = vpop.xlane.xlu0 %1387
        %v1389 = vsel %vm957, %v1365, -inf
        %1390 = vmax.xlane.f32.xlu0 %v1389
        %v1391 = vpop.xlane.xlu0 %1390
        %v1392 = vsub.f32 %v1330, %v1370
        %v1393 = vsub.f32 %v1335, %v1373
        %v1394 = vsub.f32 %v1340, %v1376
        %v1395 = vsub.f32 %v1345, %v1379
        %v1396 = vsub.f32 %v1350, %v1382
        %v1397 = vsub.f32 %v1355, %v1385
        %v1398 = vsub.f32 %v1360, %v1388
        %v1399 = vsub.f32 %v1365, %v1391
        %v1400 = vmul.f32 %v1392, 1.442695
        %v1401 = vpow.pop %v1400
        %v1402 = vmul.f32 %v1393, 1.442695
        %v1403 = vpow.pop %v1402
        %v1404 = vmul.f32 %v1394, 1.442695
        %v1405 = vpow.pop %v1404
        %v1406 = vmul.f32 %v1395, 1.442695
        %v1407 = vpow.pop %v1406
        %v1408 = vmul.f32 %v1396, 1.442695
        %v1409 = vpow.pop %v1408
        %v1410 = vmul.f32 %v1397, 1.442695
        %v1411 = vpow.pop %v1410
        %v1412 = vmul.f32 %v1398, 1.442695
        %v1413 = vpow.pop %v1412
        %v1414 = vmul.f32 %v1399, 1.442695
        %v1415 = vpow.pop %v1414
        %v1416 = vsel %vm957, %v1401, 0.0
        %1417 = vadd.xlane.f32.xlu0 %v1416
        %v1418 = vpop.xlane.xlu0 %1417
        %v1419 = vsel %vm957, %v1403, 0.0
        %1420 = vadd.xlane.f32.xlu0 %v1419
        %v1421 = vpop.xlane.xlu0 %1420
        %v1422 = vsel %vm957, %v1405, 0.0
        %1423 = vadd.xlane.f32.xlu0 %v1422
        %v1424 = vpop.xlane.xlu0 %1423
        %v1425 = vsel %vm957, %v1407, 0.0
        %1426 = vadd.xlane.f32.xlu0 %v1425
        %v1427 = vpop.xlane.xlu0 %1426
        %v1428 = vsel %vm957, %v1409, 0.0
        %1429 = vadd.xlane.f32.xlu0 %v1428
        %v1430 = vpop.xlane.xlu0 %1429
        %v1431 = vsel %vm957, %v1411, 0.0
        %1432 = vadd.xlane.f32.xlu0 %v1431
        %v1433 = vpop.xlane.xlu0 %1432
        %v1434 = vsel %vm957, %v1413, 0.0
        %1435 = vadd.xlane.f32.xlu0 %v1434
        %v1436 = vpop.xlane.xlu0 %1435
        %v1437 = vsel %vm957, %v1415, 0.0
        %1438 = vadd.xlane.f32.xlu0 %v1437
        %v1439 = vpop.xlane.xlu0 %1438
        %v1440 = vrcp.pop %v1418
        %v1441 = vrcp.pop %v1421
        %v1442 = vrcp.pop %v1424
        %v1443 = vrcp.pop %v1427
        %v1444 = vrcp.pop %v1430
        %v1445 = vrcp.pop %v1433
        %v1446 = vrcp.pop %v1436
        %v1447 = vrcp.pop %v1439
        %v1448 = vmul.f32 %v1401, %v1440
        %v1449 = vmul.f32 %v1403, %v1441
        %v1450 = vmul.f32 %v1405, %v1442
        %v1451 = vmul.f32 %v1407, %v1443
        %v1452 = vmul.f32 %v1409, %v1444
        %v1453 = vmul.f32 %v1411, %v1445
        %v1454 = vmul.f32 %v1413, %v1446
        %v1455 = vmul.f32 %v1415, %v1447
        %1456 = vrot.lane.b32.xlu0 %v700, 108
        %v1457 = vpop.permute.xlu0 %1456
        %1458 = vrot.lane.b32.xlu0 %v705, 108
        %v1459 = vpop.permute.xlu0 %1458
        %1460 = vrot.lane.b32.xlu0 %v710, 108
        %v1461 = vpop.permute.xlu0 %1460
        %1462 = vrot.lane.b32.xlu0 %v715, 108
        %v1463 = vpop.permute.xlu0 %1462
        %1464 = vrot.lane.b32.xlu0 %v720, 108
        %v1465 = vpop.permute.xlu0 %1464
        %1466 = vrot.lane.b32.xlu0 %v725, 108
        %v1467 = vpop.permute.xlu0 %1466
        %1468 = vrot.lane.b32.xlu0 %v730, 108
        %v1469 = vpop.permute.xlu0 %1468
        %1470 = vrot.lane.b32.xlu0 %v735, 108
        %v1471 = vpop.permute.xlu0 %1470
        %v1481 = vsel %vm957, %v1448, 0
        %v1484 = vsel %vm957, %v1449, 0
        %v1487 = vsel %vm957, %v1450, 0
        %v1490 = vsel %vm957, %v1451, 0
        %v1493 = vsel %vm957, %v1452, 0
        %v1496 = vsel %vm957, %v1453, 0
        %v1499 = vsel %vm957, %v1454, 0
        %v1502 = vsel %vm957, %v1455, 0
        %1504 = vmatprep.subr.mxu0 0.0
        %1505 = vmatpush1.msra.mxu0 %v1457
        %1506 = vmatprep.subr.mxu0 0.0
        %1507 = vmatpush1.msra.mxu0 %v1459
        %1508 = vmatprep.subr.mxu0 0.0
        %1509 = vmatpush1.msra.mxu0 %v1461
        %1510 = vmatprep.subr.mxu0 0.0
        %1511 = vmatpush1.msra.mxu0 %v1463
        %1512 = vmatprep.subr.mxu0 0.0
        %1513 = vmatpush1.msra.mxu0 %v1465
        %1514 = vmatprep.subr.mxu0 0.0
        %1515 = vmatpush1.msra.mxu0 %v1467
        %1516 = vmatprep.subr.mxu0 0.0
        %1517 = vmatpush1.msra.mxu0 %v1469
        %1518 = vmatprep.subr.mxu0 0.0
        %1519 = vmatpush1.msra.mxu0 %v1471
        %1520 = vmatprep.subr.mxu0 0.0
        %1521 = vmatpush1.msra.mxu0 0.0
        %1522 = vmatprep.subr.mxu0 0.0
        %1523 = vmatpush1.msra.mxu0 0.0
        %1524 = vmatprep.subr.mxu0 0.0
        %1525 = vmatpush1.msra.mxu0 0.0
        %1526 = vmatprep.subr.mxu0 0.0
        %1527 = vmatpush1.msra.mxu0 0.0
        %1528 = vmatprep.subr.mxu0 0.0
        %1529 = vmatpush1.msra.mxu0 0.0
        %1530 = vmatprep.subr.mxu0 0.0
        %1531 = vmatpush1.msra.mxu0 0.0
        %1532 = vmatprep.subr.mxu0 0.0
        %1533 = vmatpush1.msra.mxu0 0.0
        %1534 = vmatprep.subr.mxu0 0.0
        %1535 = vmatpush1.msra.mxu0 0.0
        %1536 = vmatprep.subr.mxu0 0.0
        %1537 = vmatpush1.msra.mxu0 0.0
        %1538 = vmatprep.subr.mxu0 0.0
        %1539 = vmatpush1.msra.mxu0 0.0
        %1540 = vmatprep.subr.mxu0 0.0
        %1541 = vmatpush1.msra.mxu0 0.0
        %1542 = vmatprep.subr.mxu0 0.0
        %1543 = vmatpush1.msra.mxu0 0.0
        %1544 = vmatprep.subr.mxu0 0.0
        %1545 = vmatpush1.msra.mxu0 0.0
        %1546 = vmatprep.subr.mxu0 0.0
        %1547 = vmatpush1.msra.mxu0 0.0
        %1548 = vmatprep.subr.mxu0 0.0
        %1549 = vmatpush1.msra.mxu0 0.0
        %1550 = vmatprep.subr.mxu0 0.0
        %1551 = vmatpush1.msra.mxu0 0.0
        %1552 = vmatprep.subr.mxu0 0.0
        %1553 = vmatpush1.msra.mxu0 0.0
        %1554 = vmatprep.subr.mxu0 0.0
        %1555 = vmatpush1.msra.mxu0 0.0
        %1556 = vmatprep.subr.mxu0 0.0
        %1557 = vmatpush1.msra.mxu0 0.0
        %1558 = vmatprep.subr.mxu0 0.0
        %1559 = vmatpush1.msra.mxu0 0.0
        %1560 = vmatprep.subr.mxu0 0.0
        %1561 = vmatpush1.msra.mxu0 0.0
        %1562 = vmatprep.subr.mxu0 0.0
        %1563 = vmatpush1.msra.mxu0 0.0
        %1564 = vmatprep.subr.mxu0 0.0
        %1565 = vmatpush1.msra.mxu0 0.0
        %1566 = vmatprep.subr.mxu0 0.0
        %1567 = vmatpush1.msra.mxu0 0.0
        %1568 = vmatprep.mubr.f32.mxu0 0.0
        %1569 = vmatmul.mubr.f32.gmra.mrb[0].mxu0 %v1481
        %v1570 = vpop.f32.mrb[0].mxu0
        %v1571 = vadd.f32 0.0, %v1570
        %v1572 = vpop.f32.mrb[0].mxu0
        %1573 = vmatprep.mubr.f32.mxu0 0.0
        %1574 = vmatmul.mubr.f32.gmra.mrb[0].mxu0 %v1484
        %v1575 = vpop.f32.mrb[0].mxu0
        %v1576 = vadd.f32 0.0, %v1575
        %v1577 = vpop.f32.mrb[0].mxu0
        %1578 = vmatprep.mubr.f32.mxu0 0.0
        %1579 = vmatmul.mubr.f32.gmra.mrb[0].mxu0 %v1487
        %v1580 = vpop.f32.mrb[0].mxu0
        %v1581 = vadd.f32 0.0, %v1580
        %v1582 = vpop.f32.mrb[0].mxu0
        %1583 = vmatprep.mubr.f32.mxu0 0.0
        %1584 = vmatmul.mubr.f32.gmra.mrb[0].mxu0 %v1490
        %v1585 = vpop.f32.mrb[0].mxu0
        %v1586 = vadd.f32 0.0, %v1585
        %v1587 = vpop.f32.mrb[0].mxu0
        %1588 = vmatprep.mubr.f32.mxu0 0.0
        %1589 = vmatmul.mubr.f32.gmra.mrb[0].mxu0 %v1493
        %v1590 = vpop.f32.mrb[0].mxu0
        %v1591 = vadd.f32 0.0, %v1590
        %v1592 = vpop.f32.mrb[0].mxu0
        %1593 = vmatprep.mubr.f32.mxu0 0.0
        %1594 = vmatmul.mubr.f32.gmra.mrb[0].mxu0 %v1496
        %v1595 = vpop.f32.mrb[0].mxu0
        %v1596 = vadd.f32 0.0, %v1595
        %v1597 = vpop.f32.mrb[0].mxu0
        %1598 = vmatprep.mubr.f32.mxu0 0.0
        %1599 = vmatmul.mubr.f32.gmra.mrb[0].mxu0 %v1499
        %v1600 = vpop.f32.mrb[0].mxu0
        %v1601 = vadd.f32 0.0, %v1600
        %v1602 = vpop.f32.mrb[0].mxu0
        %1603 = vmatprep.mubr.f32.mxu0 0.0
        %1604 = vmatmul.mubr.f32.gmra.mrb[0].mxu0 %v1502
        %v1605 = vpop.f32.mrb[0].mxu0
        %v1606 = vadd.f32 0.0, %v1605
        %v1607 = vpop.f32.mrb[0].mxu0
        %1608 = vdwg.mxu0
        %v1610 = vrot.slane %v778, 4
        %v1612 = vsel %vm811, %v1571, 0
        %v1615 = vsel %vm811, %v1576, 0
        %v1618 = vsel %vm811, %v1581, 0
        %v1621 = vsel %vm811, %v1586, 0
        %v1624 = vsel %vm811, %v1591, 0
        %v1627 = vsel %vm811, %v1596, 0
        %v1630 = vsel %vm811, %v1601, 0
        %v1633 = vsel %vm811, %v1606, 0
        %vm1635 = vcmask 1043456
        %v1636 = vsel %vm1635, %v1610, 0
        %1638 = vmatprep.subr.mxu0 0.0
        %1639 = vmatpush1.msra.mxu0 %v1636
        %1640 = vmatprep.subr.mxu0 0.0
        %1641 = vmatpush1.msra.mxu0 0.0
        %1642 = vmatprep.subr.mxu0 0.0
        %1643 = vmatpush1.msra.mxu0 0.0
        %1644 = vmatprep.subr.mxu0 0.0
        %1645 = vmatpush1.msra.mxu0 0.0
        %1646 = vmatprep.subr.mxu0 0.0
        %1647 = vmatpush1.msra.mxu0 0.0
        %1648 = vmatprep.subr.mxu0 0.0
        %1649 = vmatpush1.msra.mxu0 0.0
        %1650 = vmatprep.subr.mxu0 0.0
        %1651 = vmatpush1.msra.mxu0 0.0
        %1652 = vmatprep.subr.mxu0 0.0
        %1653 = vmatpush1.msra.mxu0 0.0
        %1654 = vmatprep.subr.mxu0 0.0
        %1655 = vmatpush1.msra.mxu0 0.0
        %1656 = vmatprep.subr.mxu0 0.0
        %1657 = vmatpush1.msra.mxu0 0.0
        %1658 = vmatprep.subr.mxu0 0.0
        %1659 = vmatpush1.msra.mxu0 0.0
        %1660 = vmatprep.subr.mxu0 0.0
        %1661 = vmatpush1.msra.mxu0 0.0
        %1662 = vmatprep.subr.mxu0 0.0
        %1663 = vmatpush1.msra.mxu0 0.0
        %1664 = vmatprep.subr.mxu0 0.0
        %1665 = vmatpush1.msra.mxu0 0.0
        %1666 = vmatprep.subr.mxu0 0.0
        %1667 = vmatpush1.msra.mxu0 0.0
        %1668 = vmatprep.subr.mxu0 0.0
        %1669 = vmatpush1.msra.mxu0 0.0
        %1670 = vmatprep.subr.mxu0 0.0
        %1671 = vmatpush1.msra.mxu0 0.0
        %1672 = vmatprep.subr.mxu0 0.0
        %1673 = vmatpush1.msra.mxu0 0.0
        %1674 = vmatprep.subr.mxu0 0.0
        %1675 = vmatpush1.msra.mxu0 0.0
        %1676 = vmatprep.subr.mxu0 0.0
        %1677 = vmatpush1.msra.mxu0 0.0
        %1678 = vmatprep.subr.mxu0 0.0
        %1679 = vmatpush1.msra.mxu0 0.0
        %1680 = vmatprep.subr.mxu0 0.0
        %1681 = vmatpush1.msra.mxu0 0.0
        %1682 = vmatprep.subr.mxu0 0.0
        %1683 = vmatpush1.msra.mxu0 0.0
        %1684 = vmatprep.subr.mxu0 0.0
        %1685 = vmatpush1.msra.mxu0 0.0
        %1686 = vmatprep.subr.mxu0 0.0
        %1687 = vmatpush1.msra.mxu0 0.0
        %1688 = vmatprep.subr.mxu0 0.0
        %1689 = vmatpush1.msra.mxu0 0.0
        %1690 = vmatprep.subr.mxu0 0.0
        %1691 = vmatpush1.msra.mxu0 0.0
        %1692 = vmatprep.subr.mxu0 0.0
        %1693 = vmatpush1.msra.mxu0 0.0
        %1694 = vmatprep.subr.mxu0 0.0
        %1695 = vmatpush1.msra.mxu0 0.0
        %1696 = vmatprep.subr.mxu0 0.0
        %1697 = vmatpush1.msra.mxu0 0.0
        %1698 = vmatprep.subr.mxu0 0.0
        %1699 = vmatpush1.msra.mxu0 0.0
        %1700 = vmatprep.subr.mxu0 0.0
        %1701 = vmatpush1.msra.mxu0 0.0
        %1702 = vmatprep.mubr.f32.mxu0 0.0
        %1703 = vmatmul.mubr.f32.gmra.mrb[0].mxu0 %v1612
        %v1704 = vpop.f32.mrb[0].mxu0
        %v1705 = vadd.f32 0.0, %v1704
        %v1706 = vpop.f32.mrb[0].mxu0
        %1707 = vmatprep.mubr.f32.mxu0 0.0
        %1708 = vmatmul.mubr.f32.gmra.mrb[0].mxu0 %v1615
        %v1709 = vpop.f32.mrb[0].mxu0
        %v1710 = vadd.f32 0.0, %v1709
        %v1711 = vpop.f32.mrb[0].mxu0
        %1712 = vmatprep.mubr.f32.mxu0 0.0
        %1713 = vmatmul.mubr.f32.gmra.mrb[0].mxu0 %v1618
        %v1714 = vpop.f32.mrb[0].mxu0
        %v1715 = vadd.f32 0.0, %v1714
        %v1716 = vpop.f32.mrb[0].mxu0
        %1717 = vmatprep.mubr.f32.mxu0 0.0
        %1718 = vmatmul.mubr.f32.gmra.mrb[0].mxu0 %v1621
        %v1719 = vpop.f32.mrb[0].mxu0
        %v1720 = vadd.f32 0.0, %v1719
        %v1721 = vpop.f32.mrb[0].mxu0
        %1722 = vmatprep.mubr.f32.mxu0 0.0
        %1723 = vmatmul.mubr.f32.gmra.mrb[0].mxu0 %v1624
        %v1724 = vpop.f32.mrb[0].mxu0
        %v1725 = vadd.f32 0.0, %v1724
        %v1726 = vpop.f32.mrb[0].mxu0
        %1727 = vmatprep.mubr.f32.mxu0 0.0
        %1728 = vmatmul.mubr.f32.gmra.mrb[0].mxu0 %v1627
        %v1729 = vpop.f32.mrb[0].mxu0
        %v1730 = vadd.f32 0.0, %v1729
        %v1731 = vpop.f32.mrb[0].mxu0
        %1732 = vmatprep.mubr.f32.mxu0 0.0
        %1733 = vmatmul.mubr.f32.gmra.mrb[0].mxu0 %v1630
        %v1734 = vpop.f32.mrb[0].mxu0
        %v1735 = vadd.f32 0.0, %v1734
        %v1736 = vpop.f32.mrb[0].mxu0
        %1737 = vmatprep.mubr.f32.mxu0 0.0
        %1738 = vmatmul.mubr.f32.gmra.mrb[0].mxu0 %v1633
        %v1739 = vpop.f32.mrb[0].mxu0
        %v1740 = vadd.f32 0.0, %v1739
        %v1741 = vpop.f32.mrb[0].mxu0
        %1742 = vdwg.mxu0
        %v1744 = vsel %vm811, %v1161, 0
        %v1747 = vsel %vm811, %v1166, 0
        %v1750 = vsel %vm811, %v1171, 0
        %v1753 = vsel %vm811, %v1176, 0
        %v1756 = vsel %vm811, %v1181, 0
        %v1759 = vsel %vm811, %v1186, 0
        %v1762 = vsel %vm811, %v1191, 0
        %v1765 = vsel %vm811, %v1196, 0
        %v1767 = vsel %vm1635, %v778, 0
        %1769 = vmatprep.subr.mxu0 0.0
        %1770 = vmatpush1.msra.mxu0 %v1767
        %1771 = vmatprep.subr.mxu0 0.0
        %1772 = vmatpush1.msra.mxu0 0.0
        %1773 = vmatprep.subr.mxu0 0.0
        %1774 = vmatpush1.msra.mxu0 0.0
        %1775 = vmatprep.subr.mxu0 0.0
        %1776 = vmatpush1.msra.mxu0 0.0
        %1777 = vmatprep.subr.mxu0 0.0
        %1778 = vmatpush1.msra.mxu0 0.0
        %1779 = vmatprep.subr.mxu0 0.0
        %1780 = vmatpush1.msra.mxu0 0.0
        %1781 = vmatprep.subr.mxu0 0.0
        %1782 = vmatpush1.msra.mxu0 0.0
        %1783 = vmatprep.subr.mxu0 0.0
        %1784 = vmatpush1.msra.mxu0 0.0
        %1785 = vmatprep.subr.mxu0 0.0
        %1786 = vmatpush1.msra.mxu0 0.0
        %1787 = vmatprep.subr.mxu0 0.0
        %1788 = vmatpush1.msra.mxu0 0.0
        %1789 = vmatprep.subr.mxu0 0.0
        %1790 = vmatpush1.msra.mxu0 0.0
        %1791 = vmatprep.subr.mxu0 0.0
        %1792 = vmatpush1.msra.mxu0 0.0
        %1793 = vmatprep.subr.mxu0 0.0
        %1794 = vmatpush1.msra.mxu0 0.0
        %1795 = vmatprep.subr.mxu0 0.0
        %1796 = vmatpush1.msra.mxu0 0.0
        %1797 = vmatprep.subr.mxu0 0.0
        %1798 = vmatpush1.msra.mxu0 0.0
        %1799 = vmatprep.subr.mxu0 0.0
        %1800 = vmatpush1.msra.mxu0 0.0
        %1801 = vmatprep.subr.mxu0 0.0
        %1802 = vmatpush1.msra.mxu0 0.0
        %1803 = vmatprep.subr.mxu0 0.0
        %1804 = vmatpush1.msra.mxu0 0.0
        %1805 = vmatprep.subr.mxu0 0.0
        %1806 = vmatpush1.msra.mxu0 0.0
        %1807 = vmatprep.subr.mxu0 0.0
        %1808 = vmatpush1.msra.mxu0 0.0
        %1809 = vmatprep.subr.mxu0 0.0
        %1810 = vmatpush1.msra.mxu0 0.0
        %1811 = vmatprep.subr.mxu0 0.0
        %1812 = vmatpush1.msra.mxu0 0.0
        %1813 = vmatprep.subr.mxu0 0.0
        %1814 = vmatpush1.msra.mxu0 0.0
        %1815 = vmatprep.subr.mxu0 0.0
        %1816 = vmatpush1.msra.mxu0 0.0
        %1817 = vmatprep.subr.mxu0 0.0
        %1818 = vmatpush1.msra.mxu0 0.0
        %1819 = vmatprep.subr.mxu0 0.0
        %1820 = vmatpush1.msra.mxu0 0.0
        %1821 = vmatprep.subr.mxu0 0.0
        %1822 = vmatpush1.msra.mxu0 0.0
        %1823 = vmatprep.subr.mxu0 0.0
        %1824 = vmatpush1.msra.mxu0 0.0
        %1825 = vmatprep.subr.mxu0 0.0
        %1826 = vmatpush1.msra.mxu0 0.0
        %1827 = vmatprep.subr.mxu0 0.0
        %1828 = vmatpush1.msra.mxu0 0.0
        %1829 = vmatprep.subr.mxu0 0.0
        %1830 = vmatpush1.msra.mxu0 0.0
        %1831 = vmatprep.subr.mxu0 0.0
        %1832 = vmatpush1.msra.mxu0 0.0
        %1833 = vmatprep.mubr.f32.mxu0 0.0
        %1834 = vmatmul.mubr.f32.gmra.mrb[0].mxu0 %v1744
        %v1835 = vpop.f32.mrb[0].mxu0
        %v1836 = vadd.f32 %v1705, %v1835
        %v1837 = vpop.f32.mrb[0].mxu0
        %1838 = vmatprep.mubr.f32.mxu0 0.0
        %1839 = vmatmul.mubr.f32.gmra.mrb[0].mxu0 %v1747
        %v1840 = vpop.f32.mrb[0].mxu0
        %v1841 = vadd.f32 %v1710, %v1840
        %v1842 = vpop.f32.mrb[0].mxu0
        %1843 = vmatprep.mubr.f32.mxu0 0.0
        %1844 = vmatmul.mubr.f32.gmra.mrb[0].mxu0 %v1750
        %v1845 = vpop.f32.mrb[0].mxu0
        %v1846 = vadd.f32 %v1715, %v1845
        %v1847 = vpop.f32.mrb[0].mxu0
        %1848 = vmatprep.mubr.f32.mxu0 0.0
        %1849 = vmatmul.mubr.f32.gmra.mrb[0].mxu0 %v1753
        %v1850 = vpop.f32.mrb[0].mxu0
        %v1851 = vadd.f32 %v1720, %v1850
        %v1852 = vpop.f32.mrb[0].mxu0
        %1853 = vmatprep.mubr.f32.mxu0 0.0
        %1854 = vmatmul.mubr.f32.gmra.mrb[0].mxu0 %v1756
        %v1855 = vpop.f32.mrb[0].mxu0
        %v1856 = vadd.f32 %v1725, %v1855
        %v1857 = vpop.f32.mrb[0].mxu0
        %1858 = vmatprep.mubr.f32.mxu0 0.0
        %1859 = vmatmul.mubr.f32.gmra.mrb[0].mxu0 %v1759
        %v1860 = vpop.f32.mrb[0].mxu0
        %v1861 = vadd.f32 %v1730, %v1860
        %v1862 = vpop.f32.mrb[0].mxu0
        %1863 = vmatprep.mubr.f32.mxu0 0.0
        %1864 = vmatmul.mubr.f32.gmra.mrb[0].mxu0 %v1762
        %v1865 = vpop.f32.mrb[0].mxu0
        %v1866 = vadd.f32 %v1735, %v1865
        %v1867 = vpop.f32.mrb[0].mxu0
        %1868 = vmatprep.mubr.f32.mxu0 0.0
        %1869 = vmatmul.mubr.f32.gmra.mrb[0].mxu0 %v1765
        %v1870 = vpop.f32.mrb[0].mxu0
        %v1871 = vadd.f32 %v1740, %v1870
        %v1872 = vpop.f32.mrb[0].mxu0
        %1873 = vdwg.mxu0
        %v1874 = vadd.f32 %v457, %v1836
        %v1875 = vadd.f32 %v458, %v1841
        %v1876 = vadd.f32 %v459, %v1846
        %v1877 = vadd.f32 %v460, %v1851
        %v1878 = vadd.f32 %v461, %v1856
        %v1879 = vadd.f32 %v462, %v1861
        %v1880 = vadd.f32 %v463, %v1866
        %v1881 = vadd.f32 %v464, %v1871
        %v1882 = vld [vmem:[%s8] sm:$0x1]
        %v1884 = vlaneseq
        %v1885 = vshrl.u32 %v1884, 7
        %v1886 = vsub.s32 0, %v1885
        %v1887 = vrot.slane %v1882, %v1886
        %v1889 = vadd.f32 %v1874, %v1887
        %v1890 = vadd.f32 %v1875, %v1887
        %v1891 = vadd.f32 %v1876, %v1887
        %v1892 = vadd.f32 %v1877, %v1887
        %v1893 = vadd.f32 %v1878, %v1887
        %v1894 = vadd.f32 %v1879, %v1887
        %v1895 = vadd.f32 %v1880, %v1887
        %v1896 = vadd.f32 %v1881, %v1887
        %1897 = vst.msk [vmem:[%s445] sm:$0xff] %vm465, %v1889
        %1898 = vst.msk [vmem:[%s445 + $0x8] sm:$0xff] %vm465, %v1890
        %1899 = vst.msk [vmem:[%s445 + $0x10] sm:$0xff] %vm465, %v1891
        %1900 = vst.msk [vmem:[%s445 + $0x18] sm:$0xff] %vm465, %v1892
        %1901 = vst.msk [vmem:[%s445 + $0x20] sm:$0xff] %vm465, %v1893
        %1902 = vst.msk [vmem:[%s445 + $0x28] sm:$0xff] %vm465, %v1894
        %1903 = vst.msk [vmem:[%s445 + $0x30] sm:$0xff] %vm465, %v1895
        %1904 = vst.msk [vmem:[%s445 + $0x38] sm:$0xff] %vm465, %v1896
        %s1905 = sand.u32 %s258, 1
        %s1906 = sand.u32 %s258, 1
        %s1907 = smul.addr %s1906, 64
        %s1908 = scalar_lea.vmem [#allocation3], %s1907
        // Predicated region
        $region95: #{_lambda_.26} parent=89 // pred_check
          %p1909 = pneg %p268
        $region96: #{_lambda_.26} parent=89 // pred_check_branch
          %1911 = sbr.rel (%p1909) target = $region98
        $region97: #{_lambda_.26} parent=89 // pred_region
          %s1912 = smul.u32 8, %s26
          %s1913 = smul.addr %s1912, 2
          %s1914 = sadd.s32 %s27, %s1913
          %s1915 = smul.addr %s25, 32
          %s1916 = sadd.s32 %s1914, %s1915
          %s1917 = smul.addr %s1916, 8
          %s1918 = scalar_lea.vmem %s9, %s1917
          // Predicated region
          $region99: #{_lambda_.26} parent=97 // pred_check
            _
          $region100: #{_lambda_.26} parent=97 // pred_check_branch
            %1920 = sbr.rel (0) target = $region102
          $region101: #{_lambda_.26} parent=97 // pred_region
            // Predicated region
            $region103: #{_lambda_.26} parent=101 // pred_check
              _
            $region104: #{_lambda_.26} parent=101 // pred_check_branch
              %1922 = sbr.rel (0) target = $region106
            $region105: #{_lambda_.26} parent=101 // pred_region
              // Predicated region
              $region118: #{_lambda_.26} parent=105 // pred_check
                _
              $region119: #{_lambda_.26} parent=105 // pred_check_branch
                %1951 = sbr.rel (0) target = $region121
              $region120: #{_lambda_.26} parent=105 // pred_region
                loop: start=0, step=1, limit=1
                $region122: #{_lambda_.26} parent=120 // loop_pre_header
                  _
                $region123: #{_lambda_.26} parent=120 // loop_header
                  %s1953 = sphi 0, %s1957
                  %p1954 = scmp.ge.s32.totalorder %s1953, 1
                  %s1958 = sphi %s1908, %s1908
                  %s1959 = sphi %s1918, %s1918
                $region124: #{_lambda_.26} parent=120 // loop_header_branch
                  %1956 = sbr.rel (%p1954) target = $region128
                $region125: #{_lambda_.26} parent=120 // loop_body
                  %v1960 = vld [vmem:[%s1958] sm:$0xff]
                  %1961 = vst [vmem:[%s1959] sm:$0xff] %v1960
                  %v1962 = vld [vmem:[%s1958 + $0x8] sm:$0xff]
                  %1963 = vst [vmem:[%s1959 + $0x10] sm:$0xff] %v1962
                  %v1964 = vld [vmem:[%s1958 + $0x10] sm:$0xff]
                  %1965 = vst [vmem:[%s1959 + $0x20] sm:$0xff] %v1964
                  %v1966 = vld [vmem:[%s1958 + $0x18] sm:$0xff]
                  %1967 = vst [vmem:[%s1959 + $0x30] sm:$0xff] %v1966
                  %v1968 = vld [vmem:[%s1958 + $0x20] sm:$0xff]
                  %1969 = vst [vmem:[%s1959 + $0x40] sm:$0xff] %v1968
                  %v1970 = vld [vmem:[%s1958 + $0x28] sm:$0xff]
                  %1971 = vst [vmem:[%s1959 + $0x50] sm:$0xff] %v1970
                  %v1972 = vld [vmem:[%s1958 + $0x30] sm:$0xff]
                  %1973 = vst [vmem:[%s1959 + $0x60] sm:$0xff] %v1972
                  %v1974 = vld [vmem:[%s1958 + $0x38] sm:$0xff]
                  %1975 = vst [vmem:[%s1959 + $0x70] sm:$0xff] %v1974
                $region126: #{_lambda_.26} parent=120 // loop_footer
                  %s1957 = sadd.s32 1, %s1953
                $region127: #{_lambda_.26} parent=120 // loop_footer_branch
                  %1952 = sbr.rel target = $region123
                $region128: #{_lambda_.26} parent=120 // loop_exit
                  _
              $region121: #{_lambda_.26} parent=105 // pred_fallthru
                _
              // Predicated region
              $region129: #{_lambda_.26} parent=105 // pred_check
                _
              $region130: #{_lambda_.26} parent=105 // pred_check_branch
                %1977 = sbr.rel target = $region132
              $region131: #{_lambda_.26} parent=105 // pred_region
                _
              $region132: #{_lambda_.26} parent=105 // pred_fallthru
                _
            $region106: #{_lambda_.26} parent=101 // pred_fallthru
              _
            // Predicated region
            $region107: #{_lambda_.26} parent=101 // pred_check
              _
            $region108: #{_lambda_.26} parent=101 // pred_check_branch
              %1924 = sbr.rel target = $region110
            $region109: #{_lambda_.26} parent=101 // pred_region
              loop: start=0, step=1, limit=1
              $region111: #{_lambda_.26} parent=109 // loop_pre_header
                _
              $region112: #{_lambda_.26} parent=109 // loop_header
                %s1927 = sphi 0, %s1931
                %p1928 = scmp.ge.s32.totalorder %s1927, 1
                %s1932 = sphi %s1908, %s1908
                %s1933 = sphi %s1918, %s1918
              $region113: #{_lambda_.26} parent=109 // loop_header_branch
                %1930 = sbr.rel (%p1928) target = $region117
              $region114: #{_lambda_.26} parent=109 // loop_body
                %v1934 = vld [vmem:[%s1932] sm:$0xff]
                %1935 = vst [vmem:[%s1933] sm:$0xff] %v1934
                %v1936 = vld [vmem:[%s1932 + $0x8] sm:$0xff]
                %1937 = vst [vmem:[%s1933 + $0x10] sm:$0xff] %v1936
                %v1938 = vld [vmem:[%s1932 + $0x10] sm:$0xff]
                %1939 = vst [vmem:[%s1933 + $0x20] sm:$0xff] %v1938
                %v1940 = vld [vmem:[%s1932 + $0x18] sm:$0xff]
                %1941 = vst [vmem:[%s1933 + $0x30] sm:$0xff] %v1940
                %v1942 = vld [vmem:[%s1932 + $0x20] sm:$0xff]
                %1943 = vst [vmem:[%s1933 + $0x40] sm:$0xff] %v1942
                %v1944 = vld [vmem:[%s1932 + $0x28] sm:$0xff]
                %1945 = vst [vmem:[%s1933 + $0x50] sm:$0xff] %v1944
                %v1946 = vld [vmem:[%s1932 + $0x30] sm:$0xff]
                %1947 = vst [vmem:[%s1933 + $0x60] sm:$0xff] %v1946
                %v1948 = vld [vmem:[%s1932 + $0x38] sm:$0xff]
                %1949 = vst [vmem:[%s1933 + $0x70] sm:$0xff] %v1948
              $region115: #{_lambda_.26} parent=109 // loop_footer
                %s1931 = sadd.s32 1, %s1927
              $region116: #{_lambda_.26} parent=109 // loop_footer_branch
                %1926 = sbr.rel target = $region112
              $region117: #{_lambda_.26} parent=109 // loop_exit
                _
            $region110: #{_lambda_.26} parent=101 // pred_fallthru
              _
          $region102: #{_lambda_.26} parent=97 // pred_fallthru
            _
          %1978 = vnop
        $region98: #{_lambda_.26} parent=89 // pred_fallthru
          _
      $region90: #{_lambda_.26} parent=5 // pred_fallthru
        _
      %p1979 = scmp.le.s32.totalorder 2, %s15
      // Predicated region
      $region133: #{_lambda_.26} parent=5 // pred_check
        %p1980 = pneg %p1979
      $region134: #{_lambda_.26} parent=5 // pred_check_branch
        %1982 = sbr.rel (%p1980) target = $region136
      $region135: #{_lambda_.26} parent=5 // pred_region
        %s1983 = ssub.s32 %s15, 2
        // Predicated region
        $region137: #{_lambda_.26} parent=135 // pred_check
          %p1984 = pneg %p274
        $region138: #{_lambda_.26} parent=135 // pred_check_branch
          %1986 = sbr.rel (%p1984) target = $region140
        $region139: #{_lambda_.26} parent=135 // pred_region
          %s1987 = sand.u32 %s259, 1
          %s1988 = sand.u32 %s259, 1
          %s1989 = smul.addr %s1988, 64
          %s1990 = scalar_lea.vmem [#allocation3], %s1989
        $region140: #{_lambda_.26} parent=135 // pred_fallthru
          _
      $region136: #{_lambda_.26} parent=5 // pred_fallthru
        _
    $region6: #{_lambda_.26} parent=1 // loop_footer
      %s19 = sadd.s32 1, %s15
    $region7: #{_lambda_.26} parent=1 // loop_footer_branch
      %14 = sbr.rel target = $region3
    $region8: #{_lambda_.26} parent=1 // loop_exit
      _

// kernel: _lambda_.30
$region0: #{_lambda_.30}
  #allocation0 [shape = 'u32[]', space=smem, size = 0x4, offset = 0x4, fixed_abs, tag = 'smem constant byte address 0x4 - core index']
  #allocation1 [shape = 'u32[144,128]{1,0:T(1,128)}', space=vmem, size = 0x12000, scoped, tag = 'internal scratch']
  %s0 = inlined_call_operand.vmem [shape: bf16[2,8,326], index: 0, kind: input, shape index: {}]
  %s1 = inlined_call_operand.vmem [shape: bf16[9,8,8], index: 1, kind: input, shape index: {}]
  %s2 = inlined_call_operand.vmem [shape: f32[8,1], index: 2, kind: input, shape index: {}]
  %s3 = inlined_call_operand.vmem [shape: bf16[2,8,288], index: 3, kind: output, shape index: {}]
  %s4 = sld [smem:[#allocation0]]
  $region45: #{_lambda_.30} parent=0
    _
  %s6 = ssub.s32 1, %s4
  %s7 = scalar_select 0, %s6, %s4
  loop: start=0, step=1, limit=4
  $region2: #{_lambda_.30} parent=0 // loop_pre_header
    _
  $region3: #{_lambda_.30} parent=0 // loop_header
    %s9 = sphi 0, %s13
    %p10 = scmp.ge.s32.totalorder %s9, 4
    %s19 = sphi 0, %s21
    %s22 = sphi 0, %s19
    %s23 = sphi 0, %s22
    %s39 = sphi 0, %s23
    %s43 = sphi 0, %s43
    %s45 = sphi 0, %s43
    %s46 = sphi 0, %s45
    %s60 = sphi 0, %s46
    %s64 = sphi 0, %s64
    %s66 = sphi 0, %s64
    %s67 = sphi 0, %s66
    %s81 = sphi 0, %s67
    %s87 = sphi 0, %s89
    %s90 = sphi 0, %s87
    %s91 = sphi 0, %s90
    %s107 = sphi 0, %s91
  $region4: #{_lambda_.30} parent=0 // loop_header_branch
    %12 = sbr.rel (%p10) target = $region8
  $region5: #{_lambda_.30} parent=0 // loop_body
    %s14 = ssub.s32 %s9, 1
    %s15 = ssub.s32 %s9, 2
    %s16 = sadd.s32 %s9, 1
    %s17 = ssub.s32 %s9, %s16
    %p18 = scmp.eq.s32.totalorder %s17, 0
    %s20 = sadd.s32 %s19, 1
    %s21 = scalar_select %p18, %s19, %s20
    %p24 = pneg %p18
    %p25 = scmp.eq.s32.totalorder %s9, 1
    %p26 = por %p24, %p25
    %p27 = scmp.ne.s32.totalorder %s19, %s22
    %p28 = scmp.eq.s32.totalorder %s9, 0
    %p29 = por %p27, %p28
    %p30 = scmp.ne.s32.totalorder %s19, %s22
    %p31 = scmp.eq.s32.totalorder %s14, 1
    %p32 = por %p30, %p31
    %p33 = scmp.ne.s32.totalorder %s22, %s23
    %p34 = scmp.eq.s32.totalorder %s14, 0
    %p35 = por %p33, %p34
    %p36 = scmp.ne.s32.totalorder %s22, %s23
    %p37 = scmp.eq.s32.totalorder %s15, 1
    %p38 = por %p36, %p37
    %p40 = scmp.ne.s32.totalorder %s23, %s39
    %p41 = scmp.eq.s32.totalorder %s15, 0
    %p42 = por %p40, %p41
    %s44 = sadd.s32 %s43, 1
    %p47 = scmp.eq.s32.totalorder %s9, 1
    %p48 = scmp.ne.s32.totalorder %s43, %s45
    %p49 = scmp.eq.s32.totalorder %s9, 0
    %p50 = por %p48, %p49
    %p51 = scmp.ne.s32.totalorder %s43, %s45
    %p52 = scmp.eq.s32.totalorder %s14, 1
    %p53 = por %p51, %p52
    %p54 = scmp.ne.s32.totalorder %s45, %s46
    %p55 = scmp.eq.s32.totalorder %s14, 0
    %p56 = por %p54, %p55
    %p57 = scmp.ne.s32.totalorder %s45, %s46
    %p58 = scmp.eq.s32.totalorder %s15, 1
    %p59 = por %p57, %p58
    %p61 = scmp.ne.s32.totalorder %s46, %s60
    %p62 = scmp.eq.s32.totalorder %s15, 0
    %p63 = por %p61, %p62
    %s65 = sadd.s32 %s64, 1
    %p68 = scmp.eq.s32.totalorder %s9, 1
    %p69 = scmp.ne.s32.totalorder %s64, %s66
    %p70 = scmp.eq.s32.totalorder %s9, 0
    %p71 = por %p69, %p70
    %p72 = scmp.ne.s32.totalorder %s64, %s66
    %p73 = scmp.eq.s32.totalorder %s14, 1
    %p74 = por %p72, %p73
    %p75 = scmp.ne.s32.totalorder %s66, %s67
    %p76 = scmp.eq.s32.totalorder %s14, 0
    %p77 = por %p75, %p76
    %p78 = scmp.ne.s32.totalorder %s66, %s67
    %p79 = scmp.eq.s32.totalorder %s15, 1
    %p80 = por %p78, %p79
    %p82 = scmp.ne.s32.totalorder %s67, %s81
    %p83 = scmp.eq.s32.totalorder %s15, 0
    %p84 = por %p82, %p83
    %s85 = ssub.s32 %s9, %s16
    %p86 = scmp.eq.s32.totalorder %s85, 0
    %s88 = sadd.s32 %s87, 1
    %s89 = scalar_select %p86, %s87, %s88
    %p92 = pneg %p86
    %p93 = scmp.eq.s32.totalorder %s9, 1
    %p94 = por %p92, %p93
    %p95 = scmp.ne.s32.totalorder %s87, %s90
    %p96 = scmp.eq.s32.totalorder %s9, 0
    %p97 = por %p95, %p96
    %p98 = scmp.ne.s32.totalorder %s87, %s90
    %p99 = scmp.eq.s32.totalorder %s14, 1
    %p100 = por %p98, %p99
    %p101 = scmp.ne.s32.totalorder %s90, %s91
    %p102 = scmp.eq.s32.totalorder %s14, 0
    %p103 = por %p101, %p102
    %p104 = scmp.ne.s32.totalorder %s90, %s91
    %p105 = scmp.eq.s32.totalorder %s15, 1
    %p106 = por %p104, %p105
    %p108 = scmp.ne.s32.totalorder %s91, %s107
    %p109 = scmp.eq.s32.totalorder %s15, 0
    %p110 = por %p108, %p109
    %p111 = scmp.le.s32.totalorder 1, %s9
    %p112 = scmp.lt.s32.totalorder %s9, 3
    %p113 = pnand %p111, %p112
    %p114 = pneg %p113
    // Predicated region
    $region9: #{_lambda_.30} parent=5 // pred_check
      _
    $region10: #{_lambda_.30} parent=5 // pred_check_branch
      %116 = sbr.rel (%p113) target = $region12
    $region11: #{_lambda_.30} parent=5 // pred_region
      %s117 = ssub.s32 %s9, 1
      // Predicated region
      $region13: #{_lambda_.30} parent=11 // pred_check
        %p118 = pneg %p56
      $region14: #{_lambda_.30} parent=11 // pred_check_branch
        %120 = sbr.rel (%p118) target = $region16
      $region15: #{_lambda_.30} parent=11 // pred_region
        _
      $region16: #{_lambda_.30} parent=11 // pred_fallthru
        _
      // Predicated region
      $region17: #{_lambda_.30} parent=11 // pred_check
        %p121 = pneg %p77
      $region18: #{_lambda_.30} parent=11 // pred_check_branch
        %123 = sbr.rel (%p121) target = $region20
      $region19: #{_lambda_.30} parent=11 // pred_region
        _
      $region20: #{_lambda_.30} parent=11 // pred_fallthru
        _
    $region12: #{_lambda_.30} parent=5 // pred_fallthru
      _
    %p124 = scmp.lt.s32.totalorder %s9, 2
    // Predicated region
    $region21: #{_lambda_.30} parent=5 // pred_check
      %p125 = pneg %p124
    $region22: #{_lambda_.30} parent=5 // pred_check_branch
      %127 = sbr.rel (%p125) target = $region24
    $region23: #{_lambda_.30} parent=5 // pred_region
      // Predicated region
      $region25: #{_lambda_.30} parent=23 // pred_check
        %p128 = pneg %p29
      $region26: #{_lambda_.30} parent=23 // pred_check_branch
        %130 = sbr.rel (%p128) target = $region28
      $region27: #{_lambda_.30} parent=23 // pred_region
        %p131 = scmp.lt.s32.totalorder %s9, 1
        %s132 = scalar_select %p131, %s9, 1
        %s133 = smul.addr %s132, 3
        %s134 = smul.addr %s133, 4
        %s135 = scalar_lea.vmem %s0, %s134
      $region28: #{_lambda_.30} parent=23 // pred_fallthru
        _
    $region24: #{_lambda_.30} parent=5 // pred_fallthru
      _
    %p136 = scmp.le.s32.totalorder 1, %s9
    %p137 = scmp.lt.s32.totalorder %s9, 3
    %p138 = pnand %p136, %p137
    %p139 = pneg %p138
    // Predicated region
    $region29: #{_lambda_.30} parent=5 // pred_check
      _
    $region30: #{_lambda_.30} parent=5 // pred_check_branch
      %141 = sbr.rel (%p138) target = $region32
    $region31: #{_lambda_.30} parent=5 // pred_region
      %s142 = ssub.s32 %s9, 1
      %p143 = scmp.lt.s32.totalorder %s14, 1
      %s144 = scalar_select %p143, %s14, 1
      %s145 = smul.addr %s144, 3
      %s146 = smul.addr %s145, 4
      %s147 = scalar_lea.vmem %s0, %s146
      %p148 = pneg %p35
      %p149 = pneg %p32
      %p150 = pneg %p56
      %p151 = pneg %p53
      %p152 = pneg %p77
      %p153 = pneg %p74
      %p154 = pneg %p103
      %p155 = pneg %p100
      %p156 = scmp.lt.s32.totalorder %s14, 1
      %s157 = scalar_select %p156, %s14, 1
      %s158 = smul.addr %s157, 3
      %s159 = smul.addr %s158, 4
      %s160 = scalar_lea.vmem %s3, %s159
      %p161 = scmp.lt.s32.totalorder %s14, 1
      %s162 = scalar_select %p161, %s14, 1
      %s163 = smul.addr %s162, 3
      %s164 = smul.addr %s163, 4
      %s165 = scalar_lea.vmem %s0, %s164
      %p166 = scmp.lt.s32.totalorder %s14, 1
      %s167 = scalar_select %p166, %s14, 1
      %s168 = smul.addr %s167, 3
      %s169 = smul.addr %s168, 4
      %s170 = scalar_lea.vmem %s3, %s169
      %v172 = vld [vmem:[%s165] sm:$0xff]
      %v173 = vld [vmem:[%s165 + $0x8] sm:$0xf]
      %v174 = vld [vmem:[%s1] sm:$0xf]
      %s175 = scalar_lea.vmem %s1, 4
      %v176 = vld [vmem:[%s175] sm:$0xf]
      %v179 = vunpack.c.l.b16 %v172
      %v180 = vunpack.c.h.b16 %v172
      %v181 = vunpack.c.l.b16 %v173
      %v182 = vpack.c.b16 %v179, %v179
      %v183 = vpack.c.b16 %v180, %v180
      %v184 = vpack.c.b16 %v181, %v181
      %185 = vrot.lane.b32.xlu0 %v182, 127
      %v186 = vpop.permute.xlu0 %185
      %187 = vrot.lane.b32.xlu0 %v183, 127
      %v188 = vpop.permute.xlu0 %187
      %189 = vrot.lane.b32.xlu0 %v184, 127
      %v190 = vpop.permute.xlu0 %189
      %vm191 = vcmask 1039360
      %v192 = vsel %vm191, %v186, %v188
      %v193 = vsel %vm191, %v188, %v190
      %vm194 = vcmask 64512
      %v196 = vsel %vm194, %v176, 0
      %vm198 = vcmask 1043456
      %v200 = vsel %vm198, %v192, 0
      %v203 = vsel %vm198, %v193, 0
      %v206 = vsel %vm198, %v190, 0
      %208 = vmatprep.subr.bf16.mxu0 %v203
      %209 = vmatpush1.bf16.msra.mxu0 %v200
      %210 = vmatprep.subr.bf16.mxu0 0
      %211 = vmatpush1.bf16.msra.mxu0 0
      %212 = vmatprep.subr.bf16.mxu0 0
      %213 = vmatpush1.bf16.msra.mxu0 0
      %214 = vmatprep.subr.bf16.mxu0 0
      %215 = vmatpush1.bf16.msra.mxu0 0
      %216 = vmatprep.subr.bf16.mxu0 0
      %217 = vmatpush1.bf16.msra.mxu0 0
      %218 = vmatprep.subr.bf16.mxu0 0
      %219 = vmatpush1.bf16.msra.mxu0 0
      %220 = vmatprep.subr.bf16.mxu0 0
      %221 = vmatpush1.bf16.msra.mxu0 0
      %222 = vmatprep.subr.bf16.mxu0 0
      %223 = vmatpush1.bf16.msra.mxu0 0
      %224 = vmatprep.subr.bf16.mxu0 0
      %225 = vmatpush1.bf16.msra.mxu0 0
      %226 = vmatprep.subr.bf16.mxu0 0
      %227 = vmatpush1.bf16.msra.mxu0 0
      %228 = vmatprep.subr.bf16.mxu0 0
      %229 = vmatpush1.bf16.msra.mxu0 0
      %230 = vmatprep.subr.bf16.mxu0 0
      %231 = vmatpush1.bf16.msra.mxu0 0
      %232 = vmatprep.subr.bf16.mxu0 0
      %233 = vmatpush1.bf16.msra.mxu0 0
      %234 = vmatprep.subr.bf16.mxu0 0
      %235 = vmatpush1.bf16.msra.mxu0 0
      %236 = vmatprep.subr.bf16.mxu0 0
      %237 = vmatpush1.bf16.msra.mxu0 0
      %238 = vmatprep.subr.bf16.mxu0 0
      %239 = vmatpush1.bf16.msra.mxu0 0
      %240 = vmatprep.mubr.bf16.mxu0 0
      %241 = vmatmul.mubr.bf16.gmra.mrb[0].mxu0 %v196
      %v242 = vpop.f32.mrb[0].mxu0
      %v243 = vadd.f32 0.0, %v242
      %v244 = vpop.f32.mrb[0].mxu0
      %v245 = vadd.f32 0.0, %v244
      %v246 = vpop.f32.mrb[0].mxu0
      %v247 = vpop.f32.mrb[0].mxu0
      %248 = vdwg.mxu0
      %249 = vmatprep.subr.bf16.mxu0 0
      %250 = vmatpush1.bf16.msra.mxu0 %v206
      %251 = vmatprep.subr.bf16.mxu0 0
      %252 = vmatpush1.bf16.msra.mxu0 0
      %253 = vmatprep.subr.bf16.mxu0 0
      %254 = vmatpush1.bf16.msra.mxu0 0
      %255 = vmatprep.subr.bf16.mxu0 0
      %256 = vmatpush1.bf16.msra.mxu0 0
      %257 = vmatprep.subr.bf16.mxu0 0
      %258 = vmatpush1.bf16.msra.mxu0 0
      %259 = vmatprep.subr.bf16.mxu0 0
      %260 = vmatpush1.bf16.msra.mxu0 0
      %261 = vmatprep.subr.bf16.mxu0 0
      %262 = vmatpush1.bf16.msra.mxu0 0
      %263 = vmatprep.subr.bf16.mxu0 0
      %264 = vmatpush1.bf16.msra.mxu0 0
      %265 = vmatprep.subr.bf16.mxu0 0
      %266 = vmatpush1.bf16.msra.mxu0 0
      %267 = vmatprep.subr.bf16.mxu0 0
      %268 = vmatpush1.bf16.msra.mxu0 0
      %269 = vmatprep.subr.bf16.mxu0 0
      %270 = vmatpush1.bf16.msra.mxu0 0
      %271 = vmatprep.subr.bf16.mxu0 0
      %272 = vmatpush1.bf16.msra.mxu0 0
      %273 = vmatprep.subr.bf16.mxu0 0
      %274 = vmatpush1.bf16.msra.mxu0 0
      %275 = vmatprep.subr.bf16.mxu0 0
      %276 = vmatpush1.bf16.msra.mxu0 0
      %277 = vmatprep.subr.bf16.mxu0 0
      %278 = vmatpush1.bf16.msra.mxu0 0
      %279 = vmatprep.subr.bf16.mxu0 0
      %280 = vmatpush1.bf16.msra.mxu0 0
      %281 = vmatprep.mubr.bf16.mxu0 0
      %282 = vmatmul.mubr.bf16.gmra.mrb[0].mxu0 %v196
      %v283 = vpop.f32.mrb[0].mxu0
      %v284 = vadd.f32 0.0, %v283
      %v285 = vpop.f32.mrb[0].mxu0
      %v286 = vpop.f32.mrb[0].mxu0
      %v287 = vpop.f32.mrb[0].mxu0
      %288 = vdwg.mxu0
      %v290 = vsel %vm194, %v174, 0
      %v293 = vsel %vm198, %v182, 0
      %v296 = vsel %vm198, %v183, 0
      %v299 = vsel %vm198, %v184, 0
      %301 = vmatprep.subr.bf16.mxu0 %v296
      %302 = vmatpush1.bf16.msra.mxu0 %v293
      %303 = vmatprep.subr.bf16.mxu0 0
      %304 = vmatpush1.bf16.msra.mxu0 0
      %305 = vmatprep.subr.bf16.mxu0 0
      %306 = vmatpush1.bf16.msra.mxu0 0
      %307 = vmatprep.subr.bf16.mxu0 0
      %308 = vmatpush1.bf16.msra.mxu0 0
      %309 = vmatprep.subr.bf16.mxu0 0
      %310 = vmatpush1.bf16.msra.mxu0 0
      %311 = vmatprep.subr.bf16.mxu0 0
      %312 = vmatpush1.bf16.msra.mxu0 0
      %313 = vmatprep.subr.bf16.mxu0 0
      %314 = vmatpush1.bf16.msra.mxu0 0
      %315 = vmatprep.subr.bf16.mxu0 0
      %316 = vmatpush1.bf16.msra.mxu0 0
      %317 = vmatprep.subr.bf16.mxu0 0
      %318 = vmatpush1.bf16.msra.mxu0 0
      %319 = vmatprep.subr.bf16.mxu0 0
      %320 = vmatpush1.bf16.msra.mxu0 0
      %321 = vmatprep.subr.bf16.mxu0 0
      %322 = vmatpush1.bf16.msra.mxu0 0
      %323 = vmatprep.subr.bf16.mxu0 0
      %324 = vmatpush1.bf16.msra.mxu0 0
      %325 = vmatprep.subr.bf16.mxu0 0
      %326 = vmatpush1.bf16.msra.mxu0 0
      %327 = vmatprep.subr.bf16.mxu0 0
      %328 = vmatpush1.bf16.msra.mxu0 0
      %329 = vmatprep.subr.bf16.mxu0 0
      %330 = vmatpush1.bf16.msra.mxu0 0
      %331 = vmatprep.subr.bf16.mxu0 0
      %332 = vmatpush1.bf16.msra.mxu0 0
      %333 = vmatprep.mubr.bf16.mxu0 0
      %334 = vmatmul.mubr.bf16.gmra.mrb[0].mxu0 %v290
      %v335 = vpop.f32.mrb[0].mxu0
      %v336 = vadd.f32 %v243, %v335
      %v337 = vpop.f32.mrb[0].mxu0
      %v338 = vadd.f32 %v245, %v337
      %v339 = vpop.f32.mrb[0].mxu0
      %v340 = vpop.f32.mrb[0].mxu0
      %341 = vdwg.mxu0
      %342 = vmatprep.subr.bf16.mxu0 0
      %343 = vmatpush1.bf16.msra.mxu0 %v299
      %344 = vmatprep.subr.bf16.mxu0 0
      %345 = vmatpush1.bf16.msra.mxu0 0
      %346 = vmatprep.subr.bf16.mxu0 0
      %347 = vmatpush1.bf16.msra.mxu0 0
      %348 = vmatprep.subr.bf16.mxu0 0
      %349 = vmatpush1.bf16.msra.mxu0 0
      %350 = vmatprep.subr.bf16.mxu0 0
      %351 = vmatpush1.bf16.msra.mxu0 0
      %352 = vmatprep.subr.bf16.mxu0 0
      %353 = vmatpush1.bf16.msra.mxu0 0
      %354 = vmatprep.subr.bf16.mxu0 0
      %355 = vmatpush1.bf16.msra.mxu0 0
      %356 = vmatprep.subr.bf16.mxu0 0
      %357 = vmatpush1.bf16.msra.mxu0 0
      %358 = vmatprep.subr.bf16.mxu0 0
      %359 = vmatpush1.bf16.msra.mxu0 0
      %360 = vmatprep.subr.bf16.mxu0 0
      %361 = vmatpush1.bf16.msra.mxu0 0
      %362 = vmatprep.subr.bf16.mxu0 0
      %363 = vmatpush1.bf16.msra.mxu0 0
      %364 = vmatprep.subr.bf16.mxu0 0
      %365 = vmatpush1.bf16.msra.mxu0 0
      %366 = vmatprep.subr.bf16.mxu0 0
      %367 = vmatpush1.bf16.msra.mxu0 0
      %368 = vmatprep.subr.bf16.mxu0 0
      %369 = vmatpush1.bf16.msra.mxu0 0
      %370 = vmatprep.subr.bf16.mxu0 0
      %371 = vmatpush1.bf16.msra.mxu0 0
      %372 = vmatprep.subr.bf16.mxu0 0
      %373 = vmatpush1.bf16.msra.mxu0 0
      %374 = vmatprep.mubr.bf16.mxu0 0
      %375 = vmatmul.mubr.bf16.gmra.mrb[0].mxu0 %v290
      %v376 = vpop.f32.mrb[0].mxu0
      %v377 = vadd.f32 %v284, %v376
      %v378 = vpop.f32.mrb[0].mxu0
      %v379 = vpop.f32.mrb[0].mxu0
      %v380 = vpop.f32.mrb[0].mxu0
      %381 = vdwg.mxu0
      %s382 = scalar_lea.vmem %s1, 8
      %v383 = vld [vmem:[%s382] sm:$0xf]
      %384 = vrot.lane.b32.xlu0 %v182, 126
      %v385 = vpop.permute.xlu0 %384
      %386 = vrot.lane.b32.xlu0 %v183, 126
      %v387 = vpop.permute.xlu0 %386
      %388 = vrot.lane.b32.xlu0 %v184, 126
      %v389 = vpop.permute.xlu0 %388
      %vm390 = vcmask 1031168
      %v391 = vsel %vm390, %v385, %v387
      %v392 = vsel %vm390, %v387, %v389
      %v394 = vsel %vm194, %v383, 0
      %v397 = vsel %vm198, %v391, 0
      %v400 = vsel %vm198, %v392, 0
      %v403 = vsel %vm198, %v389, 0
      %405 = vmatprep.subr.bf16.mxu0 %v400
      %406 = vmatpush1.bf16.msra.mxu0 %v397
      %407 = vmatprep.subr.bf16.mxu0 0
      %408 = vmatpush1.bf16.msra.mxu0 0
      %409 = vmatprep.subr.bf16.mxu0 0
      %410 = vmatpush1.bf16.msra.mxu0 0
      %411 = vmatprep.subr.bf16.mxu0 0
      %412 = vmatpush1.bf16.msra.mxu0 0
      %413 = vmatprep.subr.bf16.mxu0 0
      %414 = vmatpush1.bf16.msra.mxu0 0
      %415 = vmatprep.subr.bf16.mxu0 0
      %416 = vmatpush1.bf16.msra.mxu0 0
      %417 = vmatprep.subr.bf16.mxu0 0
      %418 = vmatpush1.bf16.msra.mxu0 0
      %419 = vmatprep.subr.bf16.mxu0 0
      %420 = vmatpush1.bf16.msra.mxu0 0
      %421 = vmatprep.subr.bf16.mxu0 0
      %422 = vmatpush1.bf16.msra.mxu0 0
      %423 = vmatprep.subr.bf16.mxu0 0
      %424 = vmatpush1.bf16.msra.mxu0 0
      %425 = vmatprep.subr.bf16.mxu0 0
      %426 = vmatpush1.bf16.msra.mxu0 0
      %427 = vmatprep.subr.bf16.mxu0 0
      %428 = vmatpush1.bf16.msra.mxu0 0
      %429 = vmatprep.subr.bf16.mxu0 0
      %430 = vmatpush1.bf16.msra.mxu0 0
      %431 = vmatprep.subr.bf16.mxu0 0
      %432 = vmatpush1.bf16.msra.mxu0 0
      %433 = vmatprep.subr.bf16.mxu0 0
      %434 = vmatpush1.bf16.msra.mxu0 0
      %435 = vmatprep.subr.bf16.mxu0 0
      %436 = vmatpush1.bf16.msra.mxu0 0
      %437 = vmatprep.mubr.bf16.mxu0 0
      %438 = vmatmul.mubr.bf16.gmra.mrb[0].mxu0 %v394
      %v439 = vpop.f32.mrb[0].mxu0
      %v440 = vadd.f32 0.0, %v439
      %v441 = vpop.f32.mrb[0].mxu0
      %v442 = vadd.f32 0.0, %v441
      %v443 = vpop.f32.mrb[0].mxu0
      %v444 = vpop.f32.mrb[0].mxu0
      %445 = vdwg.mxu0
      %446 = vmatprep.subr.bf16.mxu0 0
      %447 = vmatpush1.bf16.msra.mxu0 %v403
      %448 = vmatprep.subr.bf16.mxu0 0
      %449 = vmatpush1.bf16.msra.mxu0 0
      %450 = vmatprep.subr.bf16.mxu0 0
      %451 = vmatpush1.bf16.msra.mxu0 0
      %452 = vmatprep.subr.bf16.mxu0 0
      %453 = vmatpush1.bf16.msra.mxu0 0
      %454 = vmatprep.subr.bf16.mxu0 0
      %455 = vmatpush1.bf16.msra.mxu0 0
      %456 = vmatprep.subr.bf16.mxu0 0
      %457 = vmatpush1.bf16.msra.mxu0 0
      %458 = vmatprep.subr.bf16.mxu0 0
      %459 = vmatpush1.bf16.msra.mxu0 0
      %460 = vmatprep.subr.bf16.mxu0 0
      %461 = vmatpush1.bf16.msra.mxu0 0
      %462 = vmatprep.subr.bf16.mxu0 0
      %463 = vmatpush1.bf16.msra.mxu0 0
      %464 = vmatprep.subr.bf16.mxu0 0
      %465 = vmatpush1.bf16.msra.mxu0 0
      %466 = vmatprep.subr.bf16.mxu0 0
      %467 = vmatpush1.bf16.msra.mxu0 0
      %468 = vmatprep.subr.bf16.mxu0 0
      %469 = vmatpush1.bf16.msra.mxu0 0
      %470 = vmatprep.subr.bf16.mxu0 0
      %471 = vmatpush1.bf16.msra.mxu0 0
      %472 = vmatprep.subr.bf16.mxu0 0
      %473 = vmatpush1.bf16.msra.mxu0 0
      %474 = vmatprep.subr.bf16.mxu0 0
      %475 = vmatpush1.bf16.msra.mxu0 0
      %476 = vmatprep.subr.bf16.mxu0 0
      %477 = vmatpush1.bf16.msra.mxu0 0
      %478 = vmatprep.mubr.bf16.mxu0 0
      %479 = vmatmul.mubr.bf16.gmra.mrb[0].mxu0 %v394
      %v480 = vpop.f32.mrb[0].mxu0
      %v481 = vadd.f32 0.0, %v480
      %v482 = vpop.f32.mrb[0].mxu0
      %v483 = vpop.f32.mrb[0].mxu0
      %v484 = vpop.f32.mrb[0].mxu0
      %485 = vdwg.mxu0
      %v486 = vadd.f32 %v336, %v440
      %v487 = vadd.f32 %v338, %v442
      %v488 = vadd.f32 %v377, %v481
      %s489 = scalar_lea.vmem %s1, 12
      %v490 = vld [vmem:[%s489] sm:$0xf]
      %491 = vrot.lane.b32.xlu0 %v182, 110
      %v492 = vpop.permute.xlu0 %491
      %493 = vrot.lane.b32.xlu0 %v183, 110
      %v494 = vpop.permute.xlu0 %493
      %495 = vrot.lane.b32.xlu0 %v184, 110
      %v496 = vpop.permute.xlu0 %495
      %vm497 = vcmask 900096
      %v498 = vsel %vm497, %v492, %v494
      %v499 = vsel %vm497, %v494, %v496
      %v501 = vsel %vm194, %v490, 0
      %v504 = vsel %vm198, %v498, 0
      %v507 = vsel %vm198, %v499, 0
      %v510 = vsel %vm198, %v496, 0
      %512 = vmatprep.subr.bf16.mxu0 %v507
      %513 = vmatpush1.bf16.msra.mxu0 %v504
      %514 = vmatprep.subr.bf16.mxu0 0
      %515 = vmatpush1.bf16.msra.mxu0 0
      %516 = vmatprep.subr.bf16.mxu0 0
      %517 = vmatpush1.bf16.msra.mxu0 0
      %518 = vmatprep.subr.bf16.mxu0 0
      %519 = vmatpush1.bf16.msra.mxu0 0
      %520 = vmatprep.subr.bf16.mxu0 0
      %521 = vmatpush1.bf16.msra.mxu0 0
      %522 = vmatprep.subr.bf16.mxu0 0
      %523 = vmatpush1.bf16.msra.mxu0 0
      %524 = vmatprep.subr.bf16.mxu0 0
      %525 = vmatpush1.bf16.msra.mxu0 0
      %526 = vmatprep.subr.bf16.mxu0 0
      %527 = vmatpush1.bf16.msra.mxu0 0
      %528 = vmatprep.subr.bf16.mxu0 0
      %529 = vmatpush1.bf16.msra.mxu0 0
      %530 = vmatprep.subr.bf16.mxu0 0
      %531 = vmatpush1.bf16.msra.mxu0 0
      %532 = vmatprep.subr.bf16.mxu0 0
      %533 = vmatpush1.bf16.msra.mxu0 0
      %534 = vmatprep.subr.bf16.mxu0 0
      %535 = vmatpush1.bf16.msra.mxu0 0
      %536 = vmatprep.subr.bf16.mxu0 0
      %537 = vmatpush1.bf16.msra.mxu0 0
      %538 = vmatprep.subr.bf16.mxu0 0
      %539 = vmatpush1.bf16.msra.mxu0 0
      %540 = vmatprep.subr.bf16.mxu0 0
      %541 = vmatpush1.bf16.msra.mxu0 0
      %542 = vmatprep.subr.bf16.mxu0 0
      %543 = vmatpush1.bf16.msra.mxu0 0
      %544 = vmatprep.mubr.bf16.mxu0 0
      %545 = vmatmul.mubr.bf16.gmra.mrb[0].mxu0 %v501
      %v546 = vpop.f32.mrb[0].mxu0
      %v547 = vadd.f32 0.0, %v546
      %v548 = vpop.f32.mrb[0].mxu0
      %v549 = vadd.f32 0.0, %v548
      %v550 = vpop.f32.mrb[0].mxu0
      %v551 = vpop.f32.mrb[0].mxu0
      %552 = vdwg.mxu0
      %553 = vmatprep.subr.bf16.mxu0 0
      %554 = vmatpush1.bf16.msra.mxu0 %v510
      %555 = vmatprep.subr.bf16.mxu0 0
      %556 = vmatpush1.bf16.msra.mxu0 0
      %557 = vmatprep.subr.bf16.mxu0 0
      %558 = vmatpush1.bf16.msra.mxu0 0
      %559 = vmatprep.subr.bf16.mxu0 0
      %560 = vmatpush1.bf16.msra.mxu0 0
      %561 = vmatprep.subr.bf16.mxu0 0
      %562 = vmatpush1.bf16.msra.mxu0 0
      %563 = vmatprep.subr.bf16.mxu0 0
      %564 = vmatpush1.bf16.msra.mxu0 0
      %565 = vmatprep.subr.bf16.mxu0 0
      %566 = vmatpush1.bf16.msra.mxu0 0
      %567 = vmatprep.subr.bf16.mxu0 0
      %568 = vmatpush1.bf16.msra.mxu0 0
      %569 = vmatprep.subr.bf16.mxu0 0
      %570 = vmatpush1.bf16.msra.mxu0 0
      %571 = vmatprep.subr.bf16.mxu0 0
      %572 = vmatpush1.bf16.msra.mxu0 0
      %573 = vmatprep.subr.bf16.mxu0 0
      %574 = vmatpush1.bf16.msra.mxu0 0
      %575 = vmatprep.subr.bf16.mxu0 0
      %576 = vmatpush1.bf16.msra.mxu0 0
      %577 = vmatprep.subr.bf16.mxu0 0
      %578 = vmatpush1.bf16.msra.mxu0 0
      %579 = vmatprep.subr.bf16.mxu0 0
      %580 = vmatpush1.bf16.msra.mxu0 0
      %581 = vmatprep.subr.bf16.mxu0 0
      %582 = vmatpush1.bf16.msra.mxu0 0
      %583 = vmatprep.subr.bf16.mxu0 0
      %584 = vmatpush1.bf16.msra.mxu0 0
      %585 = vmatprep.mubr.bf16.mxu0 0
      %586 = vmatmul.mubr.bf16.gmra.mrb[0].mxu0 %v501
      %v587 = vpop.f32.mrb[0].mxu0
      %v588 = vadd.f32 0.0, %v587
      %v589 = vpop.f32.mrb[0].mxu0
      %v590 = vpop.f32.mrb[0].mxu0
      %v591 = vpop.f32.mrb[0].mxu0
      %592 = vdwg.mxu0
      %v593 = vadd.f32 %v486, %v547
      %v594 = vadd.f32 %v487, %v549
      %v595 = vadd.f32 %v488, %v588
      %s596 = scalar_lea.vmem %s1, 16
      %v597 = vld [vmem:[%s596] sm:$0xf]
      %598 = vrot.lane.b32.xlu0 %v182, 109
      %v599 = vpop.permute.xlu0 %598
      %600 = vrot.lane.b32.xlu0 %v183, 109
      %v601 = vpop.permute.xlu0 %600
      %602 = vrot.lane.b32.xlu0 %v184, 109
      %v603 = vpop.permute.xlu0 %602
      %vm604 = vcmask 891904
      %v605 = vsel %vm604, %v599, %v601
      %v606 = vsel %vm604, %v601, %v603
      %v608 = vsel %vm194, %v597, 0
      %v611 = vsel %vm198, %v605, 0
      %v614 = vsel %vm198, %v606, 0
      %v617 = vsel %vm198, %v603, 0
      %619 = vmatprep.subr.bf16.mxu0 %v614
      %620 = vmatpush1.bf16.msra.mxu0 %v611
      %621 = vmatprep.subr.bf16.mxu0 0
      %622 = vmatpush1.bf16.msra.mxu0 0
      %623 = vmatprep.subr.bf16.mxu0 0
      %624 = vmatpush1.bf16.msra.mxu0 0
      %625 = vmatprep.subr.bf16.mxu0 0
      %626 = vmatpush1.bf16.msra.mxu0 0
      %627 = vmatprep.subr.bf16.mxu0 0
      %628 = vmatpush1.bf16.msra.mxu0 0
      %629 = vmatprep.subr.bf16.mxu0 0
      %630 = vmatpush1.bf16.msra.mxu0 0
      %631 = vmatprep.subr.bf16.mxu0 0
      %632 = vmatpush1.bf16.msra.mxu0 0
      %633 = vmatprep.subr.bf16.mxu0 0
      %634 = vmatpush1.bf16.msra.mxu0 0
      %635 = vmatprep.subr.bf16.mxu0 0
      %636 = vmatpush1.bf16.msra.mxu0 0
      %637 = vmatprep.subr.bf16.mxu0 0
      %638 = vmatpush1.bf16.msra.mxu0 0
      %639 = vmatprep.subr.bf16.mxu0 0
      %640 = vmatpush1.bf16.msra.mxu0 0
      %641 = vmatprep.subr.bf16.mxu0 0
      %642 = vmatpush1.bf16.msra.mxu0 0
      %643 = vmatprep.subr.bf16.mxu0 0
      %644 = vmatpush1.bf16.msra.mxu0 0
      %645 = vmatprep.subr.bf16.mxu0 0
      %646 = vmatpush1.bf16.msra.mxu0 0
      %647 = vmatprep.subr.bf16.mxu0 0
      %648 = vmatpush1.bf16.msra.mxu0 0
      %649 = vmatprep.subr.bf16.mxu0 0
      %650 = vmatpush1.bf16.msra.mxu0 0
      %651 = vmatprep.mubr.bf16.mxu0 0
      %652 = vmatmul.mubr.bf16.gmra.mrb[0].mxu0 %v608
      %v653 = vpop.f32.mrb[0].mxu0
      %v654 = vadd.f32 0.0, %v653
      %v655 = vpop.f32.mrb[0].mxu0
      %v656 = vadd.f32 0.0, %v655
      %v657 = vpop.f32.mrb[0].mxu0
      %v658 = vpop.f32.mrb[0].mxu0
      %659 = vdwg.mxu0
      %660 = vmatprep.subr.bf16.mxu0 0
      %661 = vmatpush1.bf16.msra.mxu0 %v617
      %662 = vmatprep.subr.bf16.mxu0 0
      %663 = vmatpush1.bf16.msra.mxu0 0
      %664 = vmatprep.subr.bf16.mxu0 0
      %665 = vmatpush1.bf16.msra.mxu0 0
      %666 = vmatprep.subr.bf16.mxu0 0
      %667 = vmatpush1.bf16.msra.mxu0 0
      %668 = vmatprep.subr.bf16.mxu0 0
      %669 = vmatpush1.bf16.msra.mxu0 0
      %670 = vmatprep.subr.bf16.mxu0 0
      %671 = vmatpush1.bf16.msra.mxu0 0
      %672 = vmatprep.subr.bf16.mxu0 0
      %673 = vmatpush1.bf16.msra.mxu0 0
      %674 = vmatprep.subr.bf16.mxu0 0
      %675 = vmatpush1.bf16.msra.mxu0 0
      %676 = vmatprep.subr.bf16.mxu0 0
      %677 = vmatpush1.bf16.msra.mxu0 0
      %678 = vmatprep.subr.bf16.mxu0 0
      %679 = vmatpush1.bf16.msra.mxu0 0
      %680 = vmatprep.subr.bf16.mxu0 0
      %681 = vmatpush1.bf16.msra.mxu0 0
      %682 = vmatprep.subr.bf16.mxu0 0
      %683 = vmatpush1.bf16.msra.mxu0 0
      %684 = vmatprep.subr.bf16.mxu0 0
      %685 = vmatpush1.bf16.msra.mxu0 0
      %686 = vmatprep.subr.bf16.mxu0 0
      %687 = vmatpush1.bf16.msra.mxu0 0
      %688 = vmatprep.subr.bf16.mxu0 0
      %689 = vmatpush1.bf16.msra.mxu0 0
      %690 = vmatprep.subr.bf16.mxu0 0
      %691 = vmatpush1.bf16.msra.mxu0 0
      %692 = vmatprep.mubr.bf16.mxu0 0
      %693 = vmatmul.mubr.bf16.gmra.mrb[0].mxu0 %v608
      %v694 = vpop.f32.mrb[0].mxu0
      %v695 = vadd.f32 0.0, %v694
      %v696 = vpop.f32.mrb[0].mxu0
      %v697 = vpop.f32.mrb[0].mxu0
      %v698 = vpop.f32.mrb[0].mxu0
      %699 = vdwg.mxu0
      %v700 = vadd.f32 %v593, %v654
      %v701 = vadd.f32 %v594, %v656
      %v702 = vadd.f32 %v595, %v695
      %s703 = scalar_lea.vmem %s1, 20
      %v704 = vld [vmem:[%s703] sm:$0xf]
      %705 = vrot.lane.b32.xlu0 %v182, 108
      %v706 = vpop.permute.xlu0 %705
      %707 = vrot.lane.b32.xlu0 %v183, 108
      %v708 = vpop.permute.xlu0 %707
      %709 = vrot.lane.b32.xlu0 %v184, 108
      %v710 = vpop.permute.xlu0 %709
      %vm711 = vcmask 883712
      %v712 = vsel %vm711, %v706, %v708
      %v713 = vsel %vm711, %v708, %v710
      %v715 = vsel %vm194, %v704, 0
      %v718 = vsel %vm198, %v712, 0
      %v721 = vsel %vm198, %v713, 0
      %v724 = vsel %vm198, %v710, 0
      %726 = vmatprep.subr.bf16.mxu0 %v721
      %727 = vmatpush1.bf16.msra.mxu0 %v718
      %728 = vmatprep.subr.bf16.mxu0 0
      %729 = vmatpush1.bf16.msra.mxu0 0
      %730 = vmatprep.subr.bf16.mxu0 0
      %731 = vmatpush1.bf16.msra.mxu0 0
      %732 = vmatprep.subr.bf16.mxu0 0
      %733 = vmatpush1.bf16.msra.mxu0 0
      %734 = vmatprep.subr.bf16.mxu0 0
      %735 = vmatpush1.bf16.msra.mxu0 0
      %736 = vmatprep.subr.bf16.mxu0 0
      %737 = vmatpush1.bf16.msra.mxu0 0
      %738 = vmatprep.subr.bf16.mxu0 0
      %739 = vmatpush1.bf16.msra.mxu0 0
      %740 = vmatprep.subr.bf16.mxu0 0
      %741 = vmatpush1.bf16.msra.mxu0 0
      %742 = vmatprep.subr.bf16.mxu0 0
      %743 = vmatpush1.bf16.msra.mxu0 0
      %744 = vmatprep.subr.bf16.mxu0 0
      %745 = vmatpush1.bf16.msra.mxu0 0
      %746 = vmatprep.subr.bf16.mxu0 0
      %747 = vmatpush1.bf16.msra.mxu0 0
      %748 = vmatprep.subr.bf16.mxu0 0
      %749 = vmatpush1.bf16.msra.mxu0 0
      %750 = vmatprep.subr.bf16.mxu0 0
      %751 = vmatpush1.bf16.msra.mxu0 0
      %752 = vmatprep.subr.bf16.mxu0 0
      %753 = vmatpush1.bf16.msra.mxu0 0
      %754 = vmatprep.subr.bf16.mxu0 0
      %755 = vmatpush1.bf16.msra.mxu0 0
      %756 = vmatprep.subr.bf16.mxu0 0
      %757 = vmatpush1.bf16.msra.mxu0 0
      %758 = vmatprep.mubr.bf16.mxu0 0
      %759 = vmatmul.mubr.bf16.gmra.mrb[0].mxu0 %v715
      %v760 = vpop.f32.mrb[0].mxu0
      %v761 = vadd.f32 0.0, %v760
      %v762 = vpop.f32.mrb[0].mxu0
      %v763 = vadd.f32 0.0, %v762
      %v764 = vpop.f32.mrb[0].mxu0
      %v765 = vpop.f32.mrb[0].mxu0
      %766 = vdwg.mxu0
      %767 = vmatprep.subr.bf16.mxu0 0
      %768 = vmatpush1.bf16.msra.mxu0 %v724
      %769 = vmatprep.subr.bf16.mxu0 0
      %770 = vmatpush1.bf16.msra.mxu0 0
      %771 = vmatprep.subr.bf16.mxu0 0
      %772 = vmatpush1.bf16.msra.mxu0 0
      %773 = vmatprep.subr.bf16.mxu0 0
      %774 = vmatpush1.bf16.msra.mxu0 0
      %775 = vmatprep.subr.bf16.mxu0 0
      %776 = vmatpush1.bf16.msra.mxu0 0
      %777 = vmatprep.subr.bf16.mxu0 0
      %778 = vmatpush1.bf16.msra.mxu0 0
      %779 = vmatprep.subr.bf16.mxu0 0
      %780 = vmatpush1.bf16.msra.mxu0 0
      %781 = vmatprep.subr.bf16.mxu0 0
      %782 = vmatpush1.bf16.msra.mxu0 0
      %783 = vmatprep.subr.bf16.mxu0 0
      %784 = vmatpush1.bf16.msra.mxu0 0
      %785 = vmatprep.subr.bf16.mxu0 0
      %786 = vmatpush1.bf16.msra.mxu0 0
      %787 = vmatprep.subr.bf16.mxu0 0
      %788 = vmatpush1.bf16.msra.mxu0 0
      %789 = vmatprep.subr.bf16.mxu0 0
      %790 = vmatpush1.bf16.msra.mxu0 0
      %791 = vmatprep.subr.bf16.mxu0 0
      %792 = vmatpush1.bf16.msra.mxu0 0
      %793 = vmatprep.subr.bf16.mxu0 0
      %794 = vmatpush1.bf16.msra.mxu0 0
      %795 = vmatprep.subr.bf16.mxu0 0
      %796 = vmatpush1.bf16.msra.mxu0 0
      %797 = vmatprep.subr.bf16.mxu0 0
      %798 = vmatpush1.bf16.msra.mxu0 0
      %799 = vmatprep.mubr.bf16.mxu0 0
      %800 = vmatmul.mubr.bf16.gmra.mrb[0].mxu0 %v715
      %v801 = vpop.f32.mrb[0].mxu0
      %v802 = vadd.f32 0.0, %v801
      %v803 = vpop.f32.mrb[0].mxu0
      %v804 = vpop.f32.mrb[0].mxu0
      %v805 = vpop.f32.mrb[0].mxu0
      %806 = vdwg.mxu0
      %v807 = vadd.f32 %v700, %v761
      %v808 = vadd.f32 %v701, %v763
      %v809 = vadd.f32 %v702, %v802
      %s810 = scalar_lea.vmem %s1, 24
      %v811 = vld [vmem:[%s810] sm:$0xf]
      %812 = vrot.lane.b32.xlu0 %v182, 92
      %v813 = vpop.permute.xlu0 %812
      %814 = vrot.lane.b32.xlu0 %v183, 92
      %v815 = vpop.permute.xlu0 %814
      %816 = vrot.lane.b32.xlu0 %v184, 92
      %v817 = vpop.permute.xlu0 %816
      %vm818 = vcmask 752640
      %v819 = vsel %vm818, %v813, %v815
      %v820 = vsel %vm818, %v815, %v817
      %v822 = vsel %vm194, %v811, 0
      %v825 = vsel %vm198, %v819, 0
      %v828 = vsel %vm198, %v820, 0
      %v831 = vsel %vm198, %v817, 0
      %833 = vmatprep.subr.bf16.mxu0 %v828
      %834 = vmatpush1.bf16.msra.mxu0 %v825
      %835 = vmatprep.subr.bf16.mxu0 0
      %836 = vmatpush1.bf16.msra.mxu0 0
      %837 = vmatprep.subr.bf16.mxu0 0
      %838 = vmatpush1.bf16.msra.mxu0 0
      %839 = vmatprep.subr.bf16.mxu0 0
      %840 = vmatpush1.bf16.msra.mxu0 0
      %841 = vmatprep.subr.bf16.mxu0 0
      %842 = vmatpush1.bf16.msra.mxu0 0
      %843 = vmatprep.subr.bf16.mxu0 0
      %844 = vmatpush1.bf16.msra.mxu0 0
      %845 = vmatprep.subr.bf16.mxu0 0
      %846 = vmatpush1.bf16.msra.mxu0 0
      %847 = vmatprep.subr.bf16.mxu0 0
      %848 = vmatpush1.bf16.msra.mxu0 0
      %849 = vmatprep.subr.bf16.mxu0 0
      %850 = vmatpush1.bf16.msra.mxu0 0
      %851 = vmatprep.subr.bf16.mxu0 0
      %852 = vmatpush1.bf16.msra.mxu0 0
      %853 = vmatprep.subr.bf16.mxu0 0
      %854 = vmatpush1.bf16.msra.mxu0 0
      %855 = vmatprep.subr.bf16.mxu0 0
      %856 = vmatpush1.bf16.msra.mxu0 0
      %857 = vmatprep.subr.bf16.mxu0 0
      %858 = vmatpush1.bf16.msra.mxu0 0
      %859 = vmatprep.subr.bf16.mxu0 0
      %860 = vmatpush1.bf16.msra.mxu0 0
      %861 = vmatprep.subr.bf16.mxu0 0
      %862 = vmatpush1.bf16.msra.mxu0 0
      %863 = vmatprep.subr.bf16.mxu0 0
      %864 = vmatpush1.bf16.msra.mxu0 0
      %865 = vmatprep.mubr.bf16.mxu0 0
      %866 = vmatmul.mubr.bf16.gmra.mrb[0].mxu0 %v822
      %v867 = vpop.f32.mrb[0].mxu0
      %v868 = vadd.f32 0.0, %v867
      %v869 = vpop.f32.mrb[0].mxu0
      %v870 = vadd.f32 0.0, %v869
      %v871 = vpop.f32.mrb[0].mxu0
      %v872 = vpop.f32.mrb[0].mxu0
      %873 = vdwg.mxu0
      %874 = vmatprep.subr.bf16.mxu0 0
      %875 = vmatpush1.bf16.msra.mxu0 %v831
      %876 = vmatprep.subr.bf16.mxu0 0
      %877 = vmatpush1.bf16.msra.mxu0 0
      %878 = vmatprep.subr.bf16.mxu0 0
      %879 = vmatpush1.bf16.msra.mxu0 0
      %880 = vmatprep.subr.bf16.mxu0 0
      %881 = vmatpush1.bf16.msra.mxu0 0
      %882 = vmatprep.subr.bf16.mxu0 0
      %883 = vmatpush1.bf16.msra.mxu0 0
      %884 = vmatprep.subr.bf16.mxu0 0
      %885 = vmatpush1.bf16.msra.mxu0 0
      %886 = vmatprep.subr.bf16.mxu0 0
      %887 = vmatpush1.bf16.msra.mxu0 0
      %888 = vmatprep.subr.bf16.mxu0 0
      %889 = vmatpush1.bf16.msra.mxu0 0
      %890 = vmatprep.subr.bf16.mxu0 0
      %891 = vmatpush1.bf16.msra.mxu0 0
      %892 = vmatprep.subr.bf16.mxu0 0
      %893 = vmatpush1.bf16.msra.mxu0 0
      %894 = vmatprep.subr.bf16.mxu0 0
      %895 = vmatpush1.bf16.msra.mxu0 0
      %896 = vmatprep.subr.bf16.mxu0 0
      %897 = vmatpush1.bf16.msra.mxu0 0
      %898 = vmatprep.subr.bf16.mxu0 0
      %899 = vmatpush1.bf16.msra.mxu0 0
      %900 = vmatprep.subr.bf16.mxu0 0
      %901 = vmatpush1.bf16.msra.mxu0 0
      %902 = vmatprep.subr.bf16.mxu0 0
      %903 = vmatpush1.bf16.msra.mxu0 0
      %904 = vmatprep.subr.bf16.mxu0 0
      %905 = vmatpush1.bf16.msra.mxu0 0
      %906 = vmatprep.mubr.bf16.mxu0 0
      %907 = vmatmul.mubr.bf16.gmra.mrb[0].mxu0 %v822
      %v908 = vpop.f32.mrb[0].mxu0
      %v909 = vadd.f32 0.0, %v908
      %v910 = vpop.f32.mrb[0].mxu0
      %v911 = vpop.f32.mrb[0].mxu0
      %v912 = vpop.f32.mrb[0].mxu0
      %913 = vdwg.mxu0
      %v914 = vadd.f32 %v807, %v868
      %v915 = vadd.f32 %v808, %v870
      %v916 = vadd.f32 %v809, %v909
      %s917 = scalar_lea.vmem %s1, 28
      %v918 = vld [vmem:[%s917] sm:$0xf]
      %919 = vrot.lane.b32.xlu0 %v182, 91
      %v920 = vpop.permute.xlu0 %919
      %921 = vrot.lane.b32.xlu0 %v183, 91
      %v922 = vpop.permute.xlu0 %921
      %923 = vrot.lane.b32.xlu0 %v184, 91
      %v924 = vpop.permute.xlu0 %923
      %vm925 = vcmask 744448
      %v926 = vsel %vm925, %v920, %v922
      %v927 = vsel %vm925, %v922, %v924
      %v929 = vsel %vm194, %v918, 0
      %v932 = vsel %vm198, %v926, 0
      %v935 = vsel %vm198, %v927, 0
      %v938 = vsel %vm198, %v924, 0
      %940 = vmatprep.subr.bf16.mxu0 %v935
      %941 = vmatpush1.bf16.msra.mxu0 %v932
      %942 = vmatprep.subr.bf16.mxu0 0
      %943 = vmatpush1.bf16.msra.mxu0 0
      %944 = vmatprep.subr.bf16.mxu0 0
      %945 = vmatpush1.bf16.msra.mxu0 0
      %946 = vmatprep.subr.bf16.mxu0 0
      %947 = vmatpush1.bf16.msra.mxu0 0
      %948 = vmatprep.subr.bf16.mxu0 0
      %949 = vmatpush1.bf16.msra.mxu0 0
      %950 = vmatprep.subr.bf16.mxu0 0
      %951 = vmatpush1.bf16.msra.mxu0 0
      %952 = vmatprep.subr.bf16.mxu0 0
      %953 = vmatpush1.bf16.msra.mxu0 0
      %954 = vmatprep.subr.bf16.mxu0 0
      %955 = vmatpush1.bf16.msra.mxu0 0
      %956 = vmatprep.subr.bf16.mxu0 0
      %957 = vmatpush1.bf16.msra.mxu0 0
      %958 = vmatprep.subr.bf16.mxu0 0
      %959 = vmatpush1.bf16.msra.mxu0 0
      %960 = vmatprep.subr.bf16.mxu0 0
      %961 = vmatpush1.bf16.msra.mxu0 0
      %962 = vmatprep.subr.bf16.mxu0 0
      %963 = vmatpush1.bf16.msra.mxu0 0
      %964 = vmatprep.subr.bf16.mxu0 0
      %965 = vmatpush1.bf16.msra.mxu0 0
      %966 = vmatprep.subr.bf16.mxu0 0
      %967 = vmatpush1.bf16.msra.mxu0 0
      %968 = vmatprep.subr.bf16.mxu0 0
      %969 = vmatpush1.bf16.msra.mxu0 0
      %970 = vmatprep.subr.bf16.mxu0 0
      %971 = vmatpush1.bf16.msra.mxu0 0
      %972 = vmatprep.mubr.bf16.mxu0 0
      %973 = vmatmul.mubr.bf16.gmra.mrb[0].mxu0 %v929
      %v974 = vpop.f32.mrb[0].mxu0
      %v975 = vadd.f32 0.0, %v974
      %v976 = vpop.f32.mrb[0].mxu0
      %v977 = vadd.f32 0.0, %v976
      %v978 = vpop.f32.mrb[0].mxu0
      %v979 = vpop.f32.mrb[0].mxu0
      %980 = vdwg.mxu0
      %981 = vmatprep.subr.bf16.mxu0 0
      %982 = vmatpush1.bf16.msra.mxu0 %v938
      %983 = vmatprep.subr.bf16.mxu0 0
      %984 = vmatpush1.bf16.msra.mxu0 0
      %985 = vmatprep.subr.bf16.mxu0 0
      %986 = vmatpush1.bf16.msra.mxu0 0
      %987 = vmatprep.subr.bf16.mxu0 0
      %988 = vmatpush1.bf16.msra.mxu0 0
      %989 = vmatprep.subr.bf16.mxu0 0
      %990 = vmatpush1.bf16.msra.mxu0 0
      %991 = vmatprep.subr.bf16.mxu0 0
      %992 = vmatpush1.bf16.msra.mxu0 0
      %993 = vmatprep.subr.bf16.mxu0 0
      %994 = vmatpush1.bf16.msra.mxu0 0
      %995 = vmatprep.subr.bf16.mxu0 0
      %996 = vmatpush1.bf16.msra.mxu0 0
      %997 = vmatprep.subr.bf16.mxu0 0
      %998 = vmatpush1.bf16.msra.mxu0 0
      %999 = vmatprep.subr.bf16.mxu0 0
      %1000 = vmatpush1.bf16.msra.mxu0 0
      %1001 = vmatprep.subr.bf16.mxu0 0
      %1002 = vmatpush1.bf16.msra.mxu0 0
      %1003 = vmatprep.subr.bf16.mxu0 0
      %1004 = vmatpush1.bf16.msra.mxu0 0
      %1005 = vmatprep.subr.bf16.mxu0 0
      %1006 = vmatpush1.bf16.msra.mxu0 0
      %1007 = vmatprep.subr.bf16.mxu0 0
      %1008 = vmatpush1.bf16.msra.mxu0 0
      %1009 = vmatprep.subr.bf16.mxu0 0
      %1010 = vmatpush1.bf16.msra.mxu0 0
      %1011 = vmatprep.subr.bf16.mxu0 0
      %1012 = vmatpush1.bf16.msra.mxu0 0
      %1013 = vmatprep.mubr.bf16.mxu0 0
      %1014 = vmatmul.mubr.bf16.gmra.mrb[0].mxu0 %v929
      %v1015 = vpop.f32.mrb[0].mxu0
      %v1016 = vadd.f32 0.0, %v1015
      %v1017 = vpop.f32.mrb[0].mxu0
      %v1018 = vpop.f32.mrb[0].mxu0
      %v1019 = vpop.f32.mrb[0].mxu0
      %1020 = vdwg.mxu0
      %v1021 = vadd.f32 %v914, %v975
      %v1022 = vadd.f32 %v915, %v977
      %v1023 = vadd.f32 %v916, %v1016
      %s1024 = scalar_lea.vmem %s1, 32
      %v1025 = vld [vmem:[%s1024] sm:$0xf]
      %1026 = vrot.lane.b32.xlu0 %v182, 90
      %v1027 = vpop.permute.xlu0 %1026
      %1028 = vrot.lane.b32.xlu0 %v183, 90
      %v1029 = vpop.permute.xlu0 %1028
      %1030 = vrot.lane.b32.xlu0 %v184, 90
      %v1031 = vpop.permute.xlu0 %1030
      %vm1032 = vcmask 736256
      %v1033 = vsel %vm1032, %v1027, %v1029
      %v1034 = vsel %vm1032, %v1029, %v1031
      %v1036 = vsel %vm194, %v1025, 0
      %v1039 = vsel %vm198, %v1033, 0
      %v1042 = vsel %vm198, %v1034, 0
      %v1045 = vsel %vm198, %v1031, 0
      %1047 = vmatprep.subr.bf16.mxu0 %v1042
      %1048 = vmatpush1.bf16.msra.mxu0 %v1039
      %1049 = vmatprep.subr.bf16.mxu0 0
      %1050 = vmatpush1.bf16.msra.mxu0 0
      %1051 = vmatprep.subr.bf16.mxu0 0
      %1052 = vmatpush1.bf16.msra.mxu0 0
      %1053 = vmatprep.subr.bf16.mxu0 0
      %1054 = vmatpush1.bf16.msra.mxu0 0
      %1055 = vmatprep.subr.bf16.mxu0 0
      %1056 = vmatpush1.bf16.msra.mxu0 0
      %1057 = vmatprep.subr.bf16.mxu0 0
      %1058 = vmatpush1.bf16.msra.mxu0 0
      %1059 = vmatprep.subr.bf16.mxu0 0
      %1060 = vmatpush1.bf16.msra.mxu0 0
      %1061 = vmatprep.subr.bf16.mxu0 0
      %1062 = vmatpush1.bf16.msra.mxu0 0
      %1063 = vmatprep.subr.bf16.mxu0 0
      %1064 = vmatpush1.bf16.msra.mxu0 0
      %1065 = vmatprep.subr.bf16.mxu0 0
      %1066 = vmatpush1.bf16.msra.mxu0 0
      %1067 = vmatprep.subr.bf16.mxu0 0
      %1068 = vmatpush1.bf16.msra.mxu0 0
      %1069 = vmatprep.subr.bf16.mxu0 0
      %1070 = vmatpush1.bf16.msra.mxu0 0
      %1071 = vmatprep.subr.bf16.mxu0 0
      %1072 = vmatpush1.bf16.msra.mxu0 0
      %1073 = vmatprep.subr.bf16.mxu0 0
      %1074 = vmatpush1.bf16.msra.mxu0 0
      %1075 = vmatprep.subr.bf16.mxu0 0
      %1076 = vmatpush1.bf16.msra.mxu0 0
      %1077 = vmatprep.subr.bf16.mxu0 0
      %1078 = vmatpush1.bf16.msra.mxu0 0
      %1079 = vmatprep.mubr.bf16.mxu0 0
      %1080 = vmatmul.mubr.bf16.gmra.mrb[0].mxu0 %v1036
      %v1081 = vpop.f32.mrb[0].mxu0
      %v1082 = vadd.f32 0.0, %v1081
      %v1083 = vpop.f32.mrb[0].mxu0
      %v1084 = vadd.f32 0.0, %v1083
      %v1085 = vpop.f32.mrb[0].mxu0
      %v1086 = vpop.f32.mrb[0].mxu0
      %1087 = vdwg.mxu0
      %1088 = vmatprep.subr.bf16.mxu0 0
      %1089 = vmatpush1.bf16.msra.mxu0 %v1045
      %1090 = vmatprep.subr.bf16.mxu0 0
      %1091 = vmatpush1.bf16.msra.mxu0 0
      %1092 = vmatprep.subr.bf16.mxu0 0
      %1093 = vmatpush1.bf16.msra.mxu0 0
      %1094 = vmatprep.subr.bf16.mxu0 0
      %1095 = vmatpush1.bf16.msra.mxu0 0
      %1096 = vmatprep.subr.bf16.mxu0 0
      %1097 = vmatpush1.bf16.msra.mxu0 0
      %1098 = vmatprep.subr.bf16.mxu0 0
      %1099 = vmatpush1.bf16.msra.mxu0 0
      %1100 = vmatprep.subr.bf16.mxu0 0
      %1101 = vmatpush1.bf16.msra.mxu0 0
      %1102 = vmatprep.subr.bf16.mxu0 0
      %1103 = vmatpush1.bf16.msra.mxu0 0
      %1104 = vmatprep.subr.bf16.mxu0 0
      %1105 = vmatpush1.bf16.msra.mxu0 0
      %1106 = vmatprep.subr.bf16.mxu0 0
      %1107 = vmatpush1.bf16.msra.mxu0 0
      %1108 = vmatprep.subr.bf16.mxu0 0
      %1109 = vmatpush1.bf16.msra.mxu0 0
      %1110 = vmatprep.subr.bf16.mxu0 0
      %1111 = vmatpush1.bf16.msra.mxu0 0
      %1112 = vmatprep.subr.bf16.mxu0 0
      %1113 = vmatpush1.bf16.msra.mxu0 0
      %1114 = vmatprep.subr.bf16.mxu0 0
      %1115 = vmatpush1.bf16.msra.mxu0 0
      %1116 = vmatprep.subr.bf16.mxu0 0
      %1117 = vmatpush1.bf16.msra.mxu0 0
      %1118 = vmatprep.subr.bf16.mxu0 0
      %1119 = vmatpush1.bf16.msra.mxu0 0
      %1120 = vmatprep.mubr.bf16.mxu0 0
      %1121 = vmatmul.mubr.bf16.gmra.mrb[0].mxu0 %v1036
      %v1122 = vpop.f32.mrb[0].mxu0
      %v1123 = vadd.f32 0.0, %v1122
      %v1124 = vpop.f32.mrb[0].mxu0
      %v1125 = vpop.f32.mrb[0].mxu0
      %v1126 = vpop.f32.mrb[0].mxu0
      %1127 = vdwg.mxu0
      %v1128 = vadd.f32 %v1021, %v1082
      %v1129 = vadd.f32 %v1022, %v1084
      %v1130 = vadd.f32 %v1023, %v1123
      %v1131 = vld [vmem:[%s2] sm:$0xff]
      %1133 = vset.pattern.permute.xlu0 0
      %1134 = vperm.xlu0 %1133, %v1131
      %v1135 = vpop.permute.xlu0 %1134
      %v1137 = vadd.f32 %v1128, %v1135
      %v1138 = vadd.f32 %v1129, %v1135
      %v1139 = vadd.f32 %v1130, %v1135
      %v1140 = vpack.c.bf16 %v1137, %v1137
      %v1141 = vpack.c.bf16 %v1138, %v1138
      %v1142 = vpack.c.bf16 %v1139, %v1139
      %v1146 = vunpack.c.l.b16 %v1140
      %v1147 = vunpack.c.l.b16 %v1141
      %v1148 = vunpack.c.l.b16 %v1142
      %v1149 = vpack.c.b16 %v1147, %v1146
      %v1150 = vpack.c.b16 %v1148, %v1148
      %1153 = vst [vmem:[%s170] sm:$0xff] %v1149
      %vm1154 = vcmask 257024
      %1155 = vst.msk [vmem:[%s170 + $0x8] sm:$0xf] %vm1154, %v1150
      %p1156 = scmp.lt.s32.totalorder %s14, 1
      %s1157 = scalar_select %p1156, %s14, 1
      %s1158 = smul.addr %s1157, 3
      %s1159 = smul.addr %s1158, 4
      %s1160 = scalar_lea.vmem %s3, %s1159
      // Predicated region
      $region33: #{_lambda_.30} parent=31 // pred_check
        %p1161 = pneg %p100
      $region34: #{_lambda_.30} parent=31 // pred_check_branch
        %1163 = sbr.rel (%p1161) target = $region36
      $region35: #{_lambda_.30} parent=31 // pred_region
        _
      $region36: #{_lambda_.30} parent=31 // pred_fallthru
        _
    $region32: #{_lambda_.30} parent=5 // pred_fallthru
      _
    %p1164 = scmp.le.s32.totalorder 2, %s9
    // Predicated region
    $region37: #{_lambda_.30} parent=5 // pred_check
      %p1165 = pneg %p1164
    $region38: #{_lambda_.30} parent=5 // pred_check_branch
      %1167 = sbr.rel (%p1165) target = $region40
    $region39: #{_lambda_.30} parent=5 // pred_region
      %s1168 = ssub.s32 %s9, 2
      // Predicated region
      $region41: #{_lambda_.30} parent=39 // pred_check
        %p1169 = pneg %p106
      $region42: #{_lambda_.30} parent=39 // pred_check_branch
        %1171 = sbr.rel (%p1169) target = $region44
      $region43: #{_lambda_.30} parent=39 // pred_region
        %p1172 = scmp.lt.s32.totalorder %s15, 1
        %s1173 = scalar_select %p1172, %s15, 1
        %s1174 = smul.addr %s1173, 3
        %s1175 = smul.addr %s1174, 4
        %s1176 = scalar_lea.vmem %s3, %s1175
      $region44: #{_lambda_.30} parent=39 // pred_fallthru
        _
    $region40: #{_lambda_.30} parent=5 // pred_fallthru
      _
  $region6: #{_lambda_.30} parent=0 // loop_footer
    %s13 = sadd.s32 1, %s9
  $region7: #{_lambda_.30} parent=0 // loop_footer_branch
    %8 = sbr.rel target = $region3
  $region8: #{_lambda_.30} parent=0 // loop_exit
    _

</llo_original>
